<compile_context>
chip_gen: v7x
topology: tpu7x:2x2x1
jax: 0.10.0
libtpu: 0.0.40
codegen_flags: <defaults>
</compile_context>

<pallas_src>
import jax
import jax.numpy as jnp
from jax.experimental import pallas as pl
from jax.experimental.pallas import tpu as pltpu

LATENT_DIM = 32
CH = 16            # conv output channels
P = 32 * 32        # spatial positions per channel after the stride-2 conv
NEG_SLOPE = 0.01   # nn.LeakyReLU default


# ---------------------------------------------------------------------------
# Fused kernel: conv(3x3,s2,p1) + LeakyReLU -> flat VMEM activation -> fc dots
# ---------------------------------------------------------------------------
def encoder_kernel(taps_ref, cw_ref, cb_ref, wmu_ref, wvar_ref, bmu_ref, bvar_ref,
                   mu_ref, lv_ref, xflat_sc, accmu_sc, acclv_sc):
    k = pl.program_id(0)
    tk = wmu_ref.shape[1]        # K tile (lanes)
    B = xflat_sc.shape[0]        # batch

    # ---- step 0: conv + bias + LeakyReLU into the flat activation ----------
    @pl.when(k == 0)
    def _():
        accmu_sc[...] = jnp.zeros_like(accmu_sc)
        acclv_sc[...] = jnp.zeros_like(acclv_sc)
        # 9 wide multiply-adds, vectorized over all 16 channels and the whole
        # batch: (16, 1) * (1, B*1024) -> (16, B*1024).
        y = cw_ref[0] * taps_ref[0:1, :]
        for t in range(1, 9):
            y = y + cw_ref[t] * taps_ref[t:t + 1, :]
        y = y + cb_ref[...]
        y = jnp.where(y >= 0.0, y, NEG_SLOPE * y)            # LeakyReLU
        # Scatter rows into channel-major flat layout == torch x.view(B, -1).
        for b in range(B):
            for c in range(CH):
                xflat_sc[b:b + 1, c * P:(c + 1) * P] = y[c:c + 1, b * P:(b + 1) * P]

    # ---- every step: one K tile of both heads on the MXU -------------------
    off = pl.multiple_of(k * tk, tk)
    x_blk = xflat_sc[:, pl.ds(off, tk)]                      # (B, tk)
    dn = (((1,), (1,)), ((), ()))                            # contract last dims: x @ W^T
    accmu_sc[...] += jax.lax.dot_general(x_blk, wmu_ref[...], dn,
                                         preferred_element_type=jnp.float32)
    acclv_sc[...] += jax.lax.dot_general(x_blk, wvar_ref[...], dn,
                                         preferred_element_type=jnp.float32)

    @pl.when(k == pl.num_programs(0) - 1)
    def _():
        mu_ref[...] = accmu_sc[...] + bmu_ref[...]
        lv_ref[...] = acclv_sc[...] + bvar_ref[...]


def encoder_pallas(x, conv_w, conv_b, wmu, bmu, wvar, bvar, *, tk=8192):
    """x: (B, 1, 64, 64) f32 NCHW -> (mu, log_var), each (B, latent_dim)."""
    B = x.shape[0]
    L = wmu.shape[0]
    K = wmu.shape[1]
    assert K == CH * P and K % tk == 0
    BP = B * P
    nk = K // tk

    # Pure layout plumbing (no arithmetic): zero-pad + im2col the 3x3/s2 taps;
    # reshape the tiny conv params for in-kernel broadcasting.  All tap slices
    # the kernel sees are already aligned.
    xpad = jnp.pad(x[:, 0], ((0, 0), (1, 1), (1, 1)))        # (B, 66, 66)
    taps = jnp.stack([xpad[:, kh:kh + 64:2, kw:kw + 64:2]    # (9, B, 32, 32)
                      for kh in range(3) for kw in range(3)], axis=0)
    taps = taps.reshape(9, BP).astype(jnp.float32)
    cw = conv_w.reshape(CH, 9).T.reshape(9, CH, 1).astype(jnp.float32)
    cb = conv_b.reshape(CH, 1).astype(jnp.float32)

    grid_spec = pltpu.PrefetchScalarGridSpec(
        num_scalar_prefetch=0,
        grid=(nk,),
        in_specs=[
            pl.BlockSpec((9, BP), lambda k: (0, 0)),          # im2col taps (resident)
            pl.BlockSpec((9, CH, 1), lambda k: (0, 0, 0)),    # conv weights
            pl.BlockSpec((CH, 1), lambda k: (0, 0)),          # conv bias
            pl.BlockSpec((L, tk), lambda k: (0, k)),          # fc_mu weight K-tile
            pl.BlockSpec((L, tk), lambda k: (0, k)),          # fc_var weight K-tile
            pl.BlockSpec((1, L), lambda k: (0, 0)),           # fc_mu bias
            pl.BlockSpec((1, L), lambda k: (0, 0)),           # fc_var bias
        ],
        out_specs=[
            pl.BlockSpec((B, L), lambda k: (0, 0)),
            pl.BlockSpec((B, L), lambda k: (0, 0)),
        ],
        scratch_shapes=[
            pltpu.VMEM((B, K), jnp.float32),   # flat conv activation (== view(B, -1))
            pltpu.VMEM((B, L), jnp.float32),   # mu accumulator
            pltpu.VMEM((B, L), jnp.float32),   # log_var accumulator
        ],
    )
    return pl.pallas_call(
        encoder_kernel,
        out_shape=(jax.ShapeDtypeStruct((B, L), jnp.float32),
                   jax.ShapeDtypeStruct((B, L), jnp.float32)),
        grid_spec=grid_spec,
        # Pure K-reduction with resident accumulators (and conv done at k==0):
        # must be sequential, so "arbitrary".
        compiler_params=pltpu.CompilerParams(dimension_semantics=("arbitrary",)),
    )(taps, cw, cb, wmu, wvar, bmu.reshape(1, L), bvar.reshape(1, L))


@jax.jit
def encoder_forward(x, conv_w, conv_b, wmu, bmu, wvar, bvar):
    return encoder_pallas(x, conv_w, conv_b, wmu, bmu, wvar, bvar)


# ---------------------------------------------------------------------------
# Pure-JAX reference
# ---------------------------------------------------------------------------
def encoder_reference(x, conv_w, conv_b, wmu, bmu, wvar, bvar):
    y = jax.lax.conv_general_dilated(
        x, conv_w, window_strides=(2, 2), padding=((1, 1), (1, 1)),
        dimension_numbers=("NCHW", "OIHW", "NCHW"))
    y = y + conv_b[None, :, None, None]
    y = jnp.where(y >= 0, y, NEG_SLOPE * y)
    f = y.reshape(y.shape[0], -1)
    mu = f @ wmu.T + bmu
    log_var = f @ wvar.T + bvar
    return mu, log_var


if __name__ == "__main__":
    key = jax.random.PRNGKey(0)
    kx, kw, kb, kwm, kbm, kwv, kbv = jax.random.split(key, 7)

    B = 2
    x = jax.random.normal(kx, (B, 1, 64, 64), dtype=jnp.float32)

    # Deterministic synthetic parameters (shapes from the module __init__).
    K = CH * P  # 16 * 32 * 32
    conv_w = jax.random.normal(kw, (CH, 1, 3, 3), jnp.float32) * (1.0 / 3.0)
    conv_b = jax.random.normal(kb, (CH,), jnp.float32) * 0.1
    wmu = jax.random.normal(kwm, (LATENT_DIM, K), jnp.float32) * (K ** -0.5)
    bmu = jax.random.normal(kbm, (LATENT_DIM,), jnp.float32) * 0.1
    wvar = jax.random.normal(kwv, (LATENT_DIM, K), jnp.float32) * (K ** -0.5)
    bvar = jax.random.normal(kbv, (LATENT_DIM,), jnp.float32) * 0.1

    mu, log_var = encoder_forward(x, conv_w, conv_b, wmu, bmu, wvar, bvar)
    jax.block_until_ready((mu, log_var))

    mu_ref, lv_ref = encoder_reference(x, conv_w, conv_b, wmu, bmu, wvar, bvar)
    assert mu.shape == (B, LATENT_DIM) and log_var.shape == (B, LATENT_DIM)
    assert jnp.allclose(mu, mu_ref, atol=1e-2, rtol=1e-2)
    assert jnp.allclose(log_var, lv_ref, atol=1e-2, rtol=1e-2)

    print("KERNEL_OK")
</pallas_src>

<mosaic_0001>
module attributes {stable_mosaic.version = 11 : i64} {
  func.func @encoder_kernel(%arg0: i32, %arg1: memref<9x2048xf32, #tpu.memory_space<vmem>>, %arg2: memref<9x16x1xf32, #tpu.memory_space<vmem>>, %arg3: memref<16x1xf32, #tpu.memory_space<vmem>>, %arg4: memref<32x8192xf32, #tpu.memory_space<vmem>>, %arg5: memref<32x8192xf32, #tpu.memory_space<vmem>>, %arg6: memref<1x32xf32, #tpu.memory_space<vmem>>, %arg7: memref<1x32xf32, #tpu.memory_space<vmem>>, %arg8: memref<2x32xf32, #tpu.memory_space<vmem>>, %arg9: memref<2x32xf32, #tpu.memory_space<vmem>>, %arg10: memref<2x16384xf32, #tpu.memory_space<vmem>>, %arg11: memref<2x32xf32, #tpu.memory_space<vmem>>, %arg12: memref<2x32xf32, #tpu.memory_space<vmem>>) attributes {dimension_semantics = [#tpu.dimension_semantics<arbitrary>], iteration_bounds = array<i64: 2>, scalar_prefetch = 0 : i64, scratch_operands = 3 : i64, tpu.core_type = #tpu.core_type<tc>, window_params = [{pipeline_mode = #tpu.pipeline_mode<synchronous>, transform_indices = @transform_0, window_bounds = array<i64: 9, 2048>}, {pipeline_mode = #tpu.pipeline_mode<synchronous>, transform_indices = @transform_1, window_bounds = array<i64: 9, 16, 1>}, {pipeline_mode = #tpu.pipeline_mode<synchronous>, transform_indices = @transform_2, window_bounds = array<i64: 16, 1>}, {transform_indices = @transform_3, window_bounds = array<i64: 32, 8192>}, {transform_indices = @transform_4, window_bounds = array<i64: 32, 8192>}, {pipeline_mode = #tpu.pipeline_mode<synchronous>, transform_indices = @transform_5, window_bounds = array<i64: 1, 32>}, {pipeline_mode = #tpu.pipeline_mode<synchronous>, transform_indices = @transform_6, window_bounds = array<i64: 1, 32>}, {pipeline_mode = #tpu.pipeline_mode<synchronous>, transform_indices = @transform_7, window_bounds = array<i64: 2, 32>}, {pipeline_mode = #tpu.pipeline_mode<synchronous>, transform_indices = @transform_8, window_bounds = array<i64: 2, 32>}]} {
    %c0_i32 = arith.constant 0 : i32
    %0 = arith.cmpi eq, %arg0, %c0_i32 : i32
    %1 = arith.extui %0 : i1 to i32
    %c0_i32_0 = arith.constant 0 : i32
    %2 = arith.cmpi ne, %1, %c0_i32_0 : i32
    scf.if %2 {
      %cst_15 = arith.constant 0.000000e+00 : f32
      %20 = vector.broadcast %cst_15 : f32 to vector<2x32xf32>
      %c0_16 = arith.constant 0 : index
      %c0_17 = arith.constant 0 : index
      %21 = vector.load %arg11[%c0_16, %c0_17] : memref<2x32xf32, #tpu.memory_space<vmem>>, vector<2x32xf32>
      tpu.vector_store %arg11[%c0_16, %c0_17], %20 {strides = array<i32>} : memref<2x32xf32, #tpu.memory_space<vmem>>, vector<2x32xf32>,
      %cst_18 = arith.constant 0.000000e+00 : f32
      %22 = vector.broadcast %cst_18 : f32 to vector<2x32xf32>
      %c0_19 = arith.constant 0 : index
      %c0_20 = arith.constant 0 : index
      %23 = vector.load %arg12[%c0_19, %c0_20] : memref<2x32xf32, #tpu.memory_space<vmem>>, vector<2x32xf32>
      tpu.vector_store %arg12[%c0_19, %c0_20], %22 {strides = array<i32>} : memref<2x32xf32, #tpu.memory_space<vmem>>, vector<2x32xf32>,
      %c0_21 = arith.constant 0 : index
      %c0_22 = arith.constant 0 : index
      %c0_23 = arith.constant 0 : index
      %24 = vector.load %arg2[%c0_21, %c0_22, %c0_23] : memref<9x16x1xf32, #tpu.memory_space<vmem>>, vector<1x16x1xf32>
      %25 = vector.shape_cast %24 : vector<1x16x1xf32> to vector<16x1xf32>
      %c0_24 = arith.constant 0 : index
      %c0_25 = arith.constant 0 : index
      %26 = vector.load %arg1[%c0_24, %c0_25] : memref<9x2048xf32, #tpu.memory_space<vmem>>, vector<1x2048xf32>
      %27 = vector.broadcast %25 : vector<16x1xf32> to vector<16x2048xf32>
      %28 = vector.broadcast %26 : vector<1x2048xf32> to vector<16x2048xf32>
      %29 = arith.mulf %27, %28 : vector<16x2048xf32>
      %c1 = arith.constant 1 : index
      %c0_26 = arith.constant 0 : index
      %c0_27 = arith.constant 0 : index
      %30 = vector.load %arg2[%c1, %c0_26, %c0_27] : memref<9x16x1xf32, #tpu.memory_space<vmem>>, vector<1x16x1xf32>
      %31 = vector.shape_cast %30 : vector<1x16x1xf32> to vector<16x1xf32>
      %c1_28 = arith.constant 1 : index
      %c0_29 = arith.constant 0 : index
      %32 = vector.load %arg1[%c1_28, %c0_29] : memref<9x2048xf32, #tpu.memory_space<vmem>>, vector<1x2048xf32>
      %33 = vector.broadcast %31 : vector<16x1xf32> to vector<16x2048xf32>
      %34 = vector.broadcast %32 : vector<1x2048xf32> to vector<16x2048xf32>
      %35 = arith.mulf %33, %34 : vector<16x2048xf32>
      %36 = arith.addf %29, %35 : vector<16x2048xf32>
      %c2 = arith.constant 2 : index
      %c0_30 = arith.constant 0 : index
      %c0_31 = arith.constant 0 : index
      %37 = vector.load %arg2[%c2, %c0_30, %c0_31] : memref<9x16x1xf32, #tpu.memory_space<vmem>>, vector<1x16x1xf32>
      %38 = vector.shape_cast %37 : vector<1x16x1xf32> to vector<16x1xf32>
      %c2_32 = arith.constant 2 : index
      %c0_33 = arith.constant 0 : index
      %39 = vector.load %arg1[%c2_32, %c0_33] : memref<9x2048xf32, #tpu.memory_space<vmem>>, vector<1x2048xf32>
      %40 = vector.broadcast %38 : vector<16x1xf32> to vector<16x2048xf32>
      %41 = vector.broadcast %39 : vector<1x2048xf32> to vector<16x2048xf32>
      %42 = arith.mulf %40, %41 : vector<16x2048xf32>
      %43 = arith.addf %36, %42 : vector<16x2048xf32>
      %c3 = arith.constant 3 : index
      %c0_34 = arith.constant 0 : index
      %c0_35 = arith.constant 0 : index
      %44 = vector.load %arg2[%c3, %c0_34, %c0_35] : memref<9x16x1xf32, #tpu.memory_space<vmem>>, vector<1x16x1xf32>
      %45 = vector.shape_cast %44 : vector<1x16x1xf32> to vector<16x1xf32>
      %c3_36 = arith.constant 3 : index
      %c0_37 = arith.constant 0 : index
      %46 = vector.load %arg1[%c3_36, %c0_37] : memref<9x2048xf32, #tpu.memory_space<vmem>>, vector<1x2048xf32>
      %47 = vector.broadcast %45 : vector<16x1xf32> to vector<16x2048xf32>
      %48 = vector.broadcast %46 : vector<1x2048xf32> to vector<16x2048xf32>
      %49 = arith.mulf %47, %48 : vector<16x2048xf32>
      %50 = arith.addf %43, %49 : vector<16x2048xf32>
      %c4 = arith.constant 4 : index
      %c0_38 = arith.constant 0 : index
      %c0_39 = arith.constant 0 : index
      %51 = vector.load %arg2[%c4, %c0_38, %c0_39] : memref<9x16x1xf32, #tpu.memory_space<vmem>>, vector<1x16x1xf32>
      %52 = vector.shape_cast %51 : vector<1x16x1xf32> to vector<16x1xf32>
      %c4_40 = arith.constant 4 : index
      %c0_41 = arith.constant 0 : index
      %53 = vector.load %arg1[%c4_40, %c0_41] : memref<9x2048xf32, #tpu.memory_space<vmem>>, vector<1x2048xf32>
      %54 = vector.broadcast %52 : vector<16x1xf32> to vector<16x2048xf32>
      %55 = vector.broadcast %53 : vector<1x2048xf32> to vector<16x2048xf32>
      %56 = arith.mulf %54, %55 : vector<16x2048xf32>
      %57 = arith.addf %50, %56 : vector<16x2048xf32>
      %c5 = arith.constant 5 : index
      %c0_42 = arith.constant 0 : index
      %c0_43 = arith.constant 0 : index
      %58 = vector.load %arg2[%c5, %c0_42, %c0_43] : memref<9x16x1xf32, #tpu.memory_space<vmem>>, vector<1x16x1xf32>
      %59 = vector.shape_cast %58 : vector<1x16x1xf32> to vector<16x1xf32>
      %c5_44 = arith.constant 5 : index
      %c0_45 = arith.constant 0 : index
      %60 = vector.load %arg1[%c5_44, %c0_45] : memref<9x2048xf32, #tpu.memory_space<vmem>>, vector<1x2048xf32>
      %61 = vector.broadcast %59 : vector<16x1xf32> to vector<16x2048xf32>
      %62 = vector.broadcast %60 : vector<1x2048xf32> to vector<16x2048xf32>
      %63 = arith.mulf %61, %62 : vector<16x2048xf32>
      %64 = arith.addf %57, %63 : vector<16x2048xf32>
      %c6 = arith.constant 6 : index
      %c0_46 = arith.constant 0 : index
      %c0_47 = arith.constant 0 : index
      %65 = vector.load %arg2[%c6, %c0_46, %c0_47] : memref<9x16x1xf32, #tpu.memory_space<vmem>>, vector<1x16x1xf32>
      %66 = vector.shape_cast %65 : vector<1x16x1xf32> to vector<16x1xf32>
      %c6_48 = arith.constant 6 : index
      %c0_49 = arith.constant 0 : index
      %67 = vector.load %arg1[%c6_48, %c0_49] : memref<9x2048xf32, #tpu.memory_space<vmem>>, vector<1x2048xf32>
      %68 = vector.broadcast %66 : vector<16x1xf32> to vector<16x2048xf32>
      %69 = vector.broadcast %67 : vector<1x2048xf32> to vector<16x2048xf32>
      %70 = arith.mulf %68, %69 : vector<16x2048xf32>
      %71 = arith.addf %64, %70 : vector<16x2048xf32>
      %c7 = arith.constant 7 : index
      %c0_50 = arith.constant 0 : index
      %c0_51 = arith.constant 0 : index
      %72 = vector.load %arg2[%c7, %c0_50, %c0_51] : memref<9x16x1xf32, #tpu.memory_space<vmem>>, vector<1x16x1xf32>
      %73 = vector.shape_cast %72 : vector<1x16x1xf32> to vector<16x1xf32>
      %c7_52 = arith.constant 7 : index
      %c0_53 = arith.constant 0 : index
      %74 = vector.load %arg1[%c7_52, %c0_53] : memref<9x2048xf32, #tpu.memory_space<vmem>>, vector<1x2048xf32>
      %75 = vector.broadcast %73 : vector<16x1xf32> to vector<16x2048xf32>
      %76 = vector.broadcast %74 : vector<1x2048xf32> to vector<16x2048xf32>
      %77 = arith.mulf %75, %76 : vector<16x2048xf32>
      %78 = arith.addf %71, %77 : vector<16x2048xf32>
      %c8 = arith.constant 8 : index
      %c0_54 = arith.constant 0 : index
      %c0_55 = arith.constant 0 : index
      %79 = vector.load %arg2[%c8, %c0_54, %c0_55] : memref<9x16x1xf32, #tpu.memory_space<vmem>>, vector<1x16x1xf32>
      %80 = vector.shape_cast %79 : vector<1x16x1xf32> to vector<16x1xf32>
      %c8_56 = arith.constant 8 : index
      %c0_57 = arith.constant 0 : index
      %81 = vector.load %arg1[%c8_56, %c0_57] : memref<9x2048xf32, #tpu.memory_space<vmem>>, vector<1x2048xf32>
      %82 = vector.broadcast %80 : vector<16x1xf32> to vector<16x2048xf32>
      %83 = vector.broadcast %81 : vector<1x2048xf32> to vector<16x2048xf32>
      %84 = arith.mulf %82, %83 : vector<16x2048xf32>
      %85 = arith.addf %78, %84 : vector<16x2048xf32>
      %c0_58 = arith.constant 0 : index
      %c0_59 = arith.constant 0 : index
      %86 = vector.load %arg3[%c0_58, %c0_59] : memref<16x1xf32, #tpu.memory_space<vmem>>, vector<16x1xf32>
      %87 = vector.broadcast %86 : vector<16x1xf32> to vector<16x2048xf32>
      %88 = arith.addf %85, %87 : vector<16x2048xf32>
      %cst_60 = arith.constant 0.000000e+00 : f32
      %89 = vector.broadcast %cst_60 : f32 to vector<16x2048xf32>
      %90 = arith.cmpf oge, %88, %89 : vector<16x2048xf32>
      %cst_61 = arith.constant 0.00999999977 : f32
      %91 = vector.broadcast %cst_61 : f32 to vector<16x2048xf32>
      %92 = arith.mulf %91, %88 : vector<16x2048xf32>
      %93 = arith.select %90, %88, %92 : vector<16x2048xi1>, vector<16x2048xf32>
      %94 = vector.extract_strided_slice %93 {offsets = [0, 0], sizes = [1, 1024], strides = [1, 1]} : vector<16x2048xf32> to vector<1x1024xf32>
      %c0_62 = arith.constant 0 : index
      %c0_63 = arith.constant 0 : index
      %95 = vector.load %arg10[%c0_62, %c0_63] : memref<2x16384xf32, #tpu.memory_space<vmem>>, vector<1x1024xf32>
      tpu.vector_store %arg10[%c0_62, %c0_63], %94 {strides = array<i32>} : memref<2x16384xf32, #tpu.memory_space<vmem>>, vector<1x1024xf32>,
      %96 = vector.extract_strided_slice %93 {offsets = [1, 0], sizes = [1, 1024], strides = [1, 1]} : vector<16x2048xf32> to vector<1x1024xf32>
      %c0_64 = arith.constant 0 : index
      %c1024 = arith.constant 1024 : index
      %97 = vector.load %arg10[%c0_64, %c1024] : memref<2x16384xf32, #tpu.memory_space<vmem>>, vector<1x1024xf32>
      tpu.vector_store %arg10[%c0_64, %c1024], %96 {strides = array<i32>} : memref<2x16384xf32, #tpu.memory_space<vmem>>, vector<1x1024xf32>,
      %98 = vector.extract_strided_slice %93 {offsets = [2, 0], sizes = [1, 1024], strides = [1, 1]} : vector<16x2048xf32> to vector<1x1024xf32>
      %c0_65 = arith.constant 0 : index
      %c2048 = arith.constant 2048 : index
      %99 = vector.load %arg10[%c0_65, %c2048] : memref<2x16384xf32, #tpu.memory_space<vmem>>, vector<1x1024xf32>
      tpu.vector_store %arg10[%c0_65, %c2048], %98 {strides = array<i32>} : memref<2x16384xf32, #tpu.memory_space<vmem>>, vector<1x1024xf32>,
      %100 = vector.extract_strided_slice %93 {offsets = [3, 0], sizes = [1, 1024], strides = [1, 1]} : vector<16x2048xf32> to vector<1x1024xf32>
      %c0_66 = arith.constant 0 : index
      %c3072 = arith.constant 3072 : index
      %101 = vector.load %arg10[%c0_66, %c3072] : memref<2x16384xf32, #tpu.memory_space<vmem>>, vector<1x1024xf32>
      tpu.vector_store %arg10[%c0_66, %c3072], %100 {strides = array<i32>} : memref<2x16384xf32, #tpu.memory_space<vmem>>, vector<1x1024xf32>,
      %102 = vector.extract_strided_slice %93 {offsets = [4, 0], sizes = [1, 1024], strides = [1, 1]} : vector<16x2048xf32> to vector<1x1024xf32>
      %c0_67 = arith.constant 0 : index
      %c4096 = arith.constant 4096 : index
      %103 = vector.load %arg10[%c0_67, %c4096] : memref<2x16384xf32, #tpu.memory_space<vmem>>, vector<1x1024xf32>
      tpu.vector_store %arg10[%c0_67, %c4096], %102 {strides = array<i32>} : memref<2x16384xf32, #tpu.memory_space<vmem>>, vector<1x1024xf32>,
      %104 = vector.extract_strided_slice %93 {offsets = [5, 0], sizes = [1, 1024], strides = [1, 1]} : vector<16x2048xf32> to vector<1x1024xf32>
      %c0_68 = arith.constant 0 : index
      %c5120 = arith.constant 5120 : index
      %105 = vector.load %arg10[%c0_68, %c5120] : memref<2x16384xf32, #tpu.memory_space<vmem>>, vector<1x1024xf32>
      tpu.vector_store %arg10[%c0_68, %c5120], %104 {strides = array<i32>} : memref<2x16384xf32, #tpu.memory_space<vmem>>, vector<1x1024xf32>,
      %106 = vector.extract_strided_slice %93 {offsets = [6, 0], sizes = [1, 1024], strides = [1, 1]} : vector<16x2048xf32> to vector<1x1024xf32>
      %c0_69 = arith.constant 0 : index
      %c6144 = arith.constant 6144 : index
      %107 = vector.load %arg10[%c0_69, %c6144] : memref<2x16384xf32, #tpu.memory_space<vmem>>, vector<1x1024xf32>
      tpu.vector_store %arg10[%c0_69, %c6144], %106 {strides = array<i32>} : memref<2x16384xf32, #tpu.memory_space<vmem>>, vector<1x1024xf32>,
      %108 = vector.extract_strided_slice %93 {offsets = [7, 0], sizes = [1, 1024], strides = [1, 1]} : vector<16x2048xf32> to vector<1x1024xf32>
      %c0_70 = arith.constant 0 : index
      %c7168 = arith.constant 7168 : index
      %109 = vector.load %arg10[%c0_70, %c7168] : memref<2x16384xf32, #tpu.memory_space<vmem>>, vector<1x1024xf32>
      tpu.vector_store %arg10[%c0_70, %c7168], %108 {strides = array<i32>} : memref<2x16384xf32, #tpu.memory_space<vmem>>, vector<1x1024xf32>,
      %110 = vector.extract_strided_slice %93 {offsets = [8, 0], sizes = [1, 1024], strides = [1, 1]} : vector<16x2048xf32> to vector<1x1024xf32>
      %c0_71 = arith.constant 0 : index
      %c8192 = arith.constant 8192 : index
      %111 = vector.load %arg10[%c0_71, %c8192] : memref<2x16384xf32, #tpu.memory_space<vmem>>, vector<1x1024xf32>
      tpu.vector_store %arg10[%c0_71, %c8192], %110 {strides = array<i32>} : memref<2x16384xf32, #tpu.memory_space<vmem>>, vector<1x1024xf32>,
      %112 = vector.extract_strided_slice %93 {offsets = [9, 0], sizes = [1, 1024], strides = [1, 1]} : vector<16x2048xf32> to vector<1x1024xf32>
      %c0_72 = arith.constant 0 : index
      %c9216 = arith.constant 9216 : index
      %113 = vector.load %arg10[%c0_72, %c9216] : memref<2x16384xf32, #tpu.memory_space<vmem>>, vector<1x1024xf32>
      tpu.vector_store %arg10[%c0_72, %c9216], %112 {strides = array<i32>} : memref<2x16384xf32, #tpu.memory_space<vmem>>, vector<1x1024xf32>,
      %114 = vector.extract_strided_slice %93 {offsets = [10, 0], sizes = [1, 1024], strides = [1, 1]} : vector<16x2048xf32> to vector<1x1024xf32>
      %c0_73 = arith.constant 0 : index
      %c10240 = arith.constant 10240 : index
      %115 = vector.load %arg10[%c0_73, %c10240] : memref<2x16384xf32, #tpu.memory_space<vmem>>, vector<1x1024xf32>
      tpu.vector_store %arg10[%c0_73, %c10240], %114 {strides = array<i32>} : memref<2x16384xf32, #tpu.memory_space<vmem>>, vector<1x1024xf32>,
      %116 = vector.extract_strided_slice %93 {offsets = [11, 0], sizes = [1, 1024], strides = [1, 1]} : vector<16x2048xf32> to vector<1x1024xf32>
      %c0_74 = arith.constant 0 : index
      %c11264 = arith.constant 11264 : index
      %117 = vector.load %arg10[%c0_74, %c11264] : memref<2x16384xf32, #tpu.memory_space<vmem>>, vector<1x1024xf32>
      tpu.vector_store %arg10[%c0_74, %c11264], %116 {strides = array<i32>} : memref<2x16384xf32, #tpu.memory_space<vmem>>, vector<1x1024xf32>,
      %118 = vector.extract_strided_slice %93 {offsets = [12, 0], sizes = [1, 1024], strides = [1, 1]} : vector<16x2048xf32> to vector<1x1024xf32>
      %c0_75 = arith.constant 0 : index
      %c12288 = arith.constant 12288 : index
      %119 = vector.load %arg10[%c0_75, %c12288] : memref<2x16384xf32, #tpu.memory_space<vmem>>, vector<1x1024xf32>
      tpu.vector_store %arg10[%c0_75, %c12288], %118 {strides = array<i32>} : memref<2x16384xf32, #tpu.memory_space<vmem>>, vector<1x1024xf32>,
      %120 = vector.extract_strided_slice %93 {offsets = [13, 0], sizes = [1, 1024], strides = [1, 1]} : vector<16x2048xf32> to vector<1x1024xf32>
      %c0_76 = arith.constant 0 : index
      %c13312 = arith.constant 13312 : index
      %121 = vector.load %arg10[%c0_76, %c13312] : memref<2x16384xf32, #tpu.memory_space<vmem>>, vector<1x1024xf32>
      tpu.vector_store %arg10[%c0_76, %c13312], %120 {strides = array<i32>} : memref<2x16384xf32, #tpu.memory_space<vmem>>, vector<1x1024xf32>,
      %122 = vector.extract_strided_slice %93 {offsets = [14, 0], sizes = [1, 1024], strides = [1, 1]} : vector<16x2048xf32> to vector<1x1024xf32>
      %c0_77 = arith.constant 0 : index
      %c14336 = arith.constant 14336 : index
      %123 = vector.load %arg10[%c0_77, %c14336] : memref<2x16384xf32, #tpu.memory_space<vmem>>, vector<1x1024xf32>
      tpu.vector_store %arg10[%c0_77, %c14336], %122 {strides = array<i32>} : memref<2x16384xf32, #tpu.memory_space<vmem>>, vector<1x1024xf32>,
      %124 = vector.extract_strided_slice %93 {offsets = [15, 0], sizes = [1, 1024], strides = [1, 1]} : vector<16x2048xf32> to vector<1x1024xf32>
      %c0_78 = arith.constant 0 : index
      %c15360 = arith.constant 15360 : index
      %125 = vector.load %arg10[%c0_78, %c15360] : memref<2x16384xf32, #tpu.memory_space<vmem>>, vector<1x1024xf32>
      tpu.vector_store %arg10[%c0_78, %c15360], %124 {strides = array<i32>} : memref<2x16384xf32, #tpu.memory_space<vmem>>, vector<1x1024xf32>,
      %126 = vector.extract_strided_slice %93 {offsets = [0, 1024], sizes = [1, 1024], strides = [1, 1]} : vector<16x2048xf32> to vector<1x1024xf32>
      %c1_79 = arith.constant 1 : index
      %c0_80 = arith.constant 0 : index
      %127 = vector.load %arg10[%c1_79, %c0_80] : memref<2x16384xf32, #tpu.memory_space<vmem>>, vector<1x1024xf32>
      tpu.vector_store %arg10[%c1_79, %c0_80], %126 {strides = array<i32>} : memref<2x16384xf32, #tpu.memory_space<vmem>>, vector<1x1024xf32>,
      %128 = vector.extract_strided_slice %93 {offsets = [1, 1024], sizes = [1, 1024], strides = [1, 1]} : vector<16x2048xf32> to vector<1x1024xf32>
      %c1_81 = arith.constant 1 : index
      %c1024_82 = arith.constant 1024 : index
      %129 = vector.load %arg10[%c1_81, %c1024_82] : memref<2x16384xf32, #tpu.memory_space<vmem>>, vector<1x1024xf32>
      tpu.vector_store %arg10[%c1_81, %c1024_82], %128 {strides = array<i32>} : memref<2x16384xf32, #tpu.memory_space<vmem>>, vector<1x1024xf32>,
      %130 = vector.extract_strided_slice %93 {offsets = [2, 1024], sizes = [1, 1024], strides = [1, 1]} : vector<16x2048xf32> to vector<1x1024xf32>
      %c1_83 = arith.constant 1 : index
      %c2048_84 = arith.constant 2048 : index
      %131 = vector.load %arg10[%c1_83, %c2048_84] : memref<2x16384xf32, #tpu.memory_space<vmem>>, vector<1x1024xf32>
      tpu.vector_store %arg10[%c1_83, %c2048_84], %130 {strides = array<i32>} : memref<2x16384xf32, #tpu.memory_space<vmem>>, vector<1x1024xf32>,
      %132 = vector.extract_strided_slice %93 {offsets = [3, 1024], sizes = [1, 1024], strides = [1, 1]} : vector<16x2048xf32> to vector<1x1024xf32>
      %c1_85 = arith.constant 1 : index
      %c3072_86 = arith.constant 3072 : index
      %133 = vector.load %arg10[%c1_85, %c3072_86] : memref<2x16384xf32, #tpu.memory_space<vmem>>, vector<1x1024xf32>
      tpu.vector_store %arg10[%c1_85, %c3072_86], %132 {strides = array<i32>} : memref<2x16384xf32, #tpu.memory_space<vmem>>, vector<1x1024xf32>,
      %134 = vector.extract_strided_slice %93 {offsets = [4, 1024], sizes = [1, 1024], strides = [1, 1]} : vector<16x2048xf32> to vector<1x1024xf32>
      %c1_87 = arith.constant 1 : index
      %c4096_88 = arith.constant 4096 : index
      %135 = vector.load %arg10[%c1_87, %c4096_88] : memref<2x16384xf32, #tpu.memory_space<vmem>>, vector<1x1024xf32>
      tpu.vector_store %arg10[%c1_87, %c4096_88], %134 {strides = array<i32>} : memref<2x16384xf32, #tpu.memory_space<vmem>>, vector<1x1024xf32>,
      %136 = vector.extract_strided_slice %93 {offsets = [5, 1024], sizes = [1, 1024], strides = [1, 1]} : vector<16x2048xf32> to vector<1x1024xf32>
      %c1_89 = arith.constant 1 : index
      %c5120_90 = arith.constant 5120 : index
      %137 = vector.load %arg10[%c1_89, %c5120_90] : memref<2x16384xf32, #tpu.memory_space<vmem>>, vector<1x1024xf32>
      tpu.vector_store %arg10[%c1_89, %c5120_90], %136 {strides = array<i32>} : memref<2x16384xf32, #tpu.memory_space<vmem>>, vector<1x1024xf32>,
      %138 = vector.extract_strided_slice %93 {offsets = [6, 1024], sizes = [1, 1024], strides = [1, 1]} : vector<16x2048xf32> to vector<1x1024xf32>
      %c1_91 = arith.constant 1 : index
      %c6144_92 = arith.constant 6144 : index
      %139 = vector.load %arg10[%c1_91, %c6144_92] : memref<2x16384xf32, #tpu.memory_space<vmem>>, vector<1x1024xf32>
      tpu.vector_store %arg10[%c1_91, %c6144_92], %138 {strides = array<i32>} : memref<2x16384xf32, #tpu.memory_space<vmem>>, vector<1x1024xf32>,
      %140 = vector.extract_strided_slice %93 {offsets = [7, 1024], sizes = [1, 1024], strides = [1, 1]} : vector<16x2048xf32> to vector<1x1024xf32>
      %c1_93 = arith.constant 1 : index
      %c7168_94 = arith.constant 7168 : index
      %141 = vector.load %arg10[%c1_93, %c7168_94] : memref<2x16384xf32, #tpu.memory_space<vmem>>, vector<1x1024xf32>
      tpu.vector_store %arg10[%c1_93, %c7168_94], %140 {strides = array<i32>} : memref<2x16384xf32, #tpu.memory_space<vmem>>, vector<1x1024xf32>,
      %142 = vector.extract_strided_slice %93 {offsets = [8, 1024], sizes = [1, 1024], strides = [1, 1]} : vector<16x2048xf32> to vector<1x1024xf32>
      %c1_95 = arith.constant 1 : index
      %c8192_96 = arith.constant 8192 : index
      %143 = vector.load %arg10[%c1_95, %c8192_96] : memref<2x16384xf32, #tpu.memory_space<vmem>>, vector<1x1024xf32>
      tpu.vector_store %arg10[%c1_95, %c8192_96], %142 {strides = array<i32>} : memref<2x16384xf32, #tpu.memory_space<vmem>>, vector<1x1024xf32>,
      %144 = vector.extract_strided_slice %93 {offsets = [9, 1024], sizes = [1, 1024], strides = [1, 1]} : vector<16x2048xf32> to vector<1x1024xf32>
      %c1_97 = arith.constant 1 : index
      %c9216_98 = arith.constant 9216 : index
      %145 = vector.load %arg10[%c1_97, %c9216_98] : memref<2x16384xf32, #tpu.memory_space<vmem>>, vector<1x1024xf32>
      tpu.vector_store %arg10[%c1_97, %c9216_98], %144 {strides = array<i32>} : memref<2x16384xf32, #tpu.memory_space<vmem>>, vector<1x1024xf32>,
      %146 = vector.extract_strided_slice %93 {offsets = [10, 1024], sizes = [1, 1024], strides = [1, 1]} : vector<16x2048xf32> to vector<1x1024xf32>
      %c1_99 = arith.constant 1 : index
      %c10240_100 = arith.constant 10240 : index
      %147 = vector.load %arg10[%c1_99, %c10240_100] : memref<2x16384xf32, #tpu.memory_space<vmem>>, vector<1x1024xf32>
      tpu.vector_store %arg10[%c1_99, %c10240_100], %146 {strides = array<i32>} : memref<2x16384xf32, #tpu.memory_space<vmem>>, vector<1x1024xf32>,
      %148 = vector.extract_strided_slice %93 {offsets = [11, 1024], sizes = [1, 1024], strides = [1, 1]} : vector<16x2048xf32> to vector<1x1024xf32>
      %c1_101 = arith.constant 1 : index
      %c11264_102 = arith.constant 11264 : index
      %149 = vector.load %arg10[%c1_101, %c11264_102] : memref<2x16384xf32, #tpu.memory_space<vmem>>, vector<1x1024xf32>
      tpu.vector_store %arg10[%c1_101, %c11264_102], %148 {strides = array<i32>} : memref<2x16384xf32, #tpu.memory_space<vmem>>, vector<1x1024xf32>,
      %150 = vector.extract_strided_slice %93 {offsets = [12, 1024], sizes = [1, 1024], strides = [1, 1]} : vector<16x2048xf32> to vector<1x1024xf32>
      %c1_103 = arith.constant 1 : index
      %c12288_104 = arith.constant 12288 : index
      %151 = vector.load %arg10[%c1_103, %c12288_104] : memref<2x16384xf32, #tpu.memory_space<vmem>>, vector<1x1024xf32>
      tpu.vector_store %arg10[%c1_103, %c12288_104], %150 {strides = array<i32>} : memref<2x16384xf32, #tpu.memory_space<vmem>>, vector<1x1024xf32>,
      %152 = vector.extract_strided_slice %93 {offsets = [13, 1024], sizes = [1, 1024], strides = [1, 1]} : vector<16x2048xf32> to vector<1x1024xf32>
      %c1_105 = arith.constant 1 : index
      %c13312_106 = arith.constant 13312 : index
      %153 = vector.load %arg10[%c1_105, %c13312_106] : memref<2x16384xf32, #tpu.memory_space<vmem>>, vector<1x1024xf32>
      tpu.vector_store %arg10[%c1_105, %c13312_106], %152 {strides = array<i32>} : memref<2x16384xf32, #tpu.memory_space<vmem>>, vector<1x1024xf32>,
      %154 = vector.extract_strided_slice %93 {offsets = [14, 1024], sizes = [1, 1024], strides = [1, 1]} : vector<16x2048xf32> to vector<1x1024xf32>
      %c1_107 = arith.constant 1 : index
      %c14336_108 = arith.constant 14336 : index
      %155 = vector.load %arg10[%c1_107, %c14336_108] : memref<2x16384xf32, #tpu.memory_space<vmem>>, vector<1x1024xf32>
      tpu.vector_store %arg10[%c1_107, %c14336_108], %154 {strides = array<i32>} : memref<2x16384xf32, #tpu.memory_space<vmem>>, vector<1x1024xf32>,
      %156 = vector.extract_strided_slice %93 {offsets = [15, 1024], sizes = [1, 1024], strides = [1, 1]} : vector<16x2048xf32> to vector<1x1024xf32>
      %c1_109 = arith.constant 1 : index
      %c15360_110 = arith.constant 15360 : index
      %157 = vector.load %arg10[%c1_109, %c15360_110] : memref<2x16384xf32, #tpu.memory_space<vmem>>, vector<1x1024xf32>
      tpu.vector_store %arg10[%c1_109, %c15360_110], %156 {strides = array<i32>} : memref<2x16384xf32, #tpu.memory_space<vmem>>, vector<1x1024xf32>,
    } else {
    }
    %c8192_i32 = arith.constant 8192 : i32
    %3 = arith.muli %arg0, %c8192_i32 : i32
    %4 = tpu.assume_multiple %3, 8192 : i32
    %c0 = arith.constant 0 : index
    %5 = arith.index_cast %4 : i32 to index
    %6 = vector.load %arg10[%c0, %5] : memref<2x16384xf32, #tpu.memory_space<vmem>>, vector<2x8192xf32>
    %c0_1 = arith.constant 0 : index
    %c0_2 = arith.constant 0 : index
    %7 = vector.load %arg11[%c0_1, %c0_2] : memref<2x32xf32, #tpu.memory_space<vmem>>, vector<2x32xf32>
    %c0_3 = arith.constant 0 : index
    %c0_4 = arith.constant 0 : index
    %8 = vector.load %arg4[%c0_3, %c0_4] : memref<32x8192xf32, #tpu.memory_space<vmem>>, vector<32x8192xf32>
    %cst = arith.constant dense<0.000000e+00> : vector<2x32xf32>
    %9 = tpu.matmul %6, %8, %cst {dimension_numbers = #tpu.dot_dimension_numbers<[1], [1], [0], [0], [0, 0, 1, 0], [], []>} : vector<2x8192xf32>, vector<32x8192xf32>, vector<2x32xf32> -> vector<2x32xf32>
    %10 = arith.addf %7, %9 : vector<2x32xf32>
    %c0_5 = arith.constant 0 : index
    %c0_6 = arith.constant 0 : index
    %11 = vector.load %arg11[%c0_5, %c0_6] : memref<2x32xf32, #tpu.memory_space<vmem>>, vector<2x32xf32>
    tpu.vector_store %arg11[%c0_5, %c0_6], %10 {strides = array<i32>} : memref<2x32xf32, #tpu.memory_space<vmem>>, vector<2x32xf32>,
    %c0_7 = arith.constant 0 : index
    %c0_8 = arith.constant 0 : index
    %12 = vector.load %arg12[%c0_7, %c0_8] : memref<2x32xf32, #tpu.memory_space<vmem>>, vector<2x32xf32>
    %c0_9 = arith.constant 0 : index
    %c0_10 = arith.constant 0 : index
    %13 = vector.load %arg5[%c0_9, %c0_10] : memref<32x8192xf32, #tpu.memory_space<vmem>>, vector<32x8192xf32>
    %cst_11 = arith.constant dense<0.000000e+00> : vector<2x32xf32>
    %14 = tpu.matmul %6, %13, %cst_11 {dimension_numbers = #tpu.dot_dimension_numbers<[1], [1], [0], [0], [0, 0, 1, 0], [], []>} : vector<2x8192xf32>, vector<32x8192xf32>, vector<2x32xf32> -> vector<2x32xf32>
    %15 = arith.addf %12, %14 : vector<2x32xf32>
    %c0_12 = arith.constant 0 : index
    %c0_13 = arith.constant 0 : index
    %16 = vector.load %arg12[%c0_12, %c0_13] : memref<2x32xf32, #tpu.memory_space<vmem>>, vector<2x32xf32>
    tpu.vector_store %arg12[%c0_12, %c0_13], %15 {strides = array<i32>} : memref<2x32xf32, #tpu.memory_space<vmem>>, vector<2x32xf32>,
    %c1_i32 = arith.constant 1 : i32
    %17 = arith.cmpi eq, %arg0, %c1_i32 : i32
    %18 = arith.extui %17 : i1 to i32
    %c0_i32_14 = arith.constant 0 : i32
    %19 = arith.cmpi ne, %18, %c0_i32_14 : i32
    scf.if %19 {
      %c0_15 = arith.constant 0 : index
      %c0_16 = arith.constant 0 : index
      %20 = vector.load %arg11[%c0_15, %c0_16] : memref<2x32xf32, #tpu.memory_space<vmem>>, vector<2x32xf32>
      %c0_17 = arith.constant 0 : index
      %c0_18 = arith.constant 0 : index
      %21 = vector.load %arg6[%c0_17, %c0_18] : memref<1x32xf32, #tpu.memory_space<vmem>>, vector<1x32xf32>
      %22 = vector.broadcast %21 : vector<1x32xf32> to vector<2x32xf32>
      %23 = arith.addf %20, %22 : vector<2x32xf32>
      %c0_19 = arith.constant 0 : index
      %c0_20 = arith.constant 0 : index
      %24 = vector.load %arg8[%c0_19, %c0_20] : memref<2x32xf32, #tpu.memory_space<vmem>>, vector<2x32xf32>
      tpu.vector_store %arg8[%c0_19, %c0_20], %23 {strides = array<i32>} : memref<2x32xf32, #tpu.memory_space<vmem>>, vector<2x32xf32>,
      %c0_21 = arith.constant 0 : index
      %c0_22 = arith.constant 0 : index
      %25 = vector.load %arg12[%c0_21, %c0_22] : memref<2x32xf32, #tpu.memory_space<vmem>>, vector<2x32xf32>
      %c0_23 = arith.constant 0 : index
      %c0_24 = arith.constant 0 : index
      %26 = vector.load %arg7[%c0_23, %c0_24] : memref<1x32xf32, #tpu.memory_space<vmem>>, vector<1x32xf32>
      %27 = vector.broadcast %26 : vector<1x32xf32> to vector<2x32xf32>
      %28 = arith.addf %25, %27 : vector<2x32xf32>
      %c0_25 = arith.constant 0 : index
      %c0_26 = arith.constant 0 : index
      %29 = vector.load %arg9[%c0_25, %c0_26] : memref<2x32xf32, #tpu.memory_space<vmem>>, vector<2x32xf32>
      tpu.vector_store %arg9[%c0_25, %c0_26], %28 {strides = array<i32>} : memref<2x32xf32, #tpu.memory_space<vmem>>, vector<2x32xf32>,
    } else {
    }
    return
  }
  func.func @transform_0(%arg0: i32) -> (i32, i32) {
    %c0_i32 = arith.constant 0 : i32
    %c0_i32_0 = arith.constant 0 : i32
    %c0_i32_1 = arith.constant 0 : i32
    return %c0_i32, %c0_i32_0 : i32, i32
  }
  func.func @transform_1(%arg0: i32) -> (i32, i32, i32) {
    %c0_i32 = arith.constant 0 : i32
    %c0_i32_0 = arith.constant 0 : i32
    %c0_i32_1 = arith.constant 0 : i32
    %c0_i32_2 = arith.constant 0 : i32
    return %c0_i32, %c0_i32_0, %c0_i32_1 : i32, i32, i32
  }
  func.func @transform_2(%arg0: i32) -> (i32, i32) {
    %c0_i32 = arith.constant 0 : i32
    %c0_i32_0 = arith.constant 0 : i32
    %c0_i32_1 = arith.constant 0 : i32
    return %c0_i32, %c0_i32_0 : i32, i32
  }
  func.func @transform_3(%arg0: i32) -> (i32, i32) {
    %c0_i32 = arith.constant 0 : i32
    %c0_i32_0 = arith.constant 0 : i32
    return %c0_i32, %arg0 : i32, i32
  }
  func.func @transform_4(%arg0: i32) -> (i32, i32) {
    %c0_i32 = arith.constant 0 : i32
    %c0_i32_0 = arith.constant 0 : i32
    return %c0_i32, %arg0 : i32, i32
  }
  func.func @transform_5(%arg0: i32) -> (i32, i32) {
    %c0_i32 = arith.constant 0 : i32
    %c0_i32_0 = arith.constant 0 : i32
    %c0_i32_1 = arith.constant 0 : i32
    return %c0_i32, %c0_i32_0 : i32, i32
  }
  func.func @transform_6(%arg0: i32) -> (i32, i32) {
    %c0_i32 = arith.constant 0 : i32
    %c0_i32_0 = arith.constant 0 : i32
    %c0_i32_1 = arith.constant 0 : i32
    return %c0_i32, %c0_i32_0 : i32, i32
  }
  func.func @transform_7(%arg0: i32) -> (i32, i32) {
    %c0_i32 = arith.constant 0 : i32
    %c0_i32_0 = arith.constant 0 : i32
    %c0_i32_1 = arith.constant 0 : i32
    return %c0_i32, %c0_i32_0 : i32, i32
  }
  func.func @transform_8(%arg0: i32) -> (i32, i32) {
    %c0_i32 = arith.constant 0 : i32
    %c0_i32_0 = arith.constant 0 : i32
    %c0_i32_1 = arith.constant 0 : i32
    return %c0_i32, %c0_i32_0 : i32, i32
  }
}

</mosaic_0001>

<llo_original>
// kernel: encoder_forward.1
$region0: #{encoder_forward.1}
  #allocation0 [shape = 'u32[]', space=smem, size = 0x4, offset = 0x4, fixed_abs, tag = 'smem constant byte address 0x4 - core index']
  #allocation1 [shape = 'u32[144,128]{1,0:T(1,128)}', space=vmem, size = 0x12000, scoped, tag = 'internal scratch']
  #allocation2 [shape = 'f32[2,16384]{1,0:T(2,128)}', space=vmem, size = 0x20000, scoped, tag = 'scratch operand']
  #allocation3 [shape = 'f32[2,32]{1,0:T(2,128)}', space=vmem, size = 0x400, scoped, tag = 'scratch operand']
  #allocation4 [shape = 'f32[2,32]{1,0:T(2,128)}', space=vmem, size = 0x400, scoped, tag = 'scratch operand']
  %s0 = inlined_call_operand.vmem [shape: f32[9,2048], index: 0, kind: input, shape index: {}]
  %s1 = inlined_call_operand.vmem [shape: f32[9,16,1], index: 1, kind: input, shape index: {}]
  %s2 = inlined_call_operand.vmem [shape: f32[16,1], index: 2, kind: input, shape index: {}]
  %s3 = inlined_call_operand.hbm [shape: f32[32,16384], index: 3, kind: input, shape index: {}]
  %s4 = inlined_call_operand.hbm [shape: f32[32,16384], index: 4, kind: input, shape index: {}]
  %s5 = inlined_call_operand.hbm [shape: f32[1,32], index: 5, kind: input, shape index: {}]
  %s6 = inlined_call_operand.hbm [shape: f32[1,32], index: 6, kind: input, shape index: {}]
  %s7 = inlined_call_operand.hbm [shape: f32[2,32], index: 7, kind: output, shape index: {0}]
  %s8 = inlined_call_operand.hbm [shape: f32[2,32], index: 8, kind: output, shape index: {1}]
  %9 = xla_tuple %s7, %s8
  %s10 = sld [smem:[#allocation0]]
  $region93: #{encoder_forward.1} parent=0
    _
  %s12 = ssub.s32 1, %s10
  %s13 = scalar_select 0, %s12, %s10
  $region1: #{encoder_forward.1} parent=0
    #allocation5 [shape = 'u8[2097152]{0}', space=vmem, size = 0x200000, scoped, tag = 'input window, operand 3']
    #allocation6 [shape = 's32[2]{0}', space=sflag, size = 0x8, scoped, tag = 'scoped memory for encoder_forward.1']
    #allocation7 [shape = 's32[2]{0}', space=sflag, size = 0x8, scoped, tag = 'scoped memory for encoder_forward.1']
    #allocation8 [shape = 'u8[2097152]{0}', space=vmem, size = 0x200000, scoped, tag = 'input window, operand 4']
    #allocation9 [shape = 's32[2]{0}', space=sflag, size = 0x8, scoped, tag = 'scoped memory for encoder_forward.1']
    #allocation10 [shape = 'u8[512]{0}', space=vmem, size = 0x400, scoped, tag = 'input window, operand 5, single buffered']
    #allocation11 [shape = 'u8[512]{0}', space=vmem, size = 0x400, scoped, tag = 'input window, operand 6, single buffered']
    #allocation12 [shape = 's32[1]{0}', space=sflag, size = 0x4, scoped, tag = 'scoped memory for encoder_forward.1']
    #allocation13 [shape = 'u8[1024]{0}', space=vmem, size = 0x400, scoped, tag = 'output window, operand 0, single buffered']
    #allocation14 [shape = 'u8[1024]{0}', space=vmem, size = 0x400, scoped, tag = 'output window, operand 1, single buffered']
    #allocation15 [shape = 's32[1]{0}', space=sflag, size = 0x4, scoped, tag = 'scoped memory for encoder_forward.1']
    %14 = vsyncpa [#allocation6], 0
    %s15 = scalar_lea.sflag [#allocation6], 1
    %16 = vsyncpa %s15, 0
    %17 = vsyncpa [#allocation9], 0
    %s18 = scalar_lea.sflag [#allocation9], 1
    %19 = vsyncpa %s18, 0
    %20 = vsyncpa [#allocation12], 0
    %21 = vsyncpa [#allocation7], 0
    %22 = vsyncpa [#allocation15], 0
    loop: start=0, step=1, limit=4
    $region2: #{encoder_forward.1} parent=1 // loop_pre_header
      _
    $region3: #{encoder_forward.1} parent=1 // loop_header
      %s24 = sphi 0, %s28
      %p25 = scmp.ge.s32.totalorder %s24, 4
      %s32 = sphi 0, %s32
      %s34 = sphi 0, %s32
      %s35 = sphi 0, %s34
      %s49 = sphi 0, %s35
      %s53 = sphi 0, %s53
      %s55 = sphi 0, %s53
      %s56 = sphi 0, %s55
      %s70 = sphi 0, %s56
      %s74 = sphi 0, %s74
      %s76 = sphi 0, %s74
      %s77 = sphi 0, %s76
      %s91 = sphi 0, %s77
      %s97 = sphi 0, %s99
      %s100 = sphi 0, %s97
      %s101 = sphi 0, %s100
      %s117 = sphi 0, %s101
      %s123 = sphi 0, %s125
      %s126 = sphi 0, %s123
      %s127 = sphi 0, %s126
      %s143 = sphi 0, %s127
      %s147 = sphi 0, %s147
      %s149 = sphi 0, %s147
      %s150 = sphi 0, %s149
      %s164 = sphi 0, %s150
      %s168 = sphi 0, %s168
      %s170 = sphi 0, %s168
      %s171 = sphi 0, %s170
      %s185 = sphi 0, %s171
      %s189 = sphi 0, %s189
      %s191 = sphi 0, %s189
      %s192 = sphi 0, %s191
      %s206 = sphi 0, %s192
      %s210 = sphi 0, %s210
      %s212 = sphi 0, %s210
      %s213 = sphi 0, %s212
      %s227 = sphi 0, %s213
    $region4: #{encoder_forward.1} parent=1 // loop_header_branch
      %27 = sbr.rel (%p25) target = $region8
    $region5: #{encoder_forward.1} parent=1 // loop_body
      %s29 = ssub.s32 %s24, 1
      %s30 = ssub.s32 %s24, 2
      %s31 = sadd.s32 %s24, 1
      %s33 = sadd.s32 %s32, 1
      %p36 = scmp.eq.s32.totalorder %s24, 1
      %p37 = scmp.ne.s32.totalorder %s32, %s34
      %p38 = scmp.eq.s32.totalorder %s24, 0
      %p39 = por %p37, %p38
      %p40 = scmp.ne.s32.totalorder %s32, %s34
      %p41 = scmp.eq.s32.totalorder %s29, 1
      %p42 = por %p40, %p41
      %p43 = scmp.ne.s32.totalorder %s34, %s35
      %p44 = scmp.eq.s32.totalorder %s29, 0
      %p45 = por %p43, %p44
      %p46 = scmp.ne.s32.totalorder %s34, %s35
      %p47 = scmp.eq.s32.totalorder %s30, 1
      %p48 = por %p46, %p47
      %p50 = scmp.ne.s32.totalorder %s35, %s49
      %p51 = scmp.eq.s32.totalorder %s30, 0
      %p52 = por %p50, %p51
      %s54 = sadd.s32 %s53, 1
      %p57 = scmp.eq.s32.totalorder %s24, 1
      %p58 = scmp.ne.s32.totalorder %s53, %s55
      %p59 = scmp.eq.s32.totalorder %s24, 0
      %p60 = por %p58, %p59
      %p61 = scmp.ne.s32.totalorder %s53, %s55
      %p62 = scmp.eq.s32.totalorder %s29, 1
      %p63 = por %p61, %p62
      %p64 = scmp.ne.s32.totalorder %s55, %s56
      %p65 = scmp.eq.s32.totalorder %s29, 0
      %p66 = por %p64, %p65
      %p67 = scmp.ne.s32.totalorder %s55, %s56
      %p68 = scmp.eq.s32.totalorder %s30, 1
      %p69 = por %p67, %p68
      %p71 = scmp.ne.s32.totalorder %s56, %s70
      %p72 = scmp.eq.s32.totalorder %s30, 0
      %p73 = por %p71, %p72
      %s75 = sadd.s32 %s74, 1
      %p78 = scmp.eq.s32.totalorder %s24, 1
      %p79 = scmp.ne.s32.totalorder %s74, %s76
      %p80 = scmp.eq.s32.totalorder %s24, 0
      %p81 = por %p79, %p80
      %p82 = scmp.ne.s32.totalorder %s74, %s76
      %p83 = scmp.eq.s32.totalorder %s29, 1
      %p84 = por %p82, %p83
      %p85 = scmp.ne.s32.totalorder %s76, %s77
      %p86 = scmp.eq.s32.totalorder %s29, 0
      %p87 = por %p85, %p86
      %p88 = scmp.ne.s32.totalorder %s76, %s77
      %p89 = scmp.eq.s32.totalorder %s30, 1
      %p90 = por %p88, %p89
      %p92 = scmp.ne.s32.totalorder %s77, %s91
      %p93 = scmp.eq.s32.totalorder %s30, 0
      %p94 = por %p92, %p93
      %s95 = ssub.s32 %s24, %s31
      %p96 = scmp.eq.s32.totalorder %s95, 0
      %s98 = sadd.s32 %s97, 1
      %s99 = scalar_select %p96, %s97, %s98
      %p102 = pneg %p96
      %p103 = scmp.eq.s32.totalorder %s24, 1
      %p104 = por %p102, %p103
      %p105 = scmp.ne.s32.totalorder %s97, %s100
      %p106 = scmp.eq.s32.totalorder %s24, 0
      %p107 = por %p105, %p106
      %p108 = scmp.ne.s32.totalorder %s97, %s100
      %p109 = scmp.eq.s32.totalorder %s29, 1
      %p110 = por %p108, %p109
      %p111 = scmp.ne.s32.totalorder %s100, %s101
      %p112 = scmp.eq.s32.totalorder %s29, 0
      %p113 = por %p111, %p112
      %p114 = scmp.ne.s32.totalorder %s100, %s101
      %p115 = scmp.eq.s32.totalorder %s30, 1
      %p116 = por %p114, %p115
      %p118 = scmp.ne.s32.totalorder %s101, %s117
      %p119 = scmp.eq.s32.totalorder %s30, 0
      %p120 = por %p118, %p119
      %s121 = ssub.s32 %s24, %s31
      %p122 = scmp.eq.s32.totalorder %s121, 0
      %s124 = sadd.s32 %s123, 1
      %s125 = scalar_select %p122, %s123, %s124
      %p128 = pneg %p122
      %p129 = scmp.eq.s32.totalorder %s24, 1
      %p130 = por %p128, %p129
      %p131 = scmp.ne.s32.totalorder %s123, %s126
      %p132 = scmp.eq.s32.totalorder %s24, 0
      %p133 = por %p131, %p132
      %p134 = scmp.ne.s32.totalorder %s123, %s126
      %p135 = scmp.eq.s32.totalorder %s29, 1
      %p136 = por %p134, %p135
      %p137 = scmp.ne.s32.totalorder %s126, %s127
      %p138 = scmp.eq.s32.totalorder %s29, 0
      %p139 = por %p137, %p138
      %p140 = scmp.ne.s32.totalorder %s126, %s127
      %p141 = scmp.eq.s32.totalorder %s30, 1
      %p142 = por %p140, %p141
      %p144 = scmp.ne.s32.totalorder %s127, %s143
      %p145 = scmp.eq.s32.totalorder %s30, 0
      %p146 = por %p144, %p145
      %s148 = sadd.s32 %s147, 1
      %p151 = scmp.eq.s32.totalorder %s24, 1
      %p152 = scmp.ne.s32.totalorder %s147, %s149
      %p153 = scmp.eq.s32.totalorder %s24, 0
      %p154 = por %p152, %p153
      %p155 = scmp.ne.s32.totalorder %s147, %s149
      %p156 = scmp.eq.s32.totalorder %s29, 1
      %p157 = por %p155, %p156
      %p158 = scmp.ne.s32.totalorder %s149, %s150
      %p159 = scmp.eq.s32.totalorder %s29, 0
      %p160 = por %p158, %p159
      %p161 = scmp.ne.s32.totalorder %s149, %s150
      %p162 = scmp.eq.s32.totalorder %s30, 1
      %p163 = por %p161, %p162
      %p165 = scmp.ne.s32.totalorder %s150, %s164
      %p166 = scmp.eq.s32.totalorder %s30, 0
      %p167 = por %p165, %p166
      %s169 = sadd.s32 %s168, 1
      %p172 = scmp.eq.s32.totalorder %s24, 1
      %p173 = scmp.ne.s32.totalorder %s168, %s170
      %p174 = scmp.eq.s32.totalorder %s24, 0
      %p175 = por %p173, %p174
      %p176 = scmp.ne.s32.totalorder %s168, %s170
      %p177 = scmp.eq.s32.totalorder %s29, 1
      %p178 = por %p176, %p177
      %p179 = scmp.ne.s32.totalorder %s170, %s171
      %p180 = scmp.eq.s32.totalorder %s29, 0
      %p181 = por %p179, %p180
      %p182 = scmp.ne.s32.totalorder %s170, %s171
      %p183 = scmp.eq.s32.totalorder %s30, 1
      %p184 = por %p182, %p183
      %p186 = scmp.ne.s32.totalorder %s171, %s185
      %p187 = scmp.eq.s32.totalorder %s30, 0
      %p188 = por %p186, %p187
      %s190 = sadd.s32 %s189, 1
      %p193 = scmp.eq.s32.totalorder %s24, 1
      %p194 = scmp.ne.s32.totalorder %s189, %s191
      %p195 = scmp.eq.s32.totalorder %s24, 0
      %p196 = por %p194, %p195
      %p197 = scmp.ne.s32.totalorder %s189, %s191
      %p198 = scmp.eq.s32.totalorder %s29, 1
      %p199 = por %p197, %p198
      %p200 = scmp.ne.s32.totalorder %s191, %s192
      %p201 = scmp.eq.s32.totalorder %s29, 0
      %p202 = por %p200, %p201
      %p203 = scmp.ne.s32.totalorder %s191, %s192
      %p204 = scmp.eq.s32.totalorder %s30, 1
      %p205 = por %p203, %p204
      %p207 = scmp.ne.s32.totalorder %s192, %s206
      %p208 = scmp.eq.s32.totalorder %s30, 0
      %p209 = por %p207, %p208
      %s211 = sadd.s32 %s210, 1
      %p214 = scmp.eq.s32.totalorder %s24, 1
      %p215 = scmp.ne.s32.totalorder %s210, %s212
      %p216 = scmp.eq.s32.totalorder %s24, 0
      %p217 = por %p215, %p216
      %p218 = scmp.ne.s32.totalorder %s210, %s212
      %p219 = scmp.eq.s32.totalorder %s29, 1
      %p220 = por %p218, %p219
      %p221 = scmp.ne.s32.totalorder %s212, %s213
      %p222 = scmp.eq.s32.totalorder %s29, 0
      %p223 = por %p221, %p222
      %p224 = scmp.ne.s32.totalorder %s212, %s213
      %p225 = scmp.eq.s32.totalorder %s30, 1
      %p226 = por %p224, %p225
      %p228 = scmp.ne.s32.totalorder %s213, %s227
      %p229 = scmp.eq.s32.totalorder %s30, 0
      %p230 = por %p228, %p229
      %p231 = scmp.le.s32.totalorder 1, %s24
      %p232 = scmp.lt.s32.totalorder %s24, 3
      %p233 = pnand %p231, %p232
      %p234 = pneg %p233
      // Predicated region
      $region9: #{encoder_forward.1} parent=5 // pred_check
        _
      $region10: #{encoder_forward.1} parent=5 // pred_check_branch
        %236 = sbr.rel (%p233) target = $region12
      $region11: #{encoder_forward.1} parent=5 // pred_region
        %s237 = ssub.s32 %s24, 1
        // Predicated region
        $region13: #{encoder_forward.1} parent=11 // pred_check
          %p238 = pneg %p45
        $region14: #{encoder_forward.1} parent=11 // pred_check_branch
          %240 = sbr.rel (%p238) target = $region16
        $region15: #{encoder_forward.1} parent=11 // pred_region
          _
        $region16: #{encoder_forward.1} parent=11 // pred_fallthru
          _
        // Predicated region
        $region17: #{encoder_forward.1} parent=11 // pred_check
          %p241 = pneg %p66
        $region18: #{encoder_forward.1} parent=11 // pred_check_branch
          %243 = sbr.rel (%p241) target = $region20
        $region19: #{encoder_forward.1} parent=11 // pred_region
          _
        $region20: #{encoder_forward.1} parent=11 // pred_fallthru
          _
        // Predicated region
        $region21: #{encoder_forward.1} parent=11 // pred_check
          %p244 = pneg %p87
        $region22: #{encoder_forward.1} parent=11 // pred_check_branch
          %246 = sbr.rel (%p244) target = $region24
        $region23: #{encoder_forward.1} parent=11 // pred_region
          _
        $region24: #{encoder_forward.1} parent=11 // pred_fallthru
          _
        // Predicated region
        $region25: #{encoder_forward.1} parent=11 // pred_check
          %p247 = pneg %p160
        $region26: #{encoder_forward.1} parent=11 // pred_check_branch
          %249 = sbr.rel (%p247) target = $region28
        $region27: #{encoder_forward.1} parent=11 // pred_region
          %s251 = ssub.s32 16, 16
          %252 = vsyncadd [#allocation9], %s251
          %s254 = sshll.u32 [#allocation10], 4
          %s255 = int_to_ptr.vmem [resolvable:$true] %s254
          %257 = dma.hbm_to_vmem [thread:$0]  %s5, 16, %s255, [#allocation9]
        $region28: #{encoder_forward.1} parent=11 // pred_fallthru
          _
        // Predicated region
        $region29: #{encoder_forward.1} parent=11 // pred_check
          %p258 = pneg %p181
        $region30: #{encoder_forward.1} parent=11 // pred_check_branch
          %260 = sbr.rel (%p258) target = $region32
        $region31: #{encoder_forward.1} parent=11 // pred_region
          %s262 = ssub.s32 16, 16
          %263 = vsyncadd [#allocation12], %s262
          %s265 = sshll.u32 [#allocation11], 4
          %s266 = int_to_ptr.vmem [resolvable:$true] %s265
          %268 = dma.hbm_to_vmem [thread:$0]  %s6, 16, %s266, [#allocation12]
        $region32: #{encoder_forward.1} parent=11 // pred_fallthru
          _
      $region12: #{encoder_forward.1} parent=5 // pred_fallthru
        _
      %p269 = scmp.lt.s32.totalorder %s24, 2
      // Predicated region
      $region33: #{encoder_forward.1} parent=5 // pred_check
        %p270 = pneg %p269
      $region34: #{encoder_forward.1} parent=5 // pred_check_branch
        %272 = sbr.rel (%p270) target = $region36
      $region35: #{encoder_forward.1} parent=5 // pred_region
        // Predicated region
        $region37: #{encoder_forward.1} parent=35 // pred_check
          %p273 = pneg %p107
        $region38: #{encoder_forward.1} parent=35 // pred_check_branch
          %275 = sbr.rel (%p273) target = $region40
        $region39: #{encoder_forward.1} parent=35 // pred_region
          %s276 = sand.u32 %s97, 1
          %s277 = scalar_lea.sflag [#allocation6], %s276
          %s278 = sand.u32 %s97, 1
          %s279 = smul.addr %s278, 2048
          %s280 = scalar_lea.vmem [#allocation5], %s279
          %s281 = smul.u32 64, %s24
          %s283 = ssub.s32 32768, 32768
          %284 = vsyncadd %s277, %s283
          %s285 = smul.addr %s281, 128
          %s286 = scalar_lea.hbm %s3, %s285
          %s287 = sshll.u32 %s280, 4
          %s288 = int_to_ptr.vmem [resolvable:$true] %s287
          %293 = dma.hbm_to_vmem [thread:$0]  %s286, 32768, %s288, %s277, 16384, 8192, 512
        $region40: #{encoder_forward.1} parent=35 // pred_fallthru
          _
        // Predicated region
        $region41: #{encoder_forward.1} parent=35 // pred_check
          %p294 = pneg %p133
        $region42: #{encoder_forward.1} parent=35 // pred_check_branch
          %296 = sbr.rel (%p294) target = $region44
        $region43: #{encoder_forward.1} parent=35 // pred_region
          %s297 = sand.u32 %s24, 1
          %s298 = scalar_lea.sflag [#allocation9], %s297
          %s299 = sand.u32 %s123, 1
          %s300 = smul.addr %s299, 2048
          %s301 = scalar_lea.vmem [#allocation8], %s300
          %s302 = smul.u32 64, %s24
          %s304 = ssub.s32 32768, 32768
          %305 = vsyncadd %s298, %s304
          %s306 = smul.addr %s302, 128
          %s307 = scalar_lea.hbm %s4, %s306
          %s308 = sshll.u32 %s301, 4
          %s309 = int_to_ptr.vmem [resolvable:$true] %s308
          %314 = dma.hbm_to_vmem [thread:$0]  %s307, 32768, %s309, %s298, 16384, 8192, 512
        $region44: #{encoder_forward.1} parent=35 // pred_fallthru
          _
      $region36: #{encoder_forward.1} parent=5 // pred_fallthru
        _
      %p315 = scmp.le.s32.totalorder 1, %s24
      %p316 = scmp.lt.s32.totalorder %s24, 3
      %p317 = pnand %p315, %p316
      %p318 = pneg %p317
      // Predicated region
      $region45: #{encoder_forward.1} parent=5 // pred_check
        _
      $region46: #{encoder_forward.1} parent=5 // pred_check_branch
        %320 = sbr.rel (%p317) target = $region48
      $region47: #{encoder_forward.1} parent=5 // pred_region
        %s321 = ssub.s32 %s24, 1
        %s322 = sand.u32 %s100, 1
        %s323 = scalar_lea.sflag [#allocation6], %s322
        %s324 = sand.u32 %s100, 1
        %s325 = smul.addr %s324, 2048
        %s326 = scalar_lea.vmem [#allocation5], %s325
        // Predicated region
        $region49: #{encoder_forward.1} parent=47 // pred_check
          %p327 = pneg %p113
        $region50: #{encoder_forward.1} parent=47 // pred_check_branch
          %329 = sbr.rel (%p327) target = $region52
        $region51: #{encoder_forward.1} parent=47 // pred_region
          %330 = dma.done %s323, 32768
        $region52: #{encoder_forward.1} parent=47 // pred_fallthru
          _
        %s331 = sand.u32 %s29, 1
        %s332 = scalar_lea.sflag [#allocation9], %s331
        %s333 = sand.u32 %s126, 1
        %s334 = smul.addr %s333, 2048
        %s335 = scalar_lea.vmem [#allocation8], %s334
        // Predicated region
        $region53: #{encoder_forward.1} parent=47 // pred_check
          %p336 = pneg %p139
        $region54: #{encoder_forward.1} parent=47 // pred_check_branch
          %338 = sbr.rel (%p336) target = $region56
        $region55: #{encoder_forward.1} parent=47 // pred_region
          %339 = dma.done %s332, 32768
        $region56: #{encoder_forward.1} parent=47 // pred_fallthru
          _
        // Predicated region
        $region57: #{encoder_forward.1} parent=47 // pred_check
          %p340 = pneg %p160
        $region58: #{encoder_forward.1} parent=47 // pred_check_branch
          %342 = sbr.rel (%p340) target = $region60
        $region59: #{encoder_forward.1} parent=47 // pred_region
          %343 = dma.done [#allocation9], 16
        $region60: #{encoder_forward.1} parent=47 // pred_fallthru
          _
        // Predicated region
        $region61: #{encoder_forward.1} parent=47 // pred_check
          %p344 = pneg %p181
        $region62: #{encoder_forward.1} parent=47 // pred_check_branch
          %346 = sbr.rel (%p344) target = $region64
        $region63: #{encoder_forward.1} parent=47 // pred_region
          %347 = dma.done [#allocation12], 16
        $region64: #{encoder_forward.1} parent=47 // pred_fallthru
          _
        %p348 = pneg %p45
        %p349 = pneg %p42
        %p350 = pneg %p66
        %p351 = pneg %p63
        %p352 = pneg %p87
        %p353 = pneg %p84
        %s354 = sand.u32 %s100, 1
        %s355 = scalar_lea.sflag [#allocation6], %s354
        %s356 = sand.u32 %s100, 1
        %s357 = smul.addr %s356, 2048
        %s358 = scalar_lea.vmem [#allocation5], %s357
        %p359 = pneg %p113
        %p360 = pneg %p110
        %s361 = sand.u32 %s29, 1
        %s362 = scalar_lea.sflag [#allocation9], %s361
        %s363 = sand.u32 %s126, 1
        %s364 = smul.addr %s363, 2048
        %s365 = scalar_lea.vmem [#allocation8], %s364
        %p366 = pneg %p139
        %p367 = pneg %p136
        %p368 = pneg %p160
        %p369 = pneg %p157
        %p370 = pneg %p181
        %p371 = pneg %p178
        %p372 = pneg %p202
        %p373 = pneg %p199
        %p374 = pneg %p223
        %p375 = pneg %p220
        %s376 = smul.u32 64, %s29
        %s377 = smul.u32 64, %s29
        %p378 = scmp.eq.s32.totalorder %s29, 0
        // Predicated region
        $region65: #{encoder_forward.1} parent=47 // pred_check
          %p379 = pneg %p378
        $region66: #{encoder_forward.1} parent=47 // pred_check_branch
          %381 = sbr.rel (%p379) target = $region68
        $region67: #{encoder_forward.1} parent=47 // pred_region
          %vm382 = vcmask 254976
          %383 = vst.msk [vmem:[#allocation3] sm:$0x3] %vm382, 0.0
          %384 = vst.msk [vmem:[#allocation4] sm:$0x3] %vm382, 0.0
          %v385 = vld [vmem:[%s1] sm:$0xff]
          %v386 = vld [vmem:[%s1 + $0x8] sm:$0xff]
          %v387 = vld [vmem:[%s0] ss:$8 sm:$0xf]
          %v388 = vld [vmem:[%s0] ss:$8 sm:$0xf0]
          %v389 = vor.u32 %v387, %v388
          %s390 = scalar_lea.vmem %s0, 64
          %v391 = vld [vmem:[%s390] ss:$8 sm:$0xf]
          %v392 = vld [vmem:[%s390] ss:$8 sm:$0xf0]
          %v393 = vor.u32 %v391, %v392
          %395 = vset.pattern.permute.xlu0 0
          %396 = vperm.xlu0 %395, %v385
          %v397 = vpop.permute.xlu0 %396
          %400 = vset.pattern.permute.xlu0 0
          %401 = vperm.xlu0 %400, %v386
          %v402 = vpop.permute.xlu0 %401
          %v406 = vlaneseq
          %v407 = vshrl.u32 %v406, 7
          %v408 = vsub.s32 0, %v407
          %v409 = vrot.slane %v389, %v408
          %v410 = vlaneseq
          %v411 = vshrl.u32 %v410, 7
          %v412 = vsub.s32 1, %v411
          %v413 = vrot.slane %v389, %v412
          %v414 = vlaneseq
          %v415 = vshrl.u32 %v414, 7
          %v416 = vsub.s32 2, %v415
          %v417 = vrot.slane %v389, %v416
          %v418 = vlaneseq
          %v419 = vshrl.u32 %v418, 7
          %v420 = vsub.s32 3, %v419
          %v421 = vrot.slane %v389, %v420
          %v422 = vlaneseq
          %v423 = vshrl.u32 %v422, 7
          %v424 = vsub.s32 4, %v423
          %v425 = vrot.slane %v389, %v424
          %v426 = vlaneseq
          %v427 = vshrl.u32 %v426, 7
          %v428 = vsub.s32 5, %v427
          %v429 = vrot.slane %v389, %v428
          %v430 = vlaneseq
          %v431 = vshrl.u32 %v430, 7
          %v432 = vsub.s32 6, %v431
          %v433 = vrot.slane %v389, %v432
          %v434 = vlaneseq
          %v435 = vshrl.u32 %v434, 7
          %v436 = vsub.s32 7, %v435
          %v437 = vrot.slane %v389, %v436
          %v438 = vlaneseq
          %v439 = vshrl.u32 %v438, 7
          %v440 = vsub.s32 0, %v439
          %v441 = vrot.slane %v393, %v440
          %v442 = vlaneseq
          %v443 = vshrl.u32 %v442, 7
          %v444 = vsub.s32 1, %v443
          %v445 = vrot.slane %v393, %v444
          %v446 = vlaneseq
          %v447 = vshrl.u32 %v446, 7
          %v448 = vsub.s32 2, %v447
          %v449 = vrot.slane %v393, %v448
          %v450 = vlaneseq
          %v451 = vshrl.u32 %v450, 7
          %v452 = vsub.s32 3, %v451
          %v453 = vrot.slane %v393, %v452
          %v454 = vlaneseq
          %v455 = vshrl.u32 %v454, 7
          %v456 = vsub.s32 4, %v455
          %v457 = vrot.slane %v393, %v456
          %v458 = vlaneseq
          %v459 = vshrl.u32 %v458, 7
          %v460 = vsub.s32 5, %v459
          %v461 = vrot.slane %v393, %v460
          %v462 = vlaneseq
          %v463 = vshrl.u32 %v462, 7
          %v464 = vsub.s32 6, %v463
          %v465 = vrot.slane %v393, %v464
          %v466 = vlaneseq
          %v467 = vshrl.u32 %v466, 7
          %v468 = vsub.s32 7, %v467
          %v469 = vrot.slane %v393, %v468
          %v486 = vmul.f32 %v397, %v409
          %v487 = vmul.f32 %v397, %v413
          %v488 = vmul.f32 %v397, %v417
          %v489 = vmul.f32 %v397, %v421
          %v490 = vmul.f32 %v397, %v425
          %v491 = vmul.f32 %v397, %v429
          %v492 = vmul.f32 %v397, %v433
          %v493 = vmul.f32 %v397, %v437
          %v494 = vmul.f32 %v397, %v441
          %v495 = vmul.f32 %v397, %v445
          %v496 = vmul.f32 %v397, %v449
          %v497 = vmul.f32 %v397, %v453
          %v498 = vmul.f32 %v397, %v457
          %v499 = vmul.f32 %v397, %v461
          %v500 = vmul.f32 %v397, %v465
          %v501 = vmul.f32 %v397, %v469
          %v502 = vmul.f32 %v402, %v409
          %v503 = vmul.f32 %v402, %v413
          %v504 = vmul.f32 %v402, %v417
          %v505 = vmul.f32 %v402, %v421
          %v506 = vmul.f32 %v402, %v425
          %v507 = vmul.f32 %v402, %v429
          %v508 = vmul.f32 %v402, %v433
          %v509 = vmul.f32 %v402, %v437
          %v510 = vmul.f32 %v402, %v441
          %v511 = vmul.f32 %v402, %v445
          %v512 = vmul.f32 %v402, %v449
          %v513 = vmul.f32 %v402, %v453
          %v514 = vmul.f32 %v402, %v457
          %v515 = vmul.f32 %v402, %v461
          %v516 = vmul.f32 %v402, %v465
          %v517 = vmul.f32 %v402, %v469
          %s518 = scalar_lea.vmem %s1, 16
          %v519 = vld [vmem:[%s518] sm:$0xff]
          %v520 = vld [vmem:[%s518 + $0x8] sm:$0xff]
          %s521 = scalar_lea.vmem %s0, 1
          %v522 = vld [vmem:[%s521] ss:$8 sm:$0xf]
          %v523 = vld [vmem:[%s521] ss:$8 sm:$0xf0]
          %v524 = vor.u32 %v522, %v523
          %s525 = scalar_lea.vmem %s0, 65
          %v526 = vld [vmem:[%s525] ss:$8 sm:$0xf]
          %v527 = vld [vmem:[%s525] ss:$8 sm:$0xf0]
          %v528 = vor.u32 %v526, %v527
          %530 = vset.pattern.permute.xlu0 0
          %531 = vperm.xlu0 %530, %v519
          %v532 = vpop.permute.xlu0 %531
          %535 = vset.pattern.permute.xlu0 0
          %536 = vperm.xlu0 %535, %v520
          %v537 = vpop.permute.xlu0 %536
          %v541 = vlaneseq
          %v542 = vshrl.u32 %v541, 7
          %v543 = vsub.s32 0, %v542
          %v544 = vrot.slane %v524, %v543
          %v545 = vlaneseq
          %v546 = vshrl.u32 %v545, 7
          %v547 = vsub.s32 1, %v546
          %v548 = vrot.slane %v524, %v547
          %v549 = vlaneseq
          %v550 = vshrl.u32 %v549, 7
          %v551 = vsub.s32 2, %v550
          %v552 = vrot.slane %v524, %v551
          %v553 = vlaneseq
          %v554 = vshrl.u32 %v553, 7
          %v555 = vsub.s32 3, %v554
          %v556 = vrot.slane %v524, %v555
          %v557 = vlaneseq
          %v558 = vshrl.u32 %v557, 7
          %v559 = vsub.s32 4, %v558
          %v560 = vrot.slane %v524, %v559
          %v561 = vlaneseq
          %v562 = vshrl.u32 %v561, 7
          %v563 = vsub.s32 5, %v562
          %v564 = vrot.slane %v524, %v563
          %v565 = vlaneseq
          %v566 = vshrl.u32 %v565, 7
          %v567 = vsub.s32 6, %v566
          %v568 = vrot.slane %v524, %v567
          %v569 = vlaneseq
          %v570 = vshrl.u32 %v569, 7
          %v571 = vsub.s32 7, %v570
          %v572 = vrot.slane %v524, %v571
          %v573 = vlaneseq
          %v574 = vshrl.u32 %v573, 7
          %v575 = vsub.s32 0, %v574
          %v576 = vrot.slane %v528, %v575
          %v577 = vlaneseq
          %v578 = vshrl.u32 %v577, 7
          %v579 = vsub.s32 1, %v578
          %v580 = vrot.slane %v528, %v579
          %v581 = vlaneseq
          %v582 = vshrl.u32 %v581, 7
          %v583 = vsub.s32 2, %v582
          %v584 = vrot.slane %v528, %v583
          %v585 = vlaneseq
          %v586 = vshrl.u32 %v585, 7
          %v587 = vsub.s32 3, %v586
          %v588 = vrot.slane %v528, %v587
          %v589 = vlaneseq
          %v590 = vshrl.u32 %v589, 7
          %v591 = vsub.s32 4, %v590
          %v592 = vrot.slane %v528, %v591
          %v593 = vlaneseq
          %v594 = vshrl.u32 %v593, 7
          %v595 = vsub.s32 5, %v594
          %v596 = vrot.slane %v528, %v595
          %v597 = vlaneseq
          %v598 = vshrl.u32 %v597, 7
          %v599 = vsub.s32 6, %v598
          %v600 = vrot.slane %v528, %v599
          %v601 = vlaneseq
          %v602 = vshrl.u32 %v601, 7
          %v603 = vsub.s32 7, %v602
          %v604 = vrot.slane %v528, %v603
          %v621 = vmul.f32 %v532, %v544
          %v622 = vmul.f32 %v532, %v548
          %v623 = vmul.f32 %v532, %v552
          %v624 = vmul.f32 %v532, %v556
          %v625 = vmul.f32 %v532, %v560
          %v626 = vmul.f32 %v532, %v564
          %v627 = vmul.f32 %v532, %v568
          %v628 = vmul.f32 %v532, %v572
          %v629 = vmul.f32 %v532, %v576
          %v630 = vmul.f32 %v532, %v580
          %v631 = vmul.f32 %v532, %v584
          %v632 = vmul.f32 %v532, %v588
          %v633 = vmul.f32 %v532, %v592
          %v634 = vmul.f32 %v532, %v596
          %v635 = vmul.f32 %v532, %v600
          %v636 = vmul.f32 %v532, %v604
          %v637 = vmul.f32 %v537, %v544
          %v638 = vmul.f32 %v537, %v548
          %v639 = vmul.f32 %v537, %v552
          %v640 = vmul.f32 %v537, %v556
          %v641 = vmul.f32 %v537, %v560
          %v642 = vmul.f32 %v537, %v564
          %v643 = vmul.f32 %v537, %v568
          %v644 = vmul.f32 %v537, %v572
          %v645 = vmul.f32 %v537, %v576
          %v646 = vmul.f32 %v537, %v580
          %v647 = vmul.f32 %v537, %v584
          %v648 = vmul.f32 %v537, %v588
          %v649 = vmul.f32 %v537, %v592
          %v650 = vmul.f32 %v537, %v596
          %v651 = vmul.f32 %v537, %v600
          %v652 = vmul.f32 %v537, %v604
          %v653 = vadd.f32 %v486, %v621
          %v654 = vadd.f32 %v487, %v622
          %v655 = vadd.f32 %v488, %v623
          %v656 = vadd.f32 %v489, %v624
          %v657 = vadd.f32 %v490, %v625
          %v658 = vadd.f32 %v491, %v626
          %v659 = vadd.f32 %v492, %v627
          %v660 = vadd.f32 %v493, %v628
          %v661 = vadd.f32 %v494, %v629
          %v662 = vadd.f32 %v495, %v630
          %v663 = vadd.f32 %v496, %v631
          %v664 = vadd.f32 %v497, %v632
          %v665 = vadd.f32 %v498, %v633
          %v666 = vadd.f32 %v499, %v634
          %v667 = vadd.f32 %v500, %v635
          %v668 = vadd.f32 %v501, %v636
          %v669 = vadd.f32 %v502, %v637
          %v670 = vadd.f32 %v503, %v638
          %v671 = vadd.f32 %v504, %v639
          %v672 = vadd.f32 %v505, %v640
          %v673 = vadd.f32 %v506, %v641
          %v674 = vadd.f32 %v507, %v642
          %v675 = vadd.f32 %v508, %v643
          %v676 = vadd.f32 %v509, %v644
          %v677 = vadd.f32 %v510, %v645
          %v678 = vadd.f32 %v511, %v646
          %v679 = vadd.f32 %v512, %v647
          %v680 = vadd.f32 %v513, %v648
          %v681 = vadd.f32 %v514, %v649
          %v682 = vadd.f32 %v515, %v650
          %v683 = vadd.f32 %v516, %v651
          %v684 = vadd.f32 %v517, %v652
          %s685 = scalar_lea.vmem %s1, 32
          %v686 = vld [vmem:[%s685] sm:$0xff]
          %v687 = vld [vmem:[%s685 + $0x8] sm:$0xff]
          %s688 = scalar_lea.vmem %s0, 2
          %v689 = vld [vmem:[%s688] ss:$8 sm:$0xf]
          %v690 = vld [vmem:[%s688] ss:$8 sm:$0xf0]
          %v691 = vor.u32 %v689, %v690
          %s692 = scalar_lea.vmem %s0, 66
          %v693 = vld [vmem:[%s692] ss:$8 sm:$0xf]
          %v694 = vld [vmem:[%s692] ss:$8 sm:$0xf0]
          %v695 = vor.u32 %v693, %v694
          %697 = vset.pattern.permute.xlu0 0
          %698 = vperm.xlu0 %697, %v686
          %v699 = vpop.permute.xlu0 %698
          %702 = vset.pattern.permute.xlu0 0
          %703 = vperm.xlu0 %702, %v687
          %v704 = vpop.permute.xlu0 %703
          %v708 = vlaneseq
          %v709 = vshrl.u32 %v708, 7
          %v710 = vsub.s32 0, %v709
          %v711 = vrot.slane %v691, %v710
          %v712 = vlaneseq
          %v713 = vshrl.u32 %v712, 7
          %v714 = vsub.s32 1, %v713
          %v715 = vrot.slane %v691, %v714
          %v716 = vlaneseq
          %v717 = vshrl.u32 %v716, 7
          %v718 = vsub.s32 2, %v717
          %v719 = vrot.slane %v691, %v718
          %v720 = vlaneseq
          %v721 = vshrl.u32 %v720, 7
          %v722 = vsub.s32 3, %v721
          %v723 = vrot.slane %v691, %v722
          %v724 = vlaneseq
          %v725 = vshrl.u32 %v724, 7
          %v726 = vsub.s32 4, %v725
          %v727 = vrot.slane %v691, %v726
          %v728 = vlaneseq
          %v729 = vshrl.u32 %v728, 7
          %v730 = vsub.s32 5, %v729
          %v731 = vrot.slane %v691, %v730
          %v732 = vlaneseq
          %v733 = vshrl.u32 %v732, 7
          %v734 = vsub.s32 6, %v733
          %v735 = vrot.slane %v691, %v734
          %v736 = vlaneseq
          %v737 = vshrl.u32 %v736, 7
          %v738 = vsub.s32 7, %v737
          %v739 = vrot.slane %v691, %v738
          %v740 = vlaneseq
          %v741 = vshrl.u32 %v740, 7
          %v742 = vsub.s32 0, %v741
          %v743 = vrot.slane %v695, %v742
          %v744 = vlaneseq
          %v745 = vshrl.u32 %v744, 7
          %v746 = vsub.s32 1, %v745
          %v747 = vrot.slane %v695, %v746
          %v748 = vlaneseq
          %v749 = vshrl.u32 %v748, 7
          %v750 = vsub.s32 2, %v749
          %v751 = vrot.slane %v695, %v750
          %v752 = vlaneseq
          %v753 = vshrl.u32 %v752, 7
          %v754 = vsub.s32 3, %v753
          %v755 = vrot.slane %v695, %v754
          %v756 = vlaneseq
          %v757 = vshrl.u32 %v756, 7
          %v758 = vsub.s32 4, %v757
          %v759 = vrot.slane %v695, %v758
          %v760 = vlaneseq
          %v761 = vshrl.u32 %v760, 7
          %v762 = vsub.s32 5, %v761
          %v763 = vrot.slane %v695, %v762
          %v764 = vlaneseq
          %v765 = vshrl.u32 %v764, 7
          %v766 = vsub.s32 6, %v765
          %v767 = vrot.slane %v695, %v766
          %v768 = vlaneseq
          %v769 = vshrl.u32 %v768, 7
          %v770 = vsub.s32 7, %v769
          %v771 = vrot.slane %v695, %v770
          %v788 = vmul.f32 %v699, %v711
          %v789 = vmul.f32 %v699, %v715
          %v790 = vmul.f32 %v699, %v719
          %v791 = vmul.f32 %v699, %v723
          %v792 = vmul.f32 %v699, %v727
          %v793 = vmul.f32 %v699, %v731
          %v794 = vmul.f32 %v699, %v735
          %v795 = vmul.f32 %v699, %v739
          %v796 = vmul.f32 %v699, %v743
          %v797 = vmul.f32 %v699, %v747
          %v798 = vmul.f32 %v699, %v751
          %v799 = vmul.f32 %v699, %v755
          %v800 = vmul.f32 %v699, %v759
          %v801 = vmul.f32 %v699, %v763
          %v802 = vmul.f32 %v699, %v767
          %v803 = vmul.f32 %v699, %v771
          %v804 = vmul.f32 %v704, %v711
          %v805 = vmul.f32 %v704, %v715
          %v806 = vmul.f32 %v704, %v719
          %v807 = vmul.f32 %v704, %v723
          %v808 = vmul.f32 %v704, %v727
          %v809 = vmul.f32 %v704, %v731
          %v810 = vmul.f32 %v704, %v735
          %v811 = vmul.f32 %v704, %v739
          %v812 = vmul.f32 %v704, %v743
          %v813 = vmul.f32 %v704, %v747
          %v814 = vmul.f32 %v704, %v751
          %v815 = vmul.f32 %v704, %v755
          %v816 = vmul.f32 %v704, %v759
          %v817 = vmul.f32 %v704, %v763
          %v818 = vmul.f32 %v704, %v767
          %v819 = vmul.f32 %v704, %v771
          %v820 = vadd.f32 %v653, %v788
          %v821 = vadd.f32 %v654, %v789
          %v822 = vadd.f32 %v655, %v790
          %v823 = vadd.f32 %v656, %v791
          %v824 = vadd.f32 %v657, %v792
          %v825 = vadd.f32 %v658, %v793
          %v826 = vadd.f32 %v659, %v794
          %v827 = vadd.f32 %v660, %v795
          %v828 = vadd.f32 %v661, %v796
          %v829 = vadd.f32 %v662, %v797
          %v830 = vadd.f32 %v663, %v798
          %v831 = vadd.f32 %v664, %v799
          %v832 = vadd.f32 %v665, %v800
          %v833 = vadd.f32 %v666, %v801
          %v834 = vadd.f32 %v667, %v802
          %v835 = vadd.f32 %v668, %v803
          %v836 = vadd.f32 %v669, %v804
          %v837 = vadd.f32 %v670, %v805
          %v838 = vadd.f32 %v671, %v806
          %v839 = vadd.f32 %v672, %v807
          %v840 = vadd.f32 %v673, %v808
          %v841 = vadd.f32 %v674, %v809
          %v842 = vadd.f32 %v675, %v810
          %v843 = vadd.f32 %v676, %v811
          %v844 = vadd.f32 %v677, %v812
          %v845 = vadd.f32 %v678, %v813
          %v846 = vadd.f32 %v679, %v814
          %v847 = vadd.f32 %v680, %v815
          %v848 = vadd.f32 %v681, %v816
          %v849 = vadd.f32 %v682, %v817
          %v850 = vadd.f32 %v683, %v818
          %v851 = vadd.f32 %v684, %v819
          %s852 = scalar_lea.vmem %s1, 48
          %v853 = vld [vmem:[%s852] sm:$0xff]
          %v854 = vld [vmem:[%s852 + $0x8] sm:$0xff]
          %s855 = scalar_lea.vmem %s0, 3
          %v856 = vld [vmem:[%s855] ss:$8 sm:$0xf]
          %v857 = vld [vmem:[%s855] ss:$8 sm:$0xf0]
          %v858 = vor.u32 %v856, %v857
          %s859 = scalar_lea.vmem %s0, 67
          %v860 = vld [vmem:[%s859] ss:$8 sm:$0xf]
          %v861 = vld [vmem:[%s859] ss:$8 sm:$0xf0]
          %v862 = vor.u32 %v860, %v861
          %864 = vset.pattern.permute.xlu0 0
          %865 = vperm.xlu0 %864, %v853
          %v866 = vpop.permute.xlu0 %865
          %869 = vset.pattern.permute.xlu0 0
          %870 = vperm.xlu0 %869, %v854
          %v871 = vpop.permute.xlu0 %870
          %v875 = vlaneseq
          %v876 = vshrl.u32 %v875, 7
          %v877 = vsub.s32 0, %v876
          %v878 = vrot.slane %v858, %v877
          %v879 = vlaneseq
          %v880 = vshrl.u32 %v879, 7
          %v881 = vsub.s32 1, %v880
          %v882 = vrot.slane %v858, %v881
          %v883 = vlaneseq
          %v884 = vshrl.u32 %v883, 7
          %v885 = vsub.s32 2, %v884
          %v886 = vrot.slane %v858, %v885
          %v887 = vlaneseq
          %v888 = vshrl.u32 %v887, 7
          %v889 = vsub.s32 3, %v888
          %v890 = vrot.slane %v858, %v889
          %v891 = vlaneseq
          %v892 = vshrl.u32 %v891, 7
          %v893 = vsub.s32 4, %v892
          %v894 = vrot.slane %v858, %v893
          %v895 = vlaneseq
          %v896 = vshrl.u32 %v895, 7
          %v897 = vsub.s32 5, %v896
          %v898 = vrot.slane %v858, %v897
          %v899 = vlaneseq
          %v900 = vshrl.u32 %v899, 7
          %v901 = vsub.s32 6, %v900
          %v902 = vrot.slane %v858, %v901
          %v903 = vlaneseq
          %v904 = vshrl.u32 %v903, 7
          %v905 = vsub.s32 7, %v904
          %v906 = vrot.slane %v858, %v905
          %v907 = vlaneseq
          %v908 = vshrl.u32 %v907, 7
          %v909 = vsub.s32 0, %v908
          %v910 = vrot.slane %v862, %v909
          %v911 = vlaneseq
          %v912 = vshrl.u32 %v911, 7
          %v913 = vsub.s32 1, %v912
          %v914 = vrot.slane %v862, %v913
          %v915 = vlaneseq
          %v916 = vshrl.u32 %v915, 7
          %v917 = vsub.s32 2, %v916
          %v918 = vrot.slane %v862, %v917
          %v919 = vlaneseq
          %v920 = vshrl.u32 %v919, 7
          %v921 = vsub.s32 3, %v920
          %v922 = vrot.slane %v862, %v921
          %v923 = vlaneseq
          %v924 = vshrl.u32 %v923, 7
          %v925 = vsub.s32 4, %v924
          %v926 = vrot.slane %v862, %v925
          %v927 = vlaneseq
          %v928 = vshrl.u32 %v927, 7
          %v929 = vsub.s32 5, %v928
          %v930 = vrot.slane %v862, %v929
          %v931 = vlaneseq
          %v932 = vshrl.u32 %v931, 7
          %v933 = vsub.s32 6, %v932
          %v934 = vrot.slane %v862, %v933
          %v935 = vlaneseq
          %v936 = vshrl.u32 %v935, 7
          %v937 = vsub.s32 7, %v936
          %v938 = vrot.slane %v862, %v937
          %v955 = vmul.f32 %v866, %v878
          %v956 = vmul.f32 %v866, %v882
          %v957 = vmul.f32 %v866, %v886
          %v958 = vmul.f32 %v866, %v890
          %v959 = vmul.f32 %v866, %v894
          %v960 = vmul.f32 %v866, %v898
          %v961 = vmul.f32 %v866, %v902
          %v962 = vmul.f32 %v866, %v906
          %v963 = vmul.f32 %v866, %v910
          %v964 = vmul.f32 %v866, %v914
          %v965 = vmul.f32 %v866, %v918
          %v966 = vmul.f32 %v866, %v922
          %v967 = vmul.f32 %v866, %v926
          %v968 = vmul.f32 %v866, %v930
          %v969 = vmul.f32 %v866, %v934
          %v970 = vmul.f32 %v866, %v938
          %v971 = vmul.f32 %v871, %v878
          %v972 = vmul.f32 %v871, %v882
          %v973 = vmul.f32 %v871, %v886
          %v974 = vmul.f32 %v871, %v890
          %v975 = vmul.f32 %v871, %v894
          %v976 = vmul.f32 %v871, %v898
          %v977 = vmul.f32 %v871, %v902
          %v978 = vmul.f32 %v871, %v906
          %v979 = vmul.f32 %v871, %v910
          %v980 = vmul.f32 %v871, %v914
          %v981 = vmul.f32 %v871, %v918
          %v982 = vmul.f32 %v871, %v922
          %v983 = vmul.f32 %v871, %v926
          %v984 = vmul.f32 %v871, %v930
          %v985 = vmul.f32 %v871, %v934
          %v986 = vmul.f32 %v871, %v938
          %v987 = vadd.f32 %v820, %v955
          %v988 = vadd.f32 %v821, %v956
          %v989 = vadd.f32 %v822, %v957
          %v990 = vadd.f32 %v823, %v958
          %v991 = vadd.f32 %v824, %v959
          %v992 = vadd.f32 %v825, %v960
          %v993 = vadd.f32 %v826, %v961
          %v994 = vadd.f32 %v827, %v962
          %v995 = vadd.f32 %v828, %v963
          %v996 = vadd.f32 %v829, %v964
          %v997 = vadd.f32 %v830, %v965
          %v998 = vadd.f32 %v831, %v966
          %v999 = vadd.f32 %v832, %v967
          %v1000 = vadd.f32 %v833, %v968
          %v1001 = vadd.f32 %v834, %v969
          %v1002 = vadd.f32 %v835, %v970
          %v1003 = vadd.f32 %v836, %v971
          %v1004 = vadd.f32 %v837, %v972
          %v1005 = vadd.f32 %v838, %v973
          %v1006 = vadd.f32 %v839, %v974
          %v1007 = vadd.f32 %v840, %v975
          %v1008 = vadd.f32 %v841, %v976
          %v1009 = vadd.f32 %v842, %v977
          %v1010 = vadd.f32 %v843, %v978
          %v1011 = vadd.f32 %v844, %v979
          %v1012 = vadd.f32 %v845, %v980
          %v1013 = vadd.f32 %v846, %v981
          %v1014 = vadd.f32 %v847, %v982
          %v1015 = vadd.f32 %v848, %v983
          %v1016 = vadd.f32 %v849, %v984
          %v1017 = vadd.f32 %v850, %v985
          %v1018 = vadd.f32 %v851, %v986
          %s1019 = scalar_lea.vmem %s1, 64
          %v1020 = vld [vmem:[%s1019] sm:$0xff]
          %v1021 = vld [vmem:[%s1019 + $0x8] sm:$0xff]
          %s1022 = scalar_lea.vmem %s0, 4
          %v1023 = vld [vmem:[%s1022] ss:$8 sm:$0xf]
          %v1024 = vld [vmem:[%s1022] ss:$8 sm:$0xf0]
          %v1025 = vor.u32 %v1023, %v1024
          %s1026 = scalar_lea.vmem %s0, 68
          %v1027 = vld [vmem:[%s1026] ss:$8 sm:$0xf]
          %v1028 = vld [vmem:[%s1026] ss:$8 sm:$0xf0]
          %v1029 = vor.u32 %v1027, %v1028
          %1031 = vset.pattern.permute.xlu0 0
          %1032 = vperm.xlu0 %1031, %v1020
          %v1033 = vpop.permute.xlu0 %1032
          %1036 = vset.pattern.permute.xlu0 0
          %1037 = vperm.xlu0 %1036, %v1021
          %v1038 = vpop.permute.xlu0 %1037
          %v1042 = vlaneseq
          %v1043 = vshrl.u32 %v1042, 7
          %v1044 = vsub.s32 0, %v1043
          %v1045 = vrot.slane %v1025, %v1044
          %v1046 = vlaneseq
          %v1047 = vshrl.u32 %v1046, 7
          %v1048 = vsub.s32 1, %v1047
          %v1049 = vrot.slane %v1025, %v1048
          %v1050 = vlaneseq
          %v1051 = vshrl.u32 %v1050, 7
          %v1052 = vsub.s32 2, %v1051
          %v1053 = vrot.slane %v1025, %v1052
          %v1054 = vlaneseq
          %v1055 = vshrl.u32 %v1054, 7
          %v1056 = vsub.s32 3, %v1055
          %v1057 = vrot.slane %v1025, %v1056
          %v1058 = vlaneseq
          %v1059 = vshrl.u32 %v1058, 7
          %v1060 = vsub.s32 4, %v1059
          %v1061 = vrot.slane %v1025, %v1060
          %v1062 = vlaneseq
          %v1063 = vshrl.u32 %v1062, 7
          %v1064 = vsub.s32 5, %v1063
          %v1065 = vrot.slane %v1025, %v1064
          %v1066 = vlaneseq
          %v1067 = vshrl.u32 %v1066, 7
          %v1068 = vsub.s32 6, %v1067
          %v1069 = vrot.slane %v1025, %v1068
          %v1070 = vlaneseq
          %v1071 = vshrl.u32 %v1070, 7
          %v1072 = vsub.s32 7, %v1071
          %v1073 = vrot.slane %v1025, %v1072
          %v1074 = vlaneseq
          %v1075 = vshrl.u32 %v1074, 7
          %v1076 = vsub.s32 0, %v1075
          %v1077 = vrot.slane %v1029, %v1076
          %v1078 = vlaneseq
          %v1079 = vshrl.u32 %v1078, 7
          %v1080 = vsub.s32 1, %v1079
          %v1081 = vrot.slane %v1029, %v1080
          %v1082 = vlaneseq
          %v1083 = vshrl.u32 %v1082, 7
          %v1084 = vsub.s32 2, %v1083
          %v1085 = vrot.slane %v1029, %v1084
          %v1086 = vlaneseq
          %v1087 = vshrl.u32 %v1086, 7
          %v1088 = vsub.s32 3, %v1087
          %v1089 = vrot.slane %v1029, %v1088
          %v1090 = vlaneseq
          %v1091 = vshrl.u32 %v1090, 7
          %v1092 = vsub.s32 4, %v1091
          %v1093 = vrot.slane %v1029, %v1092
          %v1094 = vlaneseq
          %v1095 = vshrl.u32 %v1094, 7
          %v1096 = vsub.s32 5, %v1095
          %v1097 = vrot.slane %v1029, %v1096
          %v1098 = vlaneseq
          %v1099 = vshrl.u32 %v1098, 7
          %v1100 = vsub.s32 6, %v1099
          %v1101 = vrot.slane %v1029, %v1100
          %v1102 = vlaneseq
          %v1103 = vshrl.u32 %v1102, 7
          %v1104 = vsub.s32 7, %v1103
          %v1105 = vrot.slane %v1029, %v1104
          %v1122 = vmul.f32 %v1033, %v1045
          %v1123 = vmul.f32 %v1033, %v1049
          %v1124 = vmul.f32 %v1033, %v1053
          %v1125 = vmul.f32 %v1033, %v1057
          %v1126 = vmul.f32 %v1033, %v1061
          %v1127 = vmul.f32 %v1033, %v1065
          %v1128 = vmul.f32 %v1033, %v1069
          %v1129 = vmul.f32 %v1033, %v1073
          %v1130 = vmul.f32 %v1033, %v1077
          %v1131 = vmul.f32 %v1033, %v1081
          %v1132 = vmul.f32 %v1033, %v1085
          %v1133 = vmul.f32 %v1033, %v1089
          %v1134 = vmul.f32 %v1033, %v1093
          %v1135 = vmul.f32 %v1033, %v1097
          %v1136 = vmul.f32 %v1033, %v1101
          %v1137 = vmul.f32 %v1033, %v1105
          %v1138 = vmul.f32 %v1038, %v1045
          %v1139 = vmul.f32 %v1038, %v1049
          %v1140 = vmul.f32 %v1038, %v1053
          %v1141 = vmul.f32 %v1038, %v1057
          %v1142 = vmul.f32 %v1038, %v1061
          %v1143 = vmul.f32 %v1038, %v1065
          %v1144 = vmul.f32 %v1038, %v1069
          %v1145 = vmul.f32 %v1038, %v1073
          %v1146 = vmul.f32 %v1038, %v1077
          %v1147 = vmul.f32 %v1038, %v1081
          %v1148 = vmul.f32 %v1038, %v1085
          %v1149 = vmul.f32 %v1038, %v1089
          %v1150 = vmul.f32 %v1038, %v1093
          %v1151 = vmul.f32 %v1038, %v1097
          %v1152 = vmul.f32 %v1038, %v1101
          %v1153 = vmul.f32 %v1038, %v1105
          %v1154 = vadd.f32 %v987, %v1122
          %v1155 = vadd.f32 %v988, %v1123
          %v1156 = vadd.f32 %v989, %v1124
          %v1157 = vadd.f32 %v990, %v1125
          %v1158 = vadd.f32 %v991, %v1126
          %v1159 = vadd.f32 %v992, %v1127
          %v1160 = vadd.f32 %v993, %v1128
          %v1161 = vadd.f32 %v994, %v1129
          %v1162 = vadd.f32 %v995, %v1130
          %v1163 = vadd.f32 %v996, %v1131
          %v1164 = vadd.f32 %v997, %v1132
          %v1165 = vadd.f32 %v998, %v1133
          %v1166 = vadd.f32 %v999, %v1134
          %v1167 = vadd.f32 %v1000, %v1135
          %v1168 = vadd.f32 %v1001, %v1136
          %v1169 = vadd.f32 %v1002, %v1137
          %v1170 = vadd.f32 %v1003, %v1138
          %v1171 = vadd.f32 %v1004, %v1139
          %v1172 = vadd.f32 %v1005, %v1140
          %v1173 = vadd.f32 %v1006, %v1141
          %v1174 = vadd.f32 %v1007, %v1142
          %v1175 = vadd.f32 %v1008, %v1143
          %v1176 = vadd.f32 %v1009, %v1144
          %v1177 = vadd.f32 %v1010, %v1145
          %v1178 = vadd.f32 %v1011, %v1146
          %v1179 = vadd.f32 %v1012, %v1147
          %v1180 = vadd.f32 %v1013, %v1148
          %v1181 = vadd.f32 %v1014, %v1149
          %v1182 = vadd.f32 %v1015, %v1150
          %v1183 = vadd.f32 %v1016, %v1151
          %v1184 = vadd.f32 %v1017, %v1152
          %v1185 = vadd.f32 %v1018, %v1153
          %s1186 = scalar_lea.vmem %s1, 80
          %v1187 = vld [vmem:[%s1186] sm:$0xff]
          %v1188 = vld [vmem:[%s1186 + $0x8] sm:$0xff]
          %s1189 = scalar_lea.vmem %s0, 5
          %v1190 = vld [vmem:[%s1189] ss:$8 sm:$0xf]
          %v1191 = vld [vmem:[%s1189] ss:$8 sm:$0xf0]
          %v1192 = vor.u32 %v1190, %v1191
          %s1193 = scalar_lea.vmem %s0, 69
          %v1194 = vld [vmem:[%s1193] ss:$8 sm:$0xf]
          %v1195 = vld [vmem:[%s1193] ss:$8 sm:$0xf0]
          %v1196 = vor.u32 %v1194, %v1195
          %1198 = vset.pattern.permute.xlu0 0
          %1199 = vperm.xlu0 %1198, %v1187
          %v1200 = vpop.permute.xlu0 %1199
          %1203 = vset.pattern.permute.xlu0 0
          %1204 = vperm.xlu0 %1203, %v1188
          %v1205 = vpop.permute.xlu0 %1204
          %v1209 = vlaneseq
          %v1210 = vshrl.u32 %v1209, 7
          %v1211 = vsub.s32 0, %v1210
          %v1212 = vrot.slane %v1192, %v1211
          %v1213 = vlaneseq
          %v1214 = vshrl.u32 %v1213, 7
          %v1215 = vsub.s32 1, %v1214
          %v1216 = vrot.slane %v1192, %v1215
          %v1217 = vlaneseq
          %v1218 = vshrl.u32 %v1217, 7
          %v1219 = vsub.s32 2, %v1218
          %v1220 = vrot.slane %v1192, %v1219
          %v1221 = vlaneseq
          %v1222 = vshrl.u32 %v1221, 7
          %v1223 = vsub.s32 3, %v1222
          %v1224 = vrot.slane %v1192, %v1223
          %v1225 = vlaneseq
          %v1226 = vshrl.u32 %v1225, 7
          %v1227 = vsub.s32 4, %v1226
          %v1228 = vrot.slane %v1192, %v1227
          %v1229 = vlaneseq
          %v1230 = vshrl.u32 %v1229, 7
          %v1231 = vsub.s32 5, %v1230
          %v1232 = vrot.slane %v1192, %v1231
          %v1233 = vlaneseq
          %v1234 = vshrl.u32 %v1233, 7
          %v1235 = vsub.s32 6, %v1234
          %v1236 = vrot.slane %v1192, %v1235
          %v1237 = vlaneseq
          %v1238 = vshrl.u32 %v1237, 7
          %v1239 = vsub.s32 7, %v1238
          %v1240 = vrot.slane %v1192, %v1239
          %v1241 = vlaneseq
          %v1242 = vshrl.u32 %v1241, 7
          %v1243 = vsub.s32 0, %v1242
          %v1244 = vrot.slane %v1196, %v1243
          %v1245 = vlaneseq
          %v1246 = vshrl.u32 %v1245, 7
          %v1247 = vsub.s32 1, %v1246
          %v1248 = vrot.slane %v1196, %v1247
          %v1249 = vlaneseq
          %v1250 = vshrl.u32 %v1249, 7
          %v1251 = vsub.s32 2, %v1250
          %v1252 = vrot.slane %v1196, %v1251
          %v1253 = vlaneseq
          %v1254 = vshrl.u32 %v1253, 7
          %v1255 = vsub.s32 3, %v1254
          %v1256 = vrot.slane %v1196, %v1255
          %v1257 = vlaneseq
          %v1258 = vshrl.u32 %v1257, 7
          %v1259 = vsub.s32 4, %v1258
          %v1260 = vrot.slane %v1196, %v1259
          %v1261 = vlaneseq
          %v1262 = vshrl.u32 %v1261, 7
          %v1263 = vsub.s32 5, %v1262
          %v1264 = vrot.slane %v1196, %v1263
          %v1265 = vlaneseq
          %v1266 = vshrl.u32 %v1265, 7
          %v1267 = vsub.s32 6, %v1266
          %v1268 = vrot.slane %v1196, %v1267
          %v1269 = vlaneseq
          %v1270 = vshrl.u32 %v1269, 7
          %v1271 = vsub.s32 7, %v1270
          %v1272 = vrot.slane %v1196, %v1271
          %v1289 = vmul.f32 %v1200, %v1212
          %v1290 = vmul.f32 %v1200, %v1216
          %v1291 = vmul.f32 %v1200, %v1220
          %v1292 = vmul.f32 %v1200, %v1224
          %v1293 = vmul.f32 %v1200, %v1228
          %v1294 = vmul.f32 %v1200, %v1232
          %v1295 = vmul.f32 %v1200, %v1236
          %v1296 = vmul.f32 %v1200, %v1240
          %v1297 = vmul.f32 %v1200, %v1244
          %v1298 = vmul.f32 %v1200, %v1248
          %v1299 = vmul.f32 %v1200, %v1252
          %v1300 = vmul.f32 %v1200, %v1256
          %v1301 = vmul.f32 %v1200, %v1260
          %v1302 = vmul.f32 %v1200, %v1264
          %v1303 = vmul.f32 %v1200, %v1268
          %v1304 = vmul.f32 %v1200, %v1272
          %v1305 = vmul.f32 %v1205, %v1212
          %v1306 = vmul.f32 %v1205, %v1216
          %v1307 = vmul.f32 %v1205, %v1220
          %v1308 = vmul.f32 %v1205, %v1224
          %v1309 = vmul.f32 %v1205, %v1228
          %v1310 = vmul.f32 %v1205, %v1232
          %v1311 = vmul.f32 %v1205, %v1236
          %v1312 = vmul.f32 %v1205, %v1240
          %v1313 = vmul.f32 %v1205, %v1244
          %v1314 = vmul.f32 %v1205, %v1248
          %v1315 = vmul.f32 %v1205, %v1252
          %v1316 = vmul.f32 %v1205, %v1256
          %v1317 = vmul.f32 %v1205, %v1260
          %v1318 = vmul.f32 %v1205, %v1264
          %v1319 = vmul.f32 %v1205, %v1268
          %v1320 = vmul.f32 %v1205, %v1272
          %v1321 = vadd.f32 %v1154, %v1289
          %v1322 = vadd.f32 %v1155, %v1290
          %v1323 = vadd.f32 %v1156, %v1291
          %v1324 = vadd.f32 %v1157, %v1292
          %v1325 = vadd.f32 %v1158, %v1293
          %v1326 = vadd.f32 %v1159, %v1294
          %v1327 = vadd.f32 %v1160, %v1295
          %v1328 = vadd.f32 %v1161, %v1296
          %v1329 = vadd.f32 %v1162, %v1297
          %v1330 = vadd.f32 %v1163, %v1298
          %v1331 = vadd.f32 %v1164, %v1299
          %v1332 = vadd.f32 %v1165, %v1300
          %v1333 = vadd.f32 %v1166, %v1301
          %v1334 = vadd.f32 %v1167, %v1302
          %v1335 = vadd.f32 %v1168, %v1303
          %v1336 = vadd.f32 %v1169, %v1304
          %v1337 = vadd.f32 %v1170, %v1305
          %v1338 = vadd.f32 %v1171, %v1306
          %v1339 = vadd.f32 %v1172, %v1307
          %v1340 = vadd.f32 %v1173, %v1308
          %v1341 = vadd.f32 %v1174, %v1309
          %v1342 = vadd.f32 %v1175, %v1310
          %v1343 = vadd.f32 %v1176, %v1311
          %v1344 = vadd.f32 %v1177, %v1312
          %v1345 = vadd.f32 %v1178, %v1313
          %v1346 = vadd.f32 %v1179, %v1314
          %v1347 = vadd.f32 %v1180, %v1315
          %v1348 = vadd.f32 %v1181, %v1316
          %v1349 = vadd.f32 %v1182, %v1317
          %v1350 = vadd.f32 %v1183, %v1318
          %v1351 = vadd.f32 %v1184, %v1319
          %v1352 = vadd.f32 %v1185, %v1320
          %s1353 = scalar_lea.vmem %s1, 96
          %v1354 = vld [vmem:[%s1353] sm:$0xff]
          %v1355 = vld [vmem:[%s1353 + $0x8] sm:$0xff]
          %s1356 = scalar_lea.vmem %s0, 6
          %v1357 = vld [vmem:[%s1356] ss:$8 sm:$0xf]
          %v1358 = vld [vmem:[%s1356] ss:$8 sm:$0xf0]
          %v1359 = vor.u32 %v1357, %v1358
          %s1360 = scalar_lea.vmem %s0, 70
          %v1361 = vld [vmem:[%s1360] ss:$8 sm:$0xf]
          %v1362 = vld [vmem:[%s1360] ss:$8 sm:$0xf0]
          %v1363 = vor.u32 %v1361, %v1362
          %1365 = vset.pattern.permute.xlu0 0
          %1366 = vperm.xlu0 %1365, %v1354
          %v1367 = vpop.permute.xlu0 %1366
          %1370 = vset.pattern.permute.xlu0 0
          %1371 = vperm.xlu0 %1370, %v1355
          %v1372 = vpop.permute.xlu0 %1371
          %v1376 = vlaneseq
          %v1377 = vshrl.u32 %v1376, 7
          %v1378 = vsub.s32 0, %v1377
          %v1379 = vrot.slane %v1359, %v1378
          %v1380 = vlaneseq
          %v1381 = vshrl.u32 %v1380, 7
          %v1382 = vsub.s32 1, %v1381
          %v1383 = vrot.slane %v1359, %v1382
          %v1384 = vlaneseq
          %v1385 = vshrl.u32 %v1384, 7
          %v1386 = vsub.s32 2, %v1385
          %v1387 = vrot.slane %v1359, %v1386
          %v1388 = vlaneseq
          %v1389 = vshrl.u32 %v1388, 7
          %v1390 = vsub.s32 3, %v1389
          %v1391 = vrot.slane %v1359, %v1390
          %v1392 = vlaneseq
          %v1393 = vshrl.u32 %v1392, 7
          %v1394 = vsub.s32 4, %v1393
          %v1395 = vrot.slane %v1359, %v1394
          %v1396 = vlaneseq
          %v1397 = vshrl.u32 %v1396, 7
          %v1398 = vsub.s32 5, %v1397
          %v1399 = vrot.slane %v1359, %v1398
          %v1400 = vlaneseq
          %v1401 = vshrl.u32 %v1400, 7
          %v1402 = vsub.s32 6, %v1401
          %v1403 = vrot.slane %v1359, %v1402
          %v1404 = vlaneseq
          %v1405 = vshrl.u32 %v1404, 7
          %v1406 = vsub.s32 7, %v1405
          %v1407 = vrot.slane %v1359, %v1406
          %v1408 = vlaneseq
          %v1409 = vshrl.u32 %v1408, 7
          %v1410 = vsub.s32 0, %v1409
          %v1411 = vrot.slane %v1363, %v1410
          %v1412 = vlaneseq
          %v1413 = vshrl.u32 %v1412, 7
          %v1414 = vsub.s32 1, %v1413
          %v1415 = vrot.slane %v1363, %v1414
          %v1416 = vlaneseq
          %v1417 = vshrl.u32 %v1416, 7
          %v1418 = vsub.s32 2, %v1417
          %v1419 = vrot.slane %v1363, %v1418
          %v1420 = vlaneseq
          %v1421 = vshrl.u32 %v1420, 7
          %v1422 = vsub.s32 3, %v1421
          %v1423 = vrot.slane %v1363, %v1422
          %v1424 = vlaneseq
          %v1425 = vshrl.u32 %v1424, 7
          %v1426 = vsub.s32 4, %v1425
          %v1427 = vrot.slane %v1363, %v1426
          %v1428 = vlaneseq
          %v1429 = vshrl.u32 %v1428, 7
          %v1430 = vsub.s32 5, %v1429
          %v1431 = vrot.slane %v1363, %v1430
          %v1432 = vlaneseq
          %v1433 = vshrl.u32 %v1432, 7
          %v1434 = vsub.s32 6, %v1433
          %v1435 = vrot.slane %v1363, %v1434
          %v1436 = vlaneseq
          %v1437 = vshrl.u32 %v1436, 7
          %v1438 = vsub.s32 7, %v1437
          %v1439 = vrot.slane %v1363, %v1438
          %v1456 = vmul.f32 %v1367, %v1379
          %v1457 = vmul.f32 %v1367, %v1383
          %v1458 = vmul.f32 %v1367, %v1387
          %v1459 = vmul.f32 %v1367, %v1391
          %v1460 = vmul.f32 %v1367, %v1395
          %v1461 = vmul.f32 %v1367, %v1399
          %v1462 = vmul.f32 %v1367, %v1403
          %v1463 = vmul.f32 %v1367, %v1407
          %v1464 = vmul.f32 %v1367, %v1411
          %v1465 = vmul.f32 %v1367, %v1415
          %v1466 = vmul.f32 %v1367, %v1419
          %v1467 = vmul.f32 %v1367, %v1423
          %v1468 = vmul.f32 %v1367, %v1427
          %v1469 = vmul.f32 %v1367, %v1431
          %v1470 = vmul.f32 %v1367, %v1435
          %v1471 = vmul.f32 %v1367, %v1439
          %v1472 = vmul.f32 %v1372, %v1379
          %v1473 = vmul.f32 %v1372, %v1383
          %v1474 = vmul.f32 %v1372, %v1387
          %v1475 = vmul.f32 %v1372, %v1391
          %v1476 = vmul.f32 %v1372, %v1395
          %v1477 = vmul.f32 %v1372, %v1399
          %v1478 = vmul.f32 %v1372, %v1403
          %v1479 = vmul.f32 %v1372, %v1407
          %v1480 = vmul.f32 %v1372, %v1411
          %v1481 = vmul.f32 %v1372, %v1415
          %v1482 = vmul.f32 %v1372, %v1419
          %v1483 = vmul.f32 %v1372, %v1423
          %v1484 = vmul.f32 %v1372, %v1427
          %v1485 = vmul.f32 %v1372, %v1431
          %v1486 = vmul.f32 %v1372, %v1435
          %v1487 = vmul.f32 %v1372, %v1439
          %v1488 = vadd.f32 %v1321, %v1456
          %v1489 = vadd.f32 %v1322, %v1457
          %v1490 = vadd.f32 %v1323, %v1458
          %v1491 = vadd.f32 %v1324, %v1459
          %v1492 = vadd.f32 %v1325, %v1460
          %v1493 = vadd.f32 %v1326, %v1461
          %v1494 = vadd.f32 %v1327, %v1462
          %v1495 = vadd.f32 %v1328, %v1463
          %v1496 = vadd.f32 %v1329, %v1464
          %v1497 = vadd.f32 %v1330, %v1465
          %v1498 = vadd.f32 %v1331, %v1466
          %v1499 = vadd.f32 %v1332, %v1467
          %v1500 = vadd.f32 %v1333, %v1468
          %v1501 = vadd.f32 %v1334, %v1469
          %v1502 = vadd.f32 %v1335, %v1470
          %v1503 = vadd.f32 %v1336, %v1471
          %v1504 = vadd.f32 %v1337, %v1472
          %v1505 = vadd.f32 %v1338, %v1473
          %v1506 = vadd.f32 %v1339, %v1474
          %v1507 = vadd.f32 %v1340, %v1475
          %v1508 = vadd.f32 %v1341, %v1476
          %v1509 = vadd.f32 %v1342, %v1477
          %v1510 = vadd.f32 %v1343, %v1478
          %v1511 = vadd.f32 %v1344, %v1479
          %v1512 = vadd.f32 %v1345, %v1480
          %v1513 = vadd.f32 %v1346, %v1481
          %v1514 = vadd.f32 %v1347, %v1482
          %v1515 = vadd.f32 %v1348, %v1483
          %v1516 = vadd.f32 %v1349, %v1484
          %v1517 = vadd.f32 %v1350, %v1485
          %v1518 = vadd.f32 %v1351, %v1486
          %v1519 = vadd.f32 %v1352, %v1487
          %s1520 = scalar_lea.vmem %s1, 112
          %v1521 = vld [vmem:[%s1520] sm:$0xff]
          %v1522 = vld [vmem:[%s1520 + $0x8] sm:$0xff]
          %s1523 = scalar_lea.vmem %s0, 7
          %v1524 = vld [vmem:[%s1523] ss:$8 sm:$0xf]
          %v1525 = vld [vmem:[%s1523] ss:$8 sm:$0xf0]
          %v1526 = vor.u32 %v1524, %v1525
          %s1527 = scalar_lea.vmem %s0, 71
          %v1528 = vld [vmem:[%s1527] ss:$8 sm:$0xf]
          %v1529 = vld [vmem:[%s1527] ss:$8 sm:$0xf0]
          %v1530 = vor.u32 %v1528, %v1529
          %1532 = vset.pattern.permute.xlu0 0
          %1533 = vperm.xlu0 %1532, %v1521
          %v1534 = vpop.permute.xlu0 %1533
          %1537 = vset.pattern.permute.xlu0 0
          %1538 = vperm.xlu0 %1537, %v1522
          %v1539 = vpop.permute.xlu0 %1538
          %v1543 = vlaneseq
          %v1544 = vshrl.u32 %v1543, 7
          %v1545 = vsub.s32 0, %v1544
          %v1546 = vrot.slane %v1526, %v1545
          %v1547 = vlaneseq
          %v1548 = vshrl.u32 %v1547, 7
          %v1549 = vsub.s32 1, %v1548
          %v1550 = vrot.slane %v1526, %v1549
          %v1551 = vlaneseq
          %v1552 = vshrl.u32 %v1551, 7
          %v1553 = vsub.s32 2, %v1552
          %v1554 = vrot.slane %v1526, %v1553
          %v1555 = vlaneseq
          %v1556 = vshrl.u32 %v1555, 7
          %v1557 = vsub.s32 3, %v1556
          %v1558 = vrot.slane %v1526, %v1557
          %v1559 = vlaneseq
          %v1560 = vshrl.u32 %v1559, 7
          %v1561 = vsub.s32 4, %v1560
          %v1562 = vrot.slane %v1526, %v1561
          %v1563 = vlaneseq
          %v1564 = vshrl.u32 %v1563, 7
          %v1565 = vsub.s32 5, %v1564
          %v1566 = vrot.slane %v1526, %v1565
          %v1567 = vlaneseq
          %v1568 = vshrl.u32 %v1567, 7
          %v1569 = vsub.s32 6, %v1568
          %v1570 = vrot.slane %v1526, %v1569
          %v1571 = vlaneseq
          %v1572 = vshrl.u32 %v1571, 7
          %v1573 = vsub.s32 7, %v1572
          %v1574 = vrot.slane %v1526, %v1573
          %v1575 = vlaneseq
          %v1576 = vshrl.u32 %v1575, 7
          %v1577 = vsub.s32 0, %v1576
          %v1578 = vrot.slane %v1530, %v1577
          %v1579 = vlaneseq
          %v1580 = vshrl.u32 %v1579, 7
          %v1581 = vsub.s32 1, %v1580
          %v1582 = vrot.slane %v1530, %v1581
          %v1583 = vlaneseq
          %v1584 = vshrl.u32 %v1583, 7
          %v1585 = vsub.s32 2, %v1584
          %v1586 = vrot.slane %v1530, %v1585
          %v1587 = vlaneseq
          %v1588 = vshrl.u32 %v1587, 7
          %v1589 = vsub.s32 3, %v1588
          %v1590 = vrot.slane %v1530, %v1589
          %v1591 = vlaneseq
          %v1592 = vshrl.u32 %v1591, 7
          %v1593 = vsub.s32 4, %v1592
          %v1594 = vrot.slane %v1530, %v1593
          %v1595 = vlaneseq
          %v1596 = vshrl.u32 %v1595, 7
          %v1597 = vsub.s32 5, %v1596
          %v1598 = vrot.slane %v1530, %v1597
          %v1599 = vlaneseq
          %v1600 = vshrl.u32 %v1599, 7
          %v1601 = vsub.s32 6, %v1600
          %v1602 = vrot.slane %v1530, %v1601
          %v1603 = vlaneseq
          %v1604 = vshrl.u32 %v1603, 7
          %v1605 = vsub.s32 7, %v1604
          %v1606 = vrot.slane %v1530, %v1605
          %v1623 = vmul.f32 %v1534, %v1546
          %v1624 = vmul.f32 %v1534, %v1550
          %v1625 = vmul.f32 %v1534, %v1554
          %v1626 = vmul.f32 %v1534, %v1558
          %v1627 = vmul.f32 %v1534, %v1562
          %v1628 = vmul.f32 %v1534, %v1566
          %v1629 = vmul.f32 %v1534, %v1570
          %v1630 = vmul.f32 %v1534, %v1574
          %v1631 = vmul.f32 %v1534, %v1578
          %v1632 = vmul.f32 %v1534, %v1582
          %v1633 = vmul.f32 %v1534, %v1586
          %v1634 = vmul.f32 %v1534, %v1590
          %v1635 = vmul.f32 %v1534, %v1594
          %v1636 = vmul.f32 %v1534, %v1598
          %v1637 = vmul.f32 %v1534, %v1602
          %v1638 = vmul.f32 %v1534, %v1606
          %v1639 = vmul.f32 %v1539, %v1546
          %v1640 = vmul.f32 %v1539, %v1550
          %v1641 = vmul.f32 %v1539, %v1554
          %v1642 = vmul.f32 %v1539, %v1558
          %v1643 = vmul.f32 %v1539, %v1562
          %v1644 = vmul.f32 %v1539, %v1566
          %v1645 = vmul.f32 %v1539, %v1570
          %v1646 = vmul.f32 %v1539, %v1574
          %v1647 = vmul.f32 %v1539, %v1578
          %v1648 = vmul.f32 %v1539, %v1582
          %v1649 = vmul.f32 %v1539, %v1586
          %v1650 = vmul.f32 %v1539, %v1590
          %v1651 = vmul.f32 %v1539, %v1594
          %v1652 = vmul.f32 %v1539, %v1598
          %v1653 = vmul.f32 %v1539, %v1602
          %v1654 = vmul.f32 %v1539, %v1606
          %v1655 = vadd.f32 %v1488, %v1623
          %v1656 = vadd.f32 %v1489, %v1624
          %v1657 = vadd.f32 %v1490, %v1625
          %v1658 = vadd.f32 %v1491, %v1626
          %v1659 = vadd.f32 %v1492, %v1627
          %v1660 = vadd.f32 %v1493, %v1628
          %v1661 = vadd.f32 %v1494, %v1629
          %v1662 = vadd.f32 %v1495, %v1630
          %v1663 = vadd.f32 %v1496, %v1631
          %v1664 = vadd.f32 %v1497, %v1632
          %v1665 = vadd.f32 %v1498, %v1633
          %v1666 = vadd.f32 %v1499, %v1634
          %v1667 = vadd.f32 %v1500, %v1635
          %v1668 = vadd.f32 %v1501, %v1636
          %v1669 = vadd.f32 %v1502, %v1637
          %v1670 = vadd.f32 %v1503, %v1638
          %v1671 = vadd.f32 %v1504, %v1639
          %v1672 = vadd.f32 %v1505, %v1640
          %v1673 = vadd.f32 %v1506, %v1641
          %v1674 = vadd.f32 %v1507, %v1642
          %v1675 = vadd.f32 %v1508, %v1643
          %v1676 = vadd.f32 %v1509, %v1644
          %v1677 = vadd.f32 %v1510, %v1645
          %v1678 = vadd.f32 %v1511, %v1646
          %v1679 = vadd.f32 %v1512, %v1647
          %v1680 = vadd.f32 %v1513, %v1648
          %v1681 = vadd.f32 %v1514, %v1649
          %v1682 = vadd.f32 %v1515, %v1650
          %v1683 = vadd.f32 %v1516, %v1651
          %v1684 = vadd.f32 %v1517, %v1652
          %v1685 = vadd.f32 %v1518, %v1653
          %v1686 = vadd.f32 %v1519, %v1654
          %s1687 = scalar_lea.vmem %s1, 128
          %v1688 = vld [vmem:[%s1687] sm:$0xff]
          %v1689 = vld [vmem:[%s1687 + $0x8] sm:$0xff]
          %s1690 = scalar_lea.vmem %s0, 128
          %v1691 = vld [vmem:[%s1690] ss:$8 sm:$0xf]
          %v1692 = vld [vmem:[%s1690] ss:$8 sm:$0xf0]
          %v1693 = vor.u32 %v1691, %v1692
          %s1694 = scalar_lea.vmem %s0, 192
          %v1695 = vld [vmem:[%s1694] ss:$8 sm:$0xf]
          %v1696 = vld [vmem:[%s1694] ss:$8 sm:$0xf0]
          %v1697 = vor.u32 %v1695, %v1696
          %1699 = vset.pattern.permute.xlu0 0
          %1700 = vperm.xlu0 %1699, %v1688
          %v1701 = vpop.permute.xlu0 %1700
          %1704 = vset.pattern.permute.xlu0 0
          %1705 = vperm.xlu0 %1704, %v1689
          %v1706 = vpop.permute.xlu0 %1705
          %v1710 = vlaneseq
          %v1711 = vshrl.u32 %v1710, 7
          %v1712 = vsub.s32 0, %v1711
          %v1713 = vrot.slane %v1693, %v1712
          %v1714 = vlaneseq
          %v1715 = vshrl.u32 %v1714, 7
          %v1716 = vsub.s32 1, %v1715
          %v1717 = vrot.slane %v1693, %v1716
          %v1718 = vlaneseq
          %v1719 = vshrl.u32 %v1718, 7
          %v1720 = vsub.s32 2, %v1719
          %v1721 = vrot.slane %v1693, %v1720
          %v1722 = vlaneseq
          %v1723 = vshrl.u32 %v1722, 7
          %v1724 = vsub.s32 3, %v1723
          %v1725 = vrot.slane %v1693, %v1724
          %v1726 = vlaneseq
          %v1727 = vshrl.u32 %v1726, 7
          %v1728 = vsub.s32 4, %v1727
          %v1729 = vrot.slane %v1693, %v1728
          %v1730 = vlaneseq
          %v1731 = vshrl.u32 %v1730, 7
          %v1732 = vsub.s32 5, %v1731
          %v1733 = vrot.slane %v1693, %v1732
          %v1734 = vlaneseq
          %v1735 = vshrl.u32 %v1734, 7
          %v1736 = vsub.s32 6, %v1735
          %v1737 = vrot.slane %v1693, %v1736
          %v1738 = vlaneseq
          %v1739 = vshrl.u32 %v1738, 7
          %v1740 = vsub.s32 7, %v1739
          %v1741 = vrot.slane %v1693, %v1740
          %v1742 = vlaneseq
          %v1743 = vshrl.u32 %v1742, 7
          %v1744 = vsub.s32 0, %v1743
          %v1745 = vrot.slane %v1697, %v1744
          %v1746 = vlaneseq
          %v1747 = vshrl.u32 %v1746, 7
          %v1748 = vsub.s32 1, %v1747
          %v1749 = vrot.slane %v1697, %v1748
          %v1750 = vlaneseq
          %v1751 = vshrl.u32 %v1750, 7
          %v1752 = vsub.s32 2, %v1751
          %v1753 = vrot.slane %v1697, %v1752
          %v1754 = vlaneseq
          %v1755 = vshrl.u32 %v1754, 7
          %v1756 = vsub.s32 3, %v1755
          %v1757 = vrot.slane %v1697, %v1756
          %v1758 = vlaneseq
          %v1759 = vshrl.u32 %v1758, 7
          %v1760 = vsub.s32 4, %v1759
          %v1761 = vrot.slane %v1697, %v1760
          %v1762 = vlaneseq
          %v1763 = vshrl.u32 %v1762, 7
          %v1764 = vsub.s32 5, %v1763
          %v1765 = vrot.slane %v1697, %v1764
          %v1766 = vlaneseq
          %v1767 = vshrl.u32 %v1766, 7
          %v1768 = vsub.s32 6, %v1767
          %v1769 = vrot.slane %v1697, %v1768
          %v1770 = vlaneseq
          %v1771 = vshrl.u32 %v1770, 7
          %v1772 = vsub.s32 7, %v1771
          %v1773 = vrot.slane %v1697, %v1772
          %v1790 = vmul.f32 %v1701, %v1713
          %v1791 = vmul.f32 %v1701, %v1717
          %v1792 = vmul.f32 %v1701, %v1721
          %v1793 = vmul.f32 %v1701, %v1725
          %v1794 = vmul.f32 %v1701, %v1729
          %v1795 = vmul.f32 %v1701, %v1733
          %v1796 = vmul.f32 %v1701, %v1737
          %v1797 = vmul.f32 %v1701, %v1741
          %v1798 = vmul.f32 %v1701, %v1745
          %v1799 = vmul.f32 %v1701, %v1749
          %v1800 = vmul.f32 %v1701, %v1753
          %v1801 = vmul.f32 %v1701, %v1757
          %v1802 = vmul.f32 %v1701, %v1761
          %v1803 = vmul.f32 %v1701, %v1765
          %v1804 = vmul.f32 %v1701, %v1769
          %v1805 = vmul.f32 %v1701, %v1773
          %v1806 = vmul.f32 %v1706, %v1713
          %v1807 = vmul.f32 %v1706, %v1717
          %v1808 = vmul.f32 %v1706, %v1721
          %v1809 = vmul.f32 %v1706, %v1725
          %v1810 = vmul.f32 %v1706, %v1729
          %v1811 = vmul.f32 %v1706, %v1733
          %v1812 = vmul.f32 %v1706, %v1737
          %v1813 = vmul.f32 %v1706, %v1741
          %v1814 = vmul.f32 %v1706, %v1745
          %v1815 = vmul.f32 %v1706, %v1749
          %v1816 = vmul.f32 %v1706, %v1753
          %v1817 = vmul.f32 %v1706, %v1757
          %v1818 = vmul.f32 %v1706, %v1761
          %v1819 = vmul.f32 %v1706, %v1765
          %v1820 = vmul.f32 %v1706, %v1769
          %v1821 = vmul.f32 %v1706, %v1773
          %v1822 = vadd.f32 %v1655, %v1790
          %v1823 = vadd.f32 %v1656, %v1791
          %v1824 = vadd.f32 %v1657, %v1792
          %v1825 = vadd.f32 %v1658, %v1793
          %v1826 = vadd.f32 %v1659, %v1794
          %v1827 = vadd.f32 %v1660, %v1795
          %v1828 = vadd.f32 %v1661, %v1796
          %v1829 = vadd.f32 %v1662, %v1797
          %v1830 = vadd.f32 %v1663, %v1798
          %v1831 = vadd.f32 %v1664, %v1799
          %v1832 = vadd.f32 %v1665, %v1800
          %v1833 = vadd.f32 %v1666, %v1801
          %v1834 = vadd.f32 %v1667, %v1802
          %v1835 = vadd.f32 %v1668, %v1803
          %v1836 = vadd.f32 %v1669, %v1804
          %v1837 = vadd.f32 %v1670, %v1805
          %v1838 = vadd.f32 %v1671, %v1806
          %v1839 = vadd.f32 %v1672, %v1807
          %v1840 = vadd.f32 %v1673, %v1808
          %v1841 = vadd.f32 %v1674, %v1809
          %v1842 = vadd.f32 %v1675, %v1810
          %v1843 = vadd.f32 %v1676, %v1811
          %v1844 = vadd.f32 %v1677, %v1812
          %v1845 = vadd.f32 %v1678, %v1813
          %v1846 = vadd.f32 %v1679, %v1814
          %v1847 = vadd.f32 %v1680, %v1815
          %v1848 = vadd.f32 %v1681, %v1816
          %v1849 = vadd.f32 %v1682, %v1817
          %v1850 = vadd.f32 %v1683, %v1818
          %v1851 = vadd.f32 %v1684, %v1819
          %v1852 = vadd.f32 %v1685, %v1820
          %v1853 = vadd.f32 %v1686, %v1821
          %v1854 = vld [vmem:[%s2] sm:$0xff]
          %v1855 = vld [vmem:[%s2 + $0x8] sm:$0xff]
          %1857 = vset.pattern.permute.xlu0 0
          %1858 = vperm.xlu0 %1857, %v1854
          %v1859 = vpop.permute.xlu0 %1858
          %1862 = vset.pattern.permute.xlu0 0
          %1863 = vperm.xlu0 %1862, %v1855
          %v1864 = vpop.permute.xlu0 %1863
          %v1866 = vadd.f32 %v1822, %v1859
          %v1867 = vadd.f32 %v1823, %v1859
          %v1868 = vadd.f32 %v1824, %v1859
          %v1869 = vadd.f32 %v1825, %v1859
          %v1870 = vadd.f32 %v1826, %v1859
          %v1871 = vadd.f32 %v1827, %v1859
          %v1872 = vadd.f32 %v1828, %v1859
          %v1873 = vadd.f32 %v1829, %v1859
          %v1874 = vadd.f32 %v1830, %v1859
          %v1875 = vadd.f32 %v1831, %v1859
          %v1876 = vadd.f32 %v1832, %v1859
          %v1877 = vadd.f32 %v1833, %v1859
          %v1878 = vadd.f32 %v1834, %v1859
          %v1879 = vadd.f32 %v1835, %v1859
          %v1880 = vadd.f32 %v1836, %v1859
          %v1881 = vadd.f32 %v1837, %v1859
          %v1882 = vadd.f32 %v1838, %v1864
          %v1883 = vadd.f32 %v1839, %v1864
          %v1884 = vadd.f32 %v1840, %v1864
          %v1885 = vadd.f32 %v1841, %v1864
          %v1886 = vadd.f32 %v1842, %v1864
          %v1887 = vadd.f32 %v1843, %v1864
          %v1888 = vadd.f32 %v1844, %v1864
          %v1889 = vadd.f32 %v1845, %v1864
          %v1890 = vadd.f32 %v1846, %v1864
          %v1891 = vadd.f32 %v1847, %v1864
          %v1892 = vadd.f32 %v1848, %v1864
          %v1893 = vadd.f32 %v1849, %v1864
          %v1894 = vadd.f32 %v1850, %v1864
          %v1895 = vadd.f32 %v1851, %v1864
          %v1896 = vadd.f32 %v1852, %v1864
          %v1897 = vadd.f32 %v1853, %v1864
          %vm1898 = vcmp.ge.f32.partialorder %v1866, 0.0
          %vm1899 = vcmp.ge.f32.partialorder %v1867, 0.0
          %vm1900 = vcmp.ge.f32.partialorder %v1868, 0.0
          %vm1901 = vcmp.ge.f32.partialorder %v1869, 0.0
          %vm1902 = vcmp.ge.f32.partialorder %v1870, 0.0
          %vm1903 = vcmp.ge.f32.partialorder %v1871, 0.0
          %vm1904 = vcmp.ge.f32.partialorder %v1872, 0.0
          %vm1905 = vcmp.ge.f32.partialorder %v1873, 0.0
          %vm1906 = vcmp.ge.f32.partialorder %v1874, 0.0
          %vm1907 = vcmp.ge.f32.partialorder %v1875, 0.0
          %vm1908 = vcmp.ge.f32.partialorder %v1876, 0.0
          %vm1909 = vcmp.ge.f32.partialorder %v1877, 0.0
          %vm1910 = vcmp.ge.f32.partialorder %v1878, 0.0
          %vm1911 = vcmp.ge.f32.partialorder %v1879, 0.0
          %vm1912 = vcmp.ge.f32.partialorder %v1880, 0.0
          %vm1913 = vcmp.ge.f32.partialorder %v1881, 0.0
          %vm1914 = vcmp.ge.f32.partialorder %v1882, 0.0
          %vm1915 = vcmp.ge.f32.partialorder %v1883, 0.0
          %vm1916 = vcmp.ge.f32.partialorder %v1884, 0.0
          %vm1917 = vcmp.ge.f32.partialorder %v1885, 0.0
          %vm1918 = vcmp.ge.f32.partialorder %v1886, 0.0
          %vm1919 = vcmp.ge.f32.partialorder %v1887, 0.0
          %vm1920 = vcmp.ge.f32.partialorder %v1888, 0.0
          %vm1921 = vcmp.ge.f32.partialorder %v1889, 0.0
          %vm1922 = vcmp.ge.f32.partialorder %v1890, 0.0
          %vm1923 = vcmp.ge.f32.partialorder %v1891, 0.0
          %vm1924 = vcmp.ge.f32.partialorder %v1892, 0.0
          %vm1925 = vcmp.ge.f32.partialorder %v1893, 0.0
          %vm1926 = vcmp.ge.f32.partialorder %v1894, 0.0
          %vm1927 = vcmp.ge.f32.partialorder %v1895, 0.0
          %vm1928 = vcmp.ge.f32.partialorder %v1896, 0.0
          %vm1929 = vcmp.ge.f32.partialorder %v1897, 0.0
          %v1930 = vmul.f32 %v1866, 0.01
          %v1931 = vmul.f32 %v1867, 0.01
          %v1932 = vmul.f32 %v1868, 0.01
          %v1933 = vmul.f32 %v1869, 0.01
          %v1934 = vmul.f32 %v1870, 0.01
          %v1935 = vmul.f32 %v1871, 0.01
          %v1936 = vmul.f32 %v1872, 0.01
          %v1937 = vmul.f32 %v1873, 0.01
          %v1938 = vmul.f32 %v1874, 0.01
          %v1939 = vmul.f32 %v1875, 0.01
          %v1940 = vmul.f32 %v1876, 0.01
          %v1941 = vmul.f32 %v1877, 0.01
          %v1942 = vmul.f32 %v1878, 0.01
          %v1943 = vmul.f32 %v1879, 0.01
          %v1944 = vmul.f32 %v1880, 0.01
          %v1945 = vmul.f32 %v1881, 0.01
          %v1946 = vmul.f32 %v1882, 0.01
          %v1947 = vmul.f32 %v1883, 0.01
          %v1948 = vmul.f32 %v1884, 0.01
          %v1949 = vmul.f32 %v1885, 0.01
          %v1950 = vmul.f32 %v1886, 0.01
          %v1951 = vmul.f32 %v1887, 0.01
          %v1952 = vmul.f32 %v1888, 0.01
          %v1953 = vmul.f32 %v1889, 0.01
          %v1954 = vmul.f32 %v1890, 0.01
          %v1955 = vmul.f32 %v1891, 0.01
          %v1956 = vmul.f32 %v1892, 0.01
          %v1957 = vmul.f32 %v1893, 0.01
          %v1958 = vmul.f32 %v1894, 0.01
          %v1959 = vmul.f32 %v1895, 0.01
          %v1960 = vmul.f32 %v1896, 0.01
          %v1961 = vmul.f32 %v1897, 0.01
          %v1962 = vsel %vm1898, %v1866, %v1930
          %v1963 = vsel %vm1899, %v1867, %v1931
          %v1964 = vsel %vm1900, %v1868, %v1932
          %v1965 = vsel %vm1901, %v1869, %v1933
          %v1966 = vsel %vm1902, %v1870, %v1934
          %v1967 = vsel %vm1903, %v1871, %v1935
          %v1968 = vsel %vm1904, %v1872, %v1936
          %v1969 = vsel %vm1905, %v1873, %v1937
          %v1970 = vsel %vm1906, %v1874, %v1938
          %v1971 = vsel %vm1907, %v1875, %v1939
          %v1972 = vsel %vm1908, %v1876, %v1940
          %v1973 = vsel %vm1909, %v1877, %v1941
          %v1974 = vsel %vm1910, %v1878, %v1942
          %v1975 = vsel %vm1911, %v1879, %v1943
          %v1976 = vsel %vm1912, %v1880, %v1944
          %v1977 = vsel %vm1913, %v1881, %v1945
          %v1978 = vsel %vm1914, %v1882, %v1946
          %v1979 = vsel %vm1915, %v1883, %v1947
          %v1980 = vsel %vm1916, %v1884, %v1948
          %v1981 = vsel %vm1917, %v1885, %v1949
          %v1982 = vsel %vm1918, %v1886, %v1950
          %v1983 = vsel %vm1919, %v1887, %v1951
          %v1984 = vsel %vm1920, %v1888, %v1952
          %v1985 = vsel %vm1921, %v1889, %v1953
          %v1986 = vsel %vm1922, %v1890, %v1954
          %v1987 = vsel %vm1923, %v1891, %v1955
          %v1988 = vsel %vm1924, %v1892, %v1956
          %v1989 = vsel %vm1925, %v1893, %v1957
          %v1990 = vsel %vm1926, %v1894, %v1958
          %v1991 = vsel %vm1927, %v1895, %v1959
          %v1992 = vsel %vm1928, %v1896, %v1960
          %v1993 = vsel %vm1929, %v1897, %v1961
          %v2002 = vcombine.low %v1962, %v1963
          %v2003 = vcombine.low %v1964, %v1965
          %v2004 = vcombine.low %v1966, %v1967
          %v2005 = vcombine.low %v1968, %v1969
          %v2007 = vunpack.c.l.s4 1966171168
          %v2008 = vunpack.c.0.s8 %v2007
          %v2009 = vlaneseq
          %v2010 = vshrl.u32 %v2009, 7
          %v2011 = vsub.s32 %v2008, %v2010
          %v2012 = vrot.slane %v2002, %v2011
          %v2014 = vunpack.c.l.s4 1966171168
          %v2015 = vunpack.c.0.s8 %v2014
          %v2016 = vlaneseq
          %v2017 = vshrl.u32 %v2016, 7
          %v2018 = vsub.s32 %v2015, %v2017
          %v2019 = vrot.slane %v2003, %v2018
          %v2021 = vunpack.c.l.s4 1966171168
          %v2022 = vunpack.c.0.s8 %v2021
          %v2023 = vlaneseq
          %v2024 = vshrl.u32 %v2023, 7
          %v2025 = vsub.s32 %v2022, %v2024
          %v2026 = vrot.slane %v2004, %v2025
          %v2028 = vunpack.c.l.s4 1966171168
          %v2029 = vunpack.c.0.s8 %v2028
          %v2030 = vlaneseq
          %v2031 = vshrl.u32 %v2030, 7
          %v2032 = vsub.s32 %v2029, %v2031
          %v2033 = vrot.slane %v2005, %v2032
          %v2034 = vcombine.low %v2012, %v2019
          %v2035 = vcombine.low %v2026, %v2033
          %v2037 = vunpack.c.l.s4 1966171168
          %v2038 = vunpack.c.0.s8 %v2037
          %v2039 = vlaneseq
          %v2040 = vshrl.u32 %v2039, 7
          %v2041 = vsub.s32 %v2038, %v2040
          %v2042 = vrot.slane %v2034, %v2041
          %v2044 = vunpack.c.l.s4 1966171168
          %v2045 = vunpack.c.0.s8 %v2044
          %v2046 = vlaneseq
          %v2047 = vshrl.u32 %v2046, 7
          %v2048 = vsub.s32 %v2045, %v2047
          %v2049 = vrot.slane %v2035, %v2048
          %v2050 = vcombine.low %v2042, %v2049
          %2052 = vst [vmem:[#allocation2] ss:$2 sm:$0xff] %v2050
          %v2053 = vcombine.high %v2012, %v2019
          %v2054 = vcombine.high %v2026, %v2033
          %v2056 = vunpack.c.l.s4 1966171168
          %v2057 = vunpack.c.0.s8 %v2056
          %v2058 = vlaneseq
          %v2059 = vshrl.u32 %v2058, 7
          %v2060 = vsub.s32 %v2057, %v2059
          %v2061 = vrot.slane %v2053, %v2060
          %v2063 = vunpack.c.l.s4 1966171168
          %v2064 = vunpack.c.0.s8 %v2063
          %v2065 = vlaneseq
          %v2066 = vshrl.u32 %v2065, 7
          %v2067 = vsub.s32 %v2064, %v2066
          %v2068 = vrot.slane %v2054, %v2067
          %v2069 = vcombine.low %v2061, %v2068
          %s2071 = scalar_lea.vmem [#allocation2], 16
          %2072 = vst [vmem:[%s2071] ss:$2 sm:$0xff] %v2069
          %v2073 = vcombine.high %v2042, %v2049
          %s2075 = scalar_lea.vmem [#allocation2], 32
          %2076 = vst [vmem:[%s2075] ss:$2 sm:$0xff] %v2073
          %v2077 = vcombine.high %v2061, %v2068
          %s2079 = scalar_lea.vmem [#allocation2], 48
          %2080 = vst [vmem:[%s2079] ss:$2 sm:$0xff] %v2077
          %v2081 = vcombine.high %v1962, %v1963
          %v2082 = vcombine.high %v1964, %v1965
          %v2083 = vcombine.high %v1966, %v1967
          %v2084 = vcombine.high %v1968, %v1969
          %v2086 = vunpack.c.l.s4 1966171168
          %v2087 = vunpack.c.0.s8 %v2086
          %v2088 = vlaneseq
          %v2089 = vshrl.u32 %v2088, 7
          %v2090 = vsub.s32 %v2087, %v2089
          %v2091 = vrot.slane %v2081, %v2090
          %v2093 = vunpack.c.l.s4 1966171168
          %v2094 = vunpack.c.0.s8 %v2093
          %v2095 = vlaneseq
          %v2096 = vshrl.u32 %v2095, 7
          %v2097 = vsub.s32 %v2094, %v2096
          %v2098 = vrot.slane %v2082, %v2097
          %v2100 = vunpack.c.l.s4 1966171168
          %v2101 = vunpack.c.0.s8 %v2100
          %v2102 = vlaneseq
          %v2103 = vshrl.u32 %v2102, 7
          %v2104 = vsub.s32 %v2101, %v2103
          %v2105 = vrot.slane %v2083, %v2104
          %v2107 = vunpack.c.l.s4 1966171168
          %v2108 = vunpack.c.0.s8 %v2107
          %v2109 = vlaneseq
          %v2110 = vshrl.u32 %v2109, 7
          %v2111 = vsub.s32 %v2108, %v2110
          %v2112 = vrot.slane %v2084, %v2111
          %v2113 = vcombine.low %v2091, %v2098
          %v2114 = vcombine.low %v2105, %v2112
          %v2116 = vunpack.c.l.s4 1966171168
          %v2117 = vunpack.c.0.s8 %v2116
          %v2118 = vlaneseq
          %v2119 = vshrl.u32 %v2118, 7
          %v2120 = vsub.s32 %v2117, %v2119
          %v2121 = vrot.slane %v2113, %v2120
          %v2123 = vunpack.c.l.s4 1966171168
          %v2124 = vunpack.c.0.s8 %v2123
          %v2125 = vlaneseq
          %v2126 = vshrl.u32 %v2125, 7
          %v2127 = vsub.s32 %v2124, %v2126
          %v2128 = vrot.slane %v2114, %v2127
          %v2129 = vcombine.low %v2121, %v2128
          %s2131 = scalar_lea.vmem [#allocation2], 64
          %2132 = vst [vmem:[%s2131] ss:$2 sm:$0xff] %v2129
          %v2133 = vcombine.high %v2091, %v2098
          %v2134 = vcombine.high %v2105, %v2112
          %v2136 = vunpack.c.l.s4 1966171168
          %v2137 = vunpack.c.0.s8 %v2136
          %v2138 = vlaneseq
          %v2139 = vshrl.u32 %v2138, 7
          %v2140 = vsub.s32 %v2137, %v2139
          %v2141 = vrot.slane %v2133, %v2140
          %v2143 = vunpack.c.l.s4 1966171168
          %v2144 = vunpack.c.0.s8 %v2143
          %v2145 = vlaneseq
          %v2146 = vshrl.u32 %v2145, 7
          %v2147 = vsub.s32 %v2144, %v2146
          %v2148 = vrot.slane %v2134, %v2147
          %v2149 = vcombine.low %v2141, %v2148
          %s2151 = scalar_lea.vmem [#allocation2], 80
          %2152 = vst [vmem:[%s2151] ss:$2 sm:$0xff] %v2149
          %v2153 = vcombine.high %v2121, %v2128
          %s2155 = scalar_lea.vmem [#allocation2], 96
          %2156 = vst [vmem:[%s2155] ss:$2 sm:$0xff] %v2153
          %v2157 = vcombine.high %v2141, %v2148
          %s2159 = scalar_lea.vmem [#allocation2], 112
          %2160 = vst [vmem:[%s2159] ss:$2 sm:$0xff] %v2157
          %v2169 = vcombine.low %v1978, %v1979
          %v2170 = vcombine.low %v1980, %v1981
          %v2171 = vcombine.low %v1982, %v1983
          %v2172 = vcombine.low %v1984, %v1985
          %v2174 = vunpack.c.l.s4 1966171168
          %v2175 = vunpack.c.0.s8 %v2174
          %v2176 = vlaneseq
          %v2177 = vshrl.u32 %v2176, 7
          %v2178 = vsub.s32 %v2175, %v2177
          %v2179 = vrot.slane %v2169, %v2178
          %v2181 = vunpack.c.l.s4 1966171168
          %v2182 = vunpack.c.0.s8 %v2181
          %v2183 = vlaneseq
          %v2184 = vshrl.u32 %v2183, 7
          %v2185 = vsub.s32 %v2182, %v2184
          %v2186 = vrot.slane %v2170, %v2185
          %v2188 = vunpack.c.l.s4 1966171168
          %v2189 = vunpack.c.0.s8 %v2188
          %v2190 = vlaneseq
          %v2191 = vshrl.u32 %v2190, 7
          %v2192 = vsub.s32 %v2189, %v2191
          %v2193 = vrot.slane %v2171, %v2192
          %v2195 = vunpack.c.l.s4 1966171168
          %v2196 = vunpack.c.0.s8 %v2195
          %v2197 = vlaneseq
          %v2198 = vshrl.u32 %v2197, 7
          %v2199 = vsub.s32 %v2196, %v2198
          %v2200 = vrot.slane %v2172, %v2199
          %v2201 = vcombine.low %v2179, %v2186
          %v2202 = vcombine.low %v2193, %v2200
          %v2204 = vunpack.c.l.s4 1966171168
          %v2205 = vunpack.c.0.s8 %v2204
          %v2206 = vlaneseq
          %v2207 = vshrl.u32 %v2206, 7
          %v2208 = vsub.s32 %v2205, %v2207
          %v2209 = vrot.slane %v2201, %v2208
          %v2211 = vunpack.c.l.s4 1966171168
          %v2212 = vunpack.c.0.s8 %v2211
          %v2213 = vlaneseq
          %v2214 = vshrl.u32 %v2213, 7
          %v2215 = vsub.s32 %v2212, %v2214
          %v2216 = vrot.slane %v2202, %v2215
          %v2217 = vcombine.low %v2209, %v2216
          %s2219 = scalar_lea.vmem [#allocation2], 128
          %2220 = vst [vmem:[%s2219] ss:$2 sm:$0xff] %v2217
          %v2221 = vcombine.high %v2179, %v2186
          %v2222 = vcombine.high %v2193, %v2200
          %v2224 = vunpack.c.l.s4 1966171168
          %v2225 = vunpack.c.0.s8 %v2224
          %v2226 = vlaneseq
          %v2227 = vshrl.u32 %v2226, 7
          %v2228 = vsub.s32 %v2225, %v2227
          %v2229 = vrot.slane %v2221, %v2228
          %v2231 = vunpack.c.l.s4 1966171168
          %v2232 = vunpack.c.0.s8 %v2231
          %v2233 = vlaneseq
          %v2234 = vshrl.u32 %v2233, 7
          %v2235 = vsub.s32 %v2232, %v2234
          %v2236 = vrot.slane %v2222, %v2235
          %v2237 = vcombine.low %v2229, %v2236
          %s2239 = scalar_lea.vmem [#allocation2], 144
          %2240 = vst [vmem:[%s2239] ss:$2 sm:$0xff] %v2237
          %v2241 = vcombine.high %v2209, %v2216
          %s2243 = scalar_lea.vmem [#allocation2], 160
          %2244 = vst [vmem:[%s2243] ss:$2 sm:$0xff] %v2241
          %v2245 = vcombine.high %v2229, %v2236
          %s2247 = scalar_lea.vmem [#allocation2], 176
          %2248 = vst [vmem:[%s2247] ss:$2 sm:$0xff] %v2245
          %v2249 = vcombine.high %v1978, %v1979
          %v2250 = vcombine.high %v1980, %v1981
          %v2251 = vcombine.high %v1982, %v1983
          %v2252 = vcombine.high %v1984, %v1985
          %v2254 = vunpack.c.l.s4 1966171168
          %v2255 = vunpack.c.0.s8 %v2254
          %v2256 = vlaneseq
          %v2257 = vshrl.u32 %v2256, 7
          %v2258 = vsub.s32 %v2255, %v2257
          %v2259 = vrot.slane %v2249, %v2258
          %v2261 = vunpack.c.l.s4 1966171168
          %v2262 = vunpack.c.0.s8 %v2261
          %v2263 = vlaneseq
          %v2264 = vshrl.u32 %v2263, 7
          %v2265 = vsub.s32 %v2262, %v2264
          %v2266 = vrot.slane %v2250, %v2265
          %v2268 = vunpack.c.l.s4 1966171168
          %v2269 = vunpack.c.0.s8 %v2268
          %v2270 = vlaneseq
          %v2271 = vshrl.u32 %v2270, 7
          %v2272 = vsub.s32 %v2269, %v2271
          %v2273 = vrot.slane %v2251, %v2272
          %v2275 = vunpack.c.l.s4 1966171168
          %v2276 = vunpack.c.0.s8 %v2275
          %v2277 = vlaneseq
          %v2278 = vshrl.u32 %v2277, 7
          %v2279 = vsub.s32 %v2276, %v2278
          %v2280 = vrot.slane %v2252, %v2279
          %v2281 = vcombine.low %v2259, %v2266
          %v2282 = vcombine.low %v2273, %v2280
          %v2284 = vunpack.c.l.s4 1966171168
          %v2285 = vunpack.c.0.s8 %v2284
          %v2286 = vlaneseq
          %v2287 = vshrl.u32 %v2286, 7
          %v2288 = vsub.s32 %v2285, %v2287
          %v2289 = vrot.slane %v2281, %v2288
          %v2291 = vunpack.c.l.s4 1966171168
          %v2292 = vunpack.c.0.s8 %v2291
          %v2293 = vlaneseq
          %v2294 = vshrl.u32 %v2293, 7
          %v2295 = vsub.s32 %v2292, %v2294
          %v2296 = vrot.slane %v2282, %v2295
          %v2297 = vcombine.low %v2289, %v2296
          %s2299 = scalar_lea.vmem [#allocation2], 192
          %2300 = vst [vmem:[%s2299] ss:$2 sm:$0xff] %v2297
          %v2301 = vcombine.high %v2259, %v2266
          %v2302 = vcombine.high %v2273, %v2280
          %v2304 = vunpack.c.l.s4 1966171168
          %v2305 = vunpack.c.0.s8 %v2304
          %v2306 = vlaneseq
          %v2307 = vshrl.u32 %v2306, 7
          %v2308 = vsub.s32 %v2305, %v2307
          %v2309 = vrot.slane %v2301, %v2308
          %v2311 = vunpack.c.l.s4 1966171168
          %v2312 = vunpack.c.0.s8 %v2311
          %v2313 = vlaneseq
          %v2314 = vshrl.u32 %v2313, 7
          %v2315 = vsub.s32 %v2312, %v2314
          %v2316 = vrot.slane %v2302, %v2315
          %v2317 = vcombine.low %v2309, %v2316
          %s2319 = scalar_lea.vmem [#allocation2], 208
          %2320 = vst [vmem:[%s2319] ss:$2 sm:$0xff] %v2317
          %v2321 = vcombine.high %v2289, %v2296
          %s2323 = scalar_lea.vmem [#allocation2], 224
          %2324 = vst [vmem:[%s2323] ss:$2 sm:$0xff] %v2321
          %v2325 = vcombine.high %v2309, %v2316
          %s2327 = scalar_lea.vmem [#allocation2], 240
          %2328 = vst [vmem:[%s2327] ss:$2 sm:$0xff] %v2325
          %v2337 = vcombine.low %v1970, %v1971
          %v2338 = vcombine.low %v1972, %v1973
          %v2339 = vcombine.low %v1974, %v1975
          %v2340 = vcombine.low %v1976, %v1977
          %v2342 = vunpack.c.l.s4 1966171168
          %v2343 = vunpack.c.0.s8 %v2342
          %v2344 = vlaneseq
          %v2345 = vshrl.u32 %v2344, 7
          %v2346 = vsub.s32 %v2343, %v2345
          %v2347 = vrot.slane %v2337, %v2346
          %v2349 = vunpack.c.l.s4 1966171168
          %v2350 = vunpack.c.0.s8 %v2349
          %v2351 = vlaneseq
          %v2352 = vshrl.u32 %v2351, 7
          %v2353 = vsub.s32 %v2350, %v2352
          %v2354 = vrot.slane %v2338, %v2353
          %v2356 = vunpack.c.l.s4 1966171168
          %v2357 = vunpack.c.0.s8 %v2356
          %v2358 = vlaneseq
          %v2359 = vshrl.u32 %v2358, 7
          %v2360 = vsub.s32 %v2357, %v2359
          %v2361 = vrot.slane %v2339, %v2360
          %v2363 = vunpack.c.l.s4 1966171168
          %v2364 = vunpack.c.0.s8 %v2363
          %v2365 = vlaneseq
          %v2366 = vshrl.u32 %v2365, 7
          %v2367 = vsub.s32 %v2364, %v2366
          %v2368 = vrot.slane %v2340, %v2367
          %v2369 = vcombine.low %v2347, %v2354
          %v2370 = vcombine.low %v2361, %v2368
          %v2372 = vunpack.c.l.s4 1966171168
          %v2373 = vunpack.c.0.s8 %v2372
          %v2374 = vlaneseq
          %v2375 = vshrl.u32 %v2374, 7
          %v2376 = vsub.s32 %v2373, %v2375
          %v2377 = vrot.slane %v2369, %v2376
          %v2379 = vunpack.c.l.s4 1966171168
          %v2380 = vunpack.c.0.s8 %v2379
          %v2381 = vlaneseq
          %v2382 = vshrl.u32 %v2381, 7
          %v2383 = vsub.s32 %v2380, %v2382
          %v2384 = vrot.slane %v2370, %v2383
          %v2385 = vcombine.low %v2377, %v2384
          %s2387 = scalar_lea.vmem [#allocation2], 1
          %2388 = vst [vmem:[%s2387] ss:$2 sm:$0xff] %v2385
          %v2389 = vcombine.high %v2347, %v2354
          %v2390 = vcombine.high %v2361, %v2368
          %v2392 = vunpack.c.l.s4 1966171168
          %v2393 = vunpack.c.0.s8 %v2392
          %v2394 = vlaneseq
          %v2395 = vshrl.u32 %v2394, 7
          %v2396 = vsub.s32 %v2393, %v2395
          %v2397 = vrot.slane %v2389, %v2396
          %v2399 = vunpack.c.l.s4 1966171168
          %v2400 = vunpack.c.0.s8 %v2399
          %v2401 = vlaneseq
          %v2402 = vshrl.u32 %v2401, 7
          %v2403 = vsub.s32 %v2400, %v2402
          %v2404 = vrot.slane %v2390, %v2403
          %v2405 = vcombine.low %v2397, %v2404
          %s2407 = scalar_lea.vmem [#allocation2], 17
          %2408 = vst [vmem:[%s2407] ss:$2 sm:$0xff] %v2405
          %v2409 = vcombine.high %v2377, %v2384
          %s2411 = scalar_lea.vmem [#allocation2], 33
          %2412 = vst [vmem:[%s2411] ss:$2 sm:$0xff] %v2409
          %v2413 = vcombine.high %v2397, %v2404
          %s2415 = scalar_lea.vmem [#allocation2], 49
          %2416 = vst [vmem:[%s2415] ss:$2 sm:$0xff] %v2413
          %v2417 = vcombine.high %v1970, %v1971
          %v2418 = vcombine.high %v1972, %v1973
          %v2419 = vcombine.high %v1974, %v1975
          %v2420 = vcombine.high %v1976, %v1977
          %v2422 = vunpack.c.l.s4 1966171168
          %v2423 = vunpack.c.0.s8 %v2422
          %v2424 = vlaneseq
          %v2425 = vshrl.u32 %v2424, 7
          %v2426 = vsub.s32 %v2423, %v2425
          %v2427 = vrot.slane %v2417, %v2426
          %v2429 = vunpack.c.l.s4 1966171168
          %v2430 = vunpack.c.0.s8 %v2429
          %v2431 = vlaneseq
          %v2432 = vshrl.u32 %v2431, 7
          %v2433 = vsub.s32 %v2430, %v2432
          %v2434 = vrot.slane %v2418, %v2433
          %v2436 = vunpack.c.l.s4 1966171168
          %v2437 = vunpack.c.0.s8 %v2436
          %v2438 = vlaneseq
          %v2439 = vshrl.u32 %v2438, 7
          %v2440 = vsub.s32 %v2437, %v2439
          %v2441 = vrot.slane %v2419, %v2440
          %v2443 = vunpack.c.l.s4 1966171168
          %v2444 = vunpack.c.0.s8 %v2443
          %v2445 = vlaneseq
          %v2446 = vshrl.u32 %v2445, 7
          %v2447 = vsub.s32 %v2444, %v2446
          %v2448 = vrot.slane %v2420, %v2447
          %v2449 = vcombine.low %v2427, %v2434
          %v2450 = vcombine.low %v2441, %v2448
          %v2452 = vunpack.c.l.s4 1966171168
          %v2453 = vunpack.c.0.s8 %v2452
          %v2454 = vlaneseq
          %v2455 = vshrl.u32 %v2454, 7
          %v2456 = vsub.s32 %v2453, %v2455
          %v2457 = vrot.slane %v2449, %v2456
          %v2459 = vunpack.c.l.s4 1966171168
          %v2460 = vunpack.c.0.s8 %v2459
          %v2461 = vlaneseq
          %v2462 = vshrl.u32 %v2461, 7
          %v2463 = vsub.s32 %v2460, %v2462
          %v2464 = vrot.slane %v2450, %v2463
          %v2465 = vcombine.low %v2457, %v2464
          %s2467 = scalar_lea.vmem [#allocation2], 65
          %2468 = vst [vmem:[%s2467] ss:$2 sm:$0xff] %v2465
          %v2469 = vcombine.high %v2427, %v2434
          %v2470 = vcombine.high %v2441, %v2448
          %v2472 = vunpack.c.l.s4 1966171168
          %v2473 = vunpack.c.0.s8 %v2472
          %v2474 = vlaneseq
          %v2475 = vshrl.u32 %v2474, 7
          %v2476 = vsub.s32 %v2473, %v2475
          %v2477 = vrot.slane %v2469, %v2476
          %v2479 = vunpack.c.l.s4 1966171168
          %v2480 = vunpack.c.0.s8 %v2479
          %v2481 = vlaneseq
          %v2482 = vshrl.u32 %v2481, 7
          %v2483 = vsub.s32 %v2480, %v2482
          %v2484 = vrot.slane %v2470, %v2483
          %v2485 = vcombine.low %v2477, %v2484
          %s2487 = scalar_lea.vmem [#allocation2], 81
          %2488 = vst [vmem:[%s2487] ss:$2 sm:$0xff] %v2485
          %v2489 = vcombine.high %v2457, %v2464
          %s2491 = scalar_lea.vmem [#allocation2], 97
          %2492 = vst [vmem:[%s2491] ss:$2 sm:$0xff] %v2489
          %v2493 = vcombine.high %v2477, %v2484
          %s2495 = scalar_lea.vmem [#allocation2], 113
          %2496 = vst [vmem:[%s2495] ss:$2 sm:$0xff] %v2493
          %v2505 = vcombine.low %v1986, %v1987
          %v2506 = vcombine.low %v1988, %v1989
          %v2507 = vcombine.low %v1990, %v1991
          %v2508 = vcombine.low %v1992, %v1993
          %v2510 = vunpack.c.l.s4 1966171168
          %v2511 = vunpack.c.0.s8 %v2510
          %v2512 = vlaneseq
          %v2513 = vshrl.u32 %v2512, 7
          %v2514 = vsub.s32 %v2511, %v2513
          %v2515 = vrot.slane %v2505, %v2514
          %v2517 = vunpack.c.l.s4 1966171168
          %v2518 = vunpack.c.0.s8 %v2517
          %v2519 = vlaneseq
          %v2520 = vshrl.u32 %v2519, 7
          %v2521 = vsub.s32 %v2518, %v2520
          %v2522 = vrot.slane %v2506, %v2521
          %v2524 = vunpack.c.l.s4 1966171168
          %v2525 = vunpack.c.0.s8 %v2524
          %v2526 = vlaneseq
          %v2527 = vshrl.u32 %v2526, 7
          %v2528 = vsub.s32 %v2525, %v2527
          %v2529 = vrot.slane %v2507, %v2528
          %v2531 = vunpack.c.l.s4 1966171168
          %v2532 = vunpack.c.0.s8 %v2531
          %v2533 = vlaneseq
          %v2534 = vshrl.u32 %v2533, 7
          %v2535 = vsub.s32 %v2532, %v2534
          %v2536 = vrot.slane %v2508, %v2535
          %v2537 = vcombine.low %v2515, %v2522
          %v2538 = vcombine.low %v2529, %v2536
          %v2540 = vunpack.c.l.s4 1966171168
          %v2541 = vunpack.c.0.s8 %v2540
          %v2542 = vlaneseq
          %v2543 = vshrl.u32 %v2542, 7
          %v2544 = vsub.s32 %v2541, %v2543
          %v2545 = vrot.slane %v2537, %v2544
          %v2547 = vunpack.c.l.s4 1966171168
          %v2548 = vunpack.c.0.s8 %v2547
          %v2549 = vlaneseq
          %v2550 = vshrl.u32 %v2549, 7
          %v2551 = vsub.s32 %v2548, %v2550
          %v2552 = vrot.slane %v2538, %v2551
          %v2553 = vcombine.low %v2545, %v2552
          %s2555 = scalar_lea.vmem [#allocation2], 129
          %2556 = vst [vmem:[%s2555] ss:$2 sm:$0xff] %v2553
          %v2557 = vcombine.high %v2515, %v2522
          %v2558 = vcombine.high %v2529, %v2536
          %v2560 = vunpack.c.l.s4 1966171168
          %v2561 = vunpack.c.0.s8 %v2560
          %v2562 = vlaneseq
          %v2563 = vshrl.u32 %v2562, 7
          %v2564 = vsub.s32 %v2561, %v2563
          %v2565 = vrot.slane %v2557, %v2564
          %v2567 = vunpack.c.l.s4 1966171168
          %v2568 = vunpack.c.0.s8 %v2567
          %v2569 = vlaneseq
          %v2570 = vshrl.u32 %v2569, 7
          %v2571 = vsub.s32 %v2568, %v2570
          %v2572 = vrot.slane %v2558, %v2571
          %v2573 = vcombine.low %v2565, %v2572
          %s2575 = scalar_lea.vmem [#allocation2], 145
          %2576 = vst [vmem:[%s2575] ss:$2 sm:$0xff] %v2573
          %v2577 = vcombine.high %v2545, %v2552
          %s2579 = scalar_lea.vmem [#allocation2], 161
          %2580 = vst [vmem:[%s2579] ss:$2 sm:$0xff] %v2577
          %v2581 = vcombine.high %v2565, %v2572
          %s2583 = scalar_lea.vmem [#allocation2], 177
          %2584 = vst [vmem:[%s2583] ss:$2 sm:$0xff] %v2581
          %v2585 = vcombine.high %v1986, %v1987
          %v2586 = vcombine.high %v1988, %v1989
          %v2587 = vcombine.high %v1990, %v1991
          %v2588 = vcombine.high %v1992, %v1993
          %v2590 = vunpack.c.l.s4 1966171168
          %v2591 = vunpack.c.0.s8 %v2590
          %v2592 = vlaneseq
          %v2593 = vshrl.u32 %v2592, 7
          %v2594 = vsub.s32 %v2591, %v2593
          %v2595 = vrot.slane %v2585, %v2594
          %v2597 = vunpack.c.l.s4 1966171168
          %v2598 = vunpack.c.0.s8 %v2597
          %v2599 = vlaneseq
          %v2600 = vshrl.u32 %v2599, 7
          %v2601 = vsub.s32 %v2598, %v2600
          %v2602 = vrot.slane %v2586, %v2601
          %v2604 = vunpack.c.l.s4 1966171168
          %v2605 = vunpack.c.0.s8 %v2604
          %v2606 = vlaneseq
          %v2607 = vshrl.u32 %v2606, 7
          %v2608 = vsub.s32 %v2605, %v2607
          %v2609 = vrot.slane %v2587, %v2608
          %v2611 = vunpack.c.l.s4 1966171168
          %v2612 = vunpack.c.0.s8 %v2611
          %v2613 = vlaneseq
          %v2614 = vshrl.u32 %v2613, 7
          %v2615 = vsub.s32 %v2612, %v2614
          %v2616 = vrot.slane %v2588, %v2615
          %v2617 = vcombine.low %v2595, %v2602
          %v2618 = vcombine.low %v2609, %v2616
          %v2620 = vunpack.c.l.s4 1966171168
          %v2621 = vunpack.c.0.s8 %v2620
          %v2622 = vlaneseq
          %v2623 = vshrl.u32 %v2622, 7
          %v2624 = vsub.s32 %v2621, %v2623
          %v2625 = vrot.slane %v2617, %v2624
          %v2627 = vunpack.c.l.s4 1966171168
          %v2628 = vunpack.c.0.s8 %v2627
          %v2629 = vlaneseq
          %v2630 = vshrl.u32 %v2629, 7
          %v2631 = vsub.s32 %v2628, %v2630
          %v2632 = vrot.slane %v2618, %v2631
          %v2633 = vcombine.low %v2625, %v2632
          %s2635 = scalar_lea.vmem [#allocation2], 193
          %2636 = vst [vmem:[%s2635] ss:$2 sm:$0xff] %v2633
          %v2637 = vcombine.high %v2595, %v2602
          %v2638 = vcombine.high %v2609, %v2616
          %v2640 = vunpack.c.l.s4 1966171168
          %v2641 = vunpack.c.0.s8 %v2640
          %v2642 = vlaneseq
          %v2643 = vshrl.u32 %v2642, 7
          %v2644 = vsub.s32 %v2641, %v2643
          %v2645 = vrot.slane %v2637, %v2644
          %v2647 = vunpack.c.l.s4 1966171168
          %v2648 = vunpack.c.0.s8 %v2647
          %v2649 = vlaneseq
          %v2650 = vshrl.u32 %v2649, 7
          %v2651 = vsub.s32 %v2648, %v2650
          %v2652 = vrot.slane %v2638, %v2651
          %v2653 = vcombine.low %v2645, %v2652
          %s2655 = scalar_lea.vmem [#allocation2], 209
          %2656 = vst [vmem:[%s2655] ss:$2 sm:$0xff] %v2653
          %v2657 = vcombine.high %v2625, %v2632
          %s2659 = scalar_lea.vmem [#allocation2], 225
          %2660 = vst [vmem:[%s2659] ss:$2 sm:$0xff] %v2657
          %v2661 = vcombine.high %v2645, %v2652
          %s2663 = scalar_lea.vmem [#allocation2], 241
          %2664 = vst [vmem:[%s2663] ss:$2 sm:$0xff] %v2661
        $region68: #{encoder_forward.1} parent=47 // pred_fallthru
          _
        %s2665 = smul.u32 %s29, 8192
        %s2666 = sshra.s32 %s2665, 7
        %s2667 = sand.u32 %s2665, 127
        %s2668 = smul.addr %s2666, 2
        %s2669 = scalar_lea.vmem [#allocation2], %s2668
        %v2670 = vld [vmem:[%s2669] sm:$0xff]
        %v2671 = vld [vmem:[%s2669 + $0x8] sm:$0xff]
        %v2672 = vld [vmem:[%s2669 + $0x10] sm:$0xff]
        %v2673 = vld [vmem:[%s2669 + $0x18] sm:$0xff]
        %v2674 = vld [vmem:[%s2669 + $0x20] sm:$0xff]
        %v2675 = vld [vmem:[%s2669 + $0x28] sm:$0xff]
        %v2676 = vld [vmem:[%s2669 + $0x30] sm:$0xff]
        %v2677 = vld [vmem:[%s2669 + $0x38] sm:$0xff]
        %v2678 = vld [vmem:[%s2669 + $0x40] sm:$0xff]
        %v2679 = vld [vmem:[%s2669 + $0x48] sm:$0xff]
        %v2680 = vld [vmem:[%s2669 + $0x50] sm:$0xff]
        %v2681 = vld [vmem:[%s2669 + $0x58] sm:$0xff]
        %v2682 = vld [vmem:[%s2669 + $0x60] sm:$0xff]
        %v2683 = vld [vmem:[%s2669 + $0x68] sm:$0xff]
        %v2684 = vld [vmem:[%s2669 + $0x70] sm:$0xff]
        %v2685 = vld [vmem:[%s2669 + $0x78] sm:$0xff]
        %v2686 = vld [vmem:[#allocation3] sm:$0x3]
        %v2687 = vld [vmem:[%s326] sm:$0xff]
        %v2688 = vld [vmem:[%s326 + $0x8] sm:$0xff]
        %v2689 = vld [vmem:[%s326 + $0x10] sm:$0xff]
        %v2690 = vld [vmem:[%s326 + $0x18] sm:$0xff]
        %v2691 = vld [vmem:[%s326 + $0x20] sm:$0xff]
        %v2692 = vld [vmem:[%s326 + $0x28] sm:$0xff]
        %v2693 = vld [vmem:[%s326 + $0x30] sm:$0xff]
        %v2694 = vld [vmem:[%s326 + $0x38] sm:$0xff]
        %v2695 = vld [vmem:[%s326 + $0x40] sm:$0xff]
        %v2696 = vld [vmem:[%s326 + $0x48] sm:$0xff]
        %v2697 = vld [vmem:[%s326 + $0x50] sm:$0xff]
        %v2698 = vld [vmem:[%s326 + $0x58] sm:$0xff]
        %v2699 = vld [vmem:[%s326 + $0x60] sm:$0xff]
        %v2700 = vld [vmem:[%s326 + $0x68] sm:$0xff]
        %v2701 = vld [vmem:[%s326 + $0x70] sm:$0xff]
        %v2702 = vld [vmem:[%s326 + $0x78] sm:$0xff]
        %v2703 = vld [vmem:[%s326 + $0x80] sm:$0xff]
        %v2704 = vld [vmem:[%s326 + $0x88] sm:$0xff]
        %v2705 = vld [vmem:[%s326 + $0x90] sm:$0xff]
        %v2706 = vld [vmem:[%s326 + $0x98] sm:$0xff]
        %v2707 = vld [vmem:[%s326 + $0xa0] sm:$0xff]
        %v2708 = vld [vmem:[%s326 + $0xa8] sm:$0xff]
        %v2709 = vld [vmem:[%s326 + $0xb0] sm:$0xff]
        %v2710 = vld [vmem:[%s326 + $0xb8] sm:$0xff]
        %v2711 = vld [vmem:[%s326 + $0xc0] sm:$0xff]
        %v2712 = vld [vmem:[%s326 + $0xc8] sm:$0xff]
        %v2713 = vld [vmem:[%s326 + $0xd0] sm:$0xff]
        %v2714 = vld [vmem:[%s326 + $0xd8] sm:$0xff]
        %v2715 = vld [vmem:[%s326 + $0xe0] sm:$0xff]
        %v2716 = vld [vmem:[%s326 + $0xe8] sm:$0xff]
        %v2717 = vld [vmem:[%s326 + $0xf0] sm:$0xff]
        %v2718 = vld [vmem:[%s326 + $0xf8] sm:$0xff]
        %v2719 = vld [vmem:[%s326 + $0x100] sm:$0xff]
        %v2720 = vld [vmem:[%s326 + $0x108] sm:$0xff]
        %v2721 = vld [vmem:[%s326 + $0x110] sm:$0xff]
        %v2722 = vld [vmem:[%s326 + $0x118] sm:$0xff]
        %v2723 = vld [vmem:[%s326 + $0x120] sm:$0xff]
        %v2724 = vld [vmem:[%s326 + $0x128] sm:$0xff]
        %v2725 = vld [vmem:[%s326 + $0x130] sm:$0xff]
        %v2726 = vld [vmem:[%s326 + $0x138] sm:$0xff]
        %v2727 = vld [vmem:[%s326 + $0x140] sm:$0xff]
        %v2728 = vld [vmem:[%s326 + $0x148] sm:$0xff]
        %v2729 = vld [vmem:[%s326 + $0x150] sm:$0xff]
        %v2730 = vld [vmem:[%s326 + $0x158] sm:$0xff]
        %v2731 = vld [vmem:[%s326 + $0x160] sm:$0xff]
        %v2732 = vld [vmem:[%s326 + $0x168] sm:$0xff]
        %v2733 = vld [vmem:[%s326 + $0x170] sm:$0xff]
        %v2734 = vld [vmem:[%s326 + $0x178] sm:$0xff]
        %v2735 = vld [vmem:[%s326 + $0x180] sm:$0xff]
        %v2736 = vld [vmem:[%s326 + $0x188] sm:$0xff]
        %v2737 = vld [vmem:[%s326 + $0x190] sm:$0xff]
        %v2738 = vld [vmem:[%s326 + $0x198] sm:$0xff]
        %v2739 = vld [vmem:[%s326 + $0x1a0] sm:$0xff]
        %v2740 = vld [vmem:[%s326 + $0x1a8] sm:$0xff]
        %v2741 = vld [vmem:[%s326 + $0x1b0] sm:$0xff]
        %v2742 = vld [vmem:[%s326 + $0x1b8] sm:$0xff]
        %v2743 = vld [vmem:[%s326 + $0x1c0] sm:$0xff]
        %v2744 = vld [vmem:[%s326 + $0x1c8] sm:$0xff]
        %v2745 = vld [vmem:[%s326 + $0x1d0] sm:$0xff]
        %v2746 = vld [vmem:[%s326 + $0x1d8] sm:$0xff]
        %v2747 = vld [vmem:[%s326 + $0x1e0] sm:$0xff]
        %v2748 = vld [vmem:[%s326 + $0x1e8] sm:$0xff]
        %v2749 = vld [vmem:[%s326 + $0x1f0] sm:$0xff]
        %v2750 = vld [vmem:[%s326 + $0x1f8] sm:$0xff]
        %v2751 = vld [vmem:[%s326 + $0x200] sm:$0xff]
        %v2752 = vld [vmem:[%s326 + $0x208] sm:$0xff]
        %v2753 = vld [vmem:[%s326 + $0x210] sm:$0xff]
        %v2754 = vld [vmem:[%s326 + $0x218] sm:$0xff]
        %v2755 = vld [vmem:[%s326 + $0x220] sm:$0xff]
        %v2756 = vld [vmem:[%s326 + $0x228] sm:$0xff]
        %v2757 = vld [vmem:[%s326 + $0x230] sm:$0xff]
        %v2758 = vld [vmem:[%s326 + $0x238] sm:$0xff]
        %v2759 = vld [vmem:[%s326 + $0x240] sm:$0xff]
        %v2760 = vld [vmem:[%s326 + $0x248] sm:$0xff]
        %v2761 = vld [vmem:[%s326 + $0x250] sm:$0xff]
        %v2762 = vld [vmem:[%s326 + $0x258] sm:$0xff]
        %v2763 = vld [vmem:[%s326 + $0x260] sm:$0xff]
        %v2764 = vld [vmem:[%s326 + $0x268] sm:$0xff]
        %v2765 = vld [vmem:[%s326 + $0x270] sm:$0xff]
        %v2766 = vld [vmem:[%s326 + $0x278] sm:$0xff]
        %v2767 = vld [vmem:[%s326 + $0x280] sm:$0xff]
        %v2768 = vld [vmem:[%s326 + $0x288] sm:$0xff]
        %v2769 = vld [vmem:[%s326 + $0x290] sm:$0xff]
        %v2770 = vld [vmem:[%s326 + $0x298] sm:$0xff]
        %v2771 = vld [vmem:[%s326 + $0x2a0] sm:$0xff]
        %v2772 = vld [vmem:[%s326 + $0x2a8] sm:$0xff]
        %v2773 = vld [vmem:[%s326 + $0x2b0] sm:$0xff]
        %v2774 = vld [vmem:[%s326 + $0x2b8] sm:$0xff]
        %v2775 = vld [vmem:[%s326 + $0x2c0] sm:$0xff]
        %v2776 = vld [vmem:[%s326 + $0x2c8] sm:$0xff]
        %v2777 = vld [vmem:[%s326 + $0x2d0] sm:$0xff]
        %v2778 = vld [vmem:[%s326 + $0x2d8] sm:$0xff]
        %v2779 = vld [vmem:[%s326 + $0x2e0] sm:$0xff]
        %v2780 = vld [vmem:[%s326 + $0x2e8] sm:$0xff]
        %v2781 = vld [vmem:[%s326 + $0x2f0] sm:$0xff]
        %v2782 = vld [vmem:[%s326 + $0x2f8] sm:$0xff]
        %v2783 = vld [vmem:[%s326 + $0x300] sm:$0xff]
        %v2784 = vld [vmem:[%s326 + $0x308] sm:$0xff]
        %v2785 = vld [vmem:[%s326 + $0x310] sm:$0xff]
        %v2786 = vld [vmem:[%s326 + $0x318] sm:$0xff]
        %v2787 = vld [vmem:[%s326 + $0x320] sm:$0xff]
        %v2788 = vld [vmem:[%s326 + $0x328] sm:$0xff]
        %v2789 = vld [vmem:[%s326 + $0x330] sm:$0xff]
        %v2790 = vld [vmem:[%s326 + $0x338] sm:$0xff]
        %v2791 = vld [vmem:[%s326 + $0x340] sm:$0xff]
        %v2792 = vld [vmem:[%s326 + $0x348] sm:$0xff]
        %v2793 = vld [vmem:[%s326 + $0x350] sm:$0xff]
        %v2794 = vld [vmem:[%s326 + $0x358] sm:$0xff]
        %v2795 = vld [vmem:[%s326 + $0x360] sm:$0xff]
        %v2796 = vld [vmem:[%s326 + $0x368] sm:$0xff]
        %v2797 = vld [vmem:[%s326 + $0x370] sm:$0xff]
        %v2798 = vld [vmem:[%s326 + $0x378] sm:$0xff]
        %v2799 = vld [vmem:[%s326 + $0x380] sm:$0xff]
        %v2800 = vld [vmem:[%s326 + $0x388] sm:$0xff]
        %v2801 = vld [vmem:[%s326 + $0x390] sm:$0xff]
        %v2802 = vld [vmem:[%s326 + $0x398] sm:$0xff]
        %v2803 = vld [vmem:[%s326 + $0x3a0] sm:$0xff]
        %v2804 = vld [vmem:[%s326 + $0x3a8] sm:$0xff]
        %v2805 = vld [vmem:[%s326 + $0x3b0] sm:$0xff]
        %v2806 = vld [vmem:[%s326 + $0x3b8] sm:$0xff]
        %v2807 = vld [vmem:[%s326 + $0x3c0] sm:$0xff]
        %v2808 = vld [vmem:[%s326 + $0x3c8] sm:$0xff]
        %v2809 = vld [vmem:[%s326 + $0x3d0] sm:$0xff]
        %v2810 = vld [vmem:[%s326 + $0x3d8] sm:$0xff]
        %v2811 = vld [vmem:[%s326 + $0x3e0] sm:$0xff]
        %v2812 = vld [vmem:[%s326 + $0x3e8] sm:$0xff]
        %v2813 = vld [vmem:[%s326 + $0x3f0] sm:$0xff]
        %v2814 = vld [vmem:[%s326 + $0x3f8] sm:$0xff]
        %v2815 = vld [vmem:[%s326 + $0x400] sm:$0xff]
        %v2816 = vld [vmem:[%s326 + $0x408] sm:$0xff]
        %v2817 = vld [vmem:[%s326 + $0x410] sm:$0xff]
        %v2818 = vld [vmem:[%s326 + $0x418] sm:$0xff]
        %v2819 = vld [vmem:[%s326 + $0x420] sm:$0xff]
        %v2820 = vld [vmem:[%s326 + $0x428] sm:$0xff]
        %v2821 = vld [vmem:[%s326 + $0x430] sm:$0xff]
        %v2822 = vld [vmem:[%s326 + $0x438] sm:$0xff]
        %v2823 = vld [vmem:[%s326 + $0x440] sm:$0xff]
        %v2824 = vld [vmem:[%s326 + $0x448] sm:$0xff]
        %v2825 = vld [vmem:[%s326 + $0x450] sm:$0xff]
        %v2826 = vld [vmem:[%s326 + $0x458] sm:$0xff]
        %v2827 = vld [vmem:[%s326 + $0x460] sm:$0xff]
        %v2828 = vld [vmem:[%s326 + $0x468] sm:$0xff]
        %v2829 = vld [vmem:[%s326 + $0x470] sm:$0xff]
        %v2830 = vld [vmem:[%s326 + $0x478] sm:$0xff]
        %v2831 = vld [vmem:[%s326 + $0x480] sm:$0xff]
        %v2832 = vld [vmem:[%s326 + $0x488] sm:$0xff]
        %v2833 = vld [vmem:[%s326 + $0x490] sm:$0xff]
        %v2834 = vld [vmem:[%s326 + $0x498] sm:$0xff]
        %v2835 = vld [vmem:[%s326 + $0x4a0] sm:$0xff]
        %v2836 = vld [vmem:[%s326 + $0x4a8] sm:$0xff]
        %v2837 = vld [vmem:[%s326 + $0x4b0] sm:$0xff]
        %v2838 = vld [vmem:[%s326 + $0x4b8] sm:$0xff]
        %v2839 = vld [vmem:[%s326 + $0x4c0] sm:$0xff]
        %v2840 = vld [vmem:[%s326 + $0x4c8] sm:$0xff]
        %v2841 = vld [vmem:[%s326 + $0x4d0] sm:$0xff]
        %v2842 = vld [vmem:[%s326 + $0x4d8] sm:$0xff]
        %v2843 = vld [vmem:[%s326 + $0x4e0] sm:$0xff]
        %v2844 = vld [vmem:[%s326 + $0x4e8] sm:$0xff]
        %v2845 = vld [vmem:[%s326 + $0x4f0] sm:$0xff]
        %v2846 = vld [vmem:[%s326 + $0x4f8] sm:$0xff]
        %v2847 = vld [vmem:[%s326 + $0x500] sm:$0xff]
        %v2848 = vld [vmem:[%s326 + $0x508] sm:$0xff]
        %v2849 = vld [vmem:[%s326 + $0x510] sm:$0xff]
        %v2850 = vld [vmem:[%s326 + $0x518] sm:$0xff]
        %v2851 = vld [vmem:[%s326 + $0x520] sm:$0xff]
        %v2852 = vld [vmem:[%s326 + $0x528] sm:$0xff]
        %v2853 = vld [vmem:[%s326 + $0x530] sm:$0xff]
        %v2854 = vld [vmem:[%s326 + $0x538] sm:$0xff]
        %v2855 = vld [vmem:[%s326 + $0x540] sm:$0xff]
        %v2856 = vld [vmem:[%s326 + $0x548] sm:$0xff]
        %v2857 = vld [vmem:[%s326 + $0x550] sm:$0xff]
        %v2858 = vld [vmem:[%s326 + $0x558] sm:$0xff]
        %v2859 = vld [vmem:[%s326 + $0x560] sm:$0xff]
        %v2860 = vld [vmem:[%s326 + $0x568] sm:$0xff]
        %v2861 = vld [vmem:[%s326 + $0x570] sm:$0xff]
        %v2862 = vld [vmem:[%s326 + $0x578] sm:$0xff]
        %v2863 = vld [vmem:[%s326 + $0x580] sm:$0xff]
        %v2864 = vld [vmem:[%s326 + $0x588] sm:$0xff]
        %v2865 = vld [vmem:[%s326 + $0x590] sm:$0xff]
        %v2866 = vld [vmem:[%s326 + $0x598] sm:$0xff]
        %v2867 = vld [vmem:[%s326 + $0x5a0] sm:$0xff]
        %v2868 = vld [vmem:[%s326 + $0x5a8] sm:$0xff]
        %v2869 = vld [vmem:[%s326 + $0x5b0] sm:$0xff]
        %v2870 = vld [vmem:[%s326 + $0x5b8] sm:$0xff]
        %v2871 = vld [vmem:[%s326 + $0x5c0] sm:$0xff]
        %v2872 = vld [vmem:[%s326 + $0x5c8] sm:$0xff]
        %v2873 = vld [vmem:[%s326 + $0x5d0] sm:$0xff]
        %v2874 = vld [vmem:[%s326 + $0x5d8] sm:$0xff]
        %v2875 = vld [vmem:[%s326 + $0x5e0] sm:$0xff]
        %v2876 = vld [vmem:[%s326 + $0x5e8] sm:$0xff]
        %v2877 = vld [vmem:[%s326 + $0x5f0] sm:$0xff]
        %v2878 = vld [vmem:[%s326 + $0x5f8] sm:$0xff]
        %v2879 = vld [vmem:[%s326 + $0x600] sm:$0xff]
        %v2880 = vld [vmem:[%s326 + $0x608] sm:$0xff]
        %v2881 = vld [vmem:[%s326 + $0x610] sm:$0xff]
        %v2882 = vld [vmem:[%s326 + $0x618] sm:$0xff]
        %v2883 = vld [vmem:[%s326 + $0x620] sm:$0xff]
        %v2884 = vld [vmem:[%s326 + $0x628] sm:$0xff]
        %v2885 = vld [vmem:[%s326 + $0x630] sm:$0xff]
        %v2886 = vld [vmem:[%s326 + $0x638] sm:$0xff]
        %v2887 = vld [vmem:[%s326 + $0x640] sm:$0xff]
        %v2888 = vld [vmem:[%s326 + $0x648] sm:$0xff]
        %v2889 = vld [vmem:[%s326 + $0x650] sm:$0xff]
        %v2890 = vld [vmem:[%s326 + $0x658] sm:$0xff]
        %v2891 = vld [vmem:[%s326 + $0x660] sm:$0xff]
        %v2892 = vld [vmem:[%s326 + $0x668] sm:$0xff]
        %v2893 = vld [vmem:[%s326 + $0x670] sm:$0xff]
        %v2894 = vld [vmem:[%s326 + $0x678] sm:$0xff]
        %v2895 = vld [vmem:[%s326 + $0x680] sm:$0xff]
        %v2896 = vld [vmem:[%s326 + $0x688] sm:$0xff]
        %v2897 = vld [vmem:[%s326 + $0x690] sm:$0xff]
        %v2898 = vld [vmem:[%s326 + $0x698] sm:$0xff]
        %v2899 = vld [vmem:[%s326 + $0x6a0] sm:$0xff]
        %v2900 = vld [vmem:[%s326 + $0x6a8] sm:$0xff]
        %v2901 = vld [vmem:[%s326 + $0x6b0] sm:$0xff]
        %v2902 = vld [vmem:[%s326 + $0x6b8] sm:$0xff]
        %v2903 = vld [vmem:[%s326 + $0x6c0] sm:$0xff]
        %v2904 = vld [vmem:[%s326 + $0x6c8] sm:$0xff]
        %v2905 = vld [vmem:[%s326 + $0x6d0] sm:$0xff]
        %v2906 = vld [vmem:[%s326 + $0x6d8] sm:$0xff]
        %v2907 = vld [vmem:[%s326 + $0x6e0] sm:$0xff]
        %v2908 = vld [vmem:[%s326 + $0x6e8] sm:$0xff]
        %v2909 = vld [vmem:[%s326 + $0x6f0] sm:$0xff]
        %v2910 = vld [vmem:[%s326 + $0x6f8] sm:$0xff]
        %v2911 = vld [vmem:[%s326 + $0x700] sm:$0xff]
        %v2912 = vld [vmem:[%s326 + $0x708] sm:$0xff]
        %v2913 = vld [vmem:[%s326 + $0x710] sm:$0xff]
        %v2914 = vld [vmem:[%s326 + $0x718] sm:$0xff]
        %v2915 = vld [vmem:[%s326 + $0x720] sm:$0xff]
        %v2916 = vld [vmem:[%s326 + $0x728] sm:$0xff]
        %v2917 = vld [vmem:[%s326 + $0x730] sm:$0xff]
        %v2918 = vld [vmem:[%s326 + $0x738] sm:$0xff]
        %v2919 = vld [vmem:[%s326 + $0x740] sm:$0xff]
        %v2920 = vld [vmem:[%s326 + $0x748] sm:$0xff]
        %v2921 = vld [vmem:[%s326 + $0x750] sm:$0xff]
        %v2922 = vld [vmem:[%s326 + $0x758] sm:$0xff]
        %v2923 = vld [vmem:[%s326 + $0x760] sm:$0xff]
        %v2924 = vld [vmem:[%s326 + $0x768] sm:$0xff]
        %v2925 = vld [vmem:[%s326 + $0x770] sm:$0xff]
        %v2926 = vld [vmem:[%s326 + $0x778] sm:$0xff]
        %v2927 = vld [vmem:[%s326 + $0x780] sm:$0xff]
        %v2928 = vld [vmem:[%s326 + $0x788] sm:$0xff]
        %v2929 = vld [vmem:[%s326 + $0x790] sm:$0xff]
        %v2930 = vld [vmem:[%s326 + $0x798] sm:$0xff]
        %v2931 = vld [vmem:[%s326 + $0x7a0] sm:$0xff]
        %v2932 = vld [vmem:[%s326 + $0x7a8] sm:$0xff]
        %v2933 = vld [vmem:[%s326 + $0x7b0] sm:$0xff]
        %v2934 = vld [vmem:[%s326 + $0x7b8] sm:$0xff]
        %v2935 = vld [vmem:[%s326 + $0x7c0] sm:$0xff]
        %v2936 = vld [vmem:[%s326 + $0x7c8] sm:$0xff]
        %v2937 = vld [vmem:[%s326 + $0x7d0] sm:$0xff]
        %v2938 = vld [vmem:[%s326 + $0x7d8] sm:$0xff]
        %v2939 = vld [vmem:[%s326 + $0x7e0] sm:$0xff]
        %v2940 = vld [vmem:[%s326 + $0x7e8] sm:$0xff]
        %v2941 = vld [vmem:[%s326 + $0x7f0] sm:$0xff]
        %v2942 = vld [vmem:[%s326 + $0x7f8] sm:$0xff]
        %v2959 = vcombine.high %v2670, %v2670
        %v2961 = vunpack.c.l.s4 1983009808
        %v2962 = vunpack.c.0.s8 %v2961
        %v2963 = vlaneseq
        %v2964 = vshrl.u32 %v2963, 7
        %v2965 = vsub.s32 %v2962, %v2964
        %v2966 = vrot.slane %v2670, %v2965
        %v2968 = vunpack.c.l.s4 1983009808
        %v2969 = vunpack.c.0.s8 %v2968
        %v2970 = vlaneseq
        %v2971 = vshrl.u32 %v2970, 7
        %v2972 = vsub.s32 %v2969, %v2971
        %v2973 = vrot.slane %v2959, %v2972
        %v2974 = vcombine.high %v2966, %v2966
        %v2975 = vcombine.high %v2973, %v2973
        %v2976 = vcombine.high %v2671, %v2671
        %v2978 = vunpack.c.l.s4 1983009808
        %v2979 = vunpack.c.0.s8 %v2978
        %v2980 = vlaneseq
        %v2981 = vshrl.u32 %v2980, 7
        %v2982 = vsub.s32 %v2979, %v2981
        %v2983 = vrot.slane %v2671, %v2982
        %v2985 = vunpack.c.l.s4 1983009808
        %v2986 = vunpack.c.0.s8 %v2985
        %v2987 = vlaneseq
        %v2988 = vshrl.u32 %v2987, 7
        %v2989 = vsub.s32 %v2986, %v2988
        %v2990 = vrot.slane %v2976, %v2989
        %v2991 = vcombine.high %v2983, %v2983
        %v2992 = vcombine.high %v2990, %v2990
        %v2993 = vcombine.high %v2672, %v2672
        %v2995 = vunpack.c.l.s4 1983009808
        %v2996 = vunpack.c.0.s8 %v2995
        %v2997 = vlaneseq
        %v2998 = vshrl.u32 %v2997, 7
        %v2999 = vsub.s32 %v2996, %v2998
        %v3000 = vrot.slane %v2672, %v2999
        %v3002 = vunpack.c.l.s4 1983009808
        %v3003 = vunpack.c.0.s8 %v3002
        %v3004 = vlaneseq
        %v3005 = vshrl.u32 %v3004, 7
        %v3006 = vsub.s32 %v3003, %v3005
        %v3007 = vrot.slane %v2993, %v3006
        %v3008 = vcombine.high %v3000, %v3000
        %v3009 = vcombine.high %v3007, %v3007
        %v3010 = vcombine.high %v2673, %v2673
        %v3012 = vunpack.c.l.s4 1983009808
        %v3013 = vunpack.c.0.s8 %v3012
        %v3014 = vlaneseq
        %v3015 = vshrl.u32 %v3014, 7
        %v3016 = vsub.s32 %v3013, %v3015
        %v3017 = vrot.slane %v2673, %v3016
        %v3019 = vunpack.c.l.s4 1983009808
        %v3020 = vunpack.c.0.s8 %v3019
        %v3021 = vlaneseq
        %v3022 = vshrl.u32 %v3021, 7
        %v3023 = vsub.s32 %v3020, %v3022
        %v3024 = vrot.slane %v3010, %v3023
        %v3025 = vcombine.high %v3017, %v3017
        %v3026 = vcombine.high %v3024, %v3024
        %v3027 = vcombine.high %v2674, %v2674
        %v3029 = vunpack.c.l.s4 1983009808
        %v3030 = vunpack.c.0.s8 %v3029
        %v3031 = vlaneseq
        %v3032 = vshrl.u32 %v3031, 7
        %v3033 = vsub.s32 %v3030, %v3032
        %v3034 = vrot.slane %v2674, %v3033
        %v3036 = vunpack.c.l.s4 1983009808
        %v3037 = vunpack.c.0.s8 %v3036
        %v3038 = vlaneseq
        %v3039 = vshrl.u32 %v3038, 7
        %v3040 = vsub.s32 %v3037, %v3039
        %v3041 = vrot.slane %v3027, %v3040
        %v3042 = vcombine.high %v3034, %v3034
        %v3043 = vcombine.high %v3041, %v3041
        %v3044 = vcombine.high %v2675, %v2675
        %v3046 = vunpack.c.l.s4 1983009808
        %v3047 = vunpack.c.0.s8 %v3046
        %v3048 = vlaneseq
        %v3049 = vshrl.u32 %v3048, 7
        %v3050 = vsub.s32 %v3047, %v3049
        %v3051 = vrot.slane %v2675, %v3050
        %v3053 = vunpack.c.l.s4 1983009808
        %v3054 = vunpack.c.0.s8 %v3053
        %v3055 = vlaneseq
        %v3056 = vshrl.u32 %v3055, 7
        %v3057 = vsub.s32 %v3054, %v3056
        %v3058 = vrot.slane %v3044, %v3057
        %v3059 = vcombine.high %v3051, %v3051
        %v3060 = vcombine.high %v3058, %v3058
        %v3061 = vcombine.high %v2676, %v2676
        %v3063 = vunpack.c.l.s4 1983009808
        %v3064 = vunpack.c.0.s8 %v3063
        %v3065 = vlaneseq
        %v3066 = vshrl.u32 %v3065, 7
        %v3067 = vsub.s32 %v3064, %v3066
        %v3068 = vrot.slane %v2676, %v3067
        %v3070 = vunpack.c.l.s4 1983009808
        %v3071 = vunpack.c.0.s8 %v3070
        %v3072 = vlaneseq
        %v3073 = vshrl.u32 %v3072, 7
        %v3074 = vsub.s32 %v3071, %v3073
        %v3075 = vrot.slane %v3061, %v3074
        %v3076 = vcombine.high %v3068, %v3068
        %v3077 = vcombine.high %v3075, %v3075
        %v3078 = vcombine.high %v2677, %v2677
        %v3080 = vunpack.c.l.s4 1983009808
        %v3081 = vunpack.c.0.s8 %v3080
        %v3082 = vlaneseq
        %v3083 = vshrl.u32 %v3082, 7
        %v3084 = vsub.s32 %v3081, %v3083
        %v3085 = vrot.slane %v2677, %v3084
        %v3087 = vunpack.c.l.s4 1983009808
        %v3088 = vunpack.c.0.s8 %v3087
        %v3089 = vlaneseq
        %v3090 = vshrl.u32 %v3089, 7
        %v3091 = vsub.s32 %v3088, %v3090
        %v3092 = vrot.slane %v3078, %v3091
        %v3093 = vcombine.high %v3085, %v3085
        %v3094 = vcombine.high %v3092, %v3092
        %v3095 = vcombine.high %v2678, %v2678
        %v3097 = vunpack.c.l.s4 1983009808
        %v3098 = vunpack.c.0.s8 %v3097
        %v3099 = vlaneseq
        %v3100 = vshrl.u32 %v3099, 7
        %v3101 = vsub.s32 %v3098, %v3100
        %v3102 = vrot.slane %v2678, %v3101
        %v3104 = vunpack.c.l.s4 1983009808
        %v3105 = vunpack.c.0.s8 %v3104
        %v3106 = vlaneseq
        %v3107 = vshrl.u32 %v3106, 7
        %v3108 = vsub.s32 %v3105, %v3107
        %v3109 = vrot.slane %v3095, %v3108
        %v3110 = vcombine.high %v3102, %v3102
        %v3111 = vcombine.high %v3109, %v3109
        %v3112 = vcombine.high %v2679, %v2679
        %v3114 = vunpack.c.l.s4 1983009808
        %v3115 = vunpack.c.0.s8 %v3114
        %v3116 = vlaneseq
        %v3117 = vshrl.u32 %v3116, 7
        %v3118 = vsub.s32 %v3115, %v3117
        %v3119 = vrot.slane %v2679, %v3118
        %v3121 = vunpack.c.l.s4 1983009808
        %v3122 = vunpack.c.0.s8 %v3121
        %v3123 = vlaneseq
        %v3124 = vshrl.u32 %v3123, 7
        %v3125 = vsub.s32 %v3122, %v3124
        %v3126 = vrot.slane %v3112, %v3125
        %v3127 = vcombine.high %v3119, %v3119
        %v3128 = vcombine.high %v3126, %v3126
        %v3129 = vcombine.high %v2680, %v2680
        %v3131 = vunpack.c.l.s4 1983009808
        %v3132 = vunpack.c.0.s8 %v3131
        %v3133 = vlaneseq
        %v3134 = vshrl.u32 %v3133, 7
        %v3135 = vsub.s32 %v3132, %v3134
        %v3136 = vrot.slane %v2680, %v3135
        %v3138 = vunpack.c.l.s4 1983009808
        %v3139 = vunpack.c.0.s8 %v3138
        %v3140 = vlaneseq
        %v3141 = vshrl.u32 %v3140, 7
        %v3142 = vsub.s32 %v3139, %v3141
        %v3143 = vrot.slane %v3129, %v3142
        %v3144 = vcombine.high %v3136, %v3136
        %v3145 = vcombine.high %v3143, %v3143
        %v3146 = vcombine.high %v2681, %v2681
        %v3148 = vunpack.c.l.s4 1983009808
        %v3149 = vunpack.c.0.s8 %v3148
        %v3150 = vlaneseq
        %v3151 = vshrl.u32 %v3150, 7
        %v3152 = vsub.s32 %v3149, %v3151
        %v3153 = vrot.slane %v2681, %v3152
        %v3155 = vunpack.c.l.s4 1983009808
        %v3156 = vunpack.c.0.s8 %v3155
        %v3157 = vlaneseq
        %v3158 = vshrl.u32 %v3157, 7
        %v3159 = vsub.s32 %v3156, %v3158
        %v3160 = vrot.slane %v3146, %v3159
        %v3161 = vcombine.high %v3153, %v3153
        %v3162 = vcombine.high %v3160, %v3160
        %v3163 = vcombine.high %v2682, %v2682
        %v3165 = vunpack.c.l.s4 1983009808
        %v3166 = vunpack.c.0.s8 %v3165
        %v3167 = vlaneseq
        %v3168 = vshrl.u32 %v3167, 7
        %v3169 = vsub.s32 %v3166, %v3168
        %v3170 = vrot.slane %v2682, %v3169
        %v3172 = vunpack.c.l.s4 1983009808
        %v3173 = vunpack.c.0.s8 %v3172
        %v3174 = vlaneseq
        %v3175 = vshrl.u32 %v3174, 7
        %v3176 = vsub.s32 %v3173, %v3175
        %v3177 = vrot.slane %v3163, %v3176
        %v3178 = vcombine.high %v3170, %v3170
        %v3179 = vcombine.high %v3177, %v3177
        %v3180 = vcombine.high %v2683, %v2683
        %v3182 = vunpack.c.l.s4 1983009808
        %v3183 = vunpack.c.0.s8 %v3182
        %v3184 = vlaneseq
        %v3185 = vshrl.u32 %v3184, 7
        %v3186 = vsub.s32 %v3183, %v3185
        %v3187 = vrot.slane %v2683, %v3186
        %v3189 = vunpack.c.l.s4 1983009808
        %v3190 = vunpack.c.0.s8 %v3189
        %v3191 = vlaneseq
        %v3192 = vshrl.u32 %v3191, 7
        %v3193 = vsub.s32 %v3190, %v3192
        %v3194 = vrot.slane %v3180, %v3193
        %v3195 = vcombine.high %v3187, %v3187
        %v3196 = vcombine.high %v3194, %v3194
        %v3197 = vcombine.high %v2684, %v2684
        %v3199 = vunpack.c.l.s4 1983009808
        %v3200 = vunpack.c.0.s8 %v3199
        %v3201 = vlaneseq
        %v3202 = vshrl.u32 %v3201, 7
        %v3203 = vsub.s32 %v3200, %v3202
        %v3204 = vrot.slane %v2684, %v3203
        %v3206 = vunpack.c.l.s4 1983009808
        %v3207 = vunpack.c.0.s8 %v3206
        %v3208 = vlaneseq
        %v3209 = vshrl.u32 %v3208, 7
        %v3210 = vsub.s32 %v3207, %v3209
        %v3211 = vrot.slane %v3197, %v3210
        %v3212 = vcombine.high %v3204, %v3204
        %v3213 = vcombine.high %v3211, %v3211
        %v3214 = vcombine.high %v2685, %v2685
        %v3216 = vunpack.c.l.s4 1983009808
        %v3217 = vunpack.c.0.s8 %v3216
        %v3218 = vlaneseq
        %v3219 = vshrl.u32 %v3218, 7
        %v3220 = vsub.s32 %v3217, %v3219
        %v3221 = vrot.slane %v2685, %v3220
        %v3223 = vunpack.c.l.s4 1983009808
        %v3224 = vunpack.c.0.s8 %v3223
        %v3225 = vlaneseq
        %v3226 = vshrl.u32 %v3225, 7
        %v3227 = vsub.s32 %v3224, %v3226
        %v3228 = vrot.slane %v3214, %v3227
        %v3229 = vcombine.high %v3221, %v3221
        %v3230 = vcombine.high %v3228, %v3228
        %3295 = vmatprep.subr.mxu0 %v2688
        %3296 = vmatpush1.xpose.msra.mxu0 %v2687
        %3297 = vmatprep.subr.mxu0 %v2752
        %3298 = vmatpush1.xpose.msra.mxu0 %v2751
        %3299 = vmatprep.subr.mxu0 %v2816
        %3300 = vmatpush1.xpose.msra.mxu0 %v2815
        %3301 = vmatprep.subr.mxu0 %v2880
        %3302 = vmatpush1.xpose.msra.mxu0 %v2879
        %3303 = vmatprep.subr.mxu0 0.0
        %3304 = vmatpush1.xpose.msra.mxu0 0.0
        %3305 = vmatprep.subr.mxu0 0.0
        %3306 = vmatpush1.xpose.msra.mxu0 0.0
        %3307 = vmatprep.subr.mxu0 0.0
        %3308 = vmatpush1.xpose.msra.mxu0 0.0
        %3309 = vmatprep.subr.mxu0 0.0
        %3310 = vmatpush1.xpose.msra.mxu0 0.0
        %3311 = vmatprep.subr.mxu0 0.0
        %3312 = vmatpush1.xpose.msra.mxu0 0.0
        %3313 = vmatprep.subr.mxu0 0.0
        %3314 = vmatpush1.xpose.msra.mxu0 0.0
        %3315 = vmatprep.subr.mxu0 0.0
        %3316 = vmatpush1.xpose.msra.mxu0 0.0
        %3317 = vmatprep.subr.mxu0 0.0
        %3318 = vmatpush1.xpose.msra.mxu0 0.0
        %3319 = vmatprep.subr.mxu0 0.0
        %3320 = vmatpush1.xpose.msra.mxu0 0.0
        %3321 = vmatprep.subr.mxu0 0.0
        %3322 = vmatpush1.xpose.msra.mxu0 0.0
        %3323 = vmatprep.subr.mxu0 0.0
        %3324 = vmatpush1.xpose.msra.mxu0 0.0
        %3325 = vmatprep.subr.mxu0 0.0
        %3326 = vmatpush1.xpose.msra.mxu0 0.0
        %3327 = vmatprep.subr.mxu0 0.0
        %3328 = vmatpush1.xpose.msra.mxu0 0.0
        %3329 = vmatprep.subr.mxu0 0.0
        %3330 = vmatpush1.xpose.msra.mxu0 0.0
        %3331 = vmatprep.subr.mxu0 0.0
        %3332 = vmatpush1.xpose.msra.mxu0 0.0
        %3333 = vmatprep.subr.mxu0 0.0
        %3334 = vmatpush1.xpose.msra.mxu0 0.0
        %3335 = vmatprep.subr.mxu0 0.0
        %3336 = vmatpush1.xpose.msra.mxu0 0.0
        %3337 = vmatprep.subr.mxu0 0.0
        %3338 = vmatpush1.xpose.msra.mxu0 0.0
        %3339 = vmatprep.subr.mxu0 0.0
        %3340 = vmatpush1.xpose.msra.mxu0 0.0
        %3341 = vmatprep.subr.mxu0 0.0
        %3342 = vmatpush1.xpose.msra.mxu0 0.0
        %3343 = vmatprep.subr.mxu0 0.0
        %3344 = vmatpush1.xpose.msra.mxu0 0.0
        %3345 = vmatprep.subr.mxu0 0.0
        %3346 = vmatpush1.xpose.msra.mxu0 0.0
        %3347 = vmatprep.subr.mxu0 0.0
        %3348 = vmatpush1.xpose.msra.mxu0 0.0
        %3349 = vmatprep.subr.mxu0 0.0
        %3350 = vmatpush1.xpose.msra.mxu0 0.0
        %3351 = vmatprep.subr.mxu0 0.0
        %3352 = vmatpush1.xpose.msra.mxu0 0.0
        %3353 = vmatprep.subr.mxu0 0.0
        %3354 = vmatpush1.xpose.msra.mxu0 0.0
        %3355 = vmatprep.subr.mxu0 0.0
        %3356 = vmatpush1.xpose.msra.mxu0 0.0
        %3357 = vmatprep.subr.mxu0 0.0
        %3358 = vmatpush1.xpose.msra.mxu0 0.0
        %3359 = vmatprep.mubr.f32.mxu0 %v2974
        %3360 = vmatmul.mubr.f32.gmra.mrb[0].mxu0 %v2966
        %v3361 = vpop.f32.mrb[0].mxu0
        %v3362 = vadd.f32 0.0, %v3361
        %v3363 = vpop.f32.mrb[0].mxu0
        %3364 = vdwg.mxu0
        %3365 = vmatprep.subr.mxu0 %v2690
        %3366 = vmatpush1.xpose.msra.mxu0 %v2689
        %3367 = vmatprep.subr.mxu0 %v2754
        %3368 = vmatpush1.xpose.msra.mxu0 %v2753
        %3369 = vmatprep.subr.mxu0 %v2818
        %3370 = vmatpush1.xpose.msra.mxu0 %v2817
        %3371 = vmatprep.subr.mxu0 %v2882
        %3372 = vmatpush1.xpose.msra.mxu0 %v2881
        %3373 = vmatprep.subr.mxu0 0.0
        %3374 = vmatpush1.xpose.msra.mxu0 0.0
        %3375 = vmatprep.subr.mxu0 0.0
        %3376 = vmatpush1.xpose.msra.mxu0 0.0
        %3377 = vmatprep.subr.mxu0 0.0
        %3378 = vmatpush1.xpose.msra.mxu0 0.0
        %3379 = vmatprep.subr.mxu0 0.0
        %3380 = vmatpush1.xpose.msra.mxu0 0.0
        %3381 = vmatprep.subr.mxu0 0.0
        %3382 = vmatpush1.xpose.msra.mxu0 0.0
        %3383 = vmatprep.subr.mxu0 0.0
        %3384 = vmatpush1.xpose.msra.mxu0 0.0
        %3385 = vmatprep.subr.mxu0 0.0
        %3386 = vmatpush1.xpose.msra.mxu0 0.0
        %3387 = vmatprep.subr.mxu0 0.0
        %3388 = vmatpush1.xpose.msra.mxu0 0.0
        %3389 = vmatprep.subr.mxu0 0.0
        %3390 = vmatpush1.xpose.msra.mxu0 0.0
        %3391 = vmatprep.subr.mxu0 0.0
        %3392 = vmatpush1.xpose.msra.mxu0 0.0
        %3393 = vmatprep.subr.mxu0 0.0
        %3394 = vmatpush1.xpose.msra.mxu0 0.0
        %3395 = vmatprep.subr.mxu0 0.0
        %3396 = vmatpush1.xpose.msra.mxu0 0.0
        %3397 = vmatprep.subr.mxu0 0.0
        %3398 = vmatpush1.xpose.msra.mxu0 0.0
        %3399 = vmatprep.subr.mxu0 0.0
        %3400 = vmatpush1.xpose.msra.mxu0 0.0
        %3401 = vmatprep.subr.mxu0 0.0
        %3402 = vmatpush1.xpose.msra.mxu0 0.0
        %3403 = vmatprep.subr.mxu0 0.0
        %3404 = vmatpush1.xpose.msra.mxu0 0.0
        %3405 = vmatprep.subr.mxu0 0.0
        %3406 = vmatpush1.xpose.msra.mxu0 0.0
        %3407 = vmatprep.subr.mxu0 0.0
        %3408 = vmatpush1.xpose.msra.mxu0 0.0
        %3409 = vmatprep.subr.mxu0 0.0
        %3410 = vmatpush1.xpose.msra.mxu0 0.0
        %3411 = vmatprep.subr.mxu0 0.0
        %3412 = vmatpush1.xpose.msra.mxu0 0.0
        %3413 = vmatprep.subr.mxu0 0.0
        %3414 = vmatpush1.xpose.msra.mxu0 0.0
        %3415 = vmatprep.subr.mxu0 0.0
        %3416 = vmatpush1.xpose.msra.mxu0 0.0
        %3417 = vmatprep.subr.mxu0 0.0
        %3418 = vmatpush1.xpose.msra.mxu0 0.0
        %3419 = vmatprep.subr.mxu0 0.0
        %3420 = vmatpush1.xpose.msra.mxu0 0.0
        %3421 = vmatprep.subr.mxu0 0.0
        %3422 = vmatpush1.xpose.msra.mxu0 0.0
        %3423 = vmatprep.subr.mxu0 0.0
        %3424 = vmatpush1.xpose.msra.mxu0 0.0
        %3425 = vmatprep.subr.mxu0 0.0
        %3426 = vmatpush1.xpose.msra.mxu0 0.0
        %3427 = vmatprep.subr.mxu0 0.0
        %3428 = vmatpush1.xpose.msra.mxu0 0.0
        %3429 = vmatprep.mubr.f32.mxu0 %v2975
        %3430 = vmatmul.mubr.f32.gmra.mrb[0].mxu0 %v2973
        %v3431 = vpop.f32.mrb[0].mxu0
        %v3432 = vadd.f32 %v3362, %v3431
        %v3433 = vpop.f32.mrb[0].mxu0
        %3434 = vdwg.mxu0
        %3435 = vmatprep.subr.mxu0 %v2692
        %3436 = vmatpush1.xpose.msra.mxu0 %v2691
        %3437 = vmatprep.subr.mxu0 %v2756
        %3438 = vmatpush1.xpose.msra.mxu0 %v2755
        %3439 = vmatprep.subr.mxu0 %v2820
        %3440 = vmatpush1.xpose.msra.mxu0 %v2819
        %3441 = vmatprep.subr.mxu0 %v2884
        %3442 = vmatpush1.xpose.msra.mxu0 %v2883
        %3443 = vmatprep.subr.mxu0 0.0
        %3444 = vmatpush1.xpose.msra.mxu0 0.0
        %3445 = vmatprep.subr.mxu0 0.0
        %3446 = vmatpush1.xpose.msra.mxu0 0.0
        %3447 = vmatprep.subr.mxu0 0.0
        %3448 = vmatpush1.xpose.msra.mxu0 0.0
        %3449 = vmatprep.subr.mxu0 0.0
        %3450 = vmatpush1.xpose.msra.mxu0 0.0
        %3451 = vmatprep.subr.mxu0 0.0
        %3452 = vmatpush1.xpose.msra.mxu0 0.0
        %3453 = vmatprep.subr.mxu0 0.0
        %3454 = vmatpush1.xpose.msra.mxu0 0.0
        %3455 = vmatprep.subr.mxu0 0.0
        %3456 = vmatpush1.xpose.msra.mxu0 0.0
        %3457 = vmatprep.subr.mxu0 0.0
        %3458 = vmatpush1.xpose.msra.mxu0 0.0
        %3459 = vmatprep.subr.mxu0 0.0
        %3460 = vmatpush1.xpose.msra.mxu0 0.0
        %3461 = vmatprep.subr.mxu0 0.0
        %3462 = vmatpush1.xpose.msra.mxu0 0.0
        %3463 = vmatprep.subr.mxu0 0.0
        %3464 = vmatpush1.xpose.msra.mxu0 0.0
        %3465 = vmatprep.subr.mxu0 0.0
        %3466 = vmatpush1.xpose.msra.mxu0 0.0
        %3467 = vmatprep.subr.mxu0 0.0
        %3468 = vmatpush1.xpose.msra.mxu0 0.0
        %3469 = vmatprep.subr.mxu0 0.0
        %3470 = vmatpush1.xpose.msra.mxu0 0.0
        %3471 = vmatprep.subr.mxu0 0.0
        %3472 = vmatpush1.xpose.msra.mxu0 0.0
        %3473 = vmatprep.subr.mxu0 0.0
        %3474 = vmatpush1.xpose.msra.mxu0 0.0
        %3475 = vmatprep.subr.mxu0 0.0
        %3476 = vmatpush1.xpose.msra.mxu0 0.0
        %3477 = vmatprep.subr.mxu0 0.0
        %3478 = vmatpush1.xpose.msra.mxu0 0.0
        %3479 = vmatprep.subr.mxu0 0.0
        %3480 = vmatpush1.xpose.msra.mxu0 0.0
        %3481 = vmatprep.subr.mxu0 0.0
        %3482 = vmatpush1.xpose.msra.mxu0 0.0
        %3483 = vmatprep.subr.mxu0 0.0
        %3484 = vmatpush1.xpose.msra.mxu0 0.0
        %3485 = vmatprep.subr.mxu0 0.0
        %3486 = vmatpush1.xpose.msra.mxu0 0.0
        %3487 = vmatprep.subr.mxu0 0.0
        %3488 = vmatpush1.xpose.msra.mxu0 0.0
        %3489 = vmatprep.subr.mxu0 0.0
        %3490 = vmatpush1.xpose.msra.mxu0 0.0
        %3491 = vmatprep.subr.mxu0 0.0
        %3492 = vmatpush1.xpose.msra.mxu0 0.0
        %3493 = vmatprep.subr.mxu0 0.0
        %3494 = vmatpush1.xpose.msra.mxu0 0.0
        %3495 = vmatprep.subr.mxu0 0.0
        %3496 = vmatpush1.xpose.msra.mxu0 0.0
        %3497 = vmatprep.subr.mxu0 0.0
        %3498 = vmatpush1.xpose.msra.mxu0 0.0
        %3499 = vmatprep.mubr.f32.mxu0 %v2991
        %3500 = vmatmul.mubr.f32.gmra.mrb[0].mxu0 %v2983
        %v3501 = vpop.f32.mrb[0].mxu0
        %v3502 = vadd.f32 %v3432, %v3501
        %v3503 = vpop.f32.mrb[0].mxu0
        %3504 = vdwg.mxu0
        %3505 = vmatprep.subr.mxu0 %v2694
        %3506 = vmatpush1.xpose.msra.mxu0 %v2693
        %3507 = vmatprep.subr.mxu0 %v2758
        %3508 = vmatpush1.xpose.msra.mxu0 %v2757
        %3509 = vmatprep.subr.mxu0 %v2822
        %3510 = vmatpush1.xpose.msra.mxu0 %v2821
        %3511 = vmatprep.subr.mxu0 %v2886
        %3512 = vmatpush1.xpose.msra.mxu0 %v2885
        %3513 = vmatprep.subr.mxu0 0.0
        %3514 = vmatpush1.xpose.msra.mxu0 0.0
        %3515 = vmatprep.subr.mxu0 0.0
        %3516 = vmatpush1.xpose.msra.mxu0 0.0
        %3517 = vmatprep.subr.mxu0 0.0
        %3518 = vmatpush1.xpose.msra.mxu0 0.0
        %3519 = vmatprep.subr.mxu0 0.0
        %3520 = vmatpush1.xpose.msra.mxu0 0.0
        %3521 = vmatprep.subr.mxu0 0.0
        %3522 = vmatpush1.xpose.msra.mxu0 0.0
        %3523 = vmatprep.subr.mxu0 0.0
        %3524 = vmatpush1.xpose.msra.mxu0 0.0
        %3525 = vmatprep.subr.mxu0 0.0
        %3526 = vmatpush1.xpose.msra.mxu0 0.0
        %3527 = vmatprep.subr.mxu0 0.0
        %3528 = vmatpush1.xpose.msra.mxu0 0.0
        %3529 = vmatprep.subr.mxu0 0.0
        %3530 = vmatpush1.xpose.msra.mxu0 0.0
        %3531 = vmatprep.subr.mxu0 0.0
        %3532 = vmatpush1.xpose.msra.mxu0 0.0
        %3533 = vmatprep.subr.mxu0 0.0
        %3534 = vmatpush1.xpose.msra.mxu0 0.0
        %3535 = vmatprep.subr.mxu0 0.0
        %3536 = vmatpush1.xpose.msra.mxu0 0.0
        %3537 = vmatprep.subr.mxu0 0.0
        %3538 = vmatpush1.xpose.msra.mxu0 0.0
        %3539 = vmatprep.subr.mxu0 0.0
        %3540 = vmatpush1.xpose.msra.mxu0 0.0
        %3541 = vmatprep.subr.mxu0 0.0
        %3542 = vmatpush1.xpose.msra.mxu0 0.0
        %3543 = vmatprep.subr.mxu0 0.0
        %3544 = vmatpush1.xpose.msra.mxu0 0.0
        %3545 = vmatprep.subr.mxu0 0.0
        %3546 = vmatpush1.xpose.msra.mxu0 0.0
        %3547 = vmatprep.subr.mxu0 0.0
        %3548 = vmatpush1.xpose.msra.mxu0 0.0
        %3549 = vmatprep.subr.mxu0 0.0
        %3550 = vmatpush1.xpose.msra.mxu0 0.0
        %3551 = vmatprep.subr.mxu0 0.0
        %3552 = vmatpush1.xpose.msra.mxu0 0.0
        %3553 = vmatprep.subr.mxu0 0.0
        %3554 = vmatpush1.xpose.msra.mxu0 0.0
        %3555 = vmatprep.subr.mxu0 0.0
        %3556 = vmatpush1.xpose.msra.mxu0 0.0
        %3557 = vmatprep.subr.mxu0 0.0
        %3558 = vmatpush1.xpose.msra.mxu0 0.0
        %3559 = vmatprep.subr.mxu0 0.0
        %3560 = vmatpush1.xpose.msra.mxu0 0.0
        %3561 = vmatprep.subr.mxu0 0.0
        %3562 = vmatpush1.xpose.msra.mxu0 0.0
        %3563 = vmatprep.subr.mxu0 0.0
        %3564 = vmatpush1.xpose.msra.mxu0 0.0
        %3565 = vmatprep.subr.mxu0 0.0
        %3566 = vmatpush1.xpose.msra.mxu0 0.0
        %3567 = vmatprep.subr.mxu0 0.0
        %3568 = vmatpush1.xpose.msra.mxu0 0.0
        %3569 = vmatprep.mubr.f32.mxu0 %v2992
        %3570 = vmatmul.mubr.f32.gmra.mrb[0].mxu0 %v2990
        %v3571 = vpop.f32.mrb[0].mxu0
        %v3572 = vadd.f32 %v3502, %v3571
        %v3573 = vpop.f32.mrb[0].mxu0
        %3574 = vdwg.mxu0
        %3575 = vmatprep.subr.mxu0 %v2696
        %3576 = vmatpush1.xpose.msra.mxu0 %v2695
        %3577 = vmatprep.subr.mxu0 %v2760
        %3578 = vmatpush1.xpose.msra.mxu0 %v2759
        %3579 = vmatprep.subr.mxu0 %v2824
        %3580 = vmatpush1.xpose.msra.mxu0 %v2823
        %3581 = vmatprep.subr.mxu0 %v2888
        %3582 = vmatpush1.xpose.msra.mxu0 %v2887
        %3583 = vmatprep.subr.mxu0 0.0
        %3584 = vmatpush1.xpose.msra.mxu0 0.0
        %3585 = vmatprep.subr.mxu0 0.0
        %3586 = vmatpush1.xpose.msra.mxu0 0.0
        %3587 = vmatprep.subr.mxu0 0.0
        %3588 = vmatpush1.xpose.msra.mxu0 0.0
        %3589 = vmatprep.subr.mxu0 0.0
        %3590 = vmatpush1.xpose.msra.mxu0 0.0
        %3591 = vmatprep.subr.mxu0 0.0
        %3592 = vmatpush1.xpose.msra.mxu0 0.0
        %3593 = vmatprep.subr.mxu0 0.0
        %3594 = vmatpush1.xpose.msra.mxu0 0.0
        %3595 = vmatprep.subr.mxu0 0.0
        %3596 = vmatpush1.xpose.msra.mxu0 0.0
        %3597 = vmatprep.subr.mxu0 0.0
        %3598 = vmatpush1.xpose.msra.mxu0 0.0
        %3599 = vmatprep.subr.mxu0 0.0
        %3600 = vmatpush1.xpose.msra.mxu0 0.0
        %3601 = vmatprep.subr.mxu0 0.0
        %3602 = vmatpush1.xpose.msra.mxu0 0.0
        %3603 = vmatprep.subr.mxu0 0.0
        %3604 = vmatpush1.xpose.msra.mxu0 0.0
        %3605 = vmatprep.subr.mxu0 0.0
        %3606 = vmatpush1.xpose.msra.mxu0 0.0
        %3607 = vmatprep.subr.mxu0 0.0
        %3608 = vmatpush1.xpose.msra.mxu0 0.0
        %3609 = vmatprep.subr.mxu0 0.0
        %3610 = vmatpush1.xpose.msra.mxu0 0.0
        %3611 = vmatprep.subr.mxu0 0.0
        %3612 = vmatpush1.xpose.msra.mxu0 0.0
        %3613 = vmatprep.subr.mxu0 0.0
        %3614 = vmatpush1.xpose.msra.mxu0 0.0
        %3615 = vmatprep.subr.mxu0 0.0
        %3616 = vmatpush1.xpose.msra.mxu0 0.0
        %3617 = vmatprep.subr.mxu0 0.0
        %3618 = vmatpush1.xpose.msra.mxu0 0.0
        %3619 = vmatprep.subr.mxu0 0.0
        %3620 = vmatpush1.xpose.msra.mxu0 0.0
        %3621 = vmatprep.subr.mxu0 0.0
        %3622 = vmatpush1.xpose.msra.mxu0 0.0
        %3623 = vmatprep.subr.mxu0 0.0
        %3624 = vmatpush1.xpose.msra.mxu0 0.0
        %3625 = vmatprep.subr.mxu0 0.0
        %3626 = vmatpush1.xpose.msra.mxu0 0.0
        %3627 = vmatprep.subr.mxu0 0.0
        %3628 = vmatpush1.xpose.msra.mxu0 0.0
        %3629 = vmatprep.subr.mxu0 0.0
        %3630 = vmatpush1.xpose.msra.mxu0 0.0
        %3631 = vmatprep.subr.mxu0 0.0
        %3632 = vmatpush1.xpose.msra.mxu0 0.0
        %3633 = vmatprep.subr.mxu0 0.0
        %3634 = vmatpush1.xpose.msra.mxu0 0.0
        %3635 = vmatprep.subr.mxu0 0.0
        %3636 = vmatpush1.xpose.msra.mxu0 0.0
        %3637 = vmatprep.subr.mxu0 0.0
        %3638 = vmatpush1.xpose.msra.mxu0 0.0
        %3639 = vmatprep.mubr.f32.mxu0 %v3008
        %3640 = vmatmul.mubr.f32.gmra.mrb[0].mxu0 %v3000
        %v3641 = vpop.f32.mrb[0].mxu0
        %v3642 = vadd.f32 %v3572, %v3641
        %v3643 = vpop.f32.mrb[0].mxu0
        %3644 = vdwg.mxu0
        %3645 = vmatprep.subr.mxu0 %v2698
        %3646 = vmatpush1.xpose.msra.mxu0 %v2697
        %3647 = vmatprep.subr.mxu0 %v2762
        %3648 = vmatpush1.xpose.msra.mxu0 %v2761
        %3649 = vmatprep.subr.mxu0 %v2826
        %3650 = vmatpush1.xpose.msra.mxu0 %v2825
        %3651 = vmatprep.subr.mxu0 %v2890
        %3652 = vmatpush1.xpose.msra.mxu0 %v2889
        %3653 = vmatprep.subr.mxu0 0.0
        %3654 = vmatpush1.xpose.msra.mxu0 0.0
        %3655 = vmatprep.subr.mxu0 0.0
        %3656 = vmatpush1.xpose.msra.mxu0 0.0
        %3657 = vmatprep.subr.mxu0 0.0
        %3658 = vmatpush1.xpose.msra.mxu0 0.0
        %3659 = vmatprep.subr.mxu0 0.0
        %3660 = vmatpush1.xpose.msra.mxu0 0.0
        %3661 = vmatprep.subr.mxu0 0.0
        %3662 = vmatpush1.xpose.msra.mxu0 0.0
        %3663 = vmatprep.subr.mxu0 0.0
        %3664 = vmatpush1.xpose.msra.mxu0 0.0
        %3665 = vmatprep.subr.mxu0 0.0
        %3666 = vmatpush1.xpose.msra.mxu0 0.0
        %3667 = vmatprep.subr.mxu0 0.0
        %3668 = vmatpush1.xpose.msra.mxu0 0.0
        %3669 = vmatprep.subr.mxu0 0.0
        %3670 = vmatpush1.xpose.msra.mxu0 0.0
        %3671 = vmatprep.subr.mxu0 0.0
        %3672 = vmatpush1.xpose.msra.mxu0 0.0
        %3673 = vmatprep.subr.mxu0 0.0
        %3674 = vmatpush1.xpose.msra.mxu0 0.0
        %3675 = vmatprep.subr.mxu0 0.0
        %3676 = vmatpush1.xpose.msra.mxu0 0.0
        %3677 = vmatprep.subr.mxu0 0.0
        %3678 = vmatpush1.xpose.msra.mxu0 0.0
        %3679 = vmatprep.subr.mxu0 0.0
        %3680 = vmatpush1.xpose.msra.mxu0 0.0
        %3681 = vmatprep.subr.mxu0 0.0
        %3682 = vmatpush1.xpose.msra.mxu0 0.0
        %3683 = vmatprep.subr.mxu0 0.0
        %3684 = vmatpush1.xpose.msra.mxu0 0.0
        %3685 = vmatprep.subr.mxu0 0.0
        %3686 = vmatpush1.xpose.msra.mxu0 0.0
        %3687 = vmatprep.subr.mxu0 0.0
        %3688 = vmatpush1.xpose.msra.mxu0 0.0
        %3689 = vmatprep.subr.mxu0 0.0
        %3690 = vmatpush1.xpose.msra.mxu0 0.0
        %3691 = vmatprep.subr.mxu0 0.0
        %3692 = vmatpush1.xpose.msra.mxu0 0.0
        %3693 = vmatprep.subr.mxu0 0.0
        %3694 = vmatpush1.xpose.msra.mxu0 0.0
        %3695 = vmatprep.subr.mxu0 0.0
        %3696 = vmatpush1.xpose.msra.mxu0 0.0
        %3697 = vmatprep.subr.mxu0 0.0
        %3698 = vmatpush1.xpose.msra.mxu0 0.0
        %3699 = vmatprep.subr.mxu0 0.0
        %3700 = vmatpush1.xpose.msra.mxu0 0.0
        %3701 = vmatprep.subr.mxu0 0.0
        %3702 = vmatpush1.xpose.msra.mxu0 0.0
        %3703 = vmatprep.subr.mxu0 0.0
        %3704 = vmatpush1.xpose.msra.mxu0 0.0
        %3705 = vmatprep.subr.mxu0 0.0
        %3706 = vmatpush1.xpose.msra.mxu0 0.0
        %3707 = vmatprep.subr.mxu0 0.0
        %3708 = vmatpush1.xpose.msra.mxu0 0.0
        %3709 = vmatprep.mubr.f32.mxu0 %v3009
        %3710 = vmatmul.mubr.f32.gmra.mrb[0].mxu0 %v3007
        %v3711 = vpop.f32.mrb[0].mxu0
        %v3712 = vadd.f32 %v3642, %v3711
        %v3713 = vpop.f32.mrb[0].mxu0
        %3714 = vdwg.mxu0
        %3715 = vmatprep.subr.mxu0 %v2700
        %3716 = vmatpush1.xpose.msra.mxu0 %v2699
        %3717 = vmatprep.subr.mxu0 %v2764
        %3718 = vmatpush1.xpose.msra.mxu0 %v2763
        %3719 = vmatprep.subr.mxu0 %v2828
        %3720 = vmatpush1.xpose.msra.mxu0 %v2827
        %3721 = vmatprep.subr.mxu0 %v2892
        %3722 = vmatpush1.xpose.msra.mxu0 %v2891
        %3723 = vmatprep.subr.mxu0 0.0
        %3724 = vmatpush1.xpose.msra.mxu0 0.0
        %3725 = vmatprep.subr.mxu0 0.0
        %3726 = vmatpush1.xpose.msra.mxu0 0.0
        %3727 = vmatprep.subr.mxu0 0.0
        %3728 = vmatpush1.xpose.msra.mxu0 0.0
        %3729 = vmatprep.subr.mxu0 0.0
        %3730 = vmatpush1.xpose.msra.mxu0 0.0
        %3731 = vmatprep.subr.mxu0 0.0
        %3732 = vmatpush1.xpose.msra.mxu0 0.0
        %3733 = vmatprep.subr.mxu0 0.0
        %3734 = vmatpush1.xpose.msra.mxu0 0.0
        %3735 = vmatprep.subr.mxu0 0.0
        %3736 = vmatpush1.xpose.msra.mxu0 0.0
        %3737 = vmatprep.subr.mxu0 0.0
        %3738 = vmatpush1.xpose.msra.mxu0 0.0
        %3739 = vmatprep.subr.mxu0 0.0
        %3740 = vmatpush1.xpose.msra.mxu0 0.0
        %3741 = vmatprep.subr.mxu0 0.0
        %3742 = vmatpush1.xpose.msra.mxu0 0.0
        %3743 = vmatprep.subr.mxu0 0.0
        %3744 = vmatpush1.xpose.msra.mxu0 0.0
        %3745 = vmatprep.subr.mxu0 0.0
        %3746 = vmatpush1.xpose.msra.mxu0 0.0
        %3747 = vmatprep.subr.mxu0 0.0
        %3748 = vmatpush1.xpose.msra.mxu0 0.0
        %3749 = vmatprep.subr.mxu0 0.0
        %3750 = vmatpush1.xpose.msra.mxu0 0.0
        %3751 = vmatprep.subr.mxu0 0.0
        %3752 = vmatpush1.xpose.msra.mxu0 0.0
        %3753 = vmatprep.subr.mxu0 0.0
        %3754 = vmatpush1.xpose.msra.mxu0 0.0
        %3755 = vmatprep.subr.mxu0 0.0
        %3756 = vmatpush1.xpose.msra.mxu0 0.0
        %3757 = vmatprep.subr.mxu0 0.0
        %3758 = vmatpush1.xpose.msra.mxu0 0.0
        %3759 = vmatprep.subr.mxu0 0.0
        %3760 = vmatpush1.xpose.msra.mxu0 0.0
        %3761 = vmatprep.subr.mxu0 0.0
        %3762 = vmatpush1.xpose.msra.mxu0 0.0
        %3763 = vmatprep.subr.mxu0 0.0
        %3764 = vmatpush1.xpose.msra.mxu0 0.0
        %3765 = vmatprep.subr.mxu0 0.0
        %3766 = vmatpush1.xpose.msra.mxu0 0.0
        %3767 = vmatprep.subr.mxu0 0.0
        %3768 = vmatpush1.xpose.msra.mxu0 0.0
        %3769 = vmatprep.subr.mxu0 0.0
        %3770 = vmatpush1.xpose.msra.mxu0 0.0
        %3771 = vmatprep.subr.mxu0 0.0
        %3772 = vmatpush1.xpose.msra.mxu0 0.0
        %3773 = vmatprep.subr.mxu0 0.0
        %3774 = vmatpush1.xpose.msra.mxu0 0.0
        %3775 = vmatprep.subr.mxu0 0.0
        %3776 = vmatpush1.xpose.msra.mxu0 0.0
        %3777 = vmatprep.subr.mxu0 0.0
        %3778 = vmatpush1.xpose.msra.mxu0 0.0
        %3779 = vmatprep.mubr.f32.mxu0 %v3025
        %3780 = vmatmul.mubr.f32.gmra.mrb[0].mxu0 %v3017
        %v3781 = vpop.f32.mrb[0].mxu0
        %v3782 = vadd.f32 %v3712, %v3781
        %v3783 = vpop.f32.mrb[0].mxu0
        %3784 = vdwg.mxu0
        %3785 = vmatprep.subr.mxu0 %v2702
        %3786 = vmatpush1.xpose.msra.mxu0 %v2701
        %3787 = vmatprep.subr.mxu0 %v2766
        %3788 = vmatpush1.xpose.msra.mxu0 %v2765
        %3789 = vmatprep.subr.mxu0 %v2830
        %3790 = vmatpush1.xpose.msra.mxu0 %v2829
        %3791 = vmatprep.subr.mxu0 %v2894
        %3792 = vmatpush1.xpose.msra.mxu0 %v2893
        %3793 = vmatprep.subr.mxu0 0.0
        %3794 = vmatpush1.xpose.msra.mxu0 0.0
        %3795 = vmatprep.subr.mxu0 0.0
        %3796 = vmatpush1.xpose.msra.mxu0 0.0
        %3797 = vmatprep.subr.mxu0 0.0
        %3798 = vmatpush1.xpose.msra.mxu0 0.0
        %3799 = vmatprep.subr.mxu0 0.0
        %3800 = vmatpush1.xpose.msra.mxu0 0.0
        %3801 = vmatprep.subr.mxu0 0.0
        %3802 = vmatpush1.xpose.msra.mxu0 0.0
        %3803 = vmatprep.subr.mxu0 0.0
        %3804 = vmatpush1.xpose.msra.mxu0 0.0
        %3805 = vmatprep.subr.mxu0 0.0
        %3806 = vmatpush1.xpose.msra.mxu0 0.0
        %3807 = vmatprep.subr.mxu0 0.0
        %3808 = vmatpush1.xpose.msra.mxu0 0.0
        %3809 = vmatprep.subr.mxu0 0.0
        %3810 = vmatpush1.xpose.msra.mxu0 0.0
        %3811 = vmatprep.subr.mxu0 0.0
        %3812 = vmatpush1.xpose.msra.mxu0 0.0
        %3813 = vmatprep.subr.mxu0 0.0
        %3814 = vmatpush1.xpose.msra.mxu0 0.0
        %3815 = vmatprep.subr.mxu0 0.0
        %3816 = vmatpush1.xpose.msra.mxu0 0.0
        %3817 = vmatprep.subr.mxu0 0.0
        %3818 = vmatpush1.xpose.msra.mxu0 0.0
        %3819 = vmatprep.subr.mxu0 0.0
        %3820 = vmatpush1.xpose.msra.mxu0 0.0
        %3821 = vmatprep.subr.mxu0 0.0
        %3822 = vmatpush1.xpose.msra.mxu0 0.0
        %3823 = vmatprep.subr.mxu0 0.0
        %3824 = vmatpush1.xpose.msra.mxu0 0.0
        %3825 = vmatprep.subr.mxu0 0.0
        %3826 = vmatpush1.xpose.msra.mxu0 0.0
        %3827 = vmatprep.subr.mxu0 0.0
        %3828 = vmatpush1.xpose.msra.mxu0 0.0
        %3829 = vmatprep.subr.mxu0 0.0
        %3830 = vmatpush1.xpose.msra.mxu0 0.0
        %3831 = vmatprep.subr.mxu0 0.0
        %3832 = vmatpush1.xpose.msra.mxu0 0.0
        %3833 = vmatprep.subr.mxu0 0.0
        %3834 = vmatpush1.xpose.msra.mxu0 0.0
        %3835 = vmatprep.subr.mxu0 0.0
        %3836 = vmatpush1.xpose.msra.mxu0 0.0
        %3837 = vmatprep.subr.mxu0 0.0
        %3838 = vmatpush1.xpose.msra.mxu0 0.0
        %3839 = vmatprep.subr.mxu0 0.0
        %3840 = vmatpush1.xpose.msra.mxu0 0.0
        %3841 = vmatprep.subr.mxu0 0.0
        %3842 = vmatpush1.xpose.msra.mxu0 0.0
        %3843 = vmatprep.subr.mxu0 0.0
        %3844 = vmatpush1.xpose.msra.mxu0 0.0
        %3845 = vmatprep.subr.mxu0 0.0
        %3846 = vmatpush1.xpose.msra.mxu0 0.0
        %3847 = vmatprep.subr.mxu0 0.0
        %3848 = vmatpush1.xpose.msra.mxu0 0.0
        %3849 = vmatprep.mubr.f32.mxu0 %v3026
        %3850 = vmatmul.mubr.f32.gmra.mrb[0].mxu0 %v3024
        %v3851 = vpop.f32.mrb[0].mxu0
        %v3852 = vadd.f32 %v3782, %v3851
        %v3853 = vpop.f32.mrb[0].mxu0
        %3854 = vdwg.mxu0
        %3855 = vmatprep.subr.mxu0 %v2704
        %3856 = vmatpush1.xpose.msra.mxu0 %v2703
        %3857 = vmatprep.subr.mxu0 %v2768
        %3858 = vmatpush1.xpose.msra.mxu0 %v2767
        %3859 = vmatprep.subr.mxu0 %v2832
        %3860 = vmatpush1.xpose.msra.mxu0 %v2831
        %3861 = vmatprep.subr.mxu0 %v2896
        %3862 = vmatpush1.xpose.msra.mxu0 %v2895
        %3863 = vmatprep.subr.mxu0 0.0
        %3864 = vmatpush1.xpose.msra.mxu0 0.0
        %3865 = vmatprep.subr.mxu0 0.0
        %3866 = vmatpush1.xpose.msra.mxu0 0.0
        %3867 = vmatprep.subr.mxu0 0.0
        %3868 = vmatpush1.xpose.msra.mxu0 0.0
        %3869 = vmatprep.subr.mxu0 0.0
        %3870 = vmatpush1.xpose.msra.mxu0 0.0
        %3871 = vmatprep.subr.mxu0 0.0
        %3872 = vmatpush1.xpose.msra.mxu0 0.0
        %3873 = vmatprep.subr.mxu0 0.0
        %3874 = vmatpush1.xpose.msra.mxu0 0.0
        %3875 = vmatprep.subr.mxu0 0.0
        %3876 = vmatpush1.xpose.msra.mxu0 0.0
        %3877 = vmatprep.subr.mxu0 0.0
        %3878 = vmatpush1.xpose.msra.mxu0 0.0
        %3879 = vmatprep.subr.mxu0 0.0
        %3880 = vmatpush1.xpose.msra.mxu0 0.0
        %3881 = vmatprep.subr.mxu0 0.0
        %3882 = vmatpush1.xpose.msra.mxu0 0.0
        %3883 = vmatprep.subr.mxu0 0.0
        %3884 = vmatpush1.xpose.msra.mxu0 0.0
        %3885 = vmatprep.subr.mxu0 0.0
        %3886 = vmatpush1.xpose.msra.mxu0 0.0
        %3887 = vmatprep.subr.mxu0 0.0
        %3888 = vmatpush1.xpose.msra.mxu0 0.0
        %3889 = vmatprep.subr.mxu0 0.0
        %3890 = vmatpush1.xpose.msra.mxu0 0.0
        %3891 = vmatprep.subr.mxu0 0.0
        %3892 = vmatpush1.xpose.msra.mxu0 0.0
        %3893 = vmatprep.subr.mxu0 0.0
        %3894 = vmatpush1.xpose.msra.mxu0 0.0
        %3895 = vmatprep.subr.mxu0 0.0
        %3896 = vmatpush1.xpose.msra.mxu0 0.0
        %3897 = vmatprep.subr.mxu0 0.0
        %3898 = vmatpush1.xpose.msra.mxu0 0.0
        %3899 = vmatprep.subr.mxu0 0.0
        %3900 = vmatpush1.xpose.msra.mxu0 0.0
        %3901 = vmatprep.subr.mxu0 0.0
        %3902 = vmatpush1.xpose.msra.mxu0 0.0
        %3903 = vmatprep.subr.mxu0 0.0
        %3904 = vmatpush1.xpose.msra.mxu0 0.0
        %3905 = vmatprep.subr.mxu0 0.0
        %3906 = vmatpush1.xpose.msra.mxu0 0.0
        %3907 = vmatprep.subr.mxu0 0.0
        %3908 = vmatpush1.xpose.msra.mxu0 0.0
        %3909 = vmatprep.subr.mxu0 0.0
        %3910 = vmatpush1.xpose.msra.mxu0 0.0
        %3911 = vmatprep.subr.mxu0 0.0
        %3912 = vmatpush1.xpose.msra.mxu0 0.0
        %3913 = vmatprep.subr.mxu0 0.0
        %3914 = vmatpush1.xpose.msra.mxu0 0.0
        %3915 = vmatprep.subr.mxu0 0.0
        %3916 = vmatpush1.xpose.msra.mxu0 0.0
        %3917 = vmatprep.subr.mxu0 0.0
        %3918 = vmatpush1.xpose.msra.mxu0 0.0
        %3919 = vmatprep.mubr.f32.mxu0 %v3042
        %3920 = vmatmul.mubr.f32.gmra.mrb[0].mxu0 %v3034
        %v3921 = vpop.f32.mrb[0].mxu0
        %v3922 = vadd.f32 %v3852, %v3921
        %v3923 = vpop.f32.mrb[0].mxu0
        %3924 = vdwg.mxu0
        %3925 = vmatprep.subr.mxu0 %v2706
        %3926 = vmatpush1.xpose.msra.mxu0 %v2705
        %3927 = vmatprep.subr.mxu0 %v2770
        %3928 = vmatpush1.xpose.msra.mxu0 %v2769
        %3929 = vmatprep.subr.mxu0 %v2834
        %3930 = vmatpush1.xpose.msra.mxu0 %v2833
        %3931 = vmatprep.subr.mxu0 %v2898
        %3932 = vmatpush1.xpose.msra.mxu0 %v2897
        %3933 = vmatprep.subr.mxu0 0.0
        %3934 = vmatpush1.xpose.msra.mxu0 0.0
        %3935 = vmatprep.subr.mxu0 0.0
        %3936 = vmatpush1.xpose.msra.mxu0 0.0
        %3937 = vmatprep.subr.mxu0 0.0
        %3938 = vmatpush1.xpose.msra.mxu0 0.0
        %3939 = vmatprep.subr.mxu0 0.0
        %3940 = vmatpush1.xpose.msra.mxu0 0.0
        %3941 = vmatprep.subr.mxu0 0.0
        %3942 = vmatpush1.xpose.msra.mxu0 0.0
        %3943 = vmatprep.subr.mxu0 0.0
        %3944 = vmatpush1.xpose.msra.mxu0 0.0
        %3945 = vmatprep.subr.mxu0 0.0
        %3946 = vmatpush1.xpose.msra.mxu0 0.0
        %3947 = vmatprep.subr.mxu0 0.0
        %3948 = vmatpush1.xpose.msra.mxu0 0.0
        %3949 = vmatprep.subr.mxu0 0.0
        %3950 = vmatpush1.xpose.msra.mxu0 0.0
        %3951 = vmatprep.subr.mxu0 0.0
        %3952 = vmatpush1.xpose.msra.mxu0 0.0
        %3953 = vmatprep.subr.mxu0 0.0
        %3954 = vmatpush1.xpose.msra.mxu0 0.0
        %3955 = vmatprep.subr.mxu0 0.0
        %3956 = vmatpush1.xpose.msra.mxu0 0.0
        %3957 = vmatprep.subr.mxu0 0.0
        %3958 = vmatpush1.xpose.msra.mxu0 0.0
        %3959 = vmatprep.subr.mxu0 0.0
        %3960 = vmatpush1.xpose.msra.mxu0 0.0
        %3961 = vmatprep.subr.mxu0 0.0
        %3962 = vmatpush1.xpose.msra.mxu0 0.0
        %3963 = vmatprep.subr.mxu0 0.0
        %3964 = vmatpush1.xpose.msra.mxu0 0.0
        %3965 = vmatprep.subr.mxu0 0.0
        %3966 = vmatpush1.xpose.msra.mxu0 0.0
        %3967 = vmatprep.subr.mxu0 0.0
        %3968 = vmatpush1.xpose.msra.mxu0 0.0
        %3969 = vmatprep.subr.mxu0 0.0
        %3970 = vmatpush1.xpose.msra.mxu0 0.0
        %3971 = vmatprep.subr.mxu0 0.0
        %3972 = vmatpush1.xpose.msra.mxu0 0.0
        %3973 = vmatprep.subr.mxu0 0.0
        %3974 = vmatpush1.xpose.msra.mxu0 0.0
        %3975 = vmatprep.subr.mxu0 0.0
        %3976 = vmatpush1.xpose.msra.mxu0 0.0
        %3977 = vmatprep.subr.mxu0 0.0
        %3978 = vmatpush1.xpose.msra.mxu0 0.0
        %3979 = vmatprep.subr.mxu0 0.0
        %3980 = vmatpush1.xpose.msra.mxu0 0.0
        %3981 = vmatprep.subr.mxu0 0.0
        %3982 = vmatpush1.xpose.msra.mxu0 0.0
        %3983 = vmatprep.subr.mxu0 0.0
        %3984 = vmatpush1.xpose.msra.mxu0 0.0
        %3985 = vmatprep.subr.mxu0 0.0
        %3986 = vmatpush1.xpose.msra.mxu0 0.0
        %3987 = vmatprep.subr.mxu0 0.0
        %3988 = vmatpush1.xpose.msra.mxu0 0.0
        %3989 = vmatprep.mubr.f32.mxu0 %v3043
        %3990 = vmatmul.mubr.f32.gmra.mrb[0].mxu0 %v3041
        %v3991 = vpop.f32.mrb[0].mxu0
        %v3992 = vadd.f32 %v3922, %v3991
        %v3993 = vpop.f32.mrb[0].mxu0
        %3994 = vdwg.mxu0
        %3995 = vmatprep.subr.mxu0 %v2708
        %3996 = vmatpush1.xpose.msra.mxu0 %v2707
        %3997 = vmatprep.subr.mxu0 %v2772
        %3998 = vmatpush1.xpose.msra.mxu0 %v2771
        %3999 = vmatprep.subr.mxu0 %v2836
        %4000 = vmatpush1.xpose.msra.mxu0 %v2835
        %4001 = vmatprep.subr.mxu0 %v2900
        %4002 = vmatpush1.xpose.msra.mxu0 %v2899
        %4003 = vmatprep.subr.mxu0 0.0
        %4004 = vmatpush1.xpose.msra.mxu0 0.0
        %4005 = vmatprep.subr.mxu0 0.0
        %4006 = vmatpush1.xpose.msra.mxu0 0.0
        %4007 = vmatprep.subr.mxu0 0.0
        %4008 = vmatpush1.xpose.msra.mxu0 0.0
        %4009 = vmatprep.subr.mxu0 0.0
        %4010 = vmatpush1.xpose.msra.mxu0 0.0
        %4011 = vmatprep.subr.mxu0 0.0
        %4012 = vmatpush1.xpose.msra.mxu0 0.0
        %4013 = vmatprep.subr.mxu0 0.0
        %4014 = vmatpush1.xpose.msra.mxu0 0.0
        %4015 = vmatprep.subr.mxu0 0.0
        %4016 = vmatpush1.xpose.msra.mxu0 0.0
        %4017 = vmatprep.subr.mxu0 0.0
        %4018 = vmatpush1.xpose.msra.mxu0 0.0
        %4019 = vmatprep.subr.mxu0 0.0
        %4020 = vmatpush1.xpose.msra.mxu0 0.0
        %4021 = vmatprep.subr.mxu0 0.0
        %4022 = vmatpush1.xpose.msra.mxu0 0.0
        %4023 = vmatprep.subr.mxu0 0.0
        %4024 = vmatpush1.xpose.msra.mxu0 0.0
        %4025 = vmatprep.subr.mxu0 0.0
        %4026 = vmatpush1.xpose.msra.mxu0 0.0
        %4027 = vmatprep.subr.mxu0 0.0
        %4028 = vmatpush1.xpose.msra.mxu0 0.0
        %4029 = vmatprep.subr.mxu0 0.0
        %4030 = vmatpush1.xpose.msra.mxu0 0.0
        %4031 = vmatprep.subr.mxu0 0.0
        %4032 = vmatpush1.xpose.msra.mxu0 0.0
        %4033 = vmatprep.subr.mxu0 0.0
        %4034 = vmatpush1.xpose.msra.mxu0 0.0
        %4035 = vmatprep.subr.mxu0 0.0
        %4036 = vmatpush1.xpose.msra.mxu0 0.0
        %4037 = vmatprep.subr.mxu0 0.0
        %4038 = vmatpush1.xpose.msra.mxu0 0.0
        %4039 = vmatprep.subr.mxu0 0.0
        %4040 = vmatpush1.xpose.msra.mxu0 0.0
        %4041 = vmatprep.subr.mxu0 0.0
        %4042 = vmatpush1.xpose.msra.mxu0 0.0
        %4043 = vmatprep.subr.mxu0 0.0
        %4044 = vmatpush1.xpose.msra.mxu0 0.0
        %4045 = vmatprep.subr.mxu0 0.0
        %4046 = vmatpush1.xpose.msra.mxu0 0.0
        %4047 = vmatprep.subr.mxu0 0.0
        %4048 = vmatpush1.xpose.msra.mxu0 0.0
        %4049 = vmatprep.subr.mxu0 0.0
        %4050 = vmatpush1.xpose.msra.mxu0 0.0
        %4051 = vmatprep.subr.mxu0 0.0
        %4052 = vmatpush1.xpose.msra.mxu0 0.0
        %4053 = vmatprep.subr.mxu0 0.0
        %4054 = vmatpush1.xpose.msra.mxu0 0.0
        %4055 = vmatprep.subr.mxu0 0.0
        %4056 = vmatpush1.xpose.msra.mxu0 0.0
        %4057 = vmatprep.subr.mxu0 0.0
        %4058 = vmatpush1.xpose.msra.mxu0 0.0
        %4059 = vmatprep.mubr.f32.mxu0 %v3059
        %4060 = vmatmul.mubr.f32.gmra.mrb[0].mxu0 %v3051
        %v4061 = vpop.f32.mrb[0].mxu0
        %v4062 = vadd.f32 %v3992, %v4061
        %v4063 = vpop.f32.mrb[0].mxu0
        %4064 = vdwg.mxu0
        %4065 = vmatprep.subr.mxu0 %v2710
        %4066 = vmatpush1.xpose.msra.mxu0 %v2709
        %4067 = vmatprep.subr.mxu0 %v2774
        %4068 = vmatpush1.xpose.msra.mxu0 %v2773
        %4069 = vmatprep.subr.mxu0 %v2838
        %4070 = vmatpush1.xpose.msra.mxu0 %v2837
        %4071 = vmatprep.subr.mxu0 %v2902
        %4072 = vmatpush1.xpose.msra.mxu0 %v2901
        %4073 = vmatprep.subr.mxu0 0.0
        %4074 = vmatpush1.xpose.msra.mxu0 0.0
        %4075 = vmatprep.subr.mxu0 0.0
        %4076 = vmatpush1.xpose.msra.mxu0 0.0
        %4077 = vmatprep.subr.mxu0 0.0
        %4078 = vmatpush1.xpose.msra.mxu0 0.0
        %4079 = vmatprep.subr.mxu0 0.0
        %4080 = vmatpush1.xpose.msra.mxu0 0.0
        %4081 = vmatprep.subr.mxu0 0.0
        %4082 = vmatpush1.xpose.msra.mxu0 0.0
        %4083 = vmatprep.subr.mxu0 0.0
        %4084 = vmatpush1.xpose.msra.mxu0 0.0
        %4085 = vmatprep.subr.mxu0 0.0
        %4086 = vmatpush1.xpose.msra.mxu0 0.0
        %4087 = vmatprep.subr.mxu0 0.0
        %4088 = vmatpush1.xpose.msra.mxu0 0.0
        %4089 = vmatprep.subr.mxu0 0.0
        %4090 = vmatpush1.xpose.msra.mxu0 0.0
        %4091 = vmatprep.subr.mxu0 0.0
        %4092 = vmatpush1.xpose.msra.mxu0 0.0
        %4093 = vmatprep.subr.mxu0 0.0
        %4094 = vmatpush1.xpose.msra.mxu0 0.0
        %4095 = vmatprep.subr.mxu0 0.0
        %4096 = vmatpush1.xpose.msra.mxu0 0.0
        %4097 = vmatprep.subr.mxu0 0.0
        %4098 = vmatpush1.xpose.msra.mxu0 0.0
        %4099 = vmatprep.subr.mxu0 0.0
        %4100 = vmatpush1.xpose.msra.mxu0 0.0
        %4101 = vmatprep.subr.mxu0 0.0
        %4102 = vmatpush1.xpose.msra.mxu0 0.0
        %4103 = vmatprep.subr.mxu0 0.0
        %4104 = vmatpush1.xpose.msra.mxu0 0.0
        %4105 = vmatprep.subr.mxu0 0.0
        %4106 = vmatpush1.xpose.msra.mxu0 0.0
        %4107 = vmatprep.subr.mxu0 0.0
        %4108 = vmatpush1.xpose.msra.mxu0 0.0
        %4109 = vmatprep.subr.mxu0 0.0
        %4110 = vmatpush1.xpose.msra.mxu0 0.0
        %4111 = vmatprep.subr.mxu0 0.0
        %4112 = vmatpush1.xpose.msra.mxu0 0.0
        %4113 = vmatprep.subr.mxu0 0.0
        %4114 = vmatpush1.xpose.msra.mxu0 0.0
        %4115 = vmatprep.subr.mxu0 0.0
        %4116 = vmatpush1.xpose.msra.mxu0 0.0
        %4117 = vmatprep.subr.mxu0 0.0
        %4118 = vmatpush1.xpose.msra.mxu0 0.0
        %4119 = vmatprep.subr.mxu0 0.0
        %4120 = vmatpush1.xpose.msra.mxu0 0.0
        %4121 = vmatprep.subr.mxu0 0.0
        %4122 = vmatpush1.xpose.msra.mxu0 0.0
        %4123 = vmatprep.subr.mxu0 0.0
        %4124 = vmatpush1.xpose.msra.mxu0 0.0
        %4125 = vmatprep.subr.mxu0 0.0
        %4126 = vmatpush1.xpose.msra.mxu0 0.0
        %4127 = vmatprep.subr.mxu0 0.0
        %4128 = vmatpush1.xpose.msra.mxu0 0.0
        %4129 = vmatprep.mubr.f32.mxu0 %v3060
        %4130 = vmatmul.mubr.f32.gmra.mrb[0].mxu0 %v3058
        %v4131 = vpop.f32.mrb[0].mxu0
        %v4132 = vadd.f32 %v4062, %v4131
        %v4133 = vpop.f32.mrb[0].mxu0
        %4134 = vdwg.mxu0
        %4135 = vmatprep.subr.mxu0 %v2712
        %4136 = vmatpush1.xpose.msra.mxu0 %v2711
        %4137 = vmatprep.subr.mxu0 %v2776
        %4138 = vmatpush1.xpose.msra.mxu0 %v2775
        %4139 = vmatprep.subr.mxu0 %v2840
        %4140 = vmatpush1.xpose.msra.mxu0 %v2839
        %4141 = vmatprep.subr.mxu0 %v2904
        %4142 = vmatpush1.xpose.msra.mxu0 %v2903
        %4143 = vmatprep.subr.mxu0 0.0
        %4144 = vmatpush1.xpose.msra.mxu0 0.0
        %4145 = vmatprep.subr.mxu0 0.0
        %4146 = vmatpush1.xpose.msra.mxu0 0.0
        %4147 = vmatprep.subr.mxu0 0.0
        %4148 = vmatpush1.xpose.msra.mxu0 0.0
        %4149 = vmatprep.subr.mxu0 0.0
        %4150 = vmatpush1.xpose.msra.mxu0 0.0
        %4151 = vmatprep.subr.mxu0 0.0
        %4152 = vmatpush1.xpose.msra.mxu0 0.0
        %4153 = vmatprep.subr.mxu0 0.0
        %4154 = vmatpush1.xpose.msra.mxu0 0.0
        %4155 = vmatprep.subr.mxu0 0.0
        %4156 = vmatpush1.xpose.msra.mxu0 0.0
        %4157 = vmatprep.subr.mxu0 0.0
        %4158 = vmatpush1.xpose.msra.mxu0 0.0
        %4159 = vmatprep.subr.mxu0 0.0
        %4160 = vmatpush1.xpose.msra.mxu0 0.0
        %4161 = vmatprep.subr.mxu0 0.0
        %4162 = vmatpush1.xpose.msra.mxu0 0.0
        %4163 = vmatprep.subr.mxu0 0.0
        %4164 = vmatpush1.xpose.msra.mxu0 0.0
        %4165 = vmatprep.subr.mxu0 0.0
        %4166 = vmatpush1.xpose.msra.mxu0 0.0
        %4167 = vmatprep.subr.mxu0 0.0
        %4168 = vmatpush1.xpose.msra.mxu0 0.0
        %4169 = vmatprep.subr.mxu0 0.0
        %4170 = vmatpush1.xpose.msra.mxu0 0.0
        %4171 = vmatprep.subr.mxu0 0.0
        %4172 = vmatpush1.xpose.msra.mxu0 0.0
        %4173 = vmatprep.subr.mxu0 0.0
        %4174 = vmatpush1.xpose.msra.mxu0 0.0
        %4175 = vmatprep.subr.mxu0 0.0
        %4176 = vmatpush1.xpose.msra.mxu0 0.0
        %4177 = vmatprep.subr.mxu0 0.0
        %4178 = vmatpush1.xpose.msra.mxu0 0.0
        %4179 = vmatprep.subr.mxu0 0.0
        %4180 = vmatpush1.xpose.msra.mxu0 0.0
        %4181 = vmatprep.subr.mxu0 0.0
        %4182 = vmatpush1.xpose.msra.mxu0 0.0
        %4183 = vmatprep.subr.mxu0 0.0
        %4184 = vmatpush1.xpose.msra.mxu0 0.0
        %4185 = vmatprep.subr.mxu0 0.0
        %4186 = vmatpush1.xpose.msra.mxu0 0.0
        %4187 = vmatprep.subr.mxu0 0.0
        %4188 = vmatpush1.xpose.msra.mxu0 0.0
        %4189 = vmatprep.subr.mxu0 0.0
        %4190 = vmatpush1.xpose.msra.mxu0 0.0
        %4191 = vmatprep.subr.mxu0 0.0
        %4192 = vmatpush1.xpose.msra.mxu0 0.0
        %4193 = vmatprep.subr.mxu0 0.0
        %4194 = vmatpush1.xpose.msra.mxu0 0.0
        %4195 = vmatprep.subr.mxu0 0.0
        %4196 = vmatpush1.xpose.msra.mxu0 0.0
        %4197 = vmatprep.subr.mxu0 0.0
        %4198 = vmatpush1.xpose.msra.mxu0 0.0
        %4199 = vmatprep.mubr.f32.mxu0 %v3076
        %4200 = vmatmul.mubr.f32.gmra.mrb[0].mxu0 %v3068
        %v4201 = vpop.f32.mrb[0].mxu0
        %v4202 = vadd.f32 %v4132, %v4201
        %v4203 = vpop.f32.mrb[0].mxu0
        %4204 = vdwg.mxu0
        %4205 = vmatprep.subr.mxu0 %v2714
        %4206 = vmatpush1.xpose.msra.mxu0 %v2713
        %4207 = vmatprep.subr.mxu0 %v2778
        %4208 = vmatpush1.xpose.msra.mxu0 %v2777
        %4209 = vmatprep.subr.mxu0 %v2842
        %4210 = vmatpush1.xpose.msra.mxu0 %v2841
        %4211 = vmatprep.subr.mxu0 %v2906
        %4212 = vmatpush1.xpose.msra.mxu0 %v2905
        %4213 = vmatprep.subr.mxu0 0.0
        %4214 = vmatpush1.xpose.msra.mxu0 0.0
        %4215 = vmatprep.subr.mxu0 0.0
        %4216 = vmatpush1.xpose.msra.mxu0 0.0
        %4217 = vmatprep.subr.mxu0 0.0
        %4218 = vmatpush1.xpose.msra.mxu0 0.0
        %4219 = vmatprep.subr.mxu0 0.0
        %4220 = vmatpush1.xpose.msra.mxu0 0.0
        %4221 = vmatprep.subr.mxu0 0.0
        %4222 = vmatpush1.xpose.msra.mxu0 0.0
        %4223 = vmatprep.subr.mxu0 0.0
        %4224 = vmatpush1.xpose.msra.mxu0 0.0
        %4225 = vmatprep.subr.mxu0 0.0
        %4226 = vmatpush1.xpose.msra.mxu0 0.0
        %4227 = vmatprep.subr.mxu0 0.0
        %4228 = vmatpush1.xpose.msra.mxu0 0.0
        %4229 = vmatprep.subr.mxu0 0.0
        %4230 = vmatpush1.xpose.msra.mxu0 0.0
        %4231 = vmatprep.subr.mxu0 0.0
        %4232 = vmatpush1.xpose.msra.mxu0 0.0
        %4233 = vmatprep.subr.mxu0 0.0
        %4234 = vmatpush1.xpose.msra.mxu0 0.0
        %4235 = vmatprep.subr.mxu0 0.0
        %4236 = vmatpush1.xpose.msra.mxu0 0.0
        %4237 = vmatprep.subr.mxu0 0.0
        %4238 = vmatpush1.xpose.msra.mxu0 0.0
        %4239 = vmatprep.subr.mxu0 0.0
        %4240 = vmatpush1.xpose.msra.mxu0 0.0
        %4241 = vmatprep.subr.mxu0 0.0
        %4242 = vmatpush1.xpose.msra.mxu0 0.0
        %4243 = vmatprep.subr.mxu0 0.0
        %4244 = vmatpush1.xpose.msra.mxu0 0.0
        %4245 = vmatprep.subr.mxu0 0.0
        %4246 = vmatpush1.xpose.msra.mxu0 0.0
        %4247 = vmatprep.subr.mxu0 0.0
        %4248 = vmatpush1.xpose.msra.mxu0 0.0
        %4249 = vmatprep.subr.mxu0 0.0
        %4250 = vmatpush1.xpose.msra.mxu0 0.0
        %4251 = vmatprep.subr.mxu0 0.0
        %4252 = vmatpush1.xpose.msra.mxu0 0.0
        %4253 = vmatprep.subr.mxu0 0.0
        %4254 = vmatpush1.xpose.msra.mxu0 0.0
        %4255 = vmatprep.subr.mxu0 0.0
        %4256 = vmatpush1.xpose.msra.mxu0 0.0
        %4257 = vmatprep.subr.mxu0 0.0
        %4258 = vmatpush1.xpose.msra.mxu0 0.0
        %4259 = vmatprep.subr.mxu0 0.0
        %4260 = vmatpush1.xpose.msra.mxu0 0.0
        %4261 = vmatprep.subr.mxu0 0.0
        %4262 = vmatpush1.xpose.msra.mxu0 0.0
        %4263 = vmatprep.subr.mxu0 0.0
        %4264 = vmatpush1.xpose.msra.mxu0 0.0
        %4265 = vmatprep.subr.mxu0 0.0
        %4266 = vmatpush1.xpose.msra.mxu0 0.0
        %4267 = vmatprep.subr.mxu0 0.0
        %4268 = vmatpush1.xpose.msra.mxu0 0.0
        %4269 = vmatprep.mubr.f32.mxu0 %v3077
        %4270 = vmatmul.mubr.f32.gmra.mrb[0].mxu0 %v3075
        %v4271 = vpop.f32.mrb[0].mxu0
        %v4272 = vadd.f32 %v4202, %v4271
        %v4273 = vpop.f32.mrb[0].mxu0
        %4274 = vdwg.mxu0
        %4275 = vmatprep.subr.mxu0 %v2716
        %4276 = vmatpush1.xpose.msra.mxu0 %v2715
        %4277 = vmatprep.subr.mxu0 %v2780
        %4278 = vmatpush1.xpose.msra.mxu0 %v2779
        %4279 = vmatprep.subr.mxu0 %v2844
        %4280 = vmatpush1.xpose.msra.mxu0 %v2843
        %4281 = vmatprep.subr.mxu0 %v2908
        %4282 = vmatpush1.xpose.msra.mxu0 %v2907
        %4283 = vmatprep.subr.mxu0 0.0
        %4284 = vmatpush1.xpose.msra.mxu0 0.0
        %4285 = vmatprep.subr.mxu0 0.0
        %4286 = vmatpush1.xpose.msra.mxu0 0.0
        %4287 = vmatprep.subr.mxu0 0.0
        %4288 = vmatpush1.xpose.msra.mxu0 0.0
        %4289 = vmatprep.subr.mxu0 0.0
        %4290 = vmatpush1.xpose.msra.mxu0 0.0
        %4291 = vmatprep.subr.mxu0 0.0
        %4292 = vmatpush1.xpose.msra.mxu0 0.0
        %4293 = vmatprep.subr.mxu0 0.0
        %4294 = vmatpush1.xpose.msra.mxu0 0.0
        %4295 = vmatprep.subr.mxu0 0.0
        %4296 = vmatpush1.xpose.msra.mxu0 0.0
        %4297 = vmatprep.subr.mxu0 0.0
        %4298 = vmatpush1.xpose.msra.mxu0 0.0
        %4299 = vmatprep.subr.mxu0 0.0
        %4300 = vmatpush1.xpose.msra.mxu0 0.0
        %4301 = vmatprep.subr.mxu0 0.0
        %4302 = vmatpush1.xpose.msra.mxu0 0.0
        %4303 = vmatprep.subr.mxu0 0.0
        %4304 = vmatpush1.xpose.msra.mxu0 0.0
        %4305 = vmatprep.subr.mxu0 0.0
        %4306 = vmatpush1.xpose.msra.mxu0 0.0
        %4307 = vmatprep.subr.mxu0 0.0
        %4308 = vmatpush1.xpose.msra.mxu0 0.0
        %4309 = vmatprep.subr.mxu0 0.0
        %4310 = vmatpush1.xpose.msra.mxu0 0.0
        %4311 = vmatprep.subr.mxu0 0.0
        %4312 = vmatpush1.xpose.msra.mxu0 0.0
        %4313 = vmatprep.subr.mxu0 0.0
        %4314 = vmatpush1.xpose.msra.mxu0 0.0
        %4315 = vmatprep.subr.mxu0 0.0
        %4316 = vmatpush1.xpose.msra.mxu0 0.0
        %4317 = vmatprep.subr.mxu0 0.0
        %4318 = vmatpush1.xpose.msra.mxu0 0.0
        %4319 = vmatprep.subr.mxu0 0.0
        %4320 = vmatpush1.xpose.msra.mxu0 0.0
        %4321 = vmatprep.subr.mxu0 0.0
        %4322 = vmatpush1.xpose.msra.mxu0 0.0
        %4323 = vmatprep.subr.mxu0 0.0
        %4324 = vmatpush1.xpose.msra.mxu0 0.0
        %4325 = vmatprep.subr.mxu0 0.0
        %4326 = vmatpush1.xpose.msra.mxu0 0.0
        %4327 = vmatprep.subr.mxu0 0.0
        %4328 = vmatpush1.xpose.msra.mxu0 0.0
        %4329 = vmatprep.subr.mxu0 0.0
        %4330 = vmatpush1.xpose.msra.mxu0 0.0
        %4331 = vmatprep.subr.mxu0 0.0
        %4332 = vmatpush1.xpose.msra.mxu0 0.0
        %4333 = vmatprep.subr.mxu0 0.0
        %4334 = vmatpush1.xpose.msra.mxu0 0.0
        %4335 = vmatprep.subr.mxu0 0.0
        %4336 = vmatpush1.xpose.msra.mxu0 0.0
        %4337 = vmatprep.subr.mxu0 0.0
        %4338 = vmatpush1.xpose.msra.mxu0 0.0
        %4339 = vmatprep.mubr.f32.mxu0 %v3093
        %4340 = vmatmul.mubr.f32.gmra.mrb[0].mxu0 %v3085
        %v4341 = vpop.f32.mrb[0].mxu0
        %v4342 = vadd.f32 %v4272, %v4341
        %v4343 = vpop.f32.mrb[0].mxu0
        %4344 = vdwg.mxu0
        %4345 = vmatprep.subr.mxu0 %v2718
        %4346 = vmatpush1.xpose.msra.mxu0 %v2717
        %4347 = vmatprep.subr.mxu0 %v2782
        %4348 = vmatpush1.xpose.msra.mxu0 %v2781
        %4349 = vmatprep.subr.mxu0 %v2846
        %4350 = vmatpush1.xpose.msra.mxu0 %v2845
        %4351 = vmatprep.subr.mxu0 %v2910
        %4352 = vmatpush1.xpose.msra.mxu0 %v2909
        %4353 = vmatprep.subr.mxu0 0.0
        %4354 = vmatpush1.xpose.msra.mxu0 0.0
        %4355 = vmatprep.subr.mxu0 0.0
        %4356 = vmatpush1.xpose.msra.mxu0 0.0
        %4357 = vmatprep.subr.mxu0 0.0
        %4358 = vmatpush1.xpose.msra.mxu0 0.0
        %4359 = vmatprep.subr.mxu0 0.0
        %4360 = vmatpush1.xpose.msra.mxu0 0.0
        %4361 = vmatprep.subr.mxu0 0.0
        %4362 = vmatpush1.xpose.msra.mxu0 0.0
        %4363 = vmatprep.subr.mxu0 0.0
        %4364 = vmatpush1.xpose.msra.mxu0 0.0
        %4365 = vmatprep.subr.mxu0 0.0
        %4366 = vmatpush1.xpose.msra.mxu0 0.0
        %4367 = vmatprep.subr.mxu0 0.0
        %4368 = vmatpush1.xpose.msra.mxu0 0.0
        %4369 = vmatprep.subr.mxu0 0.0
        %4370 = vmatpush1.xpose.msra.mxu0 0.0
        %4371 = vmatprep.subr.mxu0 0.0
        %4372 = vmatpush1.xpose.msra.mxu0 0.0
        %4373 = vmatprep.subr.mxu0 0.0
        %4374 = vmatpush1.xpose.msra.mxu0 0.0
        %4375 = vmatprep.subr.mxu0 0.0
        %4376 = vmatpush1.xpose.msra.mxu0 0.0
        %4377 = vmatprep.subr.mxu0 0.0
        %4378 = vmatpush1.xpose.msra.mxu0 0.0
        %4379 = vmatprep.subr.mxu0 0.0
        %4380 = vmatpush1.xpose.msra.mxu0 0.0
        %4381 = vmatprep.subr.mxu0 0.0
        %4382 = vmatpush1.xpose.msra.mxu0 0.0
        %4383 = vmatprep.subr.mxu0 0.0
        %4384 = vmatpush1.xpose.msra.mxu0 0.0
        %4385 = vmatprep.subr.mxu0 0.0
        %4386 = vmatpush1.xpose.msra.mxu0 0.0
        %4387 = vmatprep.subr.mxu0 0.0
        %4388 = vmatpush1.xpose.msra.mxu0 0.0
        %4389 = vmatprep.subr.mxu0 0.0
        %4390 = vmatpush1.xpose.msra.mxu0 0.0
        %4391 = vmatprep.subr.mxu0 0.0
        %4392 = vmatpush1.xpose.msra.mxu0 0.0
        %4393 = vmatprep.subr.mxu0 0.0
        %4394 = vmatpush1.xpose.msra.mxu0 0.0
        %4395 = vmatprep.subr.mxu0 0.0
        %4396 = vmatpush1.xpose.msra.mxu0 0.0
        %4397 = vmatprep.subr.mxu0 0.0
        %4398 = vmatpush1.xpose.msra.mxu0 0.0
        %4399 = vmatprep.subr.mxu0 0.0
        %4400 = vmatpush1.xpose.msra.mxu0 0.0
        %4401 = vmatprep.subr.mxu0 0.0
        %4402 = vmatpush1.xpose.msra.mxu0 0.0
        %4403 = vmatprep.subr.mxu0 0.0
        %4404 = vmatpush1.xpose.msra.mxu0 0.0
        %4405 = vmatprep.subr.mxu0 0.0
        %4406 = vmatpush1.xpose.msra.mxu0 0.0
        %4407 = vmatprep.subr.mxu0 0.0
        %4408 = vmatpush1.xpose.msra.mxu0 0.0
        %4409 = vmatprep.mubr.f32.mxu0 %v3094
        %4410 = vmatmul.mubr.f32.gmra.mrb[0].mxu0 %v3092
        %v4411 = vpop.f32.mrb[0].mxu0
        %v4412 = vadd.f32 %v4342, %v4411
        %v4413 = vpop.f32.mrb[0].mxu0
        %4414 = vdwg.mxu0
        %4415 = vmatprep.subr.mxu0 %v2720
        %4416 = vmatpush1.xpose.msra.mxu0 %v2719
        %4417 = vmatprep.subr.mxu0 %v2784
        %4418 = vmatpush1.xpose.msra.mxu0 %v2783
        %4419 = vmatprep.subr.mxu0 %v2848
        %4420 = vmatpush1.xpose.msra.mxu0 %v2847
        %4421 = vmatprep.subr.mxu0 %v2912
        %4422 = vmatpush1.xpose.msra.mxu0 %v2911
        %4423 = vmatprep.subr.mxu0 0.0
        %4424 = vmatpush1.xpose.msra.mxu0 0.0
        %4425 = vmatprep.subr.mxu0 0.0
        %4426 = vmatpush1.xpose.msra.mxu0 0.0
        %4427 = vmatprep.subr.mxu0 0.0
        %4428 = vmatpush1.xpose.msra.mxu0 0.0
        %4429 = vmatprep.subr.mxu0 0.0
        %4430 = vmatpush1.xpose.msra.mxu0 0.0
        %4431 = vmatprep.subr.mxu0 0.0
        %4432 = vmatpush1.xpose.msra.mxu0 0.0
        %4433 = vmatprep.subr.mxu0 0.0
        %4434 = vmatpush1.xpose.msra.mxu0 0.0
        %4435 = vmatprep.subr.mxu0 0.0
        %4436 = vmatpush1.xpose.msra.mxu0 0.0
        %4437 = vmatprep.subr.mxu0 0.0
        %4438 = vmatpush1.xpose.msra.mxu0 0.0
        %4439 = vmatprep.subr.mxu0 0.0
        %4440 = vmatpush1.xpose.msra.mxu0 0.0
        %4441 = vmatprep.subr.mxu0 0.0
        %4442 = vmatpush1.xpose.msra.mxu0 0.0
        %4443 = vmatprep.subr.mxu0 0.0
        %4444 = vmatpush1.xpose.msra.mxu0 0.0
        %4445 = vmatprep.subr.mxu0 0.0
        %4446 = vmatpush1.xpose.msra.mxu0 0.0
        %4447 = vmatprep.subr.mxu0 0.0
        %4448 = vmatpush1.xpose.msra.mxu0 0.0
        %4449 = vmatprep.subr.mxu0 0.0
        %4450 = vmatpush1.xpose.msra.mxu0 0.0
        %4451 = vmatprep.subr.mxu0 0.0
        %4452 = vmatpush1.xpose.msra.mxu0 0.0
        %4453 = vmatprep.subr.mxu0 0.0
        %4454 = vmatpush1.xpose.msra.mxu0 0.0
        %4455 = vmatprep.subr.mxu0 0.0
        %4456 = vmatpush1.xpose.msra.mxu0 0.0
        %4457 = vmatprep.subr.mxu0 0.0
        %4458 = vmatpush1.xpose.msra.mxu0 0.0
        %4459 = vmatprep.subr.mxu0 0.0
        %4460 = vmatpush1.xpose.msra.mxu0 0.0
        %4461 = vmatprep.subr.mxu0 0.0
        %4462 = vmatpush1.xpose.msra.mxu0 0.0
        %4463 = vmatprep.subr.mxu0 0.0
        %4464 = vmatpush1.xpose.msra.mxu0 0.0
        %4465 = vmatprep.subr.mxu0 0.0
        %4466 = vmatpush1.xpose.msra.mxu0 0.0
        %4467 = vmatprep.subr.mxu0 0.0
        %4468 = vmatpush1.xpose.msra.mxu0 0.0
        %4469 = vmatprep.subr.mxu0 0.0
        %4470 = vmatpush1.xpose.msra.mxu0 0.0
        %4471 = vmatprep.subr.mxu0 0.0
        %4472 = vmatpush1.xpose.msra.mxu0 0.0
        %4473 = vmatprep.subr.mxu0 0.0
        %4474 = vmatpush1.xpose.msra.mxu0 0.0
        %4475 = vmatprep.subr.mxu0 0.0
        %4476 = vmatpush1.xpose.msra.mxu0 0.0
        %4477 = vmatprep.subr.mxu0 0.0
        %4478 = vmatpush1.xpose.msra.mxu0 0.0
        %4479 = vmatprep.mubr.f32.mxu0 %v3110
        %4480 = vmatmul.mubr.f32.gmra.mrb[0].mxu0 %v3102
        %v4481 = vpop.f32.mrb[0].mxu0
        %v4482 = vadd.f32 %v4412, %v4481
        %v4483 = vpop.f32.mrb[0].mxu0
        %4484 = vdwg.mxu0
        %4485 = vmatprep.subr.mxu0 %v2722
        %4486 = vmatpush1.xpose.msra.mxu0 %v2721
        %4487 = vmatprep.subr.mxu0 %v2786
        %4488 = vmatpush1.xpose.msra.mxu0 %v2785
        %4489 = vmatprep.subr.mxu0 %v2850
        %4490 = vmatpush1.xpose.msra.mxu0 %v2849
        %4491 = vmatprep.subr.mxu0 %v2914
        %4492 = vmatpush1.xpose.msra.mxu0 %v2913
        %4493 = vmatprep.subr.mxu0 0.0
        %4494 = vmatpush1.xpose.msra.mxu0 0.0
        %4495 = vmatprep.subr.mxu0 0.0
        %4496 = vmatpush1.xpose.msra.mxu0 0.0
        %4497 = vmatprep.subr.mxu0 0.0
        %4498 = vmatpush1.xpose.msra.mxu0 0.0
        %4499 = vmatprep.subr.mxu0 0.0
        %4500 = vmatpush1.xpose.msra.mxu0 0.0
        %4501 = vmatprep.subr.mxu0 0.0
        %4502 = vmatpush1.xpose.msra.mxu0 0.0
        %4503 = vmatprep.subr.mxu0 0.0
        %4504 = vmatpush1.xpose.msra.mxu0 0.0
        %4505 = vmatprep.subr.mxu0 0.0
        %4506 = vmatpush1.xpose.msra.mxu0 0.0
        %4507 = vmatprep.subr.mxu0 0.0
        %4508 = vmatpush1.xpose.msra.mxu0 0.0
        %4509 = vmatprep.subr.mxu0 0.0
        %4510 = vmatpush1.xpose.msra.mxu0 0.0
        %4511 = vmatprep.subr.mxu0 0.0
        %4512 = vmatpush1.xpose.msra.mxu0 0.0
        %4513 = vmatprep.subr.mxu0 0.0
        %4514 = vmatpush1.xpose.msra.mxu0 0.0
        %4515 = vmatprep.subr.mxu0 0.0
        %4516 = vmatpush1.xpose.msra.mxu0 0.0
        %4517 = vmatprep.subr.mxu0 0.0
        %4518 = vmatpush1.xpose.msra.mxu0 0.0
        %4519 = vmatprep.subr.mxu0 0.0
        %4520 = vmatpush1.xpose.msra.mxu0 0.0
        %4521 = vmatprep.subr.mxu0 0.0
        %4522 = vmatpush1.xpose.msra.mxu0 0.0
        %4523 = vmatprep.subr.mxu0 0.0
        %4524 = vmatpush1.xpose.msra.mxu0 0.0
        %4525 = vmatprep.subr.mxu0 0.0
        %4526 = vmatpush1.xpose.msra.mxu0 0.0
        %4527 = vmatprep.subr.mxu0 0.0
        %4528 = vmatpush1.xpose.msra.mxu0 0.0
        %4529 = vmatprep.subr.mxu0 0.0
        %4530 = vmatpush1.xpose.msra.mxu0 0.0
        %4531 = vmatprep.subr.mxu0 0.0
        %4532 = vmatpush1.xpose.msra.mxu0 0.0
        %4533 = vmatprep.subr.mxu0 0.0
        %4534 = vmatpush1.xpose.msra.mxu0 0.0
        %4535 = vmatprep.subr.mxu0 0.0
        %4536 = vmatpush1.xpose.msra.mxu0 0.0
        %4537 = vmatprep.subr.mxu0 0.0
        %4538 = vmatpush1.xpose.msra.mxu0 0.0
        %4539 = vmatprep.subr.mxu0 0.0
        %4540 = vmatpush1.xpose.msra.mxu0 0.0
        %4541 = vmatprep.subr.mxu0 0.0
        %4542 = vmatpush1.xpose.msra.mxu0 0.0
        %4543 = vmatprep.subr.mxu0 0.0
        %4544 = vmatpush1.xpose.msra.mxu0 0.0
        %4545 = vmatprep.subr.mxu0 0.0
        %4546 = vmatpush1.xpose.msra.mxu0 0.0
        %4547 = vmatprep.subr.mxu0 0.0
        %4548 = vmatpush1.xpose.msra.mxu0 0.0
        %4549 = vmatprep.mubr.f32.mxu0 %v3111
        %4550 = vmatmul.mubr.f32.gmra.mrb[0].mxu0 %v3109
        %v4551 = vpop.f32.mrb[0].mxu0
        %v4552 = vadd.f32 %v4482, %v4551
        %v4553 = vpop.f32.mrb[0].mxu0
        %4554 = vdwg.mxu0
        %4555 = vmatprep.subr.mxu0 %v2724
        %4556 = vmatpush1.xpose.msra.mxu0 %v2723
        %4557 = vmatprep.subr.mxu0 %v2788
        %4558 = vmatpush1.xpose.msra.mxu0 %v2787
        %4559 = vmatprep.subr.mxu0 %v2852
        %4560 = vmatpush1.xpose.msra.mxu0 %v2851
        %4561 = vmatprep.subr.mxu0 %v2916
        %4562 = vmatpush1.xpose.msra.mxu0 %v2915
        %4563 = vmatprep.subr.mxu0 0.0
        %4564 = vmatpush1.xpose.msra.mxu0 0.0
        %4565 = vmatprep.subr.mxu0 0.0
        %4566 = vmatpush1.xpose.msra.mxu0 0.0
        %4567 = vmatprep.subr.mxu0 0.0
        %4568 = vmatpush1.xpose.msra.mxu0 0.0
        %4569 = vmatprep.subr.mxu0 0.0
        %4570 = vmatpush1.xpose.msra.mxu0 0.0
        %4571 = vmatprep.subr.mxu0 0.0
        %4572 = vmatpush1.xpose.msra.mxu0 0.0
        %4573 = vmatprep.subr.mxu0 0.0
        %4574 = vmatpush1.xpose.msra.mxu0 0.0
        %4575 = vmatprep.subr.mxu0 0.0
        %4576 = vmatpush1.xpose.msra.mxu0 0.0
        %4577 = vmatprep.subr.mxu0 0.0
        %4578 = vmatpush1.xpose.msra.mxu0 0.0
        %4579 = vmatprep.subr.mxu0 0.0
        %4580 = vmatpush1.xpose.msra.mxu0 0.0
        %4581 = vmatprep.subr.mxu0 0.0
        %4582 = vmatpush1.xpose.msra.mxu0 0.0
        %4583 = vmatprep.subr.mxu0 0.0
        %4584 = vmatpush1.xpose.msra.mxu0 0.0
        %4585 = vmatprep.subr.mxu0 0.0
        %4586 = vmatpush1.xpose.msra.mxu0 0.0
        %4587 = vmatprep.subr.mxu0 0.0
        %4588 = vmatpush1.xpose.msra.mxu0 0.0
        %4589 = vmatprep.subr.mxu0 0.0
        %4590 = vmatpush1.xpose.msra.mxu0 0.0
        %4591 = vmatprep.subr.mxu0 0.0
        %4592 = vmatpush1.xpose.msra.mxu0 0.0
        %4593 = vmatprep.subr.mxu0 0.0
        %4594 = vmatpush1.xpose.msra.mxu0 0.0
        %4595 = vmatprep.subr.mxu0 0.0
        %4596 = vmatpush1.xpose.msra.mxu0 0.0
        %4597 = vmatprep.subr.mxu0 0.0
        %4598 = vmatpush1.xpose.msra.mxu0 0.0
        %4599 = vmatprep.subr.mxu0 0.0
        %4600 = vmatpush1.xpose.msra.mxu0 0.0
        %4601 = vmatprep.subr.mxu0 0.0
        %4602 = vmatpush1.xpose.msra.mxu0 0.0
        %4603 = vmatprep.subr.mxu0 0.0
        %4604 = vmatpush1.xpose.msra.mxu0 0.0
        %4605 = vmatprep.subr.mxu0 0.0
        %4606 = vmatpush1.xpose.msra.mxu0 0.0
        %4607 = vmatprep.subr.mxu0 0.0
        %4608 = vmatpush1.xpose.msra.mxu0 0.0
        %4609 = vmatprep.subr.mxu0 0.0
        %4610 = vmatpush1.xpose.msra.mxu0 0.0
        %4611 = vmatprep.subr.mxu0 0.0
        %4612 = vmatpush1.xpose.msra.mxu0 0.0
        %4613 = vmatprep.subr.mxu0 0.0
        %4614 = vmatpush1.xpose.msra.mxu0 0.0
        %4615 = vmatprep.subr.mxu0 0.0
        %4616 = vmatpush1.xpose.msra.mxu0 0.0
        %4617 = vmatprep.subr.mxu0 0.0
        %4618 = vmatpush1.xpose.msra.mxu0 0.0
        %4619 = vmatprep.mubr.f32.mxu0 %v3127
        %4620 = vmatmul.mubr.f32.gmra.mrb[0].mxu0 %v3119
        %v4621 = vpop.f32.mrb[0].mxu0
        %v4622 = vadd.f32 %v4552, %v4621
        %v4623 = vpop.f32.mrb[0].mxu0
        %4624 = vdwg.mxu0
        %4625 = vmatprep.subr.mxu0 %v2726
        %4626 = vmatpush1.xpose.msra.mxu0 %v2725
        %4627 = vmatprep.subr.mxu0 %v2790
        %4628 = vmatpush1.xpose.msra.mxu0 %v2789
        %4629 = vmatprep.subr.mxu0 %v2854
        %4630 = vmatpush1.xpose.msra.mxu0 %v2853
        %4631 = vmatprep.subr.mxu0 %v2918
        %4632 = vmatpush1.xpose.msra.mxu0 %v2917
        %4633 = vmatprep.subr.mxu0 0.0
        %4634 = vmatpush1.xpose.msra.mxu0 0.0
        %4635 = vmatprep.subr.mxu0 0.0
        %4636 = vmatpush1.xpose.msra.mxu0 0.0
        %4637 = vmatprep.subr.mxu0 0.0
        %4638 = vmatpush1.xpose.msra.mxu0 0.0
        %4639 = vmatprep.subr.mxu0 0.0
        %4640 = vmatpush1.xpose.msra.mxu0 0.0
        %4641 = vmatprep.subr.mxu0 0.0
        %4642 = vmatpush1.xpose.msra.mxu0 0.0
        %4643 = vmatprep.subr.mxu0 0.0
        %4644 = vmatpush1.xpose.msra.mxu0 0.0
        %4645 = vmatprep.subr.mxu0 0.0
        %4646 = vmatpush1.xpose.msra.mxu0 0.0
        %4647 = vmatprep.subr.mxu0 0.0
        %4648 = vmatpush1.xpose.msra.mxu0 0.0
        %4649 = vmatprep.subr.mxu0 0.0
        %4650 = vmatpush1.xpose.msra.mxu0 0.0
        %4651 = vmatprep.subr.mxu0 0.0
        %4652 = vmatpush1.xpose.msra.mxu0 0.0
        %4653 = vmatprep.subr.mxu0 0.0
        %4654 = vmatpush1.xpose.msra.mxu0 0.0
        %4655 = vmatprep.subr.mxu0 0.0
        %4656 = vmatpush1.xpose.msra.mxu0 0.0
        %4657 = vmatprep.subr.mxu0 0.0
        %4658 = vmatpush1.xpose.msra.mxu0 0.0
        %4659 = vmatprep.subr.mxu0 0.0
        %4660 = vmatpush1.xpose.msra.mxu0 0.0
        %4661 = vmatprep.subr.mxu0 0.0
        %4662 = vmatpush1.xpose.msra.mxu0 0.0
        %4663 = vmatprep.subr.mxu0 0.0
        %4664 = vmatpush1.xpose.msra.mxu0 0.0
        %4665 = vmatprep.subr.mxu0 0.0
        %4666 = vmatpush1.xpose.msra.mxu0 0.0
        %4667 = vmatprep.subr.mxu0 0.0
        %4668 = vmatpush1.xpose.msra.mxu0 0.0
        %4669 = vmatprep.subr.mxu0 0.0
        %4670 = vmatpush1.xpose.msra.mxu0 0.0
        %4671 = vmatprep.subr.mxu0 0.0
        %4672 = vmatpush1.xpose.msra.mxu0 0.0
        %4673 = vmatprep.subr.mxu0 0.0
        %4674 = vmatpush1.xpose.msra.mxu0 0.0
        %4675 = vmatprep.subr.mxu0 0.0
        %4676 = vmatpush1.xpose.msra.mxu0 0.0
        %4677 = vmatprep.subr.mxu0 0.0
        %4678 = vmatpush1.xpose.msra.mxu0 0.0
        %4679 = vmatprep.subr.mxu0 0.0
        %4680 = vmatpush1.xpose.msra.mxu0 0.0
        %4681 = vmatprep.subr.mxu0 0.0
        %4682 = vmatpush1.xpose.msra.mxu0 0.0
        %4683 = vmatprep.subr.mxu0 0.0
        %4684 = vmatpush1.xpose.msra.mxu0 0.0
        %4685 = vmatprep.subr.mxu0 0.0
        %4686 = vmatpush1.xpose.msra.mxu0 0.0
        %4687 = vmatprep.subr.mxu0 0.0
        %4688 = vmatpush1.xpose.msra.mxu0 0.0
        %4689 = vmatprep.mubr.f32.mxu0 %v3128
        %4690 = vmatmul.mubr.f32.gmra.mrb[0].mxu0 %v3126
        %v4691 = vpop.f32.mrb[0].mxu0
        %v4692 = vadd.f32 %v4622, %v4691
        %v4693 = vpop.f32.mrb[0].mxu0
        %4694 = vdwg.mxu0
        %4695 = vmatprep.subr.mxu0 %v2728
        %4696 = vmatpush1.xpose.msra.mxu0 %v2727
        %4697 = vmatprep.subr.mxu0 %v2792
        %4698 = vmatpush1.xpose.msra.mxu0 %v2791
        %4699 = vmatprep.subr.mxu0 %v2856
        %4700 = vmatpush1.xpose.msra.mxu0 %v2855
        %4701 = vmatprep.subr.mxu0 %v2920
        %4702 = vmatpush1.xpose.msra.mxu0 %v2919
        %4703 = vmatprep.subr.mxu0 0.0
        %4704 = vmatpush1.xpose.msra.mxu0 0.0
        %4705 = vmatprep.subr.mxu0 0.0
        %4706 = vmatpush1.xpose.msra.mxu0 0.0
        %4707 = vmatprep.subr.mxu0 0.0
        %4708 = vmatpush1.xpose.msra.mxu0 0.0
        %4709 = vmatprep.subr.mxu0 0.0
        %4710 = vmatpush1.xpose.msra.mxu0 0.0
        %4711 = vmatprep.subr.mxu0 0.0
        %4712 = vmatpush1.xpose.msra.mxu0 0.0
        %4713 = vmatprep.subr.mxu0 0.0
        %4714 = vmatpush1.xpose.msra.mxu0 0.0
        %4715 = vmatprep.subr.mxu0 0.0
        %4716 = vmatpush1.xpose.msra.mxu0 0.0
        %4717 = vmatprep.subr.mxu0 0.0
        %4718 = vmatpush1.xpose.msra.mxu0 0.0
        %4719 = vmatprep.subr.mxu0 0.0
        %4720 = vmatpush1.xpose.msra.mxu0 0.0
        %4721 = vmatprep.subr.mxu0 0.0
        %4722 = vmatpush1.xpose.msra.mxu0 0.0
        %4723 = vmatprep.subr.mxu0 0.0
        %4724 = vmatpush1.xpose.msra.mxu0 0.0
        %4725 = vmatprep.subr.mxu0 0.0
        %4726 = vmatpush1.xpose.msra.mxu0 0.0
        %4727 = vmatprep.subr.mxu0 0.0
        %4728 = vmatpush1.xpose.msra.mxu0 0.0
        %4729 = vmatprep.subr.mxu0 0.0
        %4730 = vmatpush1.xpose.msra.mxu0 0.0
        %4731 = vmatprep.subr.mxu0 0.0
        %4732 = vmatpush1.xpose.msra.mxu0 0.0
        %4733 = vmatprep.subr.mxu0 0.0
        %4734 = vmatpush1.xpose.msra.mxu0 0.0
        %4735 = vmatprep.subr.mxu0 0.0
        %4736 = vmatpush1.xpose.msra.mxu0 0.0
        %4737 = vmatprep.subr.mxu0 0.0
        %4738 = vmatpush1.xpose.msra.mxu0 0.0
        %4739 = vmatprep.subr.mxu0 0.0
        %4740 = vmatpush1.xpose.msra.mxu0 0.0
        %4741 = vmatprep.subr.mxu0 0.0
        %4742 = vmatpush1.xpose.msra.mxu0 0.0
        %4743 = vmatprep.subr.mxu0 0.0
        %4744 = vmatpush1.xpose.msra.mxu0 0.0
        %4745 = vmatprep.subr.mxu0 0.0
        %4746 = vmatpush1.xpose.msra.mxu0 0.0
        %4747 = vmatprep.subr.mxu0 0.0
        %4748 = vmatpush1.xpose.msra.mxu0 0.0
        %4749 = vmatprep.subr.mxu0 0.0
        %4750 = vmatpush1.xpose.msra.mxu0 0.0
        %4751 = vmatprep.subr.mxu0 0.0
        %4752 = vmatpush1.xpose.msra.mxu0 0.0
        %4753 = vmatprep.subr.mxu0 0.0
        %4754 = vmatpush1.xpose.msra.mxu0 0.0
        %4755 = vmatprep.subr.mxu0 0.0
        %4756 = vmatpush1.xpose.msra.mxu0 0.0
        %4757 = vmatprep.subr.mxu0 0.0
        %4758 = vmatpush1.xpose.msra.mxu0 0.0
        %4759 = vmatprep.mubr.f32.mxu0 %v3144
        %4760 = vmatmul.mubr.f32.gmra.mrb[0].mxu0 %v3136
        %v4761 = vpop.f32.mrb[0].mxu0
        %v4762 = vadd.f32 %v4692, %v4761
        %v4763 = vpop.f32.mrb[0].mxu0
        %4764 = vdwg.mxu0
        %4765 = vmatprep.subr.mxu0 %v2730
        %4766 = vmatpush1.xpose.msra.mxu0 %v2729
        %4767 = vmatprep.subr.mxu0 %v2794
        %4768 = vmatpush1.xpose.msra.mxu0 %v2793
        %4769 = vmatprep.subr.mxu0 %v2858
        %4770 = vmatpush1.xpose.msra.mxu0 %v2857
        %4771 = vmatprep.subr.mxu0 %v2922
        %4772 = vmatpush1.xpose.msra.mxu0 %v2921
        %4773 = vmatprep.subr.mxu0 0.0
        %4774 = vmatpush1.xpose.msra.mxu0 0.0
        %4775 = vmatprep.subr.mxu0 0.0
        %4776 = vmatpush1.xpose.msra.mxu0 0.0
        %4777 = vmatprep.subr.mxu0 0.0
        %4778 = vmatpush1.xpose.msra.mxu0 0.0
        %4779 = vmatprep.subr.mxu0 0.0
        %4780 = vmatpush1.xpose.msra.mxu0 0.0
        %4781 = vmatprep.subr.mxu0 0.0
        %4782 = vmatpush1.xpose.msra.mxu0 0.0
        %4783 = vmatprep.subr.mxu0 0.0
        %4784 = vmatpush1.xpose.msra.mxu0 0.0
        %4785 = vmatprep.subr.mxu0 0.0
        %4786 = vmatpush1.xpose.msra.mxu0 0.0
        %4787 = vmatprep.subr.mxu0 0.0
        %4788 = vmatpush1.xpose.msra.mxu0 0.0
        %4789 = vmatprep.subr.mxu0 0.0
        %4790 = vmatpush1.xpose.msra.mxu0 0.0
        %4791 = vmatprep.subr.mxu0 0.0
        %4792 = vmatpush1.xpose.msra.mxu0 0.0
        %4793 = vmatprep.subr.mxu0 0.0
        %4794 = vmatpush1.xpose.msra.mxu0 0.0
        %4795 = vmatprep.subr.mxu0 0.0
        %4796 = vmatpush1.xpose.msra.mxu0 0.0
        %4797 = vmatprep.subr.mxu0 0.0
        %4798 = vmatpush1.xpose.msra.mxu0 0.0
        %4799 = vmatprep.subr.mxu0 0.0
        %4800 = vmatpush1.xpose.msra.mxu0 0.0
        %4801 = vmatprep.subr.mxu0 0.0
        %4802 = vmatpush1.xpose.msra.mxu0 0.0
        %4803 = vmatprep.subr.mxu0 0.0
        %4804 = vmatpush1.xpose.msra.mxu0 0.0
        %4805 = vmatprep.subr.mxu0 0.0
        %4806 = vmatpush1.xpose.msra.mxu0 0.0
        %4807 = vmatprep.subr.mxu0 0.0
        %4808 = vmatpush1.xpose.msra.mxu0 0.0
        %4809 = vmatprep.subr.mxu0 0.0
        %4810 = vmatpush1.xpose.msra.mxu0 0.0
        %4811 = vmatprep.subr.mxu0 0.0
        %4812 = vmatpush1.xpose.msra.mxu0 0.0
        %4813 = vmatprep.subr.mxu0 0.0
        %4814 = vmatpush1.xpose.msra.mxu0 0.0
        %4815 = vmatprep.subr.mxu0 0.0
        %4816 = vmatpush1.xpose.msra.mxu0 0.0
        %4817 = vmatprep.subr.mxu0 0.0
        %4818 = vmatpush1.xpose.msra.mxu0 0.0
        %4819 = vmatprep.subr.mxu0 0.0
        %4820 = vmatpush1.xpose.msra.mxu0 0.0
        %4821 = vmatprep.subr.mxu0 0.0
        %4822 = vmatpush1.xpose.msra.mxu0 0.0
        %4823 = vmatprep.subr.mxu0 0.0
        %4824 = vmatpush1.xpose.msra.mxu0 0.0
        %4825 = vmatprep.subr.mxu0 0.0
        %4826 = vmatpush1.xpose.msra.mxu0 0.0
        %4827 = vmatprep.subr.mxu0 0.0
        %4828 = vmatpush1.xpose.msra.mxu0 0.0
        %4829 = vmatprep.mubr.f32.mxu0 %v3145
        %4830 = vmatmul.mubr.f32.gmra.mrb[0].mxu0 %v3143
        %v4831 = vpop.f32.mrb[0].mxu0
        %v4832 = vadd.f32 %v4762, %v4831
        %v4833 = vpop.f32.mrb[0].mxu0
        %4834 = vdwg.mxu0
        %4835 = vmatprep.subr.mxu0 %v2732
        %4836 = vmatpush1.xpose.msra.mxu0 %v2731
        %4837 = vmatprep.subr.mxu0 %v2796
        %4838 = vmatpush1.xpose.msra.mxu0 %v2795
        %4839 = vmatprep.subr.mxu0 %v2860
        %4840 = vmatpush1.xpose.msra.mxu0 %v2859
        %4841 = vmatprep.subr.mxu0 %v2924
        %4842 = vmatpush1.xpose.msra.mxu0 %v2923
        %4843 = vmatprep.subr.mxu0 0.0
        %4844 = vmatpush1.xpose.msra.mxu0 0.0
        %4845 = vmatprep.subr.mxu0 0.0
        %4846 = vmatpush1.xpose.msra.mxu0 0.0
        %4847 = vmatprep.subr.mxu0 0.0
        %4848 = vmatpush1.xpose.msra.mxu0 0.0
        %4849 = vmatprep.subr.mxu0 0.0
        %4850 = vmatpush1.xpose.msra.mxu0 0.0
        %4851 = vmatprep.subr.mxu0 0.0
        %4852 = vmatpush1.xpose.msra.mxu0 0.0
        %4853 = vmatprep.subr.mxu0 0.0
        %4854 = vmatpush1.xpose.msra.mxu0 0.0
        %4855 = vmatprep.subr.mxu0 0.0
        %4856 = vmatpush1.xpose.msra.mxu0 0.0
        %4857 = vmatprep.subr.mxu0 0.0
        %4858 = vmatpush1.xpose.msra.mxu0 0.0
        %4859 = vmatprep.subr.mxu0 0.0
        %4860 = vmatpush1.xpose.msra.mxu0 0.0
        %4861 = vmatprep.subr.mxu0 0.0
        %4862 = vmatpush1.xpose.msra.mxu0 0.0
        %4863 = vmatprep.subr.mxu0 0.0
        %4864 = vmatpush1.xpose.msra.mxu0 0.0
        %4865 = vmatprep.subr.mxu0 0.0
        %4866 = vmatpush1.xpose.msra.mxu0 0.0
        %4867 = vmatprep.subr.mxu0 0.0
        %4868 = vmatpush1.xpose.msra.mxu0 0.0
        %4869 = vmatprep.subr.mxu0 0.0
        %4870 = vmatpush1.xpose.msra.mxu0 0.0
        %4871 = vmatprep.subr.mxu0 0.0
        %4872 = vmatpush1.xpose.msra.mxu0 0.0
        %4873 = vmatprep.subr.mxu0 0.0
        %4874 = vmatpush1.xpose.msra.mxu0 0.0
        %4875 = vmatprep.subr.mxu0 0.0
        %4876 = vmatpush1.xpose.msra.mxu0 0.0
        %4877 = vmatprep.subr.mxu0 0.0
        %4878 = vmatpush1.xpose.msra.mxu0 0.0
        %4879 = vmatprep.subr.mxu0 0.0
        %4880 = vmatpush1.xpose.msra.mxu0 0.0
        %4881 = vmatprep.subr.mxu0 0.0
        %4882 = vmatpush1.xpose.msra.mxu0 0.0
        %4883 = vmatprep.subr.mxu0 0.0
        %4884 = vmatpush1.xpose.msra.mxu0 0.0
        %4885 = vmatprep.subr.mxu0 0.0
        %4886 = vmatpush1.xpose.msra.mxu0 0.0
        %4887 = vmatprep.subr.mxu0 0.0
        %4888 = vmatpush1.xpose.msra.mxu0 0.0
        %4889 = vmatprep.subr.mxu0 0.0
        %4890 = vmatpush1.xpose.msra.mxu0 0.0
        %4891 = vmatprep.subr.mxu0 0.0
        %4892 = vmatpush1.xpose.msra.mxu0 0.0
        %4893 = vmatprep.subr.mxu0 0.0
        %4894 = vmatpush1.xpose.msra.mxu0 0.0
        %4895 = vmatprep.subr.mxu0 0.0
        %4896 = vmatpush1.xpose.msra.mxu0 0.0
        %4897 = vmatprep.subr.mxu0 0.0
        %4898 = vmatpush1.xpose.msra.mxu0 0.0
        %4899 = vmatprep.mubr.f32.mxu0 %v3161
        %4900 = vmatmul.mubr.f32.gmra.mrb[0].mxu0 %v3153
        %v4901 = vpop.f32.mrb[0].mxu0
        %v4902 = vadd.f32 %v4832, %v4901
        %v4903 = vpop.f32.mrb[0].mxu0
        %4904 = vdwg.mxu0
        %4905 = vmatprep.subr.mxu0 %v2734
        %4906 = vmatpush1.xpose.msra.mxu0 %v2733
        %4907 = vmatprep.subr.mxu0 %v2798
        %4908 = vmatpush1.xpose.msra.mxu0 %v2797
        %4909 = vmatprep.subr.mxu0 %v2862
        %4910 = vmatpush1.xpose.msra.mxu0 %v2861
        %4911 = vmatprep.subr.mxu0 %v2926
        %4912 = vmatpush1.xpose.msra.mxu0 %v2925
        %4913 = vmatprep.subr.mxu0 0.0
        %4914 = vmatpush1.xpose.msra.mxu0 0.0
        %4915 = vmatprep.subr.mxu0 0.0
        %4916 = vmatpush1.xpose.msra.mxu0 0.0
        %4917 = vmatprep.subr.mxu0 0.0
        %4918 = vmatpush1.xpose.msra.mxu0 0.0
        %4919 = vmatprep.subr.mxu0 0.0
        %4920 = vmatpush1.xpose.msra.mxu0 0.0
        %4921 = vmatprep.subr.mxu0 0.0
        %4922 = vmatpush1.xpose.msra.mxu0 0.0
        %4923 = vmatprep.subr.mxu0 0.0
        %4924 = vmatpush1.xpose.msra.mxu0 0.0
        %4925 = vmatprep.subr.mxu0 0.0
        %4926 = vmatpush1.xpose.msra.mxu0 0.0
        %4927 = vmatprep.subr.mxu0 0.0
        %4928 = vmatpush1.xpose.msra.mxu0 0.0
        %4929 = vmatprep.subr.mxu0 0.0
        %4930 = vmatpush1.xpose.msra.mxu0 0.0
        %4931 = vmatprep.subr.mxu0 0.0
        %4932 = vmatpush1.xpose.msra.mxu0 0.0
        %4933 = vmatprep.subr.mxu0 0.0
        %4934 = vmatpush1.xpose.msra.mxu0 0.0
        %4935 = vmatprep.subr.mxu0 0.0
        %4936 = vmatpush1.xpose.msra.mxu0 0.0
        %4937 = vmatprep.subr.mxu0 0.0
        %4938 = vmatpush1.xpose.msra.mxu0 0.0
        %4939 = vmatprep.subr.mxu0 0.0
        %4940 = vmatpush1.xpose.msra.mxu0 0.0
        %4941 = vmatprep.subr.mxu0 0.0
        %4942 = vmatpush1.xpose.msra.mxu0 0.0
        %4943 = vmatprep.subr.mxu0 0.0
        %4944 = vmatpush1.xpose.msra.mxu0 0.0
        %4945 = vmatprep.subr.mxu0 0.0
        %4946 = vmatpush1.xpose.msra.mxu0 0.0
        %4947 = vmatprep.subr.mxu0 0.0
        %4948 = vmatpush1.xpose.msra.mxu0 0.0
        %4949 = vmatprep.subr.mxu0 0.0
        %4950 = vmatpush1.xpose.msra.mxu0 0.0
        %4951 = vmatprep.subr.mxu0 0.0
        %4952 = vmatpush1.xpose.msra.mxu0 0.0
        %4953 = vmatprep.subr.mxu0 0.0
        %4954 = vmatpush1.xpose.msra.mxu0 0.0
        %4955 = vmatprep.subr.mxu0 0.0
        %4956 = vmatpush1.xpose.msra.mxu0 0.0
        %4957 = vmatprep.subr.mxu0 0.0
        %4958 = vmatpush1.xpose.msra.mxu0 0.0
        %4959 = vmatprep.subr.mxu0 0.0
        %4960 = vmatpush1.xpose.msra.mxu0 0.0
        %4961 = vmatprep.subr.mxu0 0.0
        %4962 = vmatpush1.xpose.msra.mxu0 0.0
        %4963 = vmatprep.subr.mxu0 0.0
        %4964 = vmatpush1.xpose.msra.mxu0 0.0
        %4965 = vmatprep.subr.mxu0 0.0
        %4966 = vmatpush1.xpose.msra.mxu0 0.0
        %4967 = vmatprep.subr.mxu0 0.0
        %4968 = vmatpush1.xpose.msra.mxu0 0.0
        %4969 = vmatprep.mubr.f32.mxu0 %v3162
        %4970 = vmatmul.mubr.f32.gmra.mrb[0].mxu0 %v3160
        %v4971 = vpop.f32.mrb[0].mxu0
        %v4972 = vadd.f32 %v4902, %v4971
        %v4973 = vpop.f32.mrb[0].mxu0
        %4974 = vdwg.mxu0
        %4975 = vmatprep.subr.mxu0 %v2736
        %4976 = vmatpush1.xpose.msra.mxu0 %v2735
        %4977 = vmatprep.subr.mxu0 %v2800
        %4978 = vmatpush1.xpose.msra.mxu0 %v2799
        %4979 = vmatprep.subr.mxu0 %v2864
        %4980 = vmatpush1.xpose.msra.mxu0 %v2863
        %4981 = vmatprep.subr.mxu0 %v2928
        %4982 = vmatpush1.xpose.msra.mxu0 %v2927
        %4983 = vmatprep.subr.mxu0 0.0
        %4984 = vmatpush1.xpose.msra.mxu0 0.0
        %4985 = vmatprep.subr.mxu0 0.0
        %4986 = vmatpush1.xpose.msra.mxu0 0.0
        %4987 = vmatprep.subr.mxu0 0.0
        %4988 = vmatpush1.xpose.msra.mxu0 0.0
        %4989 = vmatprep.subr.mxu0 0.0
        %4990 = vmatpush1.xpose.msra.mxu0 0.0
        %4991 = vmatprep.subr.mxu0 0.0
        %4992 = vmatpush1.xpose.msra.mxu0 0.0
        %4993 = vmatprep.subr.mxu0 0.0
        %4994 = vmatpush1.xpose.msra.mxu0 0.0
        %4995 = vmatprep.subr.mxu0 0.0
        %4996 = vmatpush1.xpose.msra.mxu0 0.0
        %4997 = vmatprep.subr.mxu0 0.0
        %4998 = vmatpush1.xpose.msra.mxu0 0.0
        %4999 = vmatprep.subr.mxu0 0.0
        %5000 = vmatpush1.xpose.msra.mxu0 0.0
        %5001 = vmatprep.subr.mxu0 0.0
        %5002 = vmatpush1.xpose.msra.mxu0 0.0
        %5003 = vmatprep.subr.mxu0 0.0
        %5004 = vmatpush1.xpose.msra.mxu0 0.0
        %5005 = vmatprep.subr.mxu0 0.0
        %5006 = vmatpush1.xpose.msra.mxu0 0.0
        %5007 = vmatprep.subr.mxu0 0.0
        %5008 = vmatpush1.xpose.msra.mxu0 0.0
        %5009 = vmatprep.subr.mxu0 0.0
        %5010 = vmatpush1.xpose.msra.mxu0 0.0
        %5011 = vmatprep.subr.mxu0 0.0
        %5012 = vmatpush1.xpose.msra.mxu0 0.0
        %5013 = vmatprep.subr.mxu0 0.0
        %5014 = vmatpush1.xpose.msra.mxu0 0.0
        %5015 = vmatprep.subr.mxu0 0.0
        %5016 = vmatpush1.xpose.msra.mxu0 0.0
        %5017 = vmatprep.subr.mxu0 0.0
        %5018 = vmatpush1.xpose.msra.mxu0 0.0
        %5019 = vmatprep.subr.mxu0 0.0
        %5020 = vmatpush1.xpose.msra.mxu0 0.0
        %5021 = vmatprep.subr.mxu0 0.0
        %5022 = vmatpush1.xpose.msra.mxu0 0.0
        %5023 = vmatprep.subr.mxu0 0.0
        %5024 = vmatpush1.xpose.msra.mxu0 0.0
        %5025 = vmatprep.subr.mxu0 0.0
        %5026 = vmatpush1.xpose.msra.mxu0 0.0
        %5027 = vmatprep.subr.mxu0 0.0
        %5028 = vmatpush1.xpose.msra.mxu0 0.0
        %5029 = vmatprep.subr.mxu0 0.0
        %5030 = vmatpush1.xpose.msra.mxu0 0.0
        %5031 = vmatprep.subr.mxu0 0.0
        %5032 = vmatpush1.xpose.msra.mxu0 0.0
        %5033 = vmatprep.subr.mxu0 0.0
        %5034 = vmatpush1.xpose.msra.mxu0 0.0
        %5035 = vmatprep.subr.mxu0 0.0
        %5036 = vmatpush1.xpose.msra.mxu0 0.0
        %5037 = vmatprep.subr.mxu0 0.0
        %5038 = vmatpush1.xpose.msra.mxu0 0.0
        %5039 = vmatprep.mubr.f32.mxu0 %v3178
        %5040 = vmatmul.mubr.f32.gmra.mrb[0].mxu0 %v3170
        %v5041 = vpop.f32.mrb[0].mxu0
        %v5042 = vadd.f32 %v4972, %v5041
        %v5043 = vpop.f32.mrb[0].mxu0
        %5044 = vdwg.mxu0
        %5045 = vmatprep.subr.mxu0 %v2738
        %5046 = vmatpush1.xpose.msra.mxu0 %v2737
        %5047 = vmatprep.subr.mxu0 %v2802
        %5048 = vmatpush1.xpose.msra.mxu0 %v2801
        %5049 = vmatprep.subr.mxu0 %v2866
        %5050 = vmatpush1.xpose.msra.mxu0 %v2865
        %5051 = vmatprep.subr.mxu0 %v2930
        %5052 = vmatpush1.xpose.msra.mxu0 %v2929
        %5053 = vmatprep.subr.mxu0 0.0
        %5054 = vmatpush1.xpose.msra.mxu0 0.0
        %5055 = vmatprep.subr.mxu0 0.0
        %5056 = vmatpush1.xpose.msra.mxu0 0.0
        %5057 = vmatprep.subr.mxu0 0.0
        %5058 = vmatpush1.xpose.msra.mxu0 0.0
        %5059 = vmatprep.subr.mxu0 0.0
        %5060 = vmatpush1.xpose.msra.mxu0 0.0
        %5061 = vmatprep.subr.mxu0 0.0
        %5062 = vmatpush1.xpose.msra.mxu0 0.0
        %5063 = vmatprep.subr.mxu0 0.0
        %5064 = vmatpush1.xpose.msra.mxu0 0.0
        %5065 = vmatprep.subr.mxu0 0.0
        %5066 = vmatpush1.xpose.msra.mxu0 0.0
        %5067 = vmatprep.subr.mxu0 0.0
        %5068 = vmatpush1.xpose.msra.mxu0 0.0
        %5069 = vmatprep.subr.mxu0 0.0
        %5070 = vmatpush1.xpose.msra.mxu0 0.0
        %5071 = vmatprep.subr.mxu0 0.0
        %5072 = vmatpush1.xpose.msra.mxu0 0.0
        %5073 = vmatprep.subr.mxu0 0.0
        %5074 = vmatpush1.xpose.msra.mxu0 0.0
        %5075 = vmatprep.subr.mxu0 0.0
        %5076 = vmatpush1.xpose.msra.mxu0 0.0
        %5077 = vmatprep.subr.mxu0 0.0
        %5078 = vmatpush1.xpose.msra.mxu0 0.0
        %5079 = vmatprep.subr.mxu0 0.0
        %5080 = vmatpush1.xpose.msra.mxu0 0.0
        %5081 = vmatprep.subr.mxu0 0.0
        %5082 = vmatpush1.xpose.msra.mxu0 0.0
        %5083 = vmatprep.subr.mxu0 0.0
        %5084 = vmatpush1.xpose.msra.mxu0 0.0
        %5085 = vmatprep.subr.mxu0 0.0
        %5086 = vmatpush1.xpose.msra.mxu0 0.0
        %5087 = vmatprep.subr.mxu0 0.0
        %5088 = vmatpush1.xpose.msra.mxu0 0.0
        %5089 = vmatprep.subr.mxu0 0.0
        %5090 = vmatpush1.xpose.msra.mxu0 0.0
        %5091 = vmatprep.subr.mxu0 0.0
        %5092 = vmatpush1.xpose.msra.mxu0 0.0
        %5093 = vmatprep.subr.mxu0 0.0
        %5094 = vmatpush1.xpose.msra.mxu0 0.0
        %5095 = vmatprep.subr.mxu0 0.0
        %5096 = vmatpush1.xpose.msra.mxu0 0.0
        %5097 = vmatprep.subr.mxu0 0.0
        %5098 = vmatpush1.xpose.msra.mxu0 0.0
        %5099 = vmatprep.subr.mxu0 0.0
        %5100 = vmatpush1.xpose.msra.mxu0 0.0
        %5101 = vmatprep.subr.mxu0 0.0
        %5102 = vmatpush1.xpose.msra.mxu0 0.0
        %5103 = vmatprep.subr.mxu0 0.0
        %5104 = vmatpush1.xpose.msra.mxu0 0.0
        %5105 = vmatprep.subr.mxu0 0.0
        %5106 = vmatpush1.xpose.msra.mxu0 0.0
        %5107 = vmatprep.subr.mxu0 0.0
        %5108 = vmatpush1.xpose.msra.mxu0 0.0
        %5109 = vmatprep.mubr.f32.mxu0 %v3179
        %5110 = vmatmul.mubr.f32.gmra.mrb[0].mxu0 %v3177
        %v5111 = vpop.f32.mrb[0].mxu0
        %v5112 = vadd.f32 %v5042, %v5111
        %v5113 = vpop.f32.mrb[0].mxu0
        %5114 = vdwg.mxu0
        %5115 = vmatprep.subr.mxu0 %v2740
        %5116 = vmatpush1.xpose.msra.mxu0 %v2739
        %5117 = vmatprep.subr.mxu0 %v2804
        %5118 = vmatpush1.xpose.msra.mxu0 %v2803
        %5119 = vmatprep.subr.mxu0 %v2868
        %5120 = vmatpush1.xpose.msra.mxu0 %v2867
        %5121 = vmatprep.subr.mxu0 %v2932
        %5122 = vmatpush1.xpose.msra.mxu0 %v2931
        %5123 = vmatprep.subr.mxu0 0.0
        %5124 = vmatpush1.xpose.msra.mxu0 0.0
        %5125 = vmatprep.subr.mxu0 0.0
        %5126 = vmatpush1.xpose.msra.mxu0 0.0
        %5127 = vmatprep.subr.mxu0 0.0
        %5128 = vmatpush1.xpose.msra.mxu0 0.0
        %5129 = vmatprep.subr.mxu0 0.0
        %5130 = vmatpush1.xpose.msra.mxu0 0.0
        %5131 = vmatprep.subr.mxu0 0.0
        %5132 = vmatpush1.xpose.msra.mxu0 0.0
        %5133 = vmatprep.subr.mxu0 0.0
        %5134 = vmatpush1.xpose.msra.mxu0 0.0
        %5135 = vmatprep.subr.mxu0 0.0
        %5136 = vmatpush1.xpose.msra.mxu0 0.0
        %5137 = vmatprep.subr.mxu0 0.0
        %5138 = vmatpush1.xpose.msra.mxu0 0.0
        %5139 = vmatprep.subr.mxu0 0.0
        %5140 = vmatpush1.xpose.msra.mxu0 0.0
        %5141 = vmatprep.subr.mxu0 0.0
        %5142 = vmatpush1.xpose.msra.mxu0 0.0
        %5143 = vmatprep.subr.mxu0 0.0
        %5144 = vmatpush1.xpose.msra.mxu0 0.0
        %5145 = vmatprep.subr.mxu0 0.0
        %5146 = vmatpush1.xpose.msra.mxu0 0.0
        %5147 = vmatprep.subr.mxu0 0.0
        %5148 = vmatpush1.xpose.msra.mxu0 0.0
        %5149 = vmatprep.subr.mxu0 0.0
        %5150 = vmatpush1.xpose.msra.mxu0 0.0
        %5151 = vmatprep.subr.mxu0 0.0
        %5152 = vmatpush1.xpose.msra.mxu0 0.0
        %5153 = vmatprep.subr.mxu0 0.0
        %5154 = vmatpush1.xpose.msra.mxu0 0.0
        %5155 = vmatprep.subr.mxu0 0.0
        %5156 = vmatpush1.xpose.msra.mxu0 0.0
        %5157 = vmatprep.subr.mxu0 0.0
        %5158 = vmatpush1.xpose.msra.mxu0 0.0
        %5159 = vmatprep.subr.mxu0 0.0
        %5160 = vmatpush1.xpose.msra.mxu0 0.0
        %5161 = vmatprep.subr.mxu0 0.0
        %5162 = vmatpush1.xpose.msra.mxu0 0.0
        %5163 = vmatprep.subr.mxu0 0.0
        %5164 = vmatpush1.xpose.msra.mxu0 0.0
        %5165 = vmatprep.subr.mxu0 0.0
        %5166 = vmatpush1.xpose.msra.mxu0 0.0
        %5167 = vmatprep.subr.mxu0 0.0
        %5168 = vmatpush1.xpose.msra.mxu0 0.0
        %5169 = vmatprep.subr.mxu0 0.0
        %5170 = vmatpush1.xpose.msra.mxu0 0.0
        %5171 = vmatprep.subr.mxu0 0.0
        %5172 = vmatpush1.xpose.msra.mxu0 0.0
        %5173 = vmatprep.subr.mxu0 0.0
        %5174 = vmatpush1.xpose.msra.mxu0 0.0
        %5175 = vmatprep.subr.mxu0 0.0
        %5176 = vmatpush1.xpose.msra.mxu0 0.0
        %5177 = vmatprep.subr.mxu0 0.0
        %5178 = vmatpush1.xpose.msra.mxu0 0.0
        %5179 = vmatprep.mubr.f32.mxu0 %v3195
        %5180 = vmatmul.mubr.f32.gmra.mrb[0].mxu0 %v3187
        %v5181 = vpop.f32.mrb[0].mxu0
        %v5182 = vadd.f32 %v5112, %v5181
        %v5183 = vpop.f32.mrb[0].mxu0
        %5184 = vdwg.mxu0
        %5185 = vmatprep.subr.mxu0 %v2742
        %5186 = vmatpush1.xpose.msra.mxu0 %v2741
        %5187 = vmatprep.subr.mxu0 %v2806
        %5188 = vmatpush1.xpose.msra.mxu0 %v2805
        %5189 = vmatprep.subr.mxu0 %v2870
        %5190 = vmatpush1.xpose.msra.mxu0 %v2869
        %5191 = vmatprep.subr.mxu0 %v2934
        %5192 = vmatpush1.xpose.msra.mxu0 %v2933
        %5193 = vmatprep.subr.mxu0 0.0
        %5194 = vmatpush1.xpose.msra.mxu0 0.0
        %5195 = vmatprep.subr.mxu0 0.0
        %5196 = vmatpush1.xpose.msra.mxu0 0.0
        %5197 = vmatprep.subr.mxu0 0.0
        %5198 = vmatpush1.xpose.msra.mxu0 0.0
        %5199 = vmatprep.subr.mxu0 0.0
        %5200 = vmatpush1.xpose.msra.mxu0 0.0
        %5201 = vmatprep.subr.mxu0 0.0
        %5202 = vmatpush1.xpose.msra.mxu0 0.0
        %5203 = vmatprep.subr.mxu0 0.0
        %5204 = vmatpush1.xpose.msra.mxu0 0.0
        %5205 = vmatprep.subr.mxu0 0.0
        %5206 = vmatpush1.xpose.msra.mxu0 0.0
        %5207 = vmatprep.subr.mxu0 0.0
        %5208 = vmatpush1.xpose.msra.mxu0 0.0
        %5209 = vmatprep.subr.mxu0 0.0
        %5210 = vmatpush1.xpose.msra.mxu0 0.0
        %5211 = vmatprep.subr.mxu0 0.0
        %5212 = vmatpush1.xpose.msra.mxu0 0.0
        %5213 = vmatprep.subr.mxu0 0.0
        %5214 = vmatpush1.xpose.msra.mxu0 0.0
        %5215 = vmatprep.subr.mxu0 0.0
        %5216 = vmatpush1.xpose.msra.mxu0 0.0
        %5217 = vmatprep.subr.mxu0 0.0
        %5218 = vmatpush1.xpose.msra.mxu0 0.0
        %5219 = vmatprep.subr.mxu0 0.0
        %5220 = vmatpush1.xpose.msra.mxu0 0.0
        %5221 = vmatprep.subr.mxu0 0.0
        %5222 = vmatpush1.xpose.msra.mxu0 0.0
        %5223 = vmatprep.subr.mxu0 0.0
        %5224 = vmatpush1.xpose.msra.mxu0 0.0
        %5225 = vmatprep.subr.mxu0 0.0
        %5226 = vmatpush1.xpose.msra.mxu0 0.0
        %5227 = vmatprep.subr.mxu0 0.0
        %5228 = vmatpush1.xpose.msra.mxu0 0.0
        %5229 = vmatprep.subr.mxu0 0.0
        %5230 = vmatpush1.xpose.msra.mxu0 0.0
        %5231 = vmatprep.subr.mxu0 0.0
        %5232 = vmatpush1.xpose.msra.mxu0 0.0
        %5233 = vmatprep.subr.mxu0 0.0
        %5234 = vmatpush1.xpose.msra.mxu0 0.0
        %5235 = vmatprep.subr.mxu0 0.0
        %5236 = vmatpush1.xpose.msra.mxu0 0.0
        %5237 = vmatprep.subr.mxu0 0.0
        %5238 = vmatpush1.xpose.msra.mxu0 0.0
        %5239 = vmatprep.subr.mxu0 0.0
        %5240 = vmatpush1.xpose.msra.mxu0 0.0
        %5241 = vmatprep.subr.mxu0 0.0
        %5242 = vmatpush1.xpose.msra.mxu0 0.0
        %5243 = vmatprep.subr.mxu0 0.0
        %5244 = vmatpush1.xpose.msra.mxu0 0.0
        %5245 = vmatprep.subr.mxu0 0.0
        %5246 = vmatpush1.xpose.msra.mxu0 0.0
        %5247 = vmatprep.subr.mxu0 0.0
        %5248 = vmatpush1.xpose.msra.mxu0 0.0
        %5249 = vmatprep.mubr.f32.mxu0 %v3196
        %5250 = vmatmul.mubr.f32.gmra.mrb[0].mxu0 %v3194
        %v5251 = vpop.f32.mrb[0].mxu0
        %v5252 = vadd.f32 %v5182, %v5251
        %v5253 = vpop.f32.mrb[0].mxu0
        %5254 = vdwg.mxu0
        %5255 = vmatprep.subr.mxu0 %v2744
        %5256 = vmatpush1.xpose.msra.mxu0 %v2743
        %5257 = vmatprep.subr.mxu0 %v2808
        %5258 = vmatpush1.xpose.msra.mxu0 %v2807
        %5259 = vmatprep.subr.mxu0 %v2872
        %5260 = vmatpush1.xpose.msra.mxu0 %v2871
        %5261 = vmatprep.subr.mxu0 %v2936
        %5262 = vmatpush1.xpose.msra.mxu0 %v2935
        %5263 = vmatprep.subr.mxu0 0.0
        %5264 = vmatpush1.xpose.msra.mxu0 0.0
        %5265 = vmatprep.subr.mxu0 0.0
        %5266 = vmatpush1.xpose.msra.mxu0 0.0
        %5267 = vmatprep.subr.mxu0 0.0
        %5268 = vmatpush1.xpose.msra.mxu0 0.0
        %5269 = vmatprep.subr.mxu0 0.0
        %5270 = vmatpush1.xpose.msra.mxu0 0.0
        %5271 = vmatprep.subr.mxu0 0.0
        %5272 = vmatpush1.xpose.msra.mxu0 0.0
        %5273 = vmatprep.subr.mxu0 0.0
        %5274 = vmatpush1.xpose.msra.mxu0 0.0
        %5275 = vmatprep.subr.mxu0 0.0
        %5276 = vmatpush1.xpose.msra.mxu0 0.0
        %5277 = vmatprep.subr.mxu0 0.0
        %5278 = vmatpush1.xpose.msra.mxu0 0.0
        %5279 = vmatprep.subr.mxu0 0.0
        %5280 = vmatpush1.xpose.msra.mxu0 0.0
        %5281 = vmatprep.subr.mxu0 0.0
        %5282 = vmatpush1.xpose.msra.mxu0 0.0
        %5283 = vmatprep.subr.mxu0 0.0
        %5284 = vmatpush1.xpose.msra.mxu0 0.0
        %5285 = vmatprep.subr.mxu0 0.0
        %5286 = vmatpush1.xpose.msra.mxu0 0.0
        %5287 = vmatprep.subr.mxu0 0.0
        %5288 = vmatpush1.xpose.msra.mxu0 0.0
        %5289 = vmatprep.subr.mxu0 0.0
        %5290 = vmatpush1.xpose.msra.mxu0 0.0
        %5291 = vmatprep.subr.mxu0 0.0
        %5292 = vmatpush1.xpose.msra.mxu0 0.0
        %5293 = vmatprep.subr.mxu0 0.0
        %5294 = vmatpush1.xpose.msra.mxu0 0.0
        %5295 = vmatprep.subr.mxu0 0.0
        %5296 = vmatpush1.xpose.msra.mxu0 0.0
        %5297 = vmatprep.subr.mxu0 0.0
        %5298 = vmatpush1.xpose.msra.mxu0 0.0
        %5299 = vmatprep.subr.mxu0 0.0
        %5300 = vmatpush1.xpose.msra.mxu0 0.0
        %5301 = vmatprep.subr.mxu0 0.0
        %5302 = vmatpush1.xpose.msra.mxu0 0.0
        %5303 = vmatprep.subr.mxu0 0.0
        %5304 = vmatpush1.xpose.msra.mxu0 0.0
        %5305 = vmatprep.subr.mxu0 0.0
        %5306 = vmatpush1.xpose.msra.mxu0 0.0
        %5307 = vmatprep.subr.mxu0 0.0
        %5308 = vmatpush1.xpose.msra.mxu0 0.0
        %5309 = vmatprep.subr.mxu0 0.0
        %5310 = vmatpush1.xpose.msra.mxu0 0.0
        %5311 = vmatprep.subr.mxu0 0.0
        %5312 = vmatpush1.xpose.msra.mxu0 0.0
        %5313 = vmatprep.subr.mxu0 0.0
        %5314 = vmatpush1.xpose.msra.mxu0 0.0
        %5315 = vmatprep.subr.mxu0 0.0
        %5316 = vmatpush1.xpose.msra.mxu0 0.0
        %5317 = vmatprep.subr.mxu0 0.0
        %5318 = vmatpush1.xpose.msra.mxu0 0.0
        %5319 = vmatprep.mubr.f32.mxu0 %v3212
        %5320 = vmatmul.mubr.f32.gmra.mrb[0].mxu0 %v3204
        %v5321 = vpop.f32.mrb[0].mxu0
        %v5322 = vadd.f32 %v5252, %v5321
        %v5323 = vpop.f32.mrb[0].mxu0
        %5324 = vdwg.mxu0
        %5325 = vmatprep.subr.mxu0 %v2746
        %5326 = vmatpush1.xpose.msra.mxu0 %v2745
        %5327 = vmatprep.subr.mxu0 %v2810
        %5328 = vmatpush1.xpose.msra.mxu0 %v2809
        %5329 = vmatprep.subr.mxu0 %v2874
        %5330 = vmatpush1.xpose.msra.mxu0 %v2873
        %5331 = vmatprep.subr.mxu0 %v2938
        %5332 = vmatpush1.xpose.msra.mxu0 %v2937
        %5333 = vmatprep.subr.mxu0 0.0
        %5334 = vmatpush1.xpose.msra.mxu0 0.0
        %5335 = vmatprep.subr.mxu0 0.0
        %5336 = vmatpush1.xpose.msra.mxu0 0.0
        %5337 = vmatprep.subr.mxu0 0.0
        %5338 = vmatpush1.xpose.msra.mxu0 0.0
        %5339 = vmatprep.subr.mxu0 0.0
        %5340 = vmatpush1.xpose.msra.mxu0 0.0
        %5341 = vmatprep.subr.mxu0 0.0
        %5342 = vmatpush1.xpose.msra.mxu0 0.0
        %5343 = vmatprep.subr.mxu0 0.0
        %5344 = vmatpush1.xpose.msra.mxu0 0.0
        %5345 = vmatprep.subr.mxu0 0.0
        %5346 = vmatpush1.xpose.msra.mxu0 0.0
        %5347 = vmatprep.subr.mxu0 0.0
        %5348 = vmatpush1.xpose.msra.mxu0 0.0
        %5349 = vmatprep.subr.mxu0 0.0
        %5350 = vmatpush1.xpose.msra.mxu0 0.0
        %5351 = vmatprep.subr.mxu0 0.0
        %5352 = vmatpush1.xpose.msra.mxu0 0.0
        %5353 = vmatprep.subr.mxu0 0.0
        %5354 = vmatpush1.xpose.msra.mxu0 0.0
        %5355 = vmatprep.subr.mxu0 0.0
        %5356 = vmatpush1.xpose.msra.mxu0 0.0
        %5357 = vmatprep.subr.mxu0 0.0
        %5358 = vmatpush1.xpose.msra.mxu0 0.0
        %5359 = vmatprep.subr.mxu0 0.0
        %5360 = vmatpush1.xpose.msra.mxu0 0.0
        %5361 = vmatprep.subr.mxu0 0.0
        %5362 = vmatpush1.xpose.msra.mxu0 0.0
        %5363 = vmatprep.subr.mxu0 0.0
        %5364 = vmatpush1.xpose.msra.mxu0 0.0
        %5365 = vmatprep.subr.mxu0 0.0
        %5366 = vmatpush1.xpose.msra.mxu0 0.0
        %5367 = vmatprep.subr.mxu0 0.0
        %5368 = vmatpush1.xpose.msra.mxu0 0.0
        %5369 = vmatprep.subr.mxu0 0.0
        %5370 = vmatpush1.xpose.msra.mxu0 0.0
        %5371 = vmatprep.subr.mxu0 0.0
        %5372 = vmatpush1.xpose.msra.mxu0 0.0
        %5373 = vmatprep.subr.mxu0 0.0
        %5374 = vmatpush1.xpose.msra.mxu0 0.0
        %5375 = vmatprep.subr.mxu0 0.0
        %5376 = vmatpush1.xpose.msra.mxu0 0.0
        %5377 = vmatprep.subr.mxu0 0.0
        %5378 = vmatpush1.xpose.msra.mxu0 0.0
        %5379 = vmatprep.subr.mxu0 0.0
        %5380 = vmatpush1.xpose.msra.mxu0 0.0
        %5381 = vmatprep.subr.mxu0 0.0
        %5382 = vmatpush1.xpose.msra.mxu0 0.0
        %5383 = vmatprep.subr.mxu0 0.0
        %5384 = vmatpush1.xpose.msra.mxu0 0.0
        %5385 = vmatprep.subr.mxu0 0.0
        %5386 = vmatpush1.xpose.msra.mxu0 0.0
        %5387 = vmatprep.subr.mxu0 0.0
        %5388 = vmatpush1.xpose.msra.mxu0 0.0
        %5389 = vmatprep.mubr.f32.mxu0 %v3213
        %5390 = vmatmul.mubr.f32.gmra.mrb[0].mxu0 %v3211
        %v5391 = vpop.f32.mrb[0].mxu0
        %v5392 = vadd.f32 %v5322, %v5391
        %v5393 = vpop.f32.mrb[0].mxu0
        %5394 = vdwg.mxu0
        %5395 = vmatprep.subr.mxu0 %v2748
        %5396 = vmatpush1.xpose.msra.mxu0 %v2747
        %5397 = vmatprep.subr.mxu0 %v2812
        %5398 = vmatpush1.xpose.msra.mxu0 %v2811
        %5399 = vmatprep.subr.mxu0 %v2876
        %5400 = vmatpush1.xpose.msra.mxu0 %v2875
        %5401 = vmatprep.subr.mxu0 %v2940
        %5402 = vmatpush1.xpose.msra.mxu0 %v2939
        %5403 = vmatprep.subr.mxu0 0.0
        %5404 = vmatpush1.xpose.msra.mxu0 0.0
        %5405 = vmatprep.subr.mxu0 0.0
        %5406 = vmatpush1.xpose.msra.mxu0 0.0
        %5407 = vmatprep.subr.mxu0 0.0
        %5408 = vmatpush1.xpose.msra.mxu0 0.0
        %5409 = vmatprep.subr.mxu0 0.0
        %5410 = vmatpush1.xpose.msra.mxu0 0.0
        %5411 = vmatprep.subr.mxu0 0.0
        %5412 = vmatpush1.xpose.msra.mxu0 0.0
        %5413 = vmatprep.subr.mxu0 0.0
        %5414 = vmatpush1.xpose.msra.mxu0 0.0
        %5415 = vmatprep.subr.mxu0 0.0
        %5416 = vmatpush1.xpose.msra.mxu0 0.0
        %5417 = vmatprep.subr.mxu0 0.0
        %5418 = vmatpush1.xpose.msra.mxu0 0.0
        %5419 = vmatprep.subr.mxu0 0.0
        %5420 = vmatpush1.xpose.msra.mxu0 0.0
        %5421 = vmatprep.subr.mxu0 0.0
        %5422 = vmatpush1.xpose.msra.mxu0 0.0
        %5423 = vmatprep.subr.mxu0 0.0
        %5424 = vmatpush1.xpose.msra.mxu0 0.0
        %5425 = vmatprep.subr.mxu0 0.0
        %5426 = vmatpush1.xpose.msra.mxu0 0.0
        %5427 = vmatprep.subr.mxu0 0.0
        %5428 = vmatpush1.xpose.msra.mxu0 0.0
        %5429 = vmatprep.subr.mxu0 0.0
        %5430 = vmatpush1.xpose.msra.mxu0 0.0
        %5431 = vmatprep.subr.mxu0 0.0
        %5432 = vmatpush1.xpose.msra.mxu0 0.0
        %5433 = vmatprep.subr.mxu0 0.0
        %5434 = vmatpush1.xpose.msra.mxu0 0.0
        %5435 = vmatprep.subr.mxu0 0.0
        %5436 = vmatpush1.xpose.msra.mxu0 0.0
        %5437 = vmatprep.subr.mxu0 0.0
        %5438 = vmatpush1.xpose.msra.mxu0 0.0
        %5439 = vmatprep.subr.mxu0 0.0
        %5440 = vmatpush1.xpose.msra.mxu0 0.0
        %5441 = vmatprep.subr.mxu0 0.0
        %5442 = vmatpush1.xpose.msra.mxu0 0.0
        %5443 = vmatprep.subr.mxu0 0.0
        %5444 = vmatpush1.xpose.msra.mxu0 0.0
        %5445 = vmatprep.subr.mxu0 0.0
        %5446 = vmatpush1.xpose.msra.mxu0 0.0
        %5447 = vmatprep.subr.mxu0 0.0
        %5448 = vmatpush1.xpose.msra.mxu0 0.0
        %5449 = vmatprep.subr.mxu0 0.0
        %5450 = vmatpush1.xpose.msra.mxu0 0.0
        %5451 = vmatprep.subr.mxu0 0.0
        %5452 = vmatpush1.xpose.msra.mxu0 0.0
        %5453 = vmatprep.subr.mxu0 0.0
        %5454 = vmatpush1.xpose.msra.mxu0 0.0
        %5455 = vmatprep.subr.mxu0 0.0
        %5456 = vmatpush1.xpose.msra.mxu0 0.0
        %5457 = vmatprep.subr.mxu0 0.0
        %5458 = vmatpush1.xpose.msra.mxu0 0.0
        %5459 = vmatprep.mubr.f32.mxu0 %v3229
        %5460 = vmatmul.mubr.f32.gmra.mrb[0].mxu0 %v3221
        %v5461 = vpop.f32.mrb[0].mxu0
        %v5462 = vadd.f32 %v5392, %v5461
        %v5463 = vpop.f32.mrb[0].mxu0
        %5464 = vdwg.mxu0
        %5465 = vmatprep.subr.mxu0 %v2750
        %5466 = vmatpush1.xpose.msra.mxu0 %v2749
        %5467 = vmatprep.subr.mxu0 %v2814
        %5468 = vmatpush1.xpose.msra.mxu0 %v2813
        %5469 = vmatprep.subr.mxu0 %v2878
        %5470 = vmatpush1.xpose.msra.mxu0 %v2877
        %5471 = vmatprep.subr.mxu0 %v2942
        %5472 = vmatpush1.xpose.msra.mxu0 %v2941
        %5473 = vmatprep.subr.mxu0 0.0
        %5474 = vmatpush1.xpose.msra.mxu0 0.0
        %5475 = vmatprep.subr.mxu0 0.0
        %5476 = vmatpush1.xpose.msra.mxu0 0.0
        %5477 = vmatprep.subr.mxu0 0.0
        %5478 = vmatpush1.xpose.msra.mxu0 0.0
        %5479 = vmatprep.subr.mxu0 0.0
        %5480 = vmatpush1.xpose.msra.mxu0 0.0
        %5481 = vmatprep.subr.mxu0 0.0
        %5482 = vmatpush1.xpose.msra.mxu0 0.0
        %5483 = vmatprep.subr.mxu0 0.0
        %5484 = vmatpush1.xpose.msra.mxu0 0.0
        %5485 = vmatprep.subr.mxu0 0.0
        %5486 = vmatpush1.xpose.msra.mxu0 0.0
        %5487 = vmatprep.subr.mxu0 0.0
        %5488 = vmatpush1.xpose.msra.mxu0 0.0
        %5489 = vmatprep.subr.mxu0 0.0
        %5490 = vmatpush1.xpose.msra.mxu0 0.0
        %5491 = vmatprep.subr.mxu0 0.0
        %5492 = vmatpush1.xpose.msra.mxu0 0.0
        %5493 = vmatprep.subr.mxu0 0.0
        %5494 = vmatpush1.xpose.msra.mxu0 0.0
        %5495 = vmatprep.subr.mxu0 0.0
        %5496 = vmatpush1.xpose.msra.mxu0 0.0
        %5497 = vmatprep.subr.mxu0 0.0
        %5498 = vmatpush1.xpose.msra.mxu0 0.0
        %5499 = vmatprep.subr.mxu0 0.0
        %5500 = vmatpush1.xpose.msra.mxu0 0.0
        %5501 = vmatprep.subr.mxu0 0.0
        %5502 = vmatpush1.xpose.msra.mxu0 0.0
        %5503 = vmatprep.subr.mxu0 0.0
        %5504 = vmatpush1.xpose.msra.mxu0 0.0
        %5505 = vmatprep.subr.mxu0 0.0
        %5506 = vmatpush1.xpose.msra.mxu0 0.0
        %5507 = vmatprep.subr.mxu0 0.0
        %5508 = vmatpush1.xpose.msra.mxu0 0.0
        %5509 = vmatprep.subr.mxu0 0.0
        %5510 = vmatpush1.xpose.msra.mxu0 0.0
        %5511 = vmatprep.subr.mxu0 0.0
        %5512 = vmatpush1.xpose.msra.mxu0 0.0
        %5513 = vmatprep.subr.mxu0 0.0
        %5514 = vmatpush1.xpose.msra.mxu0 0.0
        %5515 = vmatprep.subr.mxu0 0.0
        %5516 = vmatpush1.xpose.msra.mxu0 0.0
        %5517 = vmatprep.subr.mxu0 0.0
        %5518 = vmatpush1.xpose.msra.mxu0 0.0
        %5519 = vmatprep.subr.mxu0 0.0
        %5520 = vmatpush1.xpose.msra.mxu0 0.0
        %5521 = vmatprep.subr.mxu0 0.0
        %5522 = vmatpush1.xpose.msra.mxu0 0.0
        %5523 = vmatprep.subr.mxu0 0.0
        %5524 = vmatpush1.xpose.msra.mxu0 0.0
        %5525 = vmatprep.subr.mxu0 0.0
        %5526 = vmatpush1.xpose.msra.mxu0 0.0
        %5527 = vmatprep.subr.mxu0 0.0
        %5528 = vmatpush1.xpose.msra.mxu0 0.0
        %5529 = vmatprep.mubr.f32.mxu0 %v3230
        %5530 = vmatmul.mubr.f32.gmra.mrb[0].mxu0 %v3228
        %v5531 = vpop.f32.mrb[0].mxu0
        %v5532 = vadd.f32 %v5462, %v5531
        %v5533 = vpop.f32.mrb[0].mxu0
        %5534 = vdwg.mxu0
        %v5535 = vadd.f32 %v2686, %v5532
        %vm5536 = vcmask 254976
        %5537 = vst.msk [vmem:[#allocation3] sm:$0x3] %vm5536, %v5535
        %v5538 = vld [vmem:[#allocation4] sm:$0x3]
        %v5539 = vld [vmem:[%s335] sm:$0xff]
        %v5540 = vld [vmem:[%s335 + $0x8] sm:$0xff]
        %v5541 = vld [vmem:[%s335 + $0x10] sm:$0xff]
        %v5542 = vld [vmem:[%s335 + $0x18] sm:$0xff]
        %v5543 = vld [vmem:[%s335 + $0x20] sm:$0xff]
        %v5544 = vld [vmem:[%s335 + $0x28] sm:$0xff]
        %v5545 = vld [vmem:[%s335 + $0x30] sm:$0xff]
        %v5546 = vld [vmem:[%s335 + $0x38] sm:$0xff]
        %v5547 = vld [vmem:[%s335 + $0x40] sm:$0xff]
        %v5548 = vld [vmem:[%s335 + $0x48] sm:$0xff]
        %v5549 = vld [vmem:[%s335 + $0x50] sm:$0xff]
        %v5550 = vld [vmem:[%s335 + $0x58] sm:$0xff]
        %v5551 = vld [vmem:[%s335 + $0x60] sm:$0xff]
        %v5552 = vld [vmem:[%s335 + $0x68] sm:$0xff]
        %v5553 = vld [vmem:[%s335 + $0x70] sm:$0xff]
        %v5554 = vld [vmem:[%s335 + $0x78] sm:$0xff]
        %v5555 = vld [vmem:[%s335 + $0x80] sm:$0xff]
        %v5556 = vld [vmem:[%s335 + $0x88] sm:$0xff]
        %v5557 = vld [vmem:[%s335 + $0x90] sm:$0xff]
        %v5558 = vld [vmem:[%s335 + $0x98] sm:$0xff]
        %v5559 = vld [vmem:[%s335 + $0xa0] sm:$0xff]
        %v5560 = vld [vmem:[%s335 + $0xa8] sm:$0xff]
        %v5561 = vld [vmem:[%s335 + $0xb0] sm:$0xff]
        %v5562 = vld [vmem:[%s335 + $0xb8] sm:$0xff]
        %v5563 = vld [vmem:[%s335 + $0xc0] sm:$0xff]
        %v5564 = vld [vmem:[%s335 + $0xc8] sm:$0xff]
        %v5565 = vld [vmem:[%s335 + $0xd0] sm:$0xff]
        %v5566 = vld [vmem:[%s335 + $0xd8] sm:$0xff]
        %v5567 = vld [vmem:[%s335 + $0xe0] sm:$0xff]
        %v5568 = vld [vmem:[%s335 + $0xe8] sm:$0xff]
        %v5569 = vld [vmem:[%s335 + $0xf0] sm:$0xff]
        %v5570 = vld [vmem:[%s335 + $0xf8] sm:$0xff]
        %v5571 = vld [vmem:[%s335 + $0x100] sm:$0xff]
        %v5572 = vld [vmem:[%s335 + $0x108] sm:$0xff]
        %v5573 = vld [vmem:[%s335 + $0x110] sm:$0xff]
        %v5574 = vld [vmem:[%s335 + $0x118] sm:$0xff]
        %v5575 = vld [vmem:[%s335 + $0x120] sm:$0xff]
        %v5576 = vld [vmem:[%s335 + $0x128] sm:$0xff]
        %v5577 = vld [vmem:[%s335 + $0x130] sm:$0xff]
        %v5578 = vld [vmem:[%s335 + $0x138] sm:$0xff]
        %v5579 = vld [vmem:[%s335 + $0x140] sm:$0xff]
        %v5580 = vld [vmem:[%s335 + $0x148] sm:$0xff]
        %v5581 = vld [vmem:[%s335 + $0x150] sm:$0xff]
        %v5582 = vld [vmem:[%s335 + $0x158] sm:$0xff]
        %v5583 = vld [vmem:[%s335 + $0x160] sm:$0xff]
        %v5584 = vld [vmem:[%s335 + $0x168] sm:$0xff]
        %v5585 = vld [vmem:[%s335 + $0x170] sm:$0xff]
        %v5586 = vld [vmem:[%s335 + $0x178] sm:$0xff]
        %v5587 = vld [vmem:[%s335 + $0x180] sm:$0xff]
        %v5588 = vld [vmem:[%s335 + $0x188] sm:$0xff]
        %v5589 = vld [vmem:[%s335 + $0x190] sm:$0xff]
        %v5590 = vld [vmem:[%s335 + $0x198] sm:$0xff]
        %v5591 = vld [vmem:[%s335 + $0x1a0] sm:$0xff]
        %v5592 = vld [vmem:[%s335 + $0x1a8] sm:$0xff]
        %v5593 = vld [vmem:[%s335 + $0x1b0] sm:$0xff]
        %v5594 = vld [vmem:[%s335 + $0x1b8] sm:$0xff]
        %v5595 = vld [vmem:[%s335 + $0x1c0] sm:$0xff]
        %v5596 = vld [vmem:[%s335 + $0x1c8] sm:$0xff]
        %v5597 = vld [vmem:[%s335 + $0x1d0] sm:$0xff]
        %v5598 = vld [vmem:[%s335 + $0x1d8] sm:$0xff]
        %v5599 = vld [vmem:[%s335 + $0x1e0] sm:$0xff]
        %v5600 = vld [vmem:[%s335 + $0x1e8] sm:$0xff]
        %v5601 = vld [vmem:[%s335 + $0x1f0] sm:$0xff]
        %v5602 = vld [vmem:[%s335 + $0x1f8] sm:$0xff]
        %v5603 = vld [vmem:[%s335 + $0x200] sm:$0xff]
        %v5604 = vld [vmem:[%s335 + $0x208] sm:$0xff]
        %v5605 = vld [vmem:[%s335 + $0x210] sm:$0xff]
        %v5606 = vld [vmem:[%s335 + $0x218] sm:$0xff]
        %v5607 = vld [vmem:[%s335 + $0x220] sm:$0xff]
        %v5608 = vld [vmem:[%s335 + $0x228] sm:$0xff]
        %v5609 = vld [vmem:[%s335 + $0x230] sm:$0xff]
        %v5610 = vld [vmem:[%s335 + $0x238] sm:$0xff]
        %v5611 = vld [vmem:[%s335 + $0x240] sm:$0xff]
        %v5612 = vld [vmem:[%s335 + $0x248] sm:$0xff]
        %v5613 = vld [vmem:[%s335 + $0x250] sm:$0xff]
        %v5614 = vld [vmem:[%s335 + $0x258] sm:$0xff]
        %v5615 = vld [vmem:[%s335 + $0x260] sm:$0xff]
        %v5616 = vld [vmem:[%s335 + $0x268] sm:$0xff]
        %v5617 = vld [vmem:[%s335 + $0x270] sm:$0xff]
        %v5618 = vld [vmem:[%s335 + $0x278] sm:$0xff]
        %v5619 = vld [vmem:[%s335 + $0x280] sm:$0xff]
        %v5620 = vld [vmem:[%s335 + $0x288] sm:$0xff]
        %v5621 = vld [vmem:[%s335 + $0x290] sm:$0xff]
        %v5622 = vld [vmem:[%s335 + $0x298] sm:$0xff]
        %v5623 = vld [vmem:[%s335 + $0x2a0] sm:$0xff]
        %v5624 = vld [vmem:[%s335 + $0x2a8] sm:$0xff]
        %v5625 = vld [vmem:[%s335 + $0x2b0] sm:$0xff]
        %v5626 = vld [vmem:[%s335 + $0x2b8] sm:$0xff]
        %v5627 = vld [vmem:[%s335 + $0x2c0] sm:$0xff]
        %v5628 = vld [vmem:[%s335 + $0x2c8] sm:$0xff]
        %v5629 = vld [vmem:[%s335 + $0x2d0] sm:$0xff]
        %v5630 = vld [vmem:[%s335 + $0x2d8] sm:$0xff]
        %v5631 = vld [vmem:[%s335 + $0x2e0] sm:$0xff]
        %v5632 = vld [vmem:[%s335 + $0x2e8] sm:$0xff]
        %v5633 = vld [vmem:[%s335 + $0x2f0] sm:$0xff]
        %v5634 = vld [vmem:[%s335 + $0x2f8] sm:$0xff]
        %v5635 = vld [vmem:[%s335 + $0x300] sm:$0xff]
        %v5636 = vld [vmem:[%s335 + $0x308] sm:$0xff]
        %v5637 = vld [vmem:[%s335 + $0x310] sm:$0xff]
        %v5638 = vld [vmem:[%s335 + $0x318] sm:$0xff]
        %v5639 = vld [vmem:[%s335 + $0x320] sm:$0xff]
        %v5640 = vld [vmem:[%s335 + $0x328] sm:$0xff]
        %v5641 = vld [vmem:[%s335 + $0x330] sm:$0xff]
        %v5642 = vld [vmem:[%s335 + $0x338] sm:$0xff]
        %v5643 = vld [vmem:[%s335 + $0x340] sm:$0xff]
        %v5644 = vld [vmem:[%s335 + $0x348] sm:$0xff]
        %v5645 = vld [vmem:[%s335 + $0x350] sm:$0xff]
        %v5646 = vld [vmem:[%s335 + $0x358] sm:$0xff]
        %v5647 = vld [vmem:[%s335 + $0x360] sm:$0xff]
        %v5648 = vld [vmem:[%s335 + $0x368] sm:$0xff]
        %v5649 = vld [vmem:[%s335 + $0x370] sm:$0xff]
        %v5650 = vld [vmem:[%s335 + $0x378] sm:$0xff]
        %v5651 = vld [vmem:[%s335 + $0x380] sm:$0xff]
        %v5652 = vld [vmem:[%s335 + $0x388] sm:$0xff]
        %v5653 = vld [vmem:[%s335 + $0x390] sm:$0xff]
        %v5654 = vld [vmem:[%s335 + $0x398] sm:$0xff]
        %v5655 = vld [vmem:[%s335 + $0x3a0] sm:$0xff]
        %v5656 = vld [vmem:[%s335 + $0x3a8] sm:$0xff]
        %v5657 = vld [vmem:[%s335 + $0x3b0] sm:$0xff]
        %v5658 = vld [vmem:[%s335 + $0x3b8] sm:$0xff]
        %v5659 = vld [vmem:[%s335 + $0x3c0] sm:$0xff]
        %v5660 = vld [vmem:[%s335 + $0x3c8] sm:$0xff]
        %v5661 = vld [vmem:[%s335 + $0x3d0] sm:$0xff]
        %v5662 = vld [vmem:[%s335 + $0x3d8] sm:$0xff]
        %v5663 = vld [vmem:[%s335 + $0x3e0] sm:$0xff]
        %v5664 = vld [vmem:[%s335 + $0x3e8] sm:$0xff]
        %v5665 = vld [vmem:[%s335 + $0x3f0] sm:$0xff]
        %v5666 = vld [vmem:[%s335 + $0x3f8] sm:$0xff]
        %v5667 = vld [vmem:[%s335 + $0x400] sm:$0xff]
        %v5668 = vld [vmem:[%s335 + $0x408] sm:$0xff]
        %v5669 = vld [vmem:[%s335 + $0x410] sm:$0xff]
        %v5670 = vld [vmem:[%s335 + $0x418] sm:$0xff]
        %v5671 = vld [vmem:[%s335 + $0x420] sm:$0xff]
        %v5672 = vld [vmem:[%s335 + $0x428] sm:$0xff]
        %v5673 = vld [vmem:[%s335 + $0x430] sm:$0xff]
        %v5674 = vld [vmem:[%s335 + $0x438] sm:$0xff]
        %v5675 = vld [vmem:[%s335 + $0x440] sm:$0xff]
        %v5676 = vld [vmem:[%s335 + $0x448] sm:$0xff]
        %v5677 = vld [vmem:[%s335 + $0x450] sm:$0xff]
        %v5678 = vld [vmem:[%s335 + $0x458] sm:$0xff]
        %v5679 = vld [vmem:[%s335 + $0x460] sm:$0xff]
        %v5680 = vld [vmem:[%s335 + $0x468] sm:$0xff]
        %v5681 = vld [vmem:[%s335 + $0x470] sm:$0xff]
        %v5682 = vld [vmem:[%s335 + $0x478] sm:$0xff]
        %v5683 = vld [vmem:[%s335 + $0x480] sm:$0xff]
        %v5684 = vld [vmem:[%s335 + $0x488] sm:$0xff]
        %v5685 = vld [vmem:[%s335 + $0x490] sm:$0xff]
        %v5686 = vld [vmem:[%s335 + $0x498] sm:$0xff]
        %v5687 = vld [vmem:[%s335 + $0x4a0] sm:$0xff]
        %v5688 = vld [vmem:[%s335 + $0x4a8] sm:$0xff]
        %v5689 = vld [vmem:[%s335 + $0x4b0] sm:$0xff]
        %v5690 = vld [vmem:[%s335 + $0x4b8] sm:$0xff]
        %v5691 = vld [vmem:[%s335 + $0x4c0] sm:$0xff]
        %v5692 = vld [vmem:[%s335 + $0x4c8] sm:$0xff]
        %v5693 = vld [vmem:[%s335 + $0x4d0] sm:$0xff]
        %v5694 = vld [vmem:[%s335 + $0x4d8] sm:$0xff]
        %v5695 = vld [vmem:[%s335 + $0x4e0] sm:$0xff]
        %v5696 = vld [vmem:[%s335 + $0x4e8] sm:$0xff]
        %v5697 = vld [vmem:[%s335 + $0x4f0] sm:$0xff]
        %v5698 = vld [vmem:[%s335 + $0x4f8] sm:$0xff]
        %v5699 = vld [vmem:[%s335 + $0x500] sm:$0xff]
        %v5700 = vld [vmem:[%s335 + $0x508] sm:$0xff]
        %v5701 = vld [vmem:[%s335 + $0x510] sm:$0xff]
        %v5702 = vld [vmem:[%s335 + $0x518] sm:$0xff]
        %v5703 = vld [vmem:[%s335 + $0x520] sm:$0xff]
        %v5704 = vld [vmem:[%s335 + $0x528] sm:$0xff]
        %v5705 = vld [vmem:[%s335 + $0x530] sm:$0xff]
        %v5706 = vld [vmem:[%s335 + $0x538] sm:$0xff]
        %v5707 = vld [vmem:[%s335 + $0x540] sm:$0xff]
        %v5708 = vld [vmem:[%s335 + $0x548] sm:$0xff]
        %v5709 = vld [vmem:[%s335 + $0x550] sm:$0xff]
        %v5710 = vld [vmem:[%s335 + $0x558] sm:$0xff]
        %v5711 = vld [vmem:[%s335 + $0x560] sm:$0xff]
        %v5712 = vld [vmem:[%s335 + $0x568] sm:$0xff]
        %v5713 = vld [vmem:[%s335 + $0x570] sm:$0xff]
        %v5714 = vld [vmem:[%s335 + $0x578] sm:$0xff]
        %v5715 = vld [vmem:[%s335 + $0x580] sm:$0xff]
        %v5716 = vld [vmem:[%s335 + $0x588] sm:$0xff]
        %v5717 = vld [vmem:[%s335 + $0x590] sm:$0xff]
        %v5718 = vld [vmem:[%s335 + $0x598] sm:$0xff]
        %v5719 = vld [vmem:[%s335 + $0x5a0] sm:$0xff]
        %v5720 = vld [vmem:[%s335 + $0x5a8] sm:$0xff]
        %v5721 = vld [vmem:[%s335 + $0x5b0] sm:$0xff]
        %v5722 = vld [vmem:[%s335 + $0x5b8] sm:$0xff]
        %v5723 = vld [vmem:[%s335 + $0x5c0] sm:$0xff]
        %v5724 = vld [vmem:[%s335 + $0x5c8] sm:$0xff]
        %v5725 = vld [vmem:[%s335 + $0x5d0] sm:$0xff]
        %v5726 = vld [vmem:[%s335 + $0x5d8] sm:$0xff]
        %v5727 = vld [vmem:[%s335 + $0x5e0] sm:$0xff]
        %v5728 = vld [vmem:[%s335 + $0x5e8] sm:$0xff]
        %v5729 = vld [vmem:[%s335 + $0x5f0] sm:$0xff]
        %v5730 = vld [vmem:[%s335 + $0x5f8] sm:$0xff]
        %v5731 = vld [vmem:[%s335 + $0x600] sm:$0xff]
        %v5732 = vld [vmem:[%s335 + $0x608] sm:$0xff]
        %v5733 = vld [vmem:[%s335 + $0x610] sm:$0xff]
        %v5734 = vld [vmem:[%s335 + $0x618] sm:$0xff]
        %v5735 = vld [vmem:[%s335 + $0x620] sm:$0xff]
        %v5736 = vld [vmem:[%s335 + $0x628] sm:$0xff]
        %v5737 = vld [vmem:[%s335 + $0x630] sm:$0xff]
        %v5738 = vld [vmem:[%s335 + $0x638] sm:$0xff]
        %v5739 = vld [vmem:[%s335 + $0x640] sm:$0xff]
        %v5740 = vld [vmem:[%s335 + $0x648] sm:$0xff]
        %v5741 = vld [vmem:[%s335 + $0x650] sm:$0xff]
        %v5742 = vld [vmem:[%s335 + $0x658] sm:$0xff]
        %v5743 = vld [vmem:[%s335 + $0x660] sm:$0xff]
        %v5744 = vld [vmem:[%s335 + $0x668] sm:$0xff]
        %v5745 = vld [vmem:[%s335 + $0x670] sm:$0xff]
        %v5746 = vld [vmem:[%s335 + $0x678] sm:$0xff]
        %v5747 = vld [vmem:[%s335 + $0x680] sm:$0xff]
        %v5748 = vld [vmem:[%s335 + $0x688] sm:$0xff]
        %v5749 = vld [vmem:[%s335 + $0x690] sm:$0xff]
        %v5750 = vld [vmem:[%s335 + $0x698] sm:$0xff]
        %v5751 = vld [vmem:[%s335 + $0x6a0] sm:$0xff]
        %v5752 = vld [vmem:[%s335 + $0x6a8] sm:$0xff]
        %v5753 = vld [vmem:[%s335 + $0x6b0] sm:$0xff]
        %v5754 = vld [vmem:[%s335 + $0x6b8] sm:$0xff]
        %v5755 = vld [vmem:[%s335 + $0x6c0] sm:$0xff]
        %v5756 = vld [vmem:[%s335 + $0x6c8] sm:$0xff]
        %v5757 = vld [vmem:[%s335 + $0x6d0] sm:$0xff]
        %v5758 = vld [vmem:[%s335 + $0x6d8] sm:$0xff]
        %v5759 = vld [vmem:[%s335 + $0x6e0] sm:$0xff]
        %v5760 = vld [vmem:[%s335 + $0x6e8] sm:$0xff]
        %v5761 = vld [vmem:[%s335 + $0x6f0] sm:$0xff]
        %v5762 = vld [vmem:[%s335 + $0x6f8] sm:$0xff]
        %v5763 = vld [vmem:[%s335 + $0x700] sm:$0xff]
        %v5764 = vld [vmem:[%s335 + $0x708] sm:$0xff]
        %v5765 = vld [vmem:[%s335 + $0x710] sm:$0xff]
        %v5766 = vld [vmem:[%s335 + $0x718] sm:$0xff]
        %v5767 = vld [vmem:[%s335 + $0x720] sm:$0xff]
        %v5768 = vld [vmem:[%s335 + $0x728] sm:$0xff]
        %v5769 = vld [vmem:[%s335 + $0x730] sm:$0xff]
        %v5770 = vld [vmem:[%s335 + $0x738] sm:$0xff]
        %v5771 = vld [vmem:[%s335 + $0x740] sm:$0xff]
        %v5772 = vld [vmem:[%s335 + $0x748] sm:$0xff]
        %v5773 = vld [vmem:[%s335 + $0x750] sm:$0xff]
        %v5774 = vld [vmem:[%s335 + $0x758] sm:$0xff]
        %v5775 = vld [vmem:[%s335 + $0x760] sm:$0xff]
        %v5776 = vld [vmem:[%s335 + $0x768] sm:$0xff]
        %v5777 = vld [vmem:[%s335 + $0x770] sm:$0xff]
        %v5778 = vld [vmem:[%s335 + $0x778] sm:$0xff]
        %v5779 = vld [vmem:[%s335 + $0x780] sm:$0xff]
        %v5780 = vld [vmem:[%s335 + $0x788] sm:$0xff]
        %v5781 = vld [vmem:[%s335 + $0x790] sm:$0xff]
        %v5782 = vld [vmem:[%s335 + $0x798] sm:$0xff]
        %v5783 = vld [vmem:[%s335 + $0x7a0] sm:$0xff]
        %v5784 = vld [vmem:[%s335 + $0x7a8] sm:$0xff]
        %v5785 = vld [vmem:[%s335 + $0x7b0] sm:$0xff]
        %v5786 = vld [vmem:[%s335 + $0x7b8] sm:$0xff]
        %v5787 = vld [vmem:[%s335 + $0x7c0] sm:$0xff]
        %v5788 = vld [vmem:[%s335 + $0x7c8] sm:$0xff]
        %v5789 = vld [vmem:[%s335 + $0x7d0] sm:$0xff]
        %v5790 = vld [vmem:[%s335 + $0x7d8] sm:$0xff]
        %v5791 = vld [vmem:[%s335 + $0x7e0] sm:$0xff]
        %v5792 = vld [vmem:[%s335 + $0x7e8] sm:$0xff]
        %v5793 = vld [vmem:[%s335 + $0x7f0] sm:$0xff]
        %v5794 = vld [vmem:[%s335 + $0x7f8] sm:$0xff]
        %5795 = vmatprep.subr.mxu0 %v5540
        %5796 = vmatpush1.xpose.msra.mxu0 %v5539
        %5797 = vmatprep.subr.mxu0 %v5604
        %5798 = vmatpush1.xpose.msra.mxu0 %v5603
        %5799 = vmatprep.subr.mxu0 %v5668
        %5800 = vmatpush1.xpose.msra.mxu0 %v5667
        %5801 = vmatprep.subr.mxu0 %v5732
        %5802 = vmatpush1.xpose.msra.mxu0 %v5731
        %5803 = vmatprep.subr.mxu0 0.0
        %5804 = vmatpush1.xpose.msra.mxu0 0.0
        %5805 = vmatprep.subr.mxu0 0.0
        %5806 = vmatpush1.xpose.msra.mxu0 0.0
        %5807 = vmatprep.subr.mxu0 0.0
        %5808 = vmatpush1.xpose.msra.mxu0 0.0
        %5809 = vmatprep.subr.mxu0 0.0
        %5810 = vmatpush1.xpose.msra.mxu0 0.0
        %5811 = vmatprep.subr.mxu0 0.0
        %5812 = vmatpush1.xpose.msra.mxu0 0.0
        %5813 = vmatprep.subr.mxu0 0.0
        %5814 = vmatpush1.xpose.msra.mxu0 0.0
        %5815 = vmatprep.subr.mxu0 0.0
        %5816 = vmatpush1.xpose.msra.mxu0 0.0
        %5817 = vmatprep.subr.mxu0 0.0
        %5818 = vmatpush1.xpose.msra.mxu0 0.0
        %5819 = vmatprep.subr.mxu0 0.0
        %5820 = vmatpush1.xpose.msra.mxu0 0.0
        %5821 = vmatprep.subr.mxu0 0.0
        %5822 = vmatpush1.xpose.msra.mxu0 0.0
        %5823 = vmatprep.subr.mxu0 0.0
        %5824 = vmatpush1.xpose.msra.mxu0 0.0
        %5825 = vmatprep.subr.mxu0 0.0
        %5826 = vmatpush1.xpose.msra.mxu0 0.0
        %5827 = vmatprep.subr.mxu0 0.0
        %5828 = vmatpush1.xpose.msra.mxu0 0.0
        %5829 = vmatprep.subr.mxu0 0.0
        %5830 = vmatpush1.xpose.msra.mxu0 0.0
        %5831 = vmatprep.subr.mxu0 0.0
        %5832 = vmatpush1.xpose.msra.mxu0 0.0
        %5833 = vmatprep.subr.mxu0 0.0
        %5834 = vmatpush1.xpose.msra.mxu0 0.0
        %5835 = vmatprep.subr.mxu0 0.0
        %5836 = vmatpush1.xpose.msra.mxu0 0.0
        %5837 = vmatprep.subr.mxu0 0.0
        %5838 = vmatpush1.xpose.msra.mxu0 0.0
        %5839 = vmatprep.subr.mxu0 0.0
        %5840 = vmatpush1.xpose.msra.mxu0 0.0
        %5841 = vmatprep.subr.mxu0 0.0
        %5842 = vmatpush1.xpose.msra.mxu0 0.0
        %5843 = vmatprep.subr.mxu0 0.0
        %5844 = vmatpush1.xpose.msra.mxu0 0.0
        %5845 = vmatprep.subr.mxu0 0.0
        %5846 = vmatpush1.xpose.msra.mxu0 0.0
        %5847 = vmatprep.subr.mxu0 0.0
        %5848 = vmatpush1.xpose.msra.mxu0 0.0
        %5849 = vmatprep.subr.mxu0 0.0
        %5850 = vmatpush1.xpose.msra.mxu0 0.0
        %5851 = vmatprep.subr.mxu0 0.0
        %5852 = vmatpush1.xpose.msra.mxu0 0.0
        %5853 = vmatprep.subr.mxu0 0.0
        %5854 = vmatpush1.xpose.msra.mxu0 0.0
        %5855 = vmatprep.subr.mxu0 0.0
        %5856 = vmatpush1.xpose.msra.mxu0 0.0
        %5857 = vmatprep.subr.mxu0 0.0
        %5858 = vmatpush1.xpose.msra.mxu0 0.0
        %5859 = vmatprep.mubr.f32.mxu0 %v2974
        %5860 = vmatmul.mubr.f32.gmra.mrb[0].mxu0 %v2966
        %v5861 = vpop.f32.mrb[0].mxu0
        %v5862 = vadd.f32 0.0, %v5861
        %v5863 = vpop.f32.mrb[0].mxu0
        %5864 = vdwg.mxu0
        %5865 = vmatprep.subr.mxu0 %v5542
        %5866 = vmatpush1.xpose.msra.mxu0 %v5541
        %5867 = vmatprep.subr.mxu0 %v5606
        %5868 = vmatpush1.xpose.msra.mxu0 %v5605
        %5869 = vmatprep.subr.mxu0 %v5670
        %5870 = vmatpush1.xpose.msra.mxu0 %v5669
        %5871 = vmatprep.subr.mxu0 %v5734
        %5872 = vmatpush1.xpose.msra.mxu0 %v5733
        %5873 = vmatprep.subr.mxu0 0.0
        %5874 = vmatpush1.xpose.msra.mxu0 0.0
        %5875 = vmatprep.subr.mxu0 0.0
        %5876 = vmatpush1.xpose.msra.mxu0 0.0
        %5877 = vmatprep.subr.mxu0 0.0
        %5878 = vmatpush1.xpose.msra.mxu0 0.0
        %5879 = vmatprep.subr.mxu0 0.0
        %5880 = vmatpush1.xpose.msra.mxu0 0.0
        %5881 = vmatprep.subr.mxu0 0.0
        %5882 = vmatpush1.xpose.msra.mxu0 0.0
        %5883 = vmatprep.subr.mxu0 0.0
        %5884 = vmatpush1.xpose.msra.mxu0 0.0
        %5885 = vmatprep.subr.mxu0 0.0
        %5886 = vmatpush1.xpose.msra.mxu0 0.0
        %5887 = vmatprep.subr.mxu0 0.0
        %5888 = vmatpush1.xpose.msra.mxu0 0.0
        %5889 = vmatprep.subr.mxu0 0.0
        %5890 = vmatpush1.xpose.msra.mxu0 0.0
        %5891 = vmatprep.subr.mxu0 0.0
        %5892 = vmatpush1.xpose.msra.mxu0 0.0
        %5893 = vmatprep.subr.mxu0 0.0
        %5894 = vmatpush1.xpose.msra.mxu0 0.0
        %5895 = vmatprep.subr.mxu0 0.0
        %5896 = vmatpush1.xpose.msra.mxu0 0.0
        %5897 = vmatprep.subr.mxu0 0.0
        %5898 = vmatpush1.xpose.msra.mxu0 0.0
        %5899 = vmatprep.subr.mxu0 0.0
        %5900 = vmatpush1.xpose.msra.mxu0 0.0
        %5901 = vmatprep.subr.mxu0 0.0
        %5902 = vmatpush1.xpose.msra.mxu0 0.0
        %5903 = vmatprep.subr.mxu0 0.0
        %5904 = vmatpush1.xpose.msra.mxu0 0.0
        %5905 = vmatprep.subr.mxu0 0.0
        %5906 = vmatpush1.xpose.msra.mxu0 0.0
        %5907 = vmatprep.subr.mxu0 0.0
        %5908 = vmatpush1.xpose.msra.mxu0 0.0
        %5909 = vmatprep.subr.mxu0 0.0
        %5910 = vmatpush1.xpose.msra.mxu0 0.0
        %5911 = vmatprep.subr.mxu0 0.0
        %5912 = vmatpush1.xpose.msra.mxu0 0.0
        %5913 = vmatprep.subr.mxu0 0.0
        %5914 = vmatpush1.xpose.msra.mxu0 0.0
        %5915 = vmatprep.subr.mxu0 0.0
        %5916 = vmatpush1.xpose.msra.mxu0 0.0
        %5917 = vmatprep.subr.mxu0 0.0
        %5918 = vmatpush1.xpose.msra.mxu0 0.0
        %5919 = vmatprep.subr.mxu0 0.0
        %5920 = vmatpush1.xpose.msra.mxu0 0.0
        %5921 = vmatprep.subr.mxu0 0.0
        %5922 = vmatpush1.xpose.msra.mxu0 0.0
        %5923 = vmatprep.subr.mxu0 0.0
        %5924 = vmatpush1.xpose.msra.mxu0 0.0
        %5925 = vmatprep.subr.mxu0 0.0
        %5926 = vmatpush1.xpose.msra.mxu0 0.0
        %5927 = vmatprep.subr.mxu0 0.0
        %5928 = vmatpush1.xpose.msra.mxu0 0.0
        %5929 = vmatprep.mubr.f32.mxu0 %v2975
        %5930 = vmatmul.mubr.f32.gmra.mrb[0].mxu0 %v2973
        %v5931 = vpop.f32.mrb[0].mxu0
        %v5932 = vadd.f32 %v5862, %v5931
        %v5933 = vpop.f32.mrb[0].mxu0
        %5934 = vdwg.mxu0
        %5935 = vmatprep.subr.mxu0 %v5544
        %5936 = vmatpush1.xpose.msra.mxu0 %v5543
        %5937 = vmatprep.subr.mxu0 %v5608
        %5938 = vmatpush1.xpose.msra.mxu0 %v5607
        %5939 = vmatprep.subr.mxu0 %v5672
        %5940 = vmatpush1.xpose.msra.mxu0 %v5671
        %5941 = vmatprep.subr.mxu0 %v5736
        %5942 = vmatpush1.xpose.msra.mxu0 %v5735
        %5943 = vmatprep.subr.mxu0 0.0
        %5944 = vmatpush1.xpose.msra.mxu0 0.0
        %5945 = vmatprep.subr.mxu0 0.0
        %5946 = vmatpush1.xpose.msra.mxu0 0.0
        %5947 = vmatprep.subr.mxu0 0.0
        %5948 = vmatpush1.xpose.msra.mxu0 0.0
        %5949 = vmatprep.subr.mxu0 0.0
        %5950 = vmatpush1.xpose.msra.mxu0 0.0
        %5951 = vmatprep.subr.mxu0 0.0
        %5952 = vmatpush1.xpose.msra.mxu0 0.0
        %5953 = vmatprep.subr.mxu0 0.0
        %5954 = vmatpush1.xpose.msra.mxu0 0.0
        %5955 = vmatprep.subr.mxu0 0.0
        %5956 = vmatpush1.xpose.msra.mxu0 0.0
        %5957 = vmatprep.subr.mxu0 0.0
        %5958 = vmatpush1.xpose.msra.mxu0 0.0
        %5959 = vmatprep.subr.mxu0 0.0
        %5960 = vmatpush1.xpose.msra.mxu0 0.0
        %5961 = vmatprep.subr.mxu0 0.0
        %5962 = vmatpush1.xpose.msra.mxu0 0.0
        %5963 = vmatprep.subr.mxu0 0.0
        %5964 = vmatpush1.xpose.msra.mxu0 0.0
        %5965 = vmatprep.subr.mxu0 0.0
        %5966 = vmatpush1.xpose.msra.mxu0 0.0
        %5967 = vmatprep.subr.mxu0 0.0
        %5968 = vmatpush1.xpose.msra.mxu0 0.0
        %5969 = vmatprep.subr.mxu0 0.0
        %5970 = vmatpush1.xpose.msra.mxu0 0.0
        %5971 = vmatprep.subr.mxu0 0.0
        %5972 = vmatpush1.xpose.msra.mxu0 0.0
        %5973 = vmatprep.subr.mxu0 0.0
        %5974 = vmatpush1.xpose.msra.mxu0 0.0
        %5975 = vmatprep.subr.mxu0 0.0
        %5976 = vmatpush1.xpose.msra.mxu0 0.0
        %5977 = vmatprep.subr.mxu0 0.0
        %5978 = vmatpush1.xpose.msra.mxu0 0.0
        %5979 = vmatprep.subr.mxu0 0.0
        %5980 = vmatpush1.xpose.msra.mxu0 0.0
        %5981 = vmatprep.subr.mxu0 0.0
        %5982 = vmatpush1.xpose.msra.mxu0 0.0
        %5983 = vmatprep.subr.mxu0 0.0
        %5984 = vmatpush1.xpose.msra.mxu0 0.0
        %5985 = vmatprep.subr.mxu0 0.0
        %5986 = vmatpush1.xpose.msra.mxu0 0.0
        %5987 = vmatprep.subr.mxu0 0.0
        %5988 = vmatpush1.xpose.msra.mxu0 0.0
        %5989 = vmatprep.subr.mxu0 0.0
        %5990 = vmatpush1.xpose.msra.mxu0 0.0
        %5991 = vmatprep.subr.mxu0 0.0
        %5992 = vmatpush1.xpose.msra.mxu0 0.0
        %5993 = vmatprep.subr.mxu0 0.0
        %5994 = vmatpush1.xpose.msra.mxu0 0.0
        %5995 = vmatprep.subr.mxu0 0.0
        %5996 = vmatpush1.xpose.msra.mxu0 0.0
        %5997 = vmatprep.subr.mxu0 0.0
        %5998 = vmatpush1.xpose.msra.mxu0 0.0
        %5999 = vmatprep.mubr.f32.mxu0 %v2991
        %6000 = vmatmul.mubr.f32.gmra.mrb[0].mxu0 %v2983
        %v6001 = vpop.f32.mrb[0].mxu0
        %v6002 = vadd.f32 %v5932, %v6001
        %v6003 = vpop.f32.mrb[0].mxu0
        %6004 = vdwg.mxu0
        %6005 = vmatprep.subr.mxu0 %v5546
        %6006 = vmatpush1.xpose.msra.mxu0 %v5545
        %6007 = vmatprep.subr.mxu0 %v5610
        %6008 = vmatpush1.xpose.msra.mxu0 %v5609
        %6009 = vmatprep.subr.mxu0 %v5674
        %6010 = vmatpush1.xpose.msra.mxu0 %v5673
        %6011 = vmatprep.subr.mxu0 %v5738
        %6012 = vmatpush1.xpose.msra.mxu0 %v5737
        %6013 = vmatprep.subr.mxu0 0.0
        %6014 = vmatpush1.xpose.msra.mxu0 0.0
        %6015 = vmatprep.subr.mxu0 0.0
        %6016 = vmatpush1.xpose.msra.mxu0 0.0
        %6017 = vmatprep.subr.mxu0 0.0
        %6018 = vmatpush1.xpose.msra.mxu0 0.0
        %6019 = vmatprep.subr.mxu0 0.0
        %6020 = vmatpush1.xpose.msra.mxu0 0.0
        %6021 = vmatprep.subr.mxu0 0.0
        %6022 = vmatpush1.xpose.msra.mxu0 0.0
        %6023 = vmatprep.subr.mxu0 0.0
        %6024 = vmatpush1.xpose.msra.mxu0 0.0
        %6025 = vmatprep.subr.mxu0 0.0
        %6026 = vmatpush1.xpose.msra.mxu0 0.0
        %6027 = vmatprep.subr.mxu0 0.0
        %6028 = vmatpush1.xpose.msra.mxu0 0.0
        %6029 = vmatprep.subr.mxu0 0.0
        %6030 = vmatpush1.xpose.msra.mxu0 0.0
        %6031 = vmatprep.subr.mxu0 0.0
        %6032 = vmatpush1.xpose.msra.mxu0 0.0
        %6033 = vmatprep.subr.mxu0 0.0
        %6034 = vmatpush1.xpose.msra.mxu0 0.0
        %6035 = vmatprep.subr.mxu0 0.0
        %6036 = vmatpush1.xpose.msra.mxu0 0.0
        %6037 = vmatprep.subr.mxu0 0.0
        %6038 = vmatpush1.xpose.msra.mxu0 0.0
        %6039 = vmatprep.subr.mxu0 0.0
        %6040 = vmatpush1.xpose.msra.mxu0 0.0
        %6041 = vmatprep.subr.mxu0 0.0
        %6042 = vmatpush1.xpose.msra.mxu0 0.0
        %6043 = vmatprep.subr.mxu0 0.0
        %6044 = vmatpush1.xpose.msra.mxu0 0.0
        %6045 = vmatprep.subr.mxu0 0.0
        %6046 = vmatpush1.xpose.msra.mxu0 0.0
        %6047 = vmatprep.subr.mxu0 0.0
        %6048 = vmatpush1.xpose.msra.mxu0 0.0
        %6049 = vmatprep.subr.mxu0 0.0
        %6050 = vmatpush1.xpose.msra.mxu0 0.0
        %6051 = vmatprep.subr.mxu0 0.0
        %6052 = vmatpush1.xpose.msra.mxu0 0.0
        %6053 = vmatprep.subr.mxu0 0.0
        %6054 = vmatpush1.xpose.msra.mxu0 0.0
        %6055 = vmatprep.subr.mxu0 0.0
        %6056 = vmatpush1.xpose.msra.mxu0 0.0
        %6057 = vmatprep.subr.mxu0 0.0
        %6058 = vmatpush1.xpose.msra.mxu0 0.0
        %6059 = vmatprep.subr.mxu0 0.0
        %6060 = vmatpush1.xpose.msra.mxu0 0.0
        %6061 = vmatprep.subr.mxu0 0.0
        %6062 = vmatpush1.xpose.msra.mxu0 0.0
        %6063 = vmatprep.subr.mxu0 0.0
        %6064 = vmatpush1.xpose.msra.mxu0 0.0
        %6065 = vmatprep.subr.mxu0 0.0
        %6066 = vmatpush1.xpose.msra.mxu0 0.0
        %6067 = vmatprep.subr.mxu0 0.0
        %6068 = vmatpush1.xpose.msra.mxu0 0.0
        %6069 = vmatprep.mubr.f32.mxu0 %v2992
        %6070 = vmatmul.mubr.f32.gmra.mrb[0].mxu0 %v2990
        %v6071 = vpop.f32.mrb[0].mxu0
        %v6072 = vadd.f32 %v6002, %v6071
        %v6073 = vpop.f32.mrb[0].mxu0
        %6074 = vdwg.mxu0
        %6075 = vmatprep.subr.mxu0 %v5548
        %6076 = vmatpush1.xpose.msra.mxu0 %v5547
        %6077 = vmatprep.subr.mxu0 %v5612
        %6078 = vmatpush1.xpose.msra.mxu0 %v5611
        %6079 = vmatprep.subr.mxu0 %v5676
        %6080 = vmatpush1.xpose.msra.mxu0 %v5675
        %6081 = vmatprep.subr.mxu0 %v5740
        %6082 = vmatpush1.xpose.msra.mxu0 %v5739
        %6083 = vmatprep.subr.mxu0 0.0
        %6084 = vmatpush1.xpose.msra.mxu0 0.0
        %6085 = vmatprep.subr.mxu0 0.0
        %6086 = vmatpush1.xpose.msra.mxu0 0.0
        %6087 = vmatprep.subr.mxu0 0.0
        %6088 = vmatpush1.xpose.msra.mxu0 0.0
        %6089 = vmatprep.subr.mxu0 0.0
        %6090 = vmatpush1.xpose.msra.mxu0 0.0
        %6091 = vmatprep.subr.mxu0 0.0
        %6092 = vmatpush1.xpose.msra.mxu0 0.0
        %6093 = vmatprep.subr.mxu0 0.0
        %6094 = vmatpush1.xpose.msra.mxu0 0.0
        %6095 = vmatprep.subr.mxu0 0.0
        %6096 = vmatpush1.xpose.msra.mxu0 0.0
        %6097 = vmatprep.subr.mxu0 0.0
        %6098 = vmatpush1.xpose.msra.mxu0 0.0
        %6099 = vmatprep.subr.mxu0 0.0
        %6100 = vmatpush1.xpose.msra.mxu0 0.0
        %6101 = vmatprep.subr.mxu0 0.0
        %6102 = vmatpush1.xpose.msra.mxu0 0.0
        %6103 = vmatprep.subr.mxu0 0.0
        %6104 = vmatpush1.xpose.msra.mxu0 0.0
        %6105 = vmatprep.subr.mxu0 0.0
        %6106 = vmatpush1.xpose.msra.mxu0 0.0
        %6107 = vmatprep.subr.mxu0 0.0
        %6108 = vmatpush1.xpose.msra.mxu0 0.0
        %6109 = vmatprep.subr.mxu0 0.0
        %6110 = vmatpush1.xpose.msra.mxu0 0.0
        %6111 = vmatprep.subr.mxu0 0.0
        %6112 = vmatpush1.xpose.msra.mxu0 0.0
        %6113 = vmatprep.subr.mxu0 0.0
        %6114 = vmatpush1.xpose.msra.mxu0 0.0
        %6115 = vmatprep.subr.mxu0 0.0
        %6116 = vmatpush1.xpose.msra.mxu0 0.0
        %6117 = vmatprep.subr.mxu0 0.0
        %6118 = vmatpush1.xpose.msra.mxu0 0.0
        %6119 = vmatprep.subr.mxu0 0.0
        %6120 = vmatpush1.xpose.msra.mxu0 0.0
        %6121 = vmatprep.subr.mxu0 0.0
        %6122 = vmatpush1.xpose.msra.mxu0 0.0
        %6123 = vmatprep.subr.mxu0 0.0
        %6124 = vmatpush1.xpose.msra.mxu0 0.0
        %6125 = vmatprep.subr.mxu0 0.0
        %6126 = vmatpush1.xpose.msra.mxu0 0.0
        %6127 = vmatprep.subr.mxu0 0.0
        %6128 = vmatpush1.xpose.msra.mxu0 0.0
        %6129 = vmatprep.subr.mxu0 0.0
        %6130 = vmatpush1.xpose.msra.mxu0 0.0
        %6131 = vmatprep.subr.mxu0 0.0
        %6132 = vmatpush1.xpose.msra.mxu0 0.0
        %6133 = vmatprep.subr.mxu0 0.0
        %6134 = vmatpush1.xpose.msra.mxu0 0.0
        %6135 = vmatprep.subr.mxu0 0.0
        %6136 = vmatpush1.xpose.msra.mxu0 0.0
        %6137 = vmatprep.subr.mxu0 0.0
        %6138 = vmatpush1.xpose.msra.mxu0 0.0
        %6139 = vmatprep.mubr.f32.mxu0 %v3008
        %6140 = vmatmul.mubr.f32.gmra.mrb[0].mxu0 %v3000
        %v6141 = vpop.f32.mrb[0].mxu0
        %v6142 = vadd.f32 %v6072, %v6141
        %v6143 = vpop.f32.mrb[0].mxu0
        %6144 = vdwg.mxu0
        %6145 = vmatprep.subr.mxu0 %v5550
        %6146 = vmatpush1.xpose.msra.mxu0 %v5549
        %6147 = vmatprep.subr.mxu0 %v5614
        %6148 = vmatpush1.xpose.msra.mxu0 %v5613
        %6149 = vmatprep.subr.mxu0 %v5678
        %6150 = vmatpush1.xpose.msra.mxu0 %v5677
        %6151 = vmatprep.subr.mxu0 %v5742
        %6152 = vmatpush1.xpose.msra.mxu0 %v5741
        %6153 = vmatprep.subr.mxu0 0.0
        %6154 = vmatpush1.xpose.msra.mxu0 0.0
        %6155 = vmatprep.subr.mxu0 0.0
        %6156 = vmatpush1.xpose.msra.mxu0 0.0
        %6157 = vmatprep.subr.mxu0 0.0
        %6158 = vmatpush1.xpose.msra.mxu0 0.0
        %6159 = vmatprep.subr.mxu0 0.0
        %6160 = vmatpush1.xpose.msra.mxu0 0.0
        %6161 = vmatprep.subr.mxu0 0.0
        %6162 = vmatpush1.xpose.msra.mxu0 0.0
        %6163 = vmatprep.subr.mxu0 0.0
        %6164 = vmatpush1.xpose.msra.mxu0 0.0
        %6165 = vmatprep.subr.mxu0 0.0
        %6166 = vmatpush1.xpose.msra.mxu0 0.0
        %6167 = vmatprep.subr.mxu0 0.0
        %6168 = vmatpush1.xpose.msra.mxu0 0.0
        %6169 = vmatprep.subr.mxu0 0.0
        %6170 = vmatpush1.xpose.msra.mxu0 0.0
        %6171 = vmatprep.subr.mxu0 0.0
        %6172 = vmatpush1.xpose.msra.mxu0 0.0
        %6173 = vmatprep.subr.mxu0 0.0
        %6174 = vmatpush1.xpose.msra.mxu0 0.0
        %6175 = vmatprep.subr.mxu0 0.0
        %6176 = vmatpush1.xpose.msra.mxu0 0.0
        %6177 = vmatprep.subr.mxu0 0.0
        %6178 = vmatpush1.xpose.msra.mxu0 0.0
        %6179 = vmatprep.subr.mxu0 0.0
        %6180 = vmatpush1.xpose.msra.mxu0 0.0
        %6181 = vmatprep.subr.mxu0 0.0
        %6182 = vmatpush1.xpose.msra.mxu0 0.0
        %6183 = vmatprep.subr.mxu0 0.0
        %6184 = vmatpush1.xpose.msra.mxu0 0.0
        %6185 = vmatprep.subr.mxu0 0.0
        %6186 = vmatpush1.xpose.msra.mxu0 0.0
        %6187 = vmatprep.subr.mxu0 0.0
        %6188 = vmatpush1.xpose.msra.mxu0 0.0
        %6189 = vmatprep.subr.mxu0 0.0
        %6190 = vmatpush1.xpose.msra.mxu0 0.0
        %6191 = vmatprep.subr.mxu0 0.0
        %6192 = vmatpush1.xpose.msra.mxu0 0.0
        %6193 = vmatprep.subr.mxu0 0.0
        %6194 = vmatpush1.xpose.msra.mxu0 0.0
        %6195 = vmatprep.subr.mxu0 0.0
        %6196 = vmatpush1.xpose.msra.mxu0 0.0
        %6197 = vmatprep.subr.mxu0 0.0
        %6198 = vmatpush1.xpose.msra.mxu0 0.0
        %6199 = vmatprep.subr.mxu0 0.0
        %6200 = vmatpush1.xpose.msra.mxu0 0.0
        %6201 = vmatprep.subr.mxu0 0.0
        %6202 = vmatpush1.xpose.msra.mxu0 0.0
        %6203 = vmatprep.subr.mxu0 0.0
        %6204 = vmatpush1.xpose.msra.mxu0 0.0
        %6205 = vmatprep.subr.mxu0 0.0
        %6206 = vmatpush1.xpose.msra.mxu0 0.0
        %6207 = vmatprep.subr.mxu0 0.0
        %6208 = vmatpush1.xpose.msra.mxu0 0.0
        %6209 = vmatprep.mubr.f32.mxu0 %v3009
        %6210 = vmatmul.mubr.f32.gmra.mrb[0].mxu0 %v3007
        %v6211 = vpop.f32.mrb[0].mxu0
        %v6212 = vadd.f32 %v6142, %v6211
        %v6213 = vpop.f32.mrb[0].mxu0
        %6214 = vdwg.mxu0
        %6215 = vmatprep.subr.mxu0 %v5552
        %6216 = vmatpush1.xpose.msra.mxu0 %v5551
        %6217 = vmatprep.subr.mxu0 %v5616
        %6218 = vmatpush1.xpose.msra.mxu0 %v5615
        %6219 = vmatprep.subr.mxu0 %v5680
        %6220 = vmatpush1.xpose.msra.mxu0 %v5679
        %6221 = vmatprep.subr.mxu0 %v5744
        %6222 = vmatpush1.xpose.msra.mxu0 %v5743
        %6223 = vmatprep.subr.mxu0 0.0
        %6224 = vmatpush1.xpose.msra.mxu0 0.0
        %6225 = vmatprep.subr.mxu0 0.0
        %6226 = vmatpush1.xpose.msra.mxu0 0.0
        %6227 = vmatprep.subr.mxu0 0.0
        %6228 = vmatpush1.xpose.msra.mxu0 0.0
        %6229 = vmatprep.subr.mxu0 0.0
        %6230 = vmatpush1.xpose.msra.mxu0 0.0
        %6231 = vmatprep.subr.mxu0 0.0
        %6232 = vmatpush1.xpose.msra.mxu0 0.0
        %6233 = vmatprep.subr.mxu0 0.0
        %6234 = vmatpush1.xpose.msra.mxu0 0.0
        %6235 = vmatprep.subr.mxu0 0.0
        %6236 = vmatpush1.xpose.msra.mxu0 0.0
        %6237 = vmatprep.subr.mxu0 0.0
        %6238 = vmatpush1.xpose.msra.mxu0 0.0
        %6239 = vmatprep.subr.mxu0 0.0
        %6240 = vmatpush1.xpose.msra.mxu0 0.0
        %6241 = vmatprep.subr.mxu0 0.0
        %6242 = vmatpush1.xpose.msra.mxu0 0.0
        %6243 = vmatprep.subr.mxu0 0.0
        %6244 = vmatpush1.xpose.msra.mxu0 0.0
        %6245 = vmatprep.subr.mxu0 0.0
        %6246 = vmatpush1.xpose.msra.mxu0 0.0
        %6247 = vmatprep.subr.mxu0 0.0
        %6248 = vmatpush1.xpose.msra.mxu0 0.0
        %6249 = vmatprep.subr.mxu0 0.0
        %6250 = vmatpush1.xpose.msra.mxu0 0.0
        %6251 = vmatprep.subr.mxu0 0.0
        %6252 = vmatpush1.xpose.msra.mxu0 0.0
        %6253 = vmatprep.subr.mxu0 0.0
        %6254 = vmatpush1.xpose.msra.mxu0 0.0
        %6255 = vmatprep.subr.mxu0 0.0
        %6256 = vmatpush1.xpose.msra.mxu0 0.0
        %6257 = vmatprep.subr.mxu0 0.0
        %6258 = vmatpush1.xpose.msra.mxu0 0.0
        %6259 = vmatprep.subr.mxu0 0.0
        %6260 = vmatpush1.xpose.msra.mxu0 0.0
        %6261 = vmatprep.subr.mxu0 0.0
        %6262 = vmatpush1.xpose.msra.mxu0 0.0
        %6263 = vmatprep.subr.mxu0 0.0
        %6264 = vmatpush1.xpose.msra.mxu0 0.0
        %6265 = vmatprep.subr.mxu0 0.0
        %6266 = vmatpush1.xpose.msra.mxu0 0.0
        %6267 = vmatprep.subr.mxu0 0.0
        %6268 = vmatpush1.xpose.msra.mxu0 0.0
        %6269 = vmatprep.subr.mxu0 0.0
        %6270 = vmatpush1.xpose.msra.mxu0 0.0
        %6271 = vmatprep.subr.mxu0 0.0
        %6272 = vmatpush1.xpose.msra.mxu0 0.0
        %6273 = vmatprep.subr.mxu0 0.0
        %6274 = vmatpush1.xpose.msra.mxu0 0.0
        %6275 = vmatprep.subr.mxu0 0.0
        %6276 = vmatpush1.xpose.msra.mxu0 0.0
        %6277 = vmatprep.subr.mxu0 0.0
        %6278 = vmatpush1.xpose.msra.mxu0 0.0
        %6279 = vmatprep.mubr.f32.mxu0 %v3025
        %6280 = vmatmul.mubr.f32.gmra.mrb[0].mxu0 %v3017
        %v6281 = vpop.f32.mrb[0].mxu0
        %v6282 = vadd.f32 %v6212, %v6281
        %v6283 = vpop.f32.mrb[0].mxu0
        %6284 = vdwg.mxu0
        %6285 = vmatprep.subr.mxu0 %v5554
        %6286 = vmatpush1.xpose.msra.mxu0 %v5553
        %6287 = vmatprep.subr.mxu0 %v5618
        %6288 = vmatpush1.xpose.msra.mxu0 %v5617
        %6289 = vmatprep.subr.mxu0 %v5682
        %6290 = vmatpush1.xpose.msra.mxu0 %v5681
        %6291 = vmatprep.subr.mxu0 %v5746
        %6292 = vmatpush1.xpose.msra.mxu0 %v5745
        %6293 = vmatprep.subr.mxu0 0.0
        %6294 = vmatpush1.xpose.msra.mxu0 0.0
        %6295 = vmatprep.subr.mxu0 0.0
        %6296 = vmatpush1.xpose.msra.mxu0 0.0
        %6297 = vmatprep.subr.mxu0 0.0
        %6298 = vmatpush1.xpose.msra.mxu0 0.0
        %6299 = vmatprep.subr.mxu0 0.0
        %6300 = vmatpush1.xpose.msra.mxu0 0.0
        %6301 = vmatprep.subr.mxu0 0.0
        %6302 = vmatpush1.xpose.msra.mxu0 0.0
        %6303 = vmatprep.subr.mxu0 0.0
        %6304 = vmatpush1.xpose.msra.mxu0 0.0
        %6305 = vmatprep.subr.mxu0 0.0
        %6306 = vmatpush1.xpose.msra.mxu0 0.0
        %6307 = vmatprep.subr.mxu0 0.0
        %6308 = vmatpush1.xpose.msra.mxu0 0.0
        %6309 = vmatprep.subr.mxu0 0.0
        %6310 = vmatpush1.xpose.msra.mxu0 0.0
        %6311 = vmatprep.subr.mxu0 0.0
        %6312 = vmatpush1.xpose.msra.mxu0 0.0
        %6313 = vmatprep.subr.mxu0 0.0
        %6314 = vmatpush1.xpose.msra.mxu0 0.0
        %6315 = vmatprep.subr.mxu0 0.0
        %6316 = vmatpush1.xpose.msra.mxu0 0.0
        %6317 = vmatprep.subr.mxu0 0.0
        %6318 = vmatpush1.xpose.msra.mxu0 0.0
        %6319 = vmatprep.subr.mxu0 0.0
        %6320 = vmatpush1.xpose.msra.mxu0 0.0
        %6321 = vmatprep.subr.mxu0 0.0
        %6322 = vmatpush1.xpose.msra.mxu0 0.0
        %6323 = vmatprep.subr.mxu0 0.0
        %6324 = vmatpush1.xpose.msra.mxu0 0.0
        %6325 = vmatprep.subr.mxu0 0.0
        %6326 = vmatpush1.xpose.msra.mxu0 0.0
        %6327 = vmatprep.subr.mxu0 0.0
        %6328 = vmatpush1.xpose.msra.mxu0 0.0
        %6329 = vmatprep.subr.mxu0 0.0
        %6330 = vmatpush1.xpose.msra.mxu0 0.0
        %6331 = vmatprep.subr.mxu0 0.0
        %6332 = vmatpush1.xpose.msra.mxu0 0.0
        %6333 = vmatprep.subr.mxu0 0.0
        %6334 = vmatpush1.xpose.msra.mxu0 0.0
        %6335 = vmatprep.subr.mxu0 0.0
        %6336 = vmatpush1.xpose.msra.mxu0 0.0
        %6337 = vmatprep.subr.mxu0 0.0
        %6338 = vmatpush1.xpose.msra.mxu0 0.0
        %6339 = vmatprep.subr.mxu0 0.0
        %6340 = vmatpush1.xpose.msra.mxu0 0.0
        %6341 = vmatprep.subr.mxu0 0.0
        %6342 = vmatpush1.xpose.msra.mxu0 0.0
        %6343 = vmatprep.subr.mxu0 0.0
        %6344 = vmatpush1.xpose.msra.mxu0 0.0
        %6345 = vmatprep.subr.mxu0 0.0
        %6346 = vmatpush1.xpose.msra.mxu0 0.0
        %6347 = vmatprep.subr.mxu0 0.0
        %6348 = vmatpush1.xpose.msra.mxu0 0.0
        %6349 = vmatprep.mubr.f32.mxu0 %v3026
        %6350 = vmatmul.mubr.f32.gmra.mrb[0].mxu0 %v3024
        %v6351 = vpop.f32.mrb[0].mxu0
        %v6352 = vadd.f32 %v6282, %v6351
        %v6353 = vpop.f32.mrb[0].mxu0
        %6354 = vdwg.mxu0
        %6355 = vmatprep.subr.mxu0 %v5556
        %6356 = vmatpush1.xpose.msra.mxu0 %v5555
        %6357 = vmatprep.subr.mxu0 %v5620
        %6358 = vmatpush1.xpose.msra.mxu0 %v5619
        %6359 = vmatprep.subr.mxu0 %v5684
        %6360 = vmatpush1.xpose.msra.mxu0 %v5683
        %6361 = vmatprep.subr.mxu0 %v5748
        %6362 = vmatpush1.xpose.msra.mxu0 %v5747
        %6363 = vmatprep.subr.mxu0 0.0
        %6364 = vmatpush1.xpose.msra.mxu0 0.0
        %6365 = vmatprep.subr.mxu0 0.0
        %6366 = vmatpush1.xpose.msra.mxu0 0.0
        %6367 = vmatprep.subr.mxu0 0.0
        %6368 = vmatpush1.xpose.msra.mxu0 0.0
        %6369 = vmatprep.subr.mxu0 0.0
        %6370 = vmatpush1.xpose.msra.mxu0 0.0
        %6371 = vmatprep.subr.mxu0 0.0
        %6372 = vmatpush1.xpose.msra.mxu0 0.0
        %6373 = vmatprep.subr.mxu0 0.0
        %6374 = vmatpush1.xpose.msra.mxu0 0.0
        %6375 = vmatprep.subr.mxu0 0.0
        %6376 = vmatpush1.xpose.msra.mxu0 0.0
        %6377 = vmatprep.subr.mxu0 0.0
        %6378 = vmatpush1.xpose.msra.mxu0 0.0
        %6379 = vmatprep.subr.mxu0 0.0
        %6380 = vmatpush1.xpose.msra.mxu0 0.0
        %6381 = vmatprep.subr.mxu0 0.0
        %6382 = vmatpush1.xpose.msra.mxu0 0.0
        %6383 = vmatprep.subr.mxu0 0.0
        %6384 = vmatpush1.xpose.msra.mxu0 0.0
        %6385 = vmatprep.subr.mxu0 0.0
        %6386 = vmatpush1.xpose.msra.mxu0 0.0
        %6387 = vmatprep.subr.mxu0 0.0
        %6388 = vmatpush1.xpose.msra.mxu0 0.0
        %6389 = vmatprep.subr.mxu0 0.0
        %6390 = vmatpush1.xpose.msra.mxu0 0.0
        %6391 = vmatprep.subr.mxu0 0.0
        %6392 = vmatpush1.xpose.msra.mxu0 0.0
        %6393 = vmatprep.subr.mxu0 0.0
        %6394 = vmatpush1.xpose.msra.mxu0 0.0
        %6395 = vmatprep.subr.mxu0 0.0
        %6396 = vmatpush1.xpose.msra.mxu0 0.0
        %6397 = vmatprep.subr.mxu0 0.0
        %6398 = vmatpush1.xpose.msra.mxu0 0.0
        %6399 = vmatprep.subr.mxu0 0.0
        %6400 = vmatpush1.xpose.msra.mxu0 0.0
        %6401 = vmatprep.subr.mxu0 0.0
        %6402 = vmatpush1.xpose.msra.mxu0 0.0
        %6403 = vmatprep.subr.mxu0 0.0
        %6404 = vmatpush1.xpose.msra.mxu0 0.0
        %6405 = vmatprep.subr.mxu0 0.0
        %6406 = vmatpush1.xpose.msra.mxu0 0.0
        %6407 = vmatprep.subr.mxu0 0.0
        %6408 = vmatpush1.xpose.msra.mxu0 0.0
        %6409 = vmatprep.subr.mxu0 0.0
        %6410 = vmatpush1.xpose.msra.mxu0 0.0
        %6411 = vmatprep.subr.mxu0 0.0
        %6412 = vmatpush1.xpose.msra.mxu0 0.0
        %6413 = vmatprep.subr.mxu0 0.0
        %6414 = vmatpush1.xpose.msra.mxu0 0.0
        %6415 = vmatprep.subr.mxu0 0.0
        %6416 = vmatpush1.xpose.msra.mxu0 0.0
        %6417 = vmatprep.subr.mxu0 0.0
        %6418 = vmatpush1.xpose.msra.mxu0 0.0
        %6419 = vmatprep.mubr.f32.mxu0 %v3042
        %6420 = vmatmul.mubr.f32.gmra.mrb[0].mxu0 %v3034
        %v6421 = vpop.f32.mrb[0].mxu0
        %v6422 = vadd.f32 %v6352, %v6421
        %v6423 = vpop.f32.mrb[0].mxu0
        %6424 = vdwg.mxu0
        %6425 = vmatprep.subr.mxu0 %v5558
        %6426 = vmatpush1.xpose.msra.mxu0 %v5557
        %6427 = vmatprep.subr.mxu0 %v5622
        %6428 = vmatpush1.xpose.msra.mxu0 %v5621
        %6429 = vmatprep.subr.mxu0 %v5686
        %6430 = vmatpush1.xpose.msra.mxu0 %v5685
        %6431 = vmatprep.subr.mxu0 %v5750
        %6432 = vmatpush1.xpose.msra.mxu0 %v5749
        %6433 = vmatprep.subr.mxu0 0.0
        %6434 = vmatpush1.xpose.msra.mxu0 0.0
        %6435 = vmatprep.subr.mxu0 0.0
        %6436 = vmatpush1.xpose.msra.mxu0 0.0
        %6437 = vmatprep.subr.mxu0 0.0
        %6438 = vmatpush1.xpose.msra.mxu0 0.0
        %6439 = vmatprep.subr.mxu0 0.0
        %6440 = vmatpush1.xpose.msra.mxu0 0.0
        %6441 = vmatprep.subr.mxu0 0.0
        %6442 = vmatpush1.xpose.msra.mxu0 0.0
        %6443 = vmatprep.subr.mxu0 0.0
        %6444 = vmatpush1.xpose.msra.mxu0 0.0
        %6445 = vmatprep.subr.mxu0 0.0
        %6446 = vmatpush1.xpose.msra.mxu0 0.0
        %6447 = vmatprep.subr.mxu0 0.0
        %6448 = vmatpush1.xpose.msra.mxu0 0.0
        %6449 = vmatprep.subr.mxu0 0.0
        %6450 = vmatpush1.xpose.msra.mxu0 0.0
        %6451 = vmatprep.subr.mxu0 0.0
        %6452 = vmatpush1.xpose.msra.mxu0 0.0
        %6453 = vmatprep.subr.mxu0 0.0
        %6454 = vmatpush1.xpose.msra.mxu0 0.0
        %6455 = vmatprep.subr.mxu0 0.0
        %6456 = vmatpush1.xpose.msra.mxu0 0.0
        %6457 = vmatprep.subr.mxu0 0.0
        %6458 = vmatpush1.xpose.msra.mxu0 0.0
        %6459 = vmatprep.subr.mxu0 0.0
        %6460 = vmatpush1.xpose.msra.mxu0 0.0
        %6461 = vmatprep.subr.mxu0 0.0
        %6462 = vmatpush1.xpose.msra.mxu0 0.0
        %6463 = vmatprep.subr.mxu0 0.0
        %6464 = vmatpush1.xpose.msra.mxu0 0.0
        %6465 = vmatprep.subr.mxu0 0.0
        %6466 = vmatpush1.xpose.msra.mxu0 0.0
        %6467 = vmatprep.subr.mxu0 0.0
        %6468 = vmatpush1.xpose.msra.mxu0 0.0
        %6469 = vmatprep.subr.mxu0 0.0
        %6470 = vmatpush1.xpose.msra.mxu0 0.0
        %6471 = vmatprep.subr.mxu0 0.0
        %6472 = vmatpush1.xpose.msra.mxu0 0.0
        %6473 = vmatprep.subr.mxu0 0.0
        %6474 = vmatpush1.xpose.msra.mxu0 0.0
        %6475 = vmatprep.subr.mxu0 0.0
        %6476 = vmatpush1.xpose.msra.mxu0 0.0
        %6477 = vmatprep.subr.mxu0 0.0
        %6478 = vmatpush1.xpose.msra.mxu0 0.0
        %6479 = vmatprep.subr.mxu0 0.0
        %6480 = vmatpush1.xpose.msra.mxu0 0.0
        %6481 = vmatprep.subr.mxu0 0.0
        %6482 = vmatpush1.xpose.msra.mxu0 0.0
        %6483 = vmatprep.subr.mxu0 0.0
        %6484 = vmatpush1.xpose.msra.mxu0 0.0
        %6485 = vmatprep.subr.mxu0 0.0
        %6486 = vmatpush1.xpose.msra.mxu0 0.0
        %6487 = vmatprep.subr.mxu0 0.0
        %6488 = vmatpush1.xpose.msra.mxu0 0.0
        %6489 = vmatprep.mubr.f32.mxu0 %v3043
        %6490 = vmatmul.mubr.f32.gmra.mrb[0].mxu0 %v3041
        %v6491 = vpop.f32.mrb[0].mxu0
        %v6492 = vadd.f32 %v6422, %v6491
        %v6493 = vpop.f32.mrb[0].mxu0
        %6494 = vdwg.mxu0
        %6495 = vmatprep.subr.mxu0 %v5560
        %6496 = vmatpush1.xpose.msra.mxu0 %v5559
        %6497 = vmatprep.subr.mxu0 %v5624
        %6498 = vmatpush1.xpose.msra.mxu0 %v5623
        %6499 = vmatprep.subr.mxu0 %v5688
        %6500 = vmatpush1.xpose.msra.mxu0 %v5687
        %6501 = vmatprep.subr.mxu0 %v5752
        %6502 = vmatpush1.xpose.msra.mxu0 %v5751
        %6503 = vmatprep.subr.mxu0 0.0
        %6504 = vmatpush1.xpose.msra.mxu0 0.0
        %6505 = vmatprep.subr.mxu0 0.0
        %6506 = vmatpush1.xpose.msra.mxu0 0.0
        %6507 = vmatprep.subr.mxu0 0.0
        %6508 = vmatpush1.xpose.msra.mxu0 0.0
        %6509 = vmatprep.subr.mxu0 0.0
        %6510 = vmatpush1.xpose.msra.mxu0 0.0
        %6511 = vmatprep.subr.mxu0 0.0
        %6512 = vmatpush1.xpose.msra.mxu0 0.0
        %6513 = vmatprep.subr.mxu0 0.0
        %6514 = vmatpush1.xpose.msra.mxu0 0.0
        %6515 = vmatprep.subr.mxu0 0.0
        %6516 = vmatpush1.xpose.msra.mxu0 0.0
        %6517 = vmatprep.subr.mxu0 0.0
        %6518 = vmatpush1.xpose.msra.mxu0 0.0
        %6519 = vmatprep.subr.mxu0 0.0
        %6520 = vmatpush1.xpose.msra.mxu0 0.0
        %6521 = vmatprep.subr.mxu0 0.0
        %6522 = vmatpush1.xpose.msra.mxu0 0.0
        %6523 = vmatprep.subr.mxu0 0.0
        %6524 = vmatpush1.xpose.msra.mxu0 0.0
        %6525 = vmatprep.subr.mxu0 0.0
        %6526 = vmatpush1.xpose.msra.mxu0 0.0
        %6527 = vmatprep.subr.mxu0 0.0
        %6528 = vmatpush1.xpose.msra.mxu0 0.0
        %6529 = vmatprep.subr.mxu0 0.0
        %6530 = vmatpush1.xpose.msra.mxu0 0.0
        %6531 = vmatprep.subr.mxu0 0.0
        %6532 = vmatpush1.xpose.msra.mxu0 0.0
        %6533 = vmatprep.subr.mxu0 0.0
        %6534 = vmatpush1.xpose.msra.mxu0 0.0
        %6535 = vmatprep.subr.mxu0 0.0
        %6536 = vmatpush1.xpose.msra.mxu0 0.0
        %6537 = vmatprep.subr.mxu0 0.0
        %6538 = vmatpush1.xpose.msra.mxu0 0.0
        %6539 = vmatprep.subr.mxu0 0.0
        %6540 = vmatpush1.xpose.msra.mxu0 0.0
        %6541 = vmatprep.subr.mxu0 0.0
        %6542 = vmatpush1.xpose.msra.mxu0 0.0
        %6543 = vmatprep.subr.mxu0 0.0
        %6544 = vmatpush1.xpose.msra.mxu0 0.0
        %6545 = vmatprep.subr.mxu0 0.0
        %6546 = vmatpush1.xpose.msra.mxu0 0.0
        %6547 = vmatprep.subr.mxu0 0.0
        %6548 = vmatpush1.xpose.msra.mxu0 0.0
        %6549 = vmatprep.subr.mxu0 0.0
        %6550 = vmatpush1.xpose.msra.mxu0 0.0
        %6551 = vmatprep.subr.mxu0 0.0
        %6552 = vmatpush1.xpose.msra.mxu0 0.0
        %6553 = vmatprep.subr.mxu0 0.0
        %6554 = vmatpush1.xpose.msra.mxu0 0.0
        %6555 = vmatprep.subr.mxu0 0.0
        %6556 = vmatpush1.xpose.msra.mxu0 0.0
        %6557 = vmatprep.subr.mxu0 0.0
        %6558 = vmatpush1.xpose.msra.mxu0 0.0
        %6559 = vmatprep.mubr.f32.mxu0 %v3059
        %6560 = vmatmul.mubr.f32.gmra.mrb[0].mxu0 %v3051
        %v6561 = vpop.f32.mrb[0].mxu0
        %v6562 = vadd.f32 %v6492, %v6561
        %v6563 = vpop.f32.mrb[0].mxu0
        %6564 = vdwg.mxu0
        %6565 = vmatprep.subr.mxu0 %v5562
        %6566 = vmatpush1.xpose.msra.mxu0 %v5561
        %6567 = vmatprep.subr.mxu0 %v5626
        %6568 = vmatpush1.xpose.msra.mxu0 %v5625
        %6569 = vmatprep.subr.mxu0 %v5690
        %6570 = vmatpush1.xpose.msra.mxu0 %v5689
        %6571 = vmatprep.subr.mxu0 %v5754
        %6572 = vmatpush1.xpose.msra.mxu0 %v5753
        %6573 = vmatprep.subr.mxu0 0.0
        %6574 = vmatpush1.xpose.msra.mxu0 0.0
        %6575 = vmatprep.subr.mxu0 0.0
        %6576 = vmatpush1.xpose.msra.mxu0 0.0
        %6577 = vmatprep.subr.mxu0 0.0
        %6578 = vmatpush1.xpose.msra.mxu0 0.0
        %6579 = vmatprep.subr.mxu0 0.0
        %6580 = vmatpush1.xpose.msra.mxu0 0.0
        %6581 = vmatprep.subr.mxu0 0.0
        %6582 = vmatpush1.xpose.msra.mxu0 0.0
        %6583 = vmatprep.subr.mxu0 0.0
        %6584 = vmatpush1.xpose.msra.mxu0 0.0
        %6585 = vmatprep.subr.mxu0 0.0
        %6586 = vmatpush1.xpose.msra.mxu0 0.0
        %6587 = vmatprep.subr.mxu0 0.0
        %6588 = vmatpush1.xpose.msra.mxu0 0.0
        %6589 = vmatprep.subr.mxu0 0.0
        %6590 = vmatpush1.xpose.msra.mxu0 0.0
        %6591 = vmatprep.subr.mxu0 0.0
        %6592 = vmatpush1.xpose.msra.mxu0 0.0
        %6593 = vmatprep.subr.mxu0 0.0
        %6594 = vmatpush1.xpose.msra.mxu0 0.0
        %6595 = vmatprep.subr.mxu0 0.0
        %6596 = vmatpush1.xpose.msra.mxu0 0.0
        %6597 = vmatprep.subr.mxu0 0.0
        %6598 = vmatpush1.xpose.msra.mxu0 0.0
        %6599 = vmatprep.subr.mxu0 0.0
        %6600 = vmatpush1.xpose.msra.mxu0 0.0
        %6601 = vmatprep.subr.mxu0 0.0
        %6602 = vmatpush1.xpose.msra.mxu0 0.0
        %6603 = vmatprep.subr.mxu0 0.0
        %6604 = vmatpush1.xpose.msra.mxu0 0.0
        %6605 = vmatprep.subr.mxu0 0.0
        %6606 = vmatpush1.xpose.msra.mxu0 0.0
        %6607 = vmatprep.subr.mxu0 0.0
        %6608 = vmatpush1.xpose.msra.mxu0 0.0
        %6609 = vmatprep.subr.mxu0 0.0
        %6610 = vmatpush1.xpose.msra.mxu0 0.0
        %6611 = vmatprep.subr.mxu0 0.0
        %6612 = vmatpush1.xpose.msra.mxu0 0.0
        %6613 = vmatprep.subr.mxu0 0.0
        %6614 = vmatpush1.xpose.msra.mxu0 0.0
        %6615 = vmatprep.subr.mxu0 0.0
        %6616 = vmatpush1.xpose.msra.mxu0 0.0
        %6617 = vmatprep.subr.mxu0 0.0
        %6618 = vmatpush1.xpose.msra.mxu0 0.0
        %6619 = vmatprep.subr.mxu0 0.0
        %6620 = vmatpush1.xpose.msra.mxu0 0.0
        %6621 = vmatprep.subr.mxu0 0.0
        %6622 = vmatpush1.xpose.msra.mxu0 0.0
        %6623 = vmatprep.subr.mxu0 0.0
        %6624 = vmatpush1.xpose.msra.mxu0 0.0
        %6625 = vmatprep.subr.mxu0 0.0
        %6626 = vmatpush1.xpose.msra.mxu0 0.0
        %6627 = vmatprep.subr.mxu0 0.0
        %6628 = vmatpush1.xpose.msra.mxu0 0.0
        %6629 = vmatprep.mubr.f32.mxu0 %v3060
        %6630 = vmatmul.mubr.f32.gmra.mrb[0].mxu0 %v3058
        %v6631 = vpop.f32.mrb[0].mxu0
        %v6632 = vadd.f32 %v6562, %v6631
        %v6633 = vpop.f32.mrb[0].mxu0
        %6634 = vdwg.mxu0
        %6635 = vmatprep.subr.mxu0 %v5564
        %6636 = vmatpush1.xpose.msra.mxu0 %v5563
        %6637 = vmatprep.subr.mxu0 %v5628
        %6638 = vmatpush1.xpose.msra.mxu0 %v5627
        %6639 = vmatprep.subr.mxu0 %v5692
        %6640 = vmatpush1.xpose.msra.mxu0 %v5691
        %6641 = vmatprep.subr.mxu0 %v5756
        %6642 = vmatpush1.xpose.msra.mxu0 %v5755
        %6643 = vmatprep.subr.mxu0 0.0
        %6644 = vmatpush1.xpose.msra.mxu0 0.0
        %6645 = vmatprep.subr.mxu0 0.0
        %6646 = vmatpush1.xpose.msra.mxu0 0.0
        %6647 = vmatprep.subr.mxu0 0.0
        %6648 = vmatpush1.xpose.msra.mxu0 0.0
        %6649 = vmatprep.subr.mxu0 0.0
        %6650 = vmatpush1.xpose.msra.mxu0 0.0
        %6651 = vmatprep.subr.mxu0 0.0
        %6652 = vmatpush1.xpose.msra.mxu0 0.0
        %6653 = vmatprep.subr.mxu0 0.0
        %6654 = vmatpush1.xpose.msra.mxu0 0.0
        %6655 = vmatprep.subr.mxu0 0.0
        %6656 = vmatpush1.xpose.msra.mxu0 0.0
        %6657 = vmatprep.subr.mxu0 0.0
        %6658 = vmatpush1.xpose.msra.mxu0 0.0
        %6659 = vmatprep.subr.mxu0 0.0
        %6660 = vmatpush1.xpose.msra.mxu0 0.0
        %6661 = vmatprep.subr.mxu0 0.0
        %6662 = vmatpush1.xpose.msra.mxu0 0.0
        %6663 = vmatprep.subr.mxu0 0.0
        %6664 = vmatpush1.xpose.msra.mxu0 0.0
        %6665 = vmatprep.subr.mxu0 0.0
        %6666 = vmatpush1.xpose.msra.mxu0 0.0
        %6667 = vmatprep.subr.mxu0 0.0
        %6668 = vmatpush1.xpose.msra.mxu0 0.0
        %6669 = vmatprep.subr.mxu0 0.0
        %6670 = vmatpush1.xpose.msra.mxu0 0.0
        %6671 = vmatprep.subr.mxu0 0.0
        %6672 = vmatpush1.xpose.msra.mxu0 0.0
        %6673 = vmatprep.subr.mxu0 0.0
        %6674 = vmatpush1.xpose.msra.mxu0 0.0
        %6675 = vmatprep.subr.mxu0 0.0
        %6676 = vmatpush1.xpose.msra.mxu0 0.0
        %6677 = vmatprep.subr.mxu0 0.0
        %6678 = vmatpush1.xpose.msra.mxu0 0.0
        %6679 = vmatprep.subr.mxu0 0.0
        %6680 = vmatpush1.xpose.msra.mxu0 0.0
        %6681 = vmatprep.subr.mxu0 0.0
        %6682 = vmatpush1.xpose.msra.mxu0 0.0
        %6683 = vmatprep.subr.mxu0 0.0
        %6684 = vmatpush1.xpose.msra.mxu0 0.0
        %6685 = vmatprep.subr.mxu0 0.0
        %6686 = vmatpush1.xpose.msra.mxu0 0.0
        %6687 = vmatprep.subr.mxu0 0.0
        %6688 = vmatpush1.xpose.msra.mxu0 0.0
        %6689 = vmatprep.subr.mxu0 0.0
        %6690 = vmatpush1.xpose.msra.mxu0 0.0
        %6691 = vmatprep.subr.mxu0 0.0
        %6692 = vmatpush1.xpose.msra.mxu0 0.0
        %6693 = vmatprep.subr.mxu0 0.0
        %6694 = vmatpush1.xpose.msra.mxu0 0.0
        %6695 = vmatprep.subr.mxu0 0.0
        %6696 = vmatpush1.xpose.msra.mxu0 0.0
        %6697 = vmatprep.subr.mxu0 0.0
        %6698 = vmatpush1.xpose.msra.mxu0 0.0
        %6699 = vmatprep.mubr.f32.mxu0 %v3076
        %6700 = vmatmul.mubr.f32.gmra.mrb[0].mxu0 %v3068
        %v6701 = vpop.f32.mrb[0].mxu0
        %v6702 = vadd.f32 %v6632, %v6701
        %v6703 = vpop.f32.mrb[0].mxu0
        %6704 = vdwg.mxu0
        %6705 = vmatprep.subr.mxu0 %v5566
        %6706 = vmatpush1.xpose.msra.mxu0 %v5565
        %6707 = vmatprep.subr.mxu0 %v5630
        %6708 = vmatpush1.xpose.msra.mxu0 %v5629
        %6709 = vmatprep.subr.mxu0 %v5694
        %6710 = vmatpush1.xpose.msra.mxu0 %v5693
        %6711 = vmatprep.subr.mxu0 %v5758
        %6712 = vmatpush1.xpose.msra.mxu0 %v5757
        %6713 = vmatprep.subr.mxu0 0.0
        %6714 = vmatpush1.xpose.msra.mxu0 0.0
        %6715 = vmatprep.subr.mxu0 0.0
        %6716 = vmatpush1.xpose.msra.mxu0 0.0
        %6717 = vmatprep.subr.mxu0 0.0
        %6718 = vmatpush1.xpose.msra.mxu0 0.0
        %6719 = vmatprep.subr.mxu0 0.0
        %6720 = vmatpush1.xpose.msra.mxu0 0.0
        %6721 = vmatprep.subr.mxu0 0.0
        %6722 = vmatpush1.xpose.msra.mxu0 0.0
        %6723 = vmatprep.subr.mxu0 0.0
        %6724 = vmatpush1.xpose.msra.mxu0 0.0
        %6725 = vmatprep.subr.mxu0 0.0
        %6726 = vmatpush1.xpose.msra.mxu0 0.0
        %6727 = vmatprep.subr.mxu0 0.0
        %6728 = vmatpush1.xpose.msra.mxu0 0.0
        %6729 = vmatprep.subr.mxu0 0.0
        %6730 = vmatpush1.xpose.msra.mxu0 0.0
        %6731 = vmatprep.subr.mxu0 0.0
        %6732 = vmatpush1.xpose.msra.mxu0 0.0
        %6733 = vmatprep.subr.mxu0 0.0
        %6734 = vmatpush1.xpose.msra.mxu0 0.0
        %6735 = vmatprep.subr.mxu0 0.0
        %6736 = vmatpush1.xpose.msra.mxu0 0.0
        %6737 = vmatprep.subr.mxu0 0.0
        %6738 = vmatpush1.xpose.msra.mxu0 0.0
        %6739 = vmatprep.subr.mxu0 0.0
        %6740 = vmatpush1.xpose.msra.mxu0 0.0
        %6741 = vmatprep.subr.mxu0 0.0
        %6742 = vmatpush1.xpose.msra.mxu0 0.0
        %6743 = vmatprep.subr.mxu0 0.0
        %6744 = vmatpush1.xpose.msra.mxu0 0.0
        %6745 = vmatprep.subr.mxu0 0.0
        %6746 = vmatpush1.xpose.msra.mxu0 0.0
        %6747 = vmatprep.subr.mxu0 0.0
        %6748 = vmatpush1.xpose.msra.mxu0 0.0
        %6749 = vmatprep.subr.mxu0 0.0
        %6750 = vmatpush1.xpose.msra.mxu0 0.0
        %6751 = vmatprep.subr.mxu0 0.0
        %6752 = vmatpush1.xpose.msra.mxu0 0.0
        %6753 = vmatprep.subr.mxu0 0.0
        %6754 = vmatpush1.xpose.msra.mxu0 0.0
        %6755 = vmatprep.subr.mxu0 0.0
        %6756 = vmatpush1.xpose.msra.mxu0 0.0
        %6757 = vmatprep.subr.mxu0 0.0
        %6758 = vmatpush1.xpose.msra.mxu0 0.0
        %6759 = vmatprep.subr.mxu0 0.0
        %6760 = vmatpush1.xpose.msra.mxu0 0.0
        %6761 = vmatprep.subr.mxu0 0.0
        %6762 = vmatpush1.xpose.msra.mxu0 0.0
        %6763 = vmatprep.subr.mxu0 0.0
        %6764 = vmatpush1.xpose.msra.mxu0 0.0
        %6765 = vmatprep.subr.mxu0 0.0
        %6766 = vmatpush1.xpose.msra.mxu0 0.0
        %6767 = vmatprep.subr.mxu0 0.0
        %6768 = vmatpush1.xpose.msra.mxu0 0.0
        %6769 = vmatprep.mubr.f32.mxu0 %v3077
        %6770 = vmatmul.mubr.f32.gmra.mrb[0].mxu0 %v3075
        %v6771 = vpop.f32.mrb[0].mxu0
        %v6772 = vadd.f32 %v6702, %v6771
        %v6773 = vpop.f32.mrb[0].mxu0
        %6774 = vdwg.mxu0
        %6775 = vmatprep.subr.mxu0 %v5568
        %6776 = vmatpush1.xpose.msra.mxu0 %v5567
        %6777 = vmatprep.subr.mxu0 %v5632
        %6778 = vmatpush1.xpose.msra.mxu0 %v5631
        %6779 = vmatprep.subr.mxu0 %v5696
        %6780 = vmatpush1.xpose.msra.mxu0 %v5695
        %6781 = vmatprep.subr.mxu0 %v5760
        %6782 = vmatpush1.xpose.msra.mxu0 %v5759
        %6783 = vmatprep.subr.mxu0 0.0
        %6784 = vmatpush1.xpose.msra.mxu0 0.0
        %6785 = vmatprep.subr.mxu0 0.0
        %6786 = vmatpush1.xpose.msra.mxu0 0.0
        %6787 = vmatprep.subr.mxu0 0.0
        %6788 = vmatpush1.xpose.msra.mxu0 0.0
        %6789 = vmatprep.subr.mxu0 0.0
        %6790 = vmatpush1.xpose.msra.mxu0 0.0
        %6791 = vmatprep.subr.mxu0 0.0
        %6792 = vmatpush1.xpose.msra.mxu0 0.0
        %6793 = vmatprep.subr.mxu0 0.0
        %6794 = vmatpush1.xpose.msra.mxu0 0.0
        %6795 = vmatprep.subr.mxu0 0.0
        %6796 = vmatpush1.xpose.msra.mxu0 0.0
        %6797 = vmatprep.subr.mxu0 0.0
        %6798 = vmatpush1.xpose.msra.mxu0 0.0
        %6799 = vmatprep.subr.mxu0 0.0
        %6800 = vmatpush1.xpose.msra.mxu0 0.0
        %6801 = vmatprep.subr.mxu0 0.0
        %6802 = vmatpush1.xpose.msra.mxu0 0.0
        %6803 = vmatprep.subr.mxu0 0.0
        %6804 = vmatpush1.xpose.msra.mxu0 0.0
        %6805 = vmatprep.subr.mxu0 0.0
        %6806 = vmatpush1.xpose.msra.mxu0 0.0
        %6807 = vmatprep.subr.mxu0 0.0
        %6808 = vmatpush1.xpose.msra.mxu0 0.0
        %6809 = vmatprep.subr.mxu0 0.0
        %6810 = vmatpush1.xpose.msra.mxu0 0.0
        %6811 = vmatprep.subr.mxu0 0.0
        %6812 = vmatpush1.xpose.msra.mxu0 0.0
        %6813 = vmatprep.subr.mxu0 0.0
        %6814 = vmatpush1.xpose.msra.mxu0 0.0
        %6815 = vmatprep.subr.mxu0 0.0
        %6816 = vmatpush1.xpose.msra.mxu0 0.0
        %6817 = vmatprep.subr.mxu0 0.0
        %6818 = vmatpush1.xpose.msra.mxu0 0.0
        %6819 = vmatprep.subr.mxu0 0.0
        %6820 = vmatpush1.xpose.msra.mxu0 0.0
        %6821 = vmatprep.subr.mxu0 0.0
        %6822 = vmatpush1.xpose.msra.mxu0 0.0
        %6823 = vmatprep.subr.mxu0 0.0
        %6824 = vmatpush1.xpose.msra.mxu0 0.0
        %6825 = vmatprep.subr.mxu0 0.0
        %6826 = vmatpush1.xpose.msra.mxu0 0.0
        %6827 = vmatprep.subr.mxu0 0.0
        %6828 = vmatpush1.xpose.msra.mxu0 0.0
        %6829 = vmatprep.subr.mxu0 0.0
        %6830 = vmatpush1.xpose.msra.mxu0 0.0
        %6831 = vmatprep.subr.mxu0 0.0
        %6832 = vmatpush1.xpose.msra.mxu0 0.0
        %6833 = vmatprep.subr.mxu0 0.0
        %6834 = vmatpush1.xpose.msra.mxu0 0.0
        %6835 = vmatprep.subr.mxu0 0.0
        %6836 = vmatpush1.xpose.msra.mxu0 0.0
        %6837 = vmatprep.subr.mxu0 0.0
        %6838 = vmatpush1.xpose.msra.mxu0 0.0
        %6839 = vmatprep.mubr.f32.mxu0 %v3093
        %6840 = vmatmul.mubr.f32.gmra.mrb[0].mxu0 %v3085
        %v6841 = vpop.f32.mrb[0].mxu0
        %v6842 = vadd.f32 %v6772, %v6841
        %v6843 = vpop.f32.mrb[0].mxu0
        %6844 = vdwg.mxu0
        %6845 = vmatprep.subr.mxu0 %v5570
        %6846 = vmatpush1.xpose.msra.mxu0 %v5569
        %6847 = vmatprep.subr.mxu0 %v5634
        %6848 = vmatpush1.xpose.msra.mxu0 %v5633
        %6849 = vmatprep.subr.mxu0 %v5698
        %6850 = vmatpush1.xpose.msra.mxu0 %v5697
        %6851 = vmatprep.subr.mxu0 %v5762
        %6852 = vmatpush1.xpose.msra.mxu0 %v5761
        %6853 = vmatprep.subr.mxu0 0.0
        %6854 = vmatpush1.xpose.msra.mxu0 0.0
        %6855 = vmatprep.subr.mxu0 0.0
        %6856 = vmatpush1.xpose.msra.mxu0 0.0
        %6857 = vmatprep.subr.mxu0 0.0
        %6858 = vmatpush1.xpose.msra.mxu0 0.0
        %6859 = vmatprep.subr.mxu0 0.0
        %6860 = vmatpush1.xpose.msra.mxu0 0.0
        %6861 = vmatprep.subr.mxu0 0.0
        %6862 = vmatpush1.xpose.msra.mxu0 0.0
        %6863 = vmatprep.subr.mxu0 0.0
        %6864 = vmatpush1.xpose.msra.mxu0 0.0
        %6865 = vmatprep.subr.mxu0 0.0
        %6866 = vmatpush1.xpose.msra.mxu0 0.0
        %6867 = vmatprep.subr.mxu0 0.0
        %6868 = vmatpush1.xpose.msra.mxu0 0.0
        %6869 = vmatprep.subr.mxu0 0.0
        %6870 = vmatpush1.xpose.msra.mxu0 0.0
        %6871 = vmatprep.subr.mxu0 0.0
        %6872 = vmatpush1.xpose.msra.mxu0 0.0
        %6873 = vmatprep.subr.mxu0 0.0
        %6874 = vmatpush1.xpose.msra.mxu0 0.0
        %6875 = vmatprep.subr.mxu0 0.0
        %6876 = vmatpush1.xpose.msra.mxu0 0.0
        %6877 = vmatprep.subr.mxu0 0.0
        %6878 = vmatpush1.xpose.msra.mxu0 0.0
        %6879 = vmatprep.subr.mxu0 0.0
        %6880 = vmatpush1.xpose.msra.mxu0 0.0
        %6881 = vmatprep.subr.mxu0 0.0
        %6882 = vmatpush1.xpose.msra.mxu0 0.0
        %6883 = vmatprep.subr.mxu0 0.0
        %6884 = vmatpush1.xpose.msra.mxu0 0.0
        %6885 = vmatprep.subr.mxu0 0.0
        %6886 = vmatpush1.xpose.msra.mxu0 0.0
        %6887 = vmatprep.subr.mxu0 0.0
        %6888 = vmatpush1.xpose.msra.mxu0 0.0
        %6889 = vmatprep.subr.mxu0 0.0
        %6890 = vmatpush1.xpose.msra.mxu0 0.0
        %6891 = vmatprep.subr.mxu0 0.0
        %6892 = vmatpush1.xpose.msra.mxu0 0.0
        %6893 = vmatprep.subr.mxu0 0.0
        %6894 = vmatpush1.xpose.msra.mxu0 0.0
        %6895 = vmatprep.subr.mxu0 0.0
        %6896 = vmatpush1.xpose.msra.mxu0 0.0
        %6897 = vmatprep.subr.mxu0 0.0
        %6898 = vmatpush1.xpose.msra.mxu0 0.0
        %6899 = vmatprep.subr.mxu0 0.0
        %6900 = vmatpush1.xpose.msra.mxu0 0.0
        %6901 = vmatprep.subr.mxu0 0.0
        %6902 = vmatpush1.xpose.msra.mxu0 0.0
        %6903 = vmatprep.subr.mxu0 0.0
        %6904 = vmatpush1.xpose.msra.mxu0 0.0
        %6905 = vmatprep.subr.mxu0 0.0
        %6906 = vmatpush1.xpose.msra.mxu0 0.0
        %6907 = vmatprep.subr.mxu0 0.0
        %6908 = vmatpush1.xpose.msra.mxu0 0.0
        %6909 = vmatprep.mubr.f32.mxu0 %v3094
        %6910 = vmatmul.mubr.f32.gmra.mrb[0].mxu0 %v3092
        %v6911 = vpop.f32.mrb[0].mxu0
        %v6912 = vadd.f32 %v6842, %v6911
        %v6913 = vpop.f32.mrb[0].mxu0
        %6914 = vdwg.mxu0
        %6915 = vmatprep.subr.mxu0 %v5572
        %6916 = vmatpush1.xpose.msra.mxu0 %v5571
        %6917 = vmatprep.subr.mxu0 %v5636
        %6918 = vmatpush1.xpose.msra.mxu0 %v5635
        %6919 = vmatprep.subr.mxu0 %v5700
        %6920 = vmatpush1.xpose.msra.mxu0 %v5699
        %6921 = vmatprep.subr.mxu0 %v5764
        %6922 = vmatpush1.xpose.msra.mxu0 %v5763
        %6923 = vmatprep.subr.mxu0 0.0
        %6924 = vmatpush1.xpose.msra.mxu0 0.0
        %6925 = vmatprep.subr.mxu0 0.0
        %6926 = vmatpush1.xpose.msra.mxu0 0.0
        %6927 = vmatprep.subr.mxu0 0.0
        %6928 = vmatpush1.xpose.msra.mxu0 0.0
        %6929 = vmatprep.subr.mxu0 0.0
        %6930 = vmatpush1.xpose.msra.mxu0 0.0
        %6931 = vmatprep.subr.mxu0 0.0
        %6932 = vmatpush1.xpose.msra.mxu0 0.0
        %6933 = vmatprep.subr.mxu0 0.0
        %6934 = vmatpush1.xpose.msra.mxu0 0.0
        %6935 = vmatprep.subr.mxu0 0.0
        %6936 = vmatpush1.xpose.msra.mxu0 0.0
        %6937 = vmatprep.subr.mxu0 0.0
        %6938 = vmatpush1.xpose.msra.mxu0 0.0
        %6939 = vmatprep.subr.mxu0 0.0
        %6940 = vmatpush1.xpose.msra.mxu0 0.0
        %6941 = vmatprep.subr.mxu0 0.0
        %6942 = vmatpush1.xpose.msra.mxu0 0.0
        %6943 = vmatprep.subr.mxu0 0.0
        %6944 = vmatpush1.xpose.msra.mxu0 0.0
        %6945 = vmatprep.subr.mxu0 0.0
        %6946 = vmatpush1.xpose.msra.mxu0 0.0
        %6947 = vmatprep.subr.mxu0 0.0
        %6948 = vmatpush1.xpose.msra.mxu0 0.0
        %6949 = vmatprep.subr.mxu0 0.0
        %6950 = vmatpush1.xpose.msra.mxu0 0.0
        %6951 = vmatprep.subr.mxu0 0.0
        %6952 = vmatpush1.xpose.msra.mxu0 0.0
        %6953 = vmatprep.subr.mxu0 0.0
        %6954 = vmatpush1.xpose.msra.mxu0 0.0
        %6955 = vmatprep.subr.mxu0 0.0
        %6956 = vmatpush1.xpose.msra.mxu0 0.0
        %6957 = vmatprep.subr.mxu0 0.0
        %6958 = vmatpush1.xpose.msra.mxu0 0.0
        %6959 = vmatprep.subr.mxu0 0.0
        %6960 = vmatpush1.xpose.msra.mxu0 0.0
        %6961 = vmatprep.subr.mxu0 0.0
        %6962 = vmatpush1.xpose.msra.mxu0 0.0
        %6963 = vmatprep.subr.mxu0 0.0
        %6964 = vmatpush1.xpose.msra.mxu0 0.0
        %6965 = vmatprep.subr.mxu0 0.0
        %6966 = vmatpush1.xpose.msra.mxu0 0.0
        %6967 = vmatprep.subr.mxu0 0.0
        %6968 = vmatpush1.xpose.msra.mxu0 0.0
        %6969 = vmatprep.subr.mxu0 0.0
        %6970 = vmatpush1.xpose.msra.mxu0 0.0
        %6971 = vmatprep.subr.mxu0 0.0
        %6972 = vmatpush1.xpose.msra.mxu0 0.0
        %6973 = vmatprep.subr.mxu0 0.0
        %6974 = vmatpush1.xpose.msra.mxu0 0.0
        %6975 = vmatprep.subr.mxu0 0.0
        %6976 = vmatpush1.xpose.msra.mxu0 0.0
        %6977 = vmatprep.subr.mxu0 0.0
        %6978 = vmatpush1.xpose.msra.mxu0 0.0
        %6979 = vmatprep.mubr.f32.mxu0 %v3110
        %6980 = vmatmul.mubr.f32.gmra.mrb[0].mxu0 %v3102
        %v6981 = vpop.f32.mrb[0].mxu0
        %v6982 = vadd.f32 %v6912, %v6981
        %v6983 = vpop.f32.mrb[0].mxu0
        %6984 = vdwg.mxu0
        %6985 = vmatprep.subr.mxu0 %v5574
        %6986 = vmatpush1.xpose.msra.mxu0 %v5573
        %6987 = vmatprep.subr.mxu0 %v5638
        %6988 = vmatpush1.xpose.msra.mxu0 %v5637
        %6989 = vmatprep.subr.mxu0 %v5702
        %6990 = vmatpush1.xpose.msra.mxu0 %v5701
        %6991 = vmatprep.subr.mxu0 %v5766
        %6992 = vmatpush1.xpose.msra.mxu0 %v5765
        %6993 = vmatprep.subr.mxu0 0.0
        %6994 = vmatpush1.xpose.msra.mxu0 0.0
        %6995 = vmatprep.subr.mxu0 0.0
        %6996 = vmatpush1.xpose.msra.mxu0 0.0
        %6997 = vmatprep.subr.mxu0 0.0
        %6998 = vmatpush1.xpose.msra.mxu0 0.0
        %6999 = vmatprep.subr.mxu0 0.0
        %7000 = vmatpush1.xpose.msra.mxu0 0.0
        %7001 = vmatprep.subr.mxu0 0.0
        %7002 = vmatpush1.xpose.msra.mxu0 0.0
        %7003 = vmatprep.subr.mxu0 0.0
        %7004 = vmatpush1.xpose.msra.mxu0 0.0
        %7005 = vmatprep.subr.mxu0 0.0
        %7006 = vmatpush1.xpose.msra.mxu0 0.0
        %7007 = vmatprep.subr.mxu0 0.0
        %7008 = vmatpush1.xpose.msra.mxu0 0.0
        %7009 = vmatprep.subr.mxu0 0.0
        %7010 = vmatpush1.xpose.msra.mxu0 0.0
        %7011 = vmatprep.subr.mxu0 0.0
        %7012 = vmatpush1.xpose.msra.mxu0 0.0
        %7013 = vmatprep.subr.mxu0 0.0
        %7014 = vmatpush1.xpose.msra.mxu0 0.0
        %7015 = vmatprep.subr.mxu0 0.0
        %7016 = vmatpush1.xpose.msra.mxu0 0.0
        %7017 = vmatprep.subr.mxu0 0.0
        %7018 = vmatpush1.xpose.msra.mxu0 0.0
        %7019 = vmatprep.subr.mxu0 0.0
        %7020 = vmatpush1.xpose.msra.mxu0 0.0
        %7021 = vmatprep.subr.mxu0 0.0
        %7022 = vmatpush1.xpose.msra.mxu0 0.0
        %7023 = vmatprep.subr.mxu0 0.0
        %7024 = vmatpush1.xpose.msra.mxu0 0.0
        %7025 = vmatprep.subr.mxu0 0.0
        %7026 = vmatpush1.xpose.msra.mxu0 0.0
        %7027 = vmatprep.subr.mxu0 0.0
        %7028 = vmatpush1.xpose.msra.mxu0 0.0
        %7029 = vmatprep.subr.mxu0 0.0
        %7030 = vmatpush1.xpose.msra.mxu0 0.0
        %7031 = vmatprep.subr.mxu0 0.0
        %7032 = vmatpush1.xpose.msra.mxu0 0.0
        %7033 = vmatprep.subr.mxu0 0.0
        %7034 = vmatpush1.xpose.msra.mxu0 0.0
        %7035 = vmatprep.subr.mxu0 0.0
        %7036 = vmatpush1.xpose.msra.mxu0 0.0
        %7037 = vmatprep.subr.mxu0 0.0
        %7038 = vmatpush1.xpose.msra.mxu0 0.0
        %7039 = vmatprep.subr.mxu0 0.0
        %7040 = vmatpush1.xpose.msra.mxu0 0.0
        %7041 = vmatprep.subr.mxu0 0.0
        %7042 = vmatpush1.xpose.msra.mxu0 0.0
        %7043 = vmatprep.subr.mxu0 0.0
        %7044 = vmatpush1.xpose.msra.mxu0 0.0
        %7045 = vmatprep.subr.mxu0 0.0
        %7046 = vmatpush1.xpose.msra.mxu0 0.0
        %7047 = vmatprep.subr.mxu0 0.0
        %7048 = vmatpush1.xpose.msra.mxu0 0.0
        %7049 = vmatprep.mubr.f32.mxu0 %v3111
        %7050 = vmatmul.mubr.f32.gmra.mrb[0].mxu0 %v3109
        %v7051 = vpop.f32.mrb[0].mxu0
        %v7052 = vadd.f32 %v6982, %v7051
        %v7053 = vpop.f32.mrb[0].mxu0
        %7054 = vdwg.mxu0
        %7055 = vmatprep.subr.mxu0 %v5576
        %7056 = vmatpush1.xpose.msra.mxu0 %v5575
        %7057 = vmatprep.subr.mxu0 %v5640
        %7058 = vmatpush1.xpose.msra.mxu0 %v5639
        %7059 = vmatprep.subr.mxu0 %v5704
        %7060 = vmatpush1.xpose.msra.mxu0 %v5703
        %7061 = vmatprep.subr.mxu0 %v5768
        %7062 = vmatpush1.xpose.msra.mxu0 %v5767
        %7063 = vmatprep.subr.mxu0 0.0
        %7064 = vmatpush1.xpose.msra.mxu0 0.0
        %7065 = vmatprep.subr.mxu0 0.0
        %7066 = vmatpush1.xpose.msra.mxu0 0.0
        %7067 = vmatprep.subr.mxu0 0.0
        %7068 = vmatpush1.xpose.msra.mxu0 0.0
        %7069 = vmatprep.subr.mxu0 0.0
        %7070 = vmatpush1.xpose.msra.mxu0 0.0
        %7071 = vmatprep.subr.mxu0 0.0
        %7072 = vmatpush1.xpose.msra.mxu0 0.0
        %7073 = vmatprep.subr.mxu0 0.0
        %7074 = vmatpush1.xpose.msra.mxu0 0.0
        %7075 = vmatprep.subr.mxu0 0.0
        %7076 = vmatpush1.xpose.msra.mxu0 0.0
        %7077 = vmatprep.subr.mxu0 0.0
        %7078 = vmatpush1.xpose.msra.mxu0 0.0
        %7079 = vmatprep.subr.mxu0 0.0
        %7080 = vmatpush1.xpose.msra.mxu0 0.0
        %7081 = vmatprep.subr.mxu0 0.0
        %7082 = vmatpush1.xpose.msra.mxu0 0.0
        %7083 = vmatprep.subr.mxu0 0.0
        %7084 = vmatpush1.xpose.msra.mxu0 0.0
        %7085 = vmatprep.subr.mxu0 0.0
        %7086 = vmatpush1.xpose.msra.mxu0 0.0
        %7087 = vmatprep.subr.mxu0 0.0
        %7088 = vmatpush1.xpose.msra.mxu0 0.0
        %7089 = vmatprep.subr.mxu0 0.0
        %7090 = vmatpush1.xpose.msra.mxu0 0.0
        %7091 = vmatprep.subr.mxu0 0.0
        %7092 = vmatpush1.xpose.msra.mxu0 0.0
        %7093 = vmatprep.subr.mxu0 0.0
        %7094 = vmatpush1.xpose.msra.mxu0 0.0
        %7095 = vmatprep.subr.mxu0 0.0
        %7096 = vmatpush1.xpose.msra.mxu0 0.0
        %7097 = vmatprep.subr.mxu0 0.0
        %7098 = vmatpush1.xpose.msra.mxu0 0.0
        %7099 = vmatprep.subr.mxu0 0.0
        %7100 = vmatpush1.xpose.msra.mxu0 0.0
        %7101 = vmatprep.subr.mxu0 0.0
        %7102 = vmatpush1.xpose.msra.mxu0 0.0
        %7103 = vmatprep.subr.mxu0 0.0
        %7104 = vmatpush1.xpose.msra.mxu0 0.0
        %7105 = vmatprep.subr.mxu0 0.0
        %7106 = vmatpush1.xpose.msra.mxu0 0.0
        %7107 = vmatprep.subr.mxu0 0.0
        %7108 = vmatpush1.xpose.msra.mxu0 0.0
        %7109 = vmatprep.subr.mxu0 0.0
        %7110 = vmatpush1.xpose.msra.mxu0 0.0
        %7111 = vmatprep.subr.mxu0 0.0
        %7112 = vmatpush1.xpose.msra.mxu0 0.0
        %7113 = vmatprep.subr.mxu0 0.0
        %7114 = vmatpush1.xpose.msra.mxu0 0.0
        %7115 = vmatprep.subr.mxu0 0.0
        %7116 = vmatpush1.xpose.msra.mxu0 0.0
        %7117 = vmatprep.subr.mxu0 0.0
        %7118 = vmatpush1.xpose.msra.mxu0 0.0
        %7119 = vmatprep.mubr.f32.mxu0 %v3127
        %7120 = vmatmul.mubr.f32.gmra.mrb[0].mxu0 %v3119
        %v7121 = vpop.f32.mrb[0].mxu0
        %v7122 = vadd.f32 %v7052, %v7121
        %v7123 = vpop.f32.mrb[0].mxu0
        %7124 = vdwg.mxu0
        %7125 = vmatprep.subr.mxu0 %v5578
        %7126 = vmatpush1.xpose.msra.mxu0 %v5577
        %7127 = vmatprep.subr.mxu0 %v5642
        %7128 = vmatpush1.xpose.msra.mxu0 %v5641
        %7129 = vmatprep.subr.mxu0 %v5706
        %7130 = vmatpush1.xpose.msra.mxu0 %v5705
        %7131 = vmatprep.subr.mxu0 %v5770
        %7132 = vmatpush1.xpose.msra.mxu0 %v5769
        %7133 = vmatprep.subr.mxu0 0.0
        %7134 = vmatpush1.xpose.msra.mxu0 0.0
        %7135 = vmatprep.subr.mxu0 0.0
        %7136 = vmatpush1.xpose.msra.mxu0 0.0
        %7137 = vmatprep.subr.mxu0 0.0
        %7138 = vmatpush1.xpose.msra.mxu0 0.0
        %7139 = vmatprep.subr.mxu0 0.0
        %7140 = vmatpush1.xpose.msra.mxu0 0.0
        %7141 = vmatprep.subr.mxu0 0.0
        %7142 = vmatpush1.xpose.msra.mxu0 0.0
        %7143 = vmatprep.subr.mxu0 0.0
        %7144 = vmatpush1.xpose.msra.mxu0 0.0
        %7145 = vmatprep.subr.mxu0 0.0
        %7146 = vmatpush1.xpose.msra.mxu0 0.0
        %7147 = vmatprep.subr.mxu0 0.0
        %7148 = vmatpush1.xpose.msra.mxu0 0.0
        %7149 = vmatprep.subr.mxu0 0.0
        %7150 = vmatpush1.xpose.msra.mxu0 0.0
        %7151 = vmatprep.subr.mxu0 0.0
        %7152 = vmatpush1.xpose.msra.mxu0 0.0
        %7153 = vmatprep.subr.mxu0 0.0
        %7154 = vmatpush1.xpose.msra.mxu0 0.0
        %7155 = vmatprep.subr.mxu0 0.0
        %7156 = vmatpush1.xpose.msra.mxu0 0.0
        %7157 = vmatprep.subr.mxu0 0.0
        %7158 = vmatpush1.xpose.msra.mxu0 0.0
        %7159 = vmatprep.subr.mxu0 0.0
        %7160 = vmatpush1.xpose.msra.mxu0 0.0
        %7161 = vmatprep.subr.mxu0 0.0
        %7162 = vmatpush1.xpose.msra.mxu0 0.0
        %7163 = vmatprep.subr.mxu0 0.0
        %7164 = vmatpush1.xpose.msra.mxu0 0.0
        %7165 = vmatprep.subr.mxu0 0.0
        %7166 = vmatpush1.xpose.msra.mxu0 0.0
        %7167 = vmatprep.subr.mxu0 0.0
        %7168 = vmatpush1.xpose.msra.mxu0 0.0
        %7169 = vmatprep.subr.mxu0 0.0
        %7170 = vmatpush1.xpose.msra.mxu0 0.0
        %7171 = vmatprep.subr.mxu0 0.0
        %7172 = vmatpush1.xpose.msra.mxu0 0.0
        %7173 = vmatprep.subr.mxu0 0.0
        %7174 = vmatpush1.xpose.msra.mxu0 0.0
        %7175 = vmatprep.subr.mxu0 0.0
        %7176 = vmatpush1.xpose.msra.mxu0 0.0
        %7177 = vmatprep.subr.mxu0 0.0
        %7178 = vmatpush1.xpose.msra.mxu0 0.0
        %7179 = vmatprep.subr.mxu0 0.0
        %7180 = vmatpush1.xpose.msra.mxu0 0.0
        %7181 = vmatprep.subr.mxu0 0.0
        %7182 = vmatpush1.xpose.msra.mxu0 0.0
        %7183 = vmatprep.subr.mxu0 0.0
        %7184 = vmatpush1.xpose.msra.mxu0 0.0
        %7185 = vmatprep.subr.mxu0 0.0
        %7186 = vmatpush1.xpose.msra.mxu0 0.0
        %7187 = vmatprep.subr.mxu0 0.0
        %7188 = vmatpush1.xpose.msra.mxu0 0.0
        %7189 = vmatprep.mubr.f32.mxu0 %v3128
        %7190 = vmatmul.mubr.f32.gmra.mrb[0].mxu0 %v3126
        %v7191 = vpop.f32.mrb[0].mxu0
        %v7192 = vadd.f32 %v7122, %v7191
        %v7193 = vpop.f32.mrb[0].mxu0
        %7194 = vdwg.mxu0
        %7195 = vmatprep.subr.mxu0 %v5580
        %7196 = vmatpush1.xpose.msra.mxu0 %v5579
        %7197 = vmatprep.subr.mxu0 %v5644
        %7198 = vmatpush1.xpose.msra.mxu0 %v5643
        %7199 = vmatprep.subr.mxu0 %v5708
        %7200 = vmatpush1.xpose.msra.mxu0 %v5707
        %7201 = vmatprep.subr.mxu0 %v5772
        %7202 = vmatpush1.xpose.msra.mxu0 %v5771
        %7203 = vmatprep.subr.mxu0 0.0
        %7204 = vmatpush1.xpose.msra.mxu0 0.0
        %7205 = vmatprep.subr.mxu0 0.0
        %7206 = vmatpush1.xpose.msra.mxu0 0.0
        %7207 = vmatprep.subr.mxu0 0.0
        %7208 = vmatpush1.xpose.msra.mxu0 0.0
        %7209 = vmatprep.subr.mxu0 0.0
        %7210 = vmatpush1.xpose.msra.mxu0 0.0
        %7211 = vmatprep.subr.mxu0 0.0
        %7212 = vmatpush1.xpose.msra.mxu0 0.0
        %7213 = vmatprep.subr.mxu0 0.0
        %7214 = vmatpush1.xpose.msra.mxu0 0.0
        %7215 = vmatprep.subr.mxu0 0.0
        %7216 = vmatpush1.xpose.msra.mxu0 0.0
        %7217 = vmatprep.subr.mxu0 0.0
        %7218 = vmatpush1.xpose.msra.mxu0 0.0
        %7219 = vmatprep.subr.mxu0 0.0
        %7220 = vmatpush1.xpose.msra.mxu0 0.0
        %7221 = vmatprep.subr.mxu0 0.0
        %7222 = vmatpush1.xpose.msra.mxu0 0.0
        %7223 = vmatprep.subr.mxu0 0.0
        %7224 = vmatpush1.xpose.msra.mxu0 0.0
        %7225 = vmatprep.subr.mxu0 0.0
        %7226 = vmatpush1.xpose.msra.mxu0 0.0
        %7227 = vmatprep.subr.mxu0 0.0
        %7228 = vmatpush1.xpose.msra.mxu0 0.0
        %7229 = vmatprep.subr.mxu0 0.0
        %7230 = vmatpush1.xpose.msra.mxu0 0.0
        %7231 = vmatprep.subr.mxu0 0.0
        %7232 = vmatpush1.xpose.msra.mxu0 0.0
        %7233 = vmatprep.subr.mxu0 0.0
        %7234 = vmatpush1.xpose.msra.mxu0 0.0
        %7235 = vmatprep.subr.mxu0 0.0
        %7236 = vmatpush1.xpose.msra.mxu0 0.0
        %7237 = vmatprep.subr.mxu0 0.0
        %7238 = vmatpush1.xpose.msra.mxu0 0.0
        %7239 = vmatprep.subr.mxu0 0.0
        %7240 = vmatpush1.xpose.msra.mxu0 0.0
        %7241 = vmatprep.subr.mxu0 0.0
        %7242 = vmatpush1.xpose.msra.mxu0 0.0
        %7243 = vmatprep.subr.mxu0 0.0
        %7244 = vmatpush1.xpose.msra.mxu0 0.0
        %7245 = vmatprep.subr.mxu0 0.0
        %7246 = vmatpush1.xpose.msra.mxu0 0.0
        %7247 = vmatprep.subr.mxu0 0.0
        %7248 = vmatpush1.xpose.msra.mxu0 0.0
        %7249 = vmatprep.subr.mxu0 0.0
        %7250 = vmatpush1.xpose.msra.mxu0 0.0
        %7251 = vmatprep.subr.mxu0 0.0
        %7252 = vmatpush1.xpose.msra.mxu0 0.0
        %7253 = vmatprep.subr.mxu0 0.0
        %7254 = vmatpush1.xpose.msra.mxu0 0.0
        %7255 = vmatprep.subr.mxu0 0.0
        %7256 = vmatpush1.xpose.msra.mxu0 0.0
        %7257 = vmatprep.subr.mxu0 0.0
        %7258 = vmatpush1.xpose.msra.mxu0 0.0
        %7259 = vmatprep.mubr.f32.mxu0 %v3144
        %7260 = vmatmul.mubr.f32.gmra.mrb[0].mxu0 %v3136
        %v7261 = vpop.f32.mrb[0].mxu0
        %v7262 = vadd.f32 %v7192, %v7261
        %v7263 = vpop.f32.mrb[0].mxu0
        %7264 = vdwg.mxu0
        %7265 = vmatprep.subr.mxu0 %v5582
        %7266 = vmatpush1.xpose.msra.mxu0 %v5581
        %7267 = vmatprep.subr.mxu0 %v5646
        %7268 = vmatpush1.xpose.msra.mxu0 %v5645
        %7269 = vmatprep.subr.mxu0 %v5710
        %7270 = vmatpush1.xpose.msra.mxu0 %v5709
        %7271 = vmatprep.subr.mxu0 %v5774
        %7272 = vmatpush1.xpose.msra.mxu0 %v5773
        %7273 = vmatprep.subr.mxu0 0.0
        %7274 = vmatpush1.xpose.msra.mxu0 0.0
        %7275 = vmatprep.subr.mxu0 0.0
        %7276 = vmatpush1.xpose.msra.mxu0 0.0
        %7277 = vmatprep.subr.mxu0 0.0
        %7278 = vmatpush1.xpose.msra.mxu0 0.0
        %7279 = vmatprep.subr.mxu0 0.0
        %7280 = vmatpush1.xpose.msra.mxu0 0.0
        %7281 = vmatprep.subr.mxu0 0.0
        %7282 = vmatpush1.xpose.msra.mxu0 0.0
        %7283 = vmatprep.subr.mxu0 0.0
        %7284 = vmatpush1.xpose.msra.mxu0 0.0
        %7285 = vmatprep.subr.mxu0 0.0
        %7286 = vmatpush1.xpose.msra.mxu0 0.0
        %7287 = vmatprep.subr.mxu0 0.0
        %7288 = vmatpush1.xpose.msra.mxu0 0.0
        %7289 = vmatprep.subr.mxu0 0.0
        %7290 = vmatpush1.xpose.msra.mxu0 0.0
        %7291 = vmatprep.subr.mxu0 0.0
        %7292 = vmatpush1.xpose.msra.mxu0 0.0
        %7293 = vmatprep.subr.mxu0 0.0
        %7294 = vmatpush1.xpose.msra.mxu0 0.0
        %7295 = vmatprep.subr.mxu0 0.0
        %7296 = vmatpush1.xpose.msra.mxu0 0.0
        %7297 = vmatprep.subr.mxu0 0.0
        %7298 = vmatpush1.xpose.msra.mxu0 0.0
        %7299 = vmatprep.subr.mxu0 0.0
        %7300 = vmatpush1.xpose.msra.mxu0 0.0
        %7301 = vmatprep.subr.mxu0 0.0
        %7302 = vmatpush1.xpose.msra.mxu0 0.0
        %7303 = vmatprep.subr.mxu0 0.0
        %7304 = vmatpush1.xpose.msra.mxu0 0.0
        %7305 = vmatprep.subr.mxu0 0.0
        %7306 = vmatpush1.xpose.msra.mxu0 0.0
        %7307 = vmatprep.subr.mxu0 0.0
        %7308 = vmatpush1.xpose.msra.mxu0 0.0
        %7309 = vmatprep.subr.mxu0 0.0
        %7310 = vmatpush1.xpose.msra.mxu0 0.0
        %7311 = vmatprep.subr.mxu0 0.0
        %7312 = vmatpush1.xpose.msra.mxu0 0.0
        %7313 = vmatprep.subr.mxu0 0.0
        %7314 = vmatpush1.xpose.msra.mxu0 0.0
        %7315 = vmatprep.subr.mxu0 0.0
        %7316 = vmatpush1.xpose.msra.mxu0 0.0
        %7317 = vmatprep.subr.mxu0 0.0
        %7318 = vmatpush1.xpose.msra.mxu0 0.0
        %7319 = vmatprep.subr.mxu0 0.0
        %7320 = vmatpush1.xpose.msra.mxu0 0.0
        %7321 = vmatprep.subr.mxu0 0.0
        %7322 = vmatpush1.xpose.msra.mxu0 0.0
        %7323 = vmatprep.subr.mxu0 0.0
        %7324 = vmatpush1.xpose.msra.mxu0 0.0
        %7325 = vmatprep.subr.mxu0 0.0
        %7326 = vmatpush1.xpose.msra.mxu0 0.0
        %7327 = vmatprep.subr.mxu0 0.0
        %7328 = vmatpush1.xpose.msra.mxu0 0.0
        %7329 = vmatprep.mubr.f32.mxu0 %v3145
        %7330 = vmatmul.mubr.f32.gmra.mrb[0].mxu0 %v3143
        %v7331 = vpop.f32.mrb[0].mxu0
        %v7332 = vadd.f32 %v7262, %v7331
        %v7333 = vpop.f32.mrb[0].mxu0
        %7334 = vdwg.mxu0
        %7335 = vmatprep.subr.mxu0 %v5584
        %7336 = vmatpush1.xpose.msra.mxu0 %v5583
        %7337 = vmatprep.subr.mxu0 %v5648
        %7338 = vmatpush1.xpose.msra.mxu0 %v5647
        %7339 = vmatprep.subr.mxu0 %v5712
        %7340 = vmatpush1.xpose.msra.mxu0 %v5711
        %7341 = vmatprep.subr.mxu0 %v5776
        %7342 = vmatpush1.xpose.msra.mxu0 %v5775
        %7343 = vmatprep.subr.mxu0 0.0
        %7344 = vmatpush1.xpose.msra.mxu0 0.0
        %7345 = vmatprep.subr.mxu0 0.0
        %7346 = vmatpush1.xpose.msra.mxu0 0.0
        %7347 = vmatprep.subr.mxu0 0.0
        %7348 = vmatpush1.xpose.msra.mxu0 0.0
        %7349 = vmatprep.subr.mxu0 0.0
        %7350 = vmatpush1.xpose.msra.mxu0 0.0
        %7351 = vmatprep.subr.mxu0 0.0
        %7352 = vmatpush1.xpose.msra.mxu0 0.0
        %7353 = vmatprep.subr.mxu0 0.0
        %7354 = vmatpush1.xpose.msra.mxu0 0.0
        %7355 = vmatprep.subr.mxu0 0.0
        %7356 = vmatpush1.xpose.msra.mxu0 0.0
        %7357 = vmatprep.subr.mxu0 0.0
        %7358 = vmatpush1.xpose.msra.mxu0 0.0
        %7359 = vmatprep.subr.mxu0 0.0
        %7360 = vmatpush1.xpose.msra.mxu0 0.0
        %7361 = vmatprep.subr.mxu0 0.0
        %7362 = vmatpush1.xpose.msra.mxu0 0.0
        %7363 = vmatprep.subr.mxu0 0.0
        %7364 = vmatpush1.xpose.msra.mxu0 0.0
        %7365 = vmatprep.subr.mxu0 0.0
        %7366 = vmatpush1.xpose.msra.mxu0 0.0
        %7367 = vmatprep.subr.mxu0 0.0
        %7368 = vmatpush1.xpose.msra.mxu0 0.0
        %7369 = vmatprep.subr.mxu0 0.0
        %7370 = vmatpush1.xpose.msra.mxu0 0.0
        %7371 = vmatprep.subr.mxu0 0.0
        %7372 = vmatpush1.xpose.msra.mxu0 0.0
        %7373 = vmatprep.subr.mxu0 0.0
        %7374 = vmatpush1.xpose.msra.mxu0 0.0
        %7375 = vmatprep.subr.mxu0 0.0
        %7376 = vmatpush1.xpose.msra.mxu0 0.0
        %7377 = vmatprep.subr.mxu0 0.0
        %7378 = vmatpush1.xpose.msra.mxu0 0.0
        %7379 = vmatprep.subr.mxu0 0.0
        %7380 = vmatpush1.xpose.msra.mxu0 0.0
        %7381 = vmatprep.subr.mxu0 0.0
        %7382 = vmatpush1.xpose.msra.mxu0 0.0
        %7383 = vmatprep.subr.mxu0 0.0
        %7384 = vmatpush1.xpose.msra.mxu0 0.0
        %7385 = vmatprep.subr.mxu0 0.0
        %7386 = vmatpush1.xpose.msra.mxu0 0.0
        %7387 = vmatprep.subr.mxu0 0.0
        %7388 = vmatpush1.xpose.msra.mxu0 0.0
        %7389 = vmatprep.subr.mxu0 0.0
        %7390 = vmatpush1.xpose.msra.mxu0 0.0
        %7391 = vmatprep.subr.mxu0 0.0
        %7392 = vmatpush1.xpose.msra.mxu0 0.0
        %7393 = vmatprep.subr.mxu0 0.0
        %7394 = vmatpush1.xpose.msra.mxu0 0.0
        %7395 = vmatprep.subr.mxu0 0.0
        %7396 = vmatpush1.xpose.msra.mxu0 0.0
        %7397 = vmatprep.subr.mxu0 0.0
        %7398 = vmatpush1.xpose.msra.mxu0 0.0
        %7399 = vmatprep.mubr.f32.mxu0 %v3161
        %7400 = vmatmul.mubr.f32.gmra.mrb[0].mxu0 %v3153
        %v7401 = vpop.f32.mrb[0].mxu0
        %v7402 = vadd.f32 %v7332, %v7401
        %v7403 = vpop.f32.mrb[0].mxu0
        %7404 = vdwg.mxu0
        %7405 = vmatprep.subr.mxu0 %v5586
        %7406 = vmatpush1.xpose.msra.mxu0 %v5585
        %7407 = vmatprep.subr.mxu0 %v5650
        %7408 = vmatpush1.xpose.msra.mxu0 %v5649
        %7409 = vmatprep.subr.mxu0 %v5714
        %7410 = vmatpush1.xpose.msra.mxu0 %v5713
        %7411 = vmatprep.subr.mxu0 %v5778
        %7412 = vmatpush1.xpose.msra.mxu0 %v5777
        %7413 = vmatprep.subr.mxu0 0.0
        %7414 = vmatpush1.xpose.msra.mxu0 0.0
        %7415 = vmatprep.subr.mxu0 0.0
        %7416 = vmatpush1.xpose.msra.mxu0 0.0
        %7417 = vmatprep.subr.mxu0 0.0
        %7418 = vmatpush1.xpose.msra.mxu0 0.0
        %7419 = vmatprep.subr.mxu0 0.0
        %7420 = vmatpush1.xpose.msra.mxu0 0.0
        %7421 = vmatprep.subr.mxu0 0.0
        %7422 = vmatpush1.xpose.msra.mxu0 0.0
        %7423 = vmatprep.subr.mxu0 0.0
        %7424 = vmatpush1.xpose.msra.mxu0 0.0
        %7425 = vmatprep.subr.mxu0 0.0
        %7426 = vmatpush1.xpose.msra.mxu0 0.0
        %7427 = vmatprep.subr.mxu0 0.0
        %7428 = vmatpush1.xpose.msra.mxu0 0.0
        %7429 = vmatprep.subr.mxu0 0.0
        %7430 = vmatpush1.xpose.msra.mxu0 0.0
        %7431 = vmatprep.subr.mxu0 0.0
        %7432 = vmatpush1.xpose.msra.mxu0 0.0
        %7433 = vmatprep.subr.mxu0 0.0
        %7434 = vmatpush1.xpose.msra.mxu0 0.0
        %7435 = vmatprep.subr.mxu0 0.0
        %7436 = vmatpush1.xpose.msra.mxu0 0.0
        %7437 = vmatprep.subr.mxu0 0.0
        %7438 = vmatpush1.xpose.msra.mxu0 0.0
        %7439 = vmatprep.subr.mxu0 0.0
        %7440 = vmatpush1.xpose.msra.mxu0 0.0
        %7441 = vmatprep.subr.mxu0 0.0
        %7442 = vmatpush1.xpose.msra.mxu0 0.0
        %7443 = vmatprep.subr.mxu0 0.0
        %7444 = vmatpush1.xpose.msra.mxu0 0.0
        %7445 = vmatprep.subr.mxu0 0.0
        %7446 = vmatpush1.xpose.msra.mxu0 0.0
        %7447 = vmatprep.subr.mxu0 0.0
        %7448 = vmatpush1.xpose.msra.mxu0 0.0
        %7449 = vmatprep.subr.mxu0 0.0
        %7450 = vmatpush1.xpose.msra.mxu0 0.0
        %7451 = vmatprep.subr.mxu0 0.0
        %7452 = vmatpush1.xpose.msra.mxu0 0.0
        %7453 = vmatprep.subr.mxu0 0.0
        %7454 = vmatpush1.xpose.msra.mxu0 0.0
        %7455 = vmatprep.subr.mxu0 0.0
        %7456 = vmatpush1.xpose.msra.mxu0 0.0
        %7457 = vmatprep.subr.mxu0 0.0
        %7458 = vmatpush1.xpose.msra.mxu0 0.0
        %7459 = vmatprep.subr.mxu0 0.0
        %7460 = vmatpush1.xpose.msra.mxu0 0.0
        %7461 = vmatprep.subr.mxu0 0.0
        %7462 = vmatpush1.xpose.msra.mxu0 0.0
        %7463 = vmatprep.subr.mxu0 0.0
        %7464 = vmatpush1.xpose.msra.mxu0 0.0
        %7465 = vmatprep.subr.mxu0 0.0
        %7466 = vmatpush1.xpose.msra.mxu0 0.0
        %7467 = vmatprep.subr.mxu0 0.0
        %7468 = vmatpush1.xpose.msra.mxu0 0.0
        %7469 = vmatprep.mubr.f32.mxu0 %v3162
        %7470 = vmatmul.mubr.f32.gmra.mrb[0].mxu0 %v3160
        %v7471 = vpop.f32.mrb[0].mxu0
        %v7472 = vadd.f32 %v7402, %v7471
        %v7473 = vpop.f32.mrb[0].mxu0
        %7474 = vdwg.mxu0
        %7475 = vmatprep.subr.mxu0 %v5588
        %7476 = vmatpush1.xpose.msra.mxu0 %v5587
        %7477 = vmatprep.subr.mxu0 %v5652
        %7478 = vmatpush1.xpose.msra.mxu0 %v5651
        %7479 = vmatprep.subr.mxu0 %v5716
        %7480 = vmatpush1.xpose.msra.mxu0 %v5715
        %7481 = vmatprep.subr.mxu0 %v5780
        %7482 = vmatpush1.xpose.msra.mxu0 %v5779
        %7483 = vmatprep.subr.mxu0 0.0
        %7484 = vmatpush1.xpose.msra.mxu0 0.0
        %7485 = vmatprep.subr.mxu0 0.0
        %7486 = vmatpush1.xpose.msra.mxu0 0.0
        %7487 = vmatprep.subr.mxu0 0.0
        %7488 = vmatpush1.xpose.msra.mxu0 0.0
        %7489 = vmatprep.subr.mxu0 0.0
        %7490 = vmatpush1.xpose.msra.mxu0 0.0
        %7491 = vmatprep.subr.mxu0 0.0
        %7492 = vmatpush1.xpose.msra.mxu0 0.0
        %7493 = vmatprep.subr.mxu0 0.0
        %7494 = vmatpush1.xpose.msra.mxu0 0.0
        %7495 = vmatprep.subr.mxu0 0.0
        %7496 = vmatpush1.xpose.msra.mxu0 0.0
        %7497 = vmatprep.subr.mxu0 0.0
        %7498 = vmatpush1.xpose.msra.mxu0 0.0
        %7499 = vmatprep.subr.mxu0 0.0
        %7500 = vmatpush1.xpose.msra.mxu0 0.0
        %7501 = vmatprep.subr.mxu0 0.0
        %7502 = vmatpush1.xpose.msra.mxu0 0.0
        %7503 = vmatprep.subr.mxu0 0.0
        %7504 = vmatpush1.xpose.msra.mxu0 0.0
        %7505 = vmatprep.subr.mxu0 0.0
        %7506 = vmatpush1.xpose.msra.mxu0 0.0
        %7507 = vmatprep.subr.mxu0 0.0
        %7508 = vmatpush1.xpose.msra.mxu0 0.0
        %7509 = vmatprep.subr.mxu0 0.0
        %7510 = vmatpush1.xpose.msra.mxu0 0.0
        %7511 = vmatprep.subr.mxu0 0.0
        %7512 = vmatpush1.xpose.msra.mxu0 0.0
        %7513 = vmatprep.subr.mxu0 0.0
        %7514 = vmatpush1.xpose.msra.mxu0 0.0
        %7515 = vmatprep.subr.mxu0 0.0
        %7516 = vmatpush1.xpose.msra.mxu0 0.0
        %7517 = vmatprep.subr.mxu0 0.0
        %7518 = vmatpush1.xpose.msra.mxu0 0.0
        %7519 = vmatprep.subr.mxu0 0.0
        %7520 = vmatpush1.xpose.msra.mxu0 0.0
        %7521 = vmatprep.subr.mxu0 0.0
        %7522 = vmatpush1.xpose.msra.mxu0 0.0
        %7523 = vmatprep.subr.mxu0 0.0
        %7524 = vmatpush1.xpose.msra.mxu0 0.0
        %7525 = vmatprep.subr.mxu0 0.0
        %7526 = vmatpush1.xpose.msra.mxu0 0.0
        %7527 = vmatprep.subr.mxu0 0.0
        %7528 = vmatpush1.xpose.msra.mxu0 0.0
        %7529 = vmatprep.subr.mxu0 0.0
        %7530 = vmatpush1.xpose.msra.mxu0 0.0
        %7531 = vmatprep.subr.mxu0 0.0
        %7532 = vmatpush1.xpose.msra.mxu0 0.0
        %7533 = vmatprep.subr.mxu0 0.0
        %7534 = vmatpush1.xpose.msra.mxu0 0.0
        %7535 = vmatprep.subr.mxu0 0.0
        %7536 = vmatpush1.xpose.msra.mxu0 0.0
        %7537 = vmatprep.subr.mxu0 0.0
        %7538 = vmatpush1.xpose.msra.mxu0 0.0
        %7539 = vmatprep.mubr.f32.mxu0 %v3178
        %7540 = vmatmul.mubr.f32.gmra.mrb[0].mxu0 %v3170
        %v7541 = vpop.f32.mrb[0].mxu0
        %v7542 = vadd.f32 %v7472, %v7541
        %v7543 = vpop.f32.mrb[0].mxu0
        %7544 = vdwg.mxu0
        %7545 = vmatprep.subr.mxu0 %v5590
        %7546 = vmatpush1.xpose.msra.mxu0 %v5589
        %7547 = vmatprep.subr.mxu0 %v5654
        %7548 = vmatpush1.xpose.msra.mxu0 %v5653
        %7549 = vmatprep.subr.mxu0 %v5718
        %7550 = vmatpush1.xpose.msra.mxu0 %v5717
        %7551 = vmatprep.subr.mxu0 %v5782
        %7552 = vmatpush1.xpose.msra.mxu0 %v5781
        %7553 = vmatprep.subr.mxu0 0.0
        %7554 = vmatpush1.xpose.msra.mxu0 0.0
        %7555 = vmatprep.subr.mxu0 0.0
        %7556 = vmatpush1.xpose.msra.mxu0 0.0
        %7557 = vmatprep.subr.mxu0 0.0
        %7558 = vmatpush1.xpose.msra.mxu0 0.0
        %7559 = vmatprep.subr.mxu0 0.0
        %7560 = vmatpush1.xpose.msra.mxu0 0.0
        %7561 = vmatprep.subr.mxu0 0.0
        %7562 = vmatpush1.xpose.msra.mxu0 0.0
        %7563 = vmatprep.subr.mxu0 0.0
        %7564 = vmatpush1.xpose.msra.mxu0 0.0
        %7565 = vmatprep.subr.mxu0 0.0
        %7566 = vmatpush1.xpose.msra.mxu0 0.0
        %7567 = vmatprep.subr.mxu0 0.0
        %7568 = vmatpush1.xpose.msra.mxu0 0.0
        %7569 = vmatprep.subr.mxu0 0.0
        %7570 = vmatpush1.xpose.msra.mxu0 0.0
        %7571 = vmatprep.subr.mxu0 0.0
        %7572 = vmatpush1.xpose.msra.mxu0 0.0
        %7573 = vmatprep.subr.mxu0 0.0
        %7574 = vmatpush1.xpose.msra.mxu0 0.0
        %7575 = vmatprep.subr.mxu0 0.0
        %7576 = vmatpush1.xpose.msra.mxu0 0.0
        %7577 = vmatprep.subr.mxu0 0.0
        %7578 = vmatpush1.xpose.msra.mxu0 0.0
        %7579 = vmatprep.subr.mxu0 0.0
        %7580 = vmatpush1.xpose.msra.mxu0 0.0
        %7581 = vmatprep.subr.mxu0 0.0
        %7582 = vmatpush1.xpose.msra.mxu0 0.0
        %7583 = vmatprep.subr.mxu0 0.0
        %7584 = vmatpush1.xpose.msra.mxu0 0.0
        %7585 = vmatprep.subr.mxu0 0.0
        %7586 = vmatpush1.xpose.msra.mxu0 0.0
        %7587 = vmatprep.subr.mxu0 0.0
        %7588 = vmatpush1.xpose.msra.mxu0 0.0
        %7589 = vmatprep.subr.mxu0 0.0
        %7590 = vmatpush1.xpose.msra.mxu0 0.0
        %7591 = vmatprep.subr.mxu0 0.0
        %7592 = vmatpush1.xpose.msra.mxu0 0.0
        %7593 = vmatprep.subr.mxu0 0.0
        %7594 = vmatpush1.xpose.msra.mxu0 0.0
        %7595 = vmatprep.subr.mxu0 0.0
        %7596 = vmatpush1.xpose.msra.mxu0 0.0
        %7597 = vmatprep.subr.mxu0 0.0
        %7598 = vmatpush1.xpose.msra.mxu0 0.0
        %7599 = vmatprep.subr.mxu0 0.0
        %7600 = vmatpush1.xpose.msra.mxu0 0.0
        %7601 = vmatprep.subr.mxu0 0.0
        %7602 = vmatpush1.xpose.msra.mxu0 0.0
        %7603 = vmatprep.subr.mxu0 0.0
        %7604 = vmatpush1.xpose.msra.mxu0 0.0
        %7605 = vmatprep.subr.mxu0 0.0
        %7606 = vmatpush1.xpose.msra.mxu0 0.0
        %7607 = vmatprep.subr.mxu0 0.0
        %7608 = vmatpush1.xpose.msra.mxu0 0.0
        %7609 = vmatprep.mubr.f32.mxu0 %v3179
        %7610 = vmatmul.mubr.f32.gmra.mrb[0].mxu0 %v3177
        %v7611 = vpop.f32.mrb[0].mxu0
        %v7612 = vadd.f32 %v7542, %v7611
        %v7613 = vpop.f32.mrb[0].mxu0
        %7614 = vdwg.mxu0
        %7615 = vmatprep.subr.mxu0 %v5592
        %7616 = vmatpush1.xpose.msra.mxu0 %v5591
        %7617 = vmatprep.subr.mxu0 %v5656
        %7618 = vmatpush1.xpose.msra.mxu0 %v5655
        %7619 = vmatprep.subr.mxu0 %v5720
        %7620 = vmatpush1.xpose.msra.mxu0 %v5719
        %7621 = vmatprep.subr.mxu0 %v5784
        %7622 = vmatpush1.xpose.msra.mxu0 %v5783
        %7623 = vmatprep.subr.mxu0 0.0
        %7624 = vmatpush1.xpose.msra.mxu0 0.0
        %7625 = vmatprep.subr.mxu0 0.0
        %7626 = vmatpush1.xpose.msra.mxu0 0.0
        %7627 = vmatprep.subr.mxu0 0.0
        %7628 = vmatpush1.xpose.msra.mxu0 0.0
        %7629 = vmatprep.subr.mxu0 0.0
        %7630 = vmatpush1.xpose.msra.mxu0 0.0
        %7631 = vmatprep.subr.mxu0 0.0
        %7632 = vmatpush1.xpose.msra.mxu0 0.0
        %7633 = vmatprep.subr.mxu0 0.0
        %7634 = vmatpush1.xpose.msra.mxu0 0.0
        %7635 = vmatprep.subr.mxu0 0.0
        %7636 = vmatpush1.xpose.msra.mxu0 0.0
        %7637 = vmatprep.subr.mxu0 0.0
        %7638 = vmatpush1.xpose.msra.mxu0 0.0
        %7639 = vmatprep.subr.mxu0 0.0
        %7640 = vmatpush1.xpose.msra.mxu0 0.0
        %7641 = vmatprep.subr.mxu0 0.0
        %7642 = vmatpush1.xpose.msra.mxu0 0.0
        %7643 = vmatprep.subr.mxu0 0.0
        %7644 = vmatpush1.xpose.msra.mxu0 0.0
        %7645 = vmatprep.subr.mxu0 0.0
        %7646 = vmatpush1.xpose.msra.mxu0 0.0
        %7647 = vmatprep.subr.mxu0 0.0
        %7648 = vmatpush1.xpose.msra.mxu0 0.0
        %7649 = vmatprep.subr.mxu0 0.0
        %7650 = vmatpush1.xpose.msra.mxu0 0.0
        %7651 = vmatprep.subr.mxu0 0.0
        %7652 = vmatpush1.xpose.msra.mxu0 0.0
        %7653 = vmatprep.subr.mxu0 0.0
        %7654 = vmatpush1.xpose.msra.mxu0 0.0
        %7655 = vmatprep.subr.mxu0 0.0
        %7656 = vmatpush1.xpose.msra.mxu0 0.0
        %7657 = vmatprep.subr.mxu0 0.0
        %7658 = vmatpush1.xpose.msra.mxu0 0.0
        %7659 = vmatprep.subr.mxu0 0.0
        %7660 = vmatpush1.xpose.msra.mxu0 0.0
        %7661 = vmatprep.subr.mxu0 0.0
        %7662 = vmatpush1.xpose.msra.mxu0 0.0
        %7663 = vmatprep.subr.mxu0 0.0
        %7664 = vmatpush1.xpose.msra.mxu0 0.0
        %7665 = vmatprep.subr.mxu0 0.0
        %7666 = vmatpush1.xpose.msra.mxu0 0.0
        %7667 = vmatprep.subr.mxu0 0.0
        %7668 = vmatpush1.xpose.msra.mxu0 0.0
        %7669 = vmatprep.subr.mxu0 0.0
        %7670 = vmatpush1.xpose.msra.mxu0 0.0
        %7671 = vmatprep.subr.mxu0 0.0
        %7672 = vmatpush1.xpose.msra.mxu0 0.0
        %7673 = vmatprep.subr.mxu0 0.0
        %7674 = vmatpush1.xpose.msra.mxu0 0.0
        %7675 = vmatprep.subr.mxu0 0.0
        %7676 = vmatpush1.xpose.msra.mxu0 0.0
        %7677 = vmatprep.subr.mxu0 0.0
        %7678 = vmatpush1.xpose.msra.mxu0 0.0
        %7679 = vmatprep.mubr.f32.mxu0 %v3195
        %7680 = vmatmul.mubr.f32.gmra.mrb[0].mxu0 %v3187
        %v7681 = vpop.f32.mrb[0].mxu0
        %v7682 = vadd.f32 %v7612, %v7681
        %v7683 = vpop.f32.mrb[0].mxu0
        %7684 = vdwg.mxu0
        %7685 = vmatprep.subr.mxu0 %v5594
        %7686 = vmatpush1.xpose.msra.mxu0 %v5593
        %7687 = vmatprep.subr.mxu0 %v5658
        %7688 = vmatpush1.xpose.msra.mxu0 %v5657
        %7689 = vmatprep.subr.mxu0 %v5722
        %7690 = vmatpush1.xpose.msra.mxu0 %v5721
        %7691 = vmatprep.subr.mxu0 %v5786
        %7692 = vmatpush1.xpose.msra.mxu0 %v5785
        %7693 = vmatprep.subr.mxu0 0.0
        %7694 = vmatpush1.xpose.msra.mxu0 0.0
        %7695 = vmatprep.subr.mxu0 0.0
        %7696 = vmatpush1.xpose.msra.mxu0 0.0
        %7697 = vmatprep.subr.mxu0 0.0
        %7698 = vmatpush1.xpose.msra.mxu0 0.0
        %7699 = vmatprep.subr.mxu0 0.0
        %7700 = vmatpush1.xpose.msra.mxu0 0.0
        %7701 = vmatprep.subr.mxu0 0.0
        %7702 = vmatpush1.xpose.msra.mxu0 0.0
        %7703 = vmatprep.subr.mxu0 0.0
        %7704 = vmatpush1.xpose.msra.mxu0 0.0
        %7705 = vmatprep.subr.mxu0 0.0
        %7706 = vmatpush1.xpose.msra.mxu0 0.0
        %7707 = vmatprep.subr.mxu0 0.0
        %7708 = vmatpush1.xpose.msra.mxu0 0.0
        %7709 = vmatprep.subr.mxu0 0.0
        %7710 = vmatpush1.xpose.msra.mxu0 0.0
        %7711 = vmatprep.subr.mxu0 0.0
        %7712 = vmatpush1.xpose.msra.mxu0 0.0
        %7713 = vmatprep.subr.mxu0 0.0
        %7714 = vmatpush1.xpose.msra.mxu0 0.0
        %7715 = vmatprep.subr.mxu0 0.0
        %7716 = vmatpush1.xpose.msra.mxu0 0.0
        %7717 = vmatprep.subr.mxu0 0.0
        %7718 = vmatpush1.xpose.msra.mxu0 0.0
        %7719 = vmatprep.subr.mxu0 0.0
        %7720 = vmatpush1.xpose.msra.mxu0 0.0
        %7721 = vmatprep.subr.mxu0 0.0
        %7722 = vmatpush1.xpose.msra.mxu0 0.0
        %7723 = vmatprep.subr.mxu0 0.0
        %7724 = vmatpush1.xpose.msra.mxu0 0.0
        %7725 = vmatprep.subr.mxu0 0.0
        %7726 = vmatpush1.xpose.msra.mxu0 0.0
        %7727 = vmatprep.subr.mxu0 0.0
        %7728 = vmatpush1.xpose.msra.mxu0 0.0
        %7729 = vmatprep.subr.mxu0 0.0
        %7730 = vmatpush1.xpose.msra.mxu0 0.0
        %7731 = vmatprep.subr.mxu0 0.0
        %7732 = vmatpush1.xpose.msra.mxu0 0.0
        %7733 = vmatprep.subr.mxu0 0.0
        %7734 = vmatpush1.xpose.msra.mxu0 0.0
        %7735 = vmatprep.subr.mxu0 0.0
        %7736 = vmatpush1.xpose.msra.mxu0 0.0
        %7737 = vmatprep.subr.mxu0 0.0
        %7738 = vmatpush1.xpose.msra.mxu0 0.0
        %7739 = vmatprep.subr.mxu0 0.0
        %7740 = vmatpush1.xpose.msra.mxu0 0.0
        %7741 = vmatprep.subr.mxu0 0.0
        %7742 = vmatpush1.xpose.msra.mxu0 0.0
        %7743 = vmatprep.subr.mxu0 0.0
        %7744 = vmatpush1.xpose.msra.mxu0 0.0
        %7745 = vmatprep.subr.mxu0 0.0
        %7746 = vmatpush1.xpose.msra.mxu0 0.0
        %7747 = vmatprep.subr.mxu0 0.0
        %7748 = vmatpush1.xpose.msra.mxu0 0.0
        %7749 = vmatprep.mubr.f32.mxu0 %v3196
        %7750 = vmatmul.mubr.f32.gmra.mrb[0].mxu0 %v3194
        %v7751 = vpop.f32.mrb[0].mxu0
        %v7752 = vadd.f32 %v7682, %v7751
        %v7753 = vpop.f32.mrb[0].mxu0
        %7754 = vdwg.mxu0
        %7755 = vmatprep.subr.mxu0 %v5596
        %7756 = vmatpush1.xpose.msra.mxu0 %v5595
        %7757 = vmatprep.subr.mxu0 %v5660
        %7758 = vmatpush1.xpose.msra.mxu0 %v5659
        %7759 = vmatprep.subr.mxu0 %v5724
        %7760 = vmatpush1.xpose.msra.mxu0 %v5723
        %7761 = vmatprep.subr.mxu0 %v5788
        %7762 = vmatpush1.xpose.msra.mxu0 %v5787
        %7763 = vmatprep.subr.mxu0 0.0
        %7764 = vmatpush1.xpose.msra.mxu0 0.0
        %7765 = vmatprep.subr.mxu0 0.0
        %7766 = vmatpush1.xpose.msra.mxu0 0.0
        %7767 = vmatprep.subr.mxu0 0.0
        %7768 = vmatpush1.xpose.msra.mxu0 0.0
        %7769 = vmatprep.subr.mxu0 0.0
        %7770 = vmatpush1.xpose.msra.mxu0 0.0
        %7771 = vmatprep.subr.mxu0 0.0
        %7772 = vmatpush1.xpose.msra.mxu0 0.0
        %7773 = vmatprep.subr.mxu0 0.0
        %7774 = vmatpush1.xpose.msra.mxu0 0.0
        %7775 = vmatprep.subr.mxu0 0.0
        %7776 = vmatpush1.xpose.msra.mxu0 0.0
        %7777 = vmatprep.subr.mxu0 0.0
        %7778 = vmatpush1.xpose.msra.mxu0 0.0
        %7779 = vmatprep.subr.mxu0 0.0
        %7780 = vmatpush1.xpose.msra.mxu0 0.0
        %7781 = vmatprep.subr.mxu0 0.0
        %7782 = vmatpush1.xpose.msra.mxu0 0.0
        %7783 = vmatprep.subr.mxu0 0.0
        %7784 = vmatpush1.xpose.msra.mxu0 0.0
        %7785 = vmatprep.subr.mxu0 0.0
        %7786 = vmatpush1.xpose.msra.mxu0 0.0
        %7787 = vmatprep.subr.mxu0 0.0
        %7788 = vmatpush1.xpose.msra.mxu0 0.0
        %7789 = vmatprep.subr.mxu0 0.0
        %7790 = vmatpush1.xpose.msra.mxu0 0.0
        %7791 = vmatprep.subr.mxu0 0.0
        %7792 = vmatpush1.xpose.msra.mxu0 0.0
        %7793 = vmatprep.subr.mxu0 0.0
        %7794 = vmatpush1.xpose.msra.mxu0 0.0
        %7795 = vmatprep.subr.mxu0 0.0
        %7796 = vmatpush1.xpose.msra.mxu0 0.0
        %7797 = vmatprep.subr.mxu0 0.0
        %7798 = vmatpush1.xpose.msra.mxu0 0.0
        %7799 = vmatprep.subr.mxu0 0.0
        %7800 = vmatpush1.xpose.msra.mxu0 0.0
        %7801 = vmatprep.subr.mxu0 0.0
        %7802 = vmatpush1.xpose.msra.mxu0 0.0
        %7803 = vmatprep.subr.mxu0 0.0
        %7804 = vmatpush1.xpose.msra.mxu0 0.0
        %7805 = vmatprep.subr.mxu0 0.0
        %7806 = vmatpush1.xpose.msra.mxu0 0.0
        %7807 = vmatprep.subr.mxu0 0.0
        %7808 = vmatpush1.xpose.msra.mxu0 0.0
        %7809 = vmatprep.subr.mxu0 0.0
        %7810 = vmatpush1.xpose.msra.mxu0 0.0
        %7811 = vmatprep.subr.mxu0 0.0
        %7812 = vmatpush1.xpose.msra.mxu0 0.0
        %7813 = vmatprep.subr.mxu0 0.0
        %7814 = vmatpush1.xpose.msra.mxu0 0.0
        %7815 = vmatprep.subr.mxu0 0.0
        %7816 = vmatpush1.xpose.msra.mxu0 0.0
        %7817 = vmatprep.subr.mxu0 0.0
        %7818 = vmatpush1.xpose.msra.mxu0 0.0
        %7819 = vmatprep.mubr.f32.mxu0 %v3212
        %7820 = vmatmul.mubr.f32.gmra.mrb[0].mxu0 %v3204
        %v7821 = vpop.f32.mrb[0].mxu0
        %v7822 = vadd.f32 %v7752, %v7821
        %v7823 = vpop.f32.mrb[0].mxu0
        %7824 = vdwg.mxu0
        %7825 = vmatprep.subr.mxu0 %v5598
        %7826 = vmatpush1.xpose.msra.mxu0 %v5597
        %7827 = vmatprep.subr.mxu0 %v5662
        %7828 = vmatpush1.xpose.msra.mxu0 %v5661
        %7829 = vmatprep.subr.mxu0 %v5726
        %7830 = vmatpush1.xpose.msra.mxu0 %v5725
        %7831 = vmatprep.subr.mxu0 %v5790
        %7832 = vmatpush1.xpose.msra.mxu0 %v5789
        %7833 = vmatprep.subr.mxu0 0.0
        %7834 = vmatpush1.xpose.msra.mxu0 0.0
        %7835 = vmatprep.subr.mxu0 0.0
        %7836 = vmatpush1.xpose.msra.mxu0 0.0
        %7837 = vmatprep.subr.mxu0 0.0
        %7838 = vmatpush1.xpose.msra.mxu0 0.0
        %7839 = vmatprep.subr.mxu0 0.0
        %7840 = vmatpush1.xpose.msra.mxu0 0.0
        %7841 = vmatprep.subr.mxu0 0.0
        %7842 = vmatpush1.xpose.msra.mxu0 0.0
        %7843 = vmatprep.subr.mxu0 0.0
        %7844 = vmatpush1.xpose.msra.mxu0 0.0
        %7845 = vmatprep.subr.mxu0 0.0
        %7846 = vmatpush1.xpose.msra.mxu0 0.0
        %7847 = vmatprep.subr.mxu0 0.0
        %7848 = vmatpush1.xpose.msra.mxu0 0.0
        %7849 = vmatprep.subr.mxu0 0.0
        %7850 = vmatpush1.xpose.msra.mxu0 0.0
        %7851 = vmatprep.subr.mxu0 0.0
        %7852 = vmatpush1.xpose.msra.mxu0 0.0
        %7853 = vmatprep.subr.mxu0 0.0
        %7854 = vmatpush1.xpose.msra.mxu0 0.0
        %7855 = vmatprep.subr.mxu0 0.0
        %7856 = vmatpush1.xpose.msra.mxu0 0.0
        %7857 = vmatprep.subr.mxu0 0.0
        %7858 = vmatpush1.xpose.msra.mxu0 0.0
        %7859 = vmatprep.subr.mxu0 0.0
        %7860 = vmatpush1.xpose.msra.mxu0 0.0
        %7861 = vmatprep.subr.mxu0 0.0
        %7862 = vmatpush1.xpose.msra.mxu0 0.0
        %7863 = vmatprep.subr.mxu0 0.0
        %7864 = vmatpush1.xpose.msra.mxu0 0.0
        %7865 = vmatprep.subr.mxu0 0.0
        %7866 = vmatpush1.xpose.msra.mxu0 0.0
        %7867 = vmatprep.subr.mxu0 0.0
        %7868 = vmatpush1.xpose.msra.mxu0 0.0
        %7869 = vmatprep.subr.mxu0 0.0
        %7870 = vmatpush1.xpose.msra.mxu0 0.0
        %7871 = vmatprep.subr.mxu0 0.0
        %7872 = vmatpush1.xpose.msra.mxu0 0.0
        %7873 = vmatprep.subr.mxu0 0.0
        %7874 = vmatpush1.xpose.msra.mxu0 0.0
        %7875 = vmatprep.subr.mxu0 0.0
        %7876 = vmatpush1.xpose.msra.mxu0 0.0
        %7877 = vmatprep.subr.mxu0 0.0
        %7878 = vmatpush1.xpose.msra.mxu0 0.0
        %7879 = vmatprep.subr.mxu0 0.0
        %7880 = vmatpush1.xpose.msra.mxu0 0.0
        %7881 = vmatprep.subr.mxu0 0.0
        %7882 = vmatpush1.xpose.msra.mxu0 0.0
        %7883 = vmatprep.subr.mxu0 0.0
        %7884 = vmatpush1.xpose.msra.mxu0 0.0
        %7885 = vmatprep.subr.mxu0 0.0
        %7886 = vmatpush1.xpose.msra.mxu0 0.0
        %7887 = vmatprep.subr.mxu0 0.0
        %7888 = vmatpush1.xpose.msra.mxu0 0.0
        %7889 = vmatprep.mubr.f32.mxu0 %v3213
        %7890 = vmatmul.mubr.f32.gmra.mrb[0].mxu0 %v3211
        %v7891 = vpop.f32.mrb[0].mxu0
        %v7892 = vadd.f32 %v7822, %v7891
        %v7893 = vpop.f32.mrb[0].mxu0
        %7894 = vdwg.mxu0
        %7895 = vmatprep.subr.mxu0 %v5600
        %7896 = vmatpush1.xpose.msra.mxu0 %v5599
        %7897 = vmatprep.subr.mxu0 %v5664
        %7898 = vmatpush1.xpose.msra.mxu0 %v5663
        %7899 = vmatprep.subr.mxu0 %v5728
        %7900 = vmatpush1.xpose.msra.mxu0 %v5727
        %7901 = vmatprep.subr.mxu0 %v5792
        %7902 = vmatpush1.xpose.msra.mxu0 %v5791
        %7903 = vmatprep.subr.mxu0 0.0
        %7904 = vmatpush1.xpose.msra.mxu0 0.0
        %7905 = vmatprep.subr.mxu0 0.0
        %7906 = vmatpush1.xpose.msra.mxu0 0.0
        %7907 = vmatprep.subr.mxu0 0.0
        %7908 = vmatpush1.xpose.msra.mxu0 0.0
        %7909 = vmatprep.subr.mxu0 0.0
        %7910 = vmatpush1.xpose.msra.mxu0 0.0
        %7911 = vmatprep.subr.mxu0 0.0
        %7912 = vmatpush1.xpose.msra.mxu0 0.0
        %7913 = vmatprep.subr.mxu0 0.0
        %7914 = vmatpush1.xpose.msra.mxu0 0.0
        %7915 = vmatprep.subr.mxu0 0.0
        %7916 = vmatpush1.xpose.msra.mxu0 0.0
        %7917 = vmatprep.subr.mxu0 0.0
        %7918 = vmatpush1.xpose.msra.mxu0 0.0
        %7919 = vmatprep.subr.mxu0 0.0
        %7920 = vmatpush1.xpose.msra.mxu0 0.0
        %7921 = vmatprep.subr.mxu0 0.0
        %7922 = vmatpush1.xpose.msra.mxu0 0.0
        %7923 = vmatprep.subr.mxu0 0.0
        %7924 = vmatpush1.xpose.msra.mxu0 0.0
        %7925 = vmatprep.subr.mxu0 0.0
        %7926 = vmatpush1.xpose.msra.mxu0 0.0
        %7927 = vmatprep.subr.mxu0 0.0
        %7928 = vmatpush1.xpose.msra.mxu0 0.0
        %7929 = vmatprep.subr.mxu0 0.0
        %7930 = vmatpush1.xpose.msra.mxu0 0.0
        %7931 = vmatprep.subr.mxu0 0.0
        %7932 = vmatpush1.xpose.msra.mxu0 0.0
        %7933 = vmatprep.subr.mxu0 0.0
        %7934 = vmatpush1.xpose.msra.mxu0 0.0
        %7935 = vmatprep.subr.mxu0 0.0
        %7936 = vmatpush1.xpose.msra.mxu0 0.0
        %7937 = vmatprep.subr.mxu0 0.0
        %7938 = vmatpush1.xpose.msra.mxu0 0.0
        %7939 = vmatprep.subr.mxu0 0.0
        %7940 = vmatpush1.xpose.msra.mxu0 0.0
        %7941 = vmatprep.subr.mxu0 0.0
        %7942 = vmatpush1.xpose.msra.mxu0 0.0
        %7943 = vmatprep.subr.mxu0 0.0
        %7944 = vmatpush1.xpose.msra.mxu0 0.0
        %7945 = vmatprep.subr.mxu0 0.0
        %7946 = vmatpush1.xpose.msra.mxu0 0.0
        %7947 = vmatprep.subr.mxu0 0.0
        %7948 = vmatpush1.xpose.msra.mxu0 0.0
        %7949 = vmatprep.subr.mxu0 0.0
        %7950 = vmatpush1.xpose.msra.mxu0 0.0
        %7951 = vmatprep.subr.mxu0 0.0
        %7952 = vmatpush1.xpose.msra.mxu0 0.0
        %7953 = vmatprep.subr.mxu0 0.0
        %7954 = vmatpush1.xpose.msra.mxu0 0.0
        %7955 = vmatprep.subr.mxu0 0.0
        %7956 = vmatpush1.xpose.msra.mxu0 0.0
        %7957 = vmatprep.subr.mxu0 0.0
        %7958 = vmatpush1.xpose.msra.mxu0 0.0
        %7959 = vmatprep.mubr.f32.mxu0 %v3229
        %7960 = vmatmul.mubr.f32.gmra.mrb[0].mxu0 %v3221
        %v7961 = vpop.f32.mrb[0].mxu0
        %v7962 = vadd.f32 %v7892, %v7961
        %v7963 = vpop.f32.mrb[0].mxu0
        %7964 = vdwg.mxu0
        %7965 = vmatprep.subr.mxu0 %v5602
        %7966 = vmatpush1.xpose.msra.mxu0 %v5601
        %7967 = vmatprep.subr.mxu0 %v5666
        %7968 = vmatpush1.xpose.msra.mxu0 %v5665
        %7969 = vmatprep.subr.mxu0 %v5730
        %7970 = vmatpush1.xpose.msra.mxu0 %v5729
        %7971 = vmatprep.subr.mxu0 %v5794
        %7972 = vmatpush1.xpose.msra.mxu0 %v5793
        %7973 = vmatprep.subr.mxu0 0.0
        %7974 = vmatpush1.xpose.msra.mxu0 0.0
        %7975 = vmatprep.subr.mxu0 0.0
        %7976 = vmatpush1.xpose.msra.mxu0 0.0
        %7977 = vmatprep.subr.mxu0 0.0
        %7978 = vmatpush1.xpose.msra.mxu0 0.0
        %7979 = vmatprep.subr.mxu0 0.0
        %7980 = vmatpush1.xpose.msra.mxu0 0.0
        %7981 = vmatprep.subr.mxu0 0.0
        %7982 = vmatpush1.xpose.msra.mxu0 0.0
        %7983 = vmatprep.subr.mxu0 0.0
        %7984 = vmatpush1.xpose.msra.mxu0 0.0
        %7985 = vmatprep.subr.mxu0 0.0
        %7986 = vmatpush1.xpose.msra.mxu0 0.0
        %7987 = vmatprep.subr.mxu0 0.0
        %7988 = vmatpush1.xpose.msra.mxu0 0.0
        %7989 = vmatprep.subr.mxu0 0.0
        %7990 = vmatpush1.xpose.msra.mxu0 0.0
        %7991 = vmatprep.subr.mxu0 0.0
        %7992 = vmatpush1.xpose.msra.mxu0 0.0
        %7993 = vmatprep.subr.mxu0 0.0
        %7994 = vmatpush1.xpose.msra.mxu0 0.0
        %7995 = vmatprep.subr.mxu0 0.0
        %7996 = vmatpush1.xpose.msra.mxu0 0.0
        %7997 = vmatprep.subr.mxu0 0.0
        %7998 = vmatpush1.xpose.msra.mxu0 0.0
        %7999 = vmatprep.subr.mxu0 0.0
        %8000 = vmatpush1.xpose.msra.mxu0 0.0
        %8001 = vmatprep.subr.mxu0 0.0
        %8002 = vmatpush1.xpose.msra.mxu0 0.0
        %8003 = vmatprep.subr.mxu0 0.0
        %8004 = vmatpush1.xpose.msra.mxu0 0.0
        %8005 = vmatprep.subr.mxu0 0.0
        %8006 = vmatpush1.xpose.msra.mxu0 0.0
        %8007 = vmatprep.subr.mxu0 0.0
        %8008 = vmatpush1.xpose.msra.mxu0 0.0
        %8009 = vmatprep.subr.mxu0 0.0
        %8010 = vmatpush1.xpose.msra.mxu0 0.0
        %8011 = vmatprep.subr.mxu0 0.0
        %8012 = vmatpush1.xpose.msra.mxu0 0.0
        %8013 = vmatprep.subr.mxu0 0.0
        %8014 = vmatpush1.xpose.msra.mxu0 0.0
        %8015 = vmatprep.subr.mxu0 0.0
        %8016 = vmatpush1.xpose.msra.mxu0 0.0
        %8017 = vmatprep.subr.mxu0 0.0
        %8018 = vmatpush1.xpose.msra.mxu0 0.0
        %8019 = vmatprep.subr.mxu0 0.0
        %8020 = vmatpush1.xpose.msra.mxu0 0.0
        %8021 = vmatprep.subr.mxu0 0.0
        %8022 = vmatpush1.xpose.msra.mxu0 0.0
        %8023 = vmatprep.subr.mxu0 0.0
        %8024 = vmatpush1.xpose.msra.mxu0 0.0
        %8025 = vmatprep.subr.mxu0 0.0
        %8026 = vmatpush1.xpose.msra.mxu0 0.0
        %8027 = vmatprep.subr.mxu0 0.0
        %8028 = vmatpush1.xpose.msra.mxu0 0.0
        %8029 = vmatprep.mubr.f32.mxu0 %v3230
        %8030 = vmatmul.mubr.f32.gmra.mrb[0].mxu0 %v3228
        %v8031 = vpop.f32.mrb[0].mxu0
        %v8032 = vadd.f32 %v7962, %v8031
        %v8033 = vpop.f32.mrb[0].mxu0
        %8034 = vdwg.mxu0
        %v8035 = vadd.f32 %v5538, %v8032
        %8036 = vst.msk [vmem:[#allocation4] sm:$0x3] %vm5536, %v8035
        %p8037 = scmp.eq.s32.totalorder %s29, 1
        // Predicated region
        $region69: #{encoder_forward.1} parent=47 // pred_check
          %p8038 = pneg %p8037
        $region70: #{encoder_forward.1} parent=47 // pred_check_branch
          %8040 = sbr.rel (%p8038) target = $region72
        $region71: #{encoder_forward.1} parent=47 // pred_region
          %v8041 = vld [vmem:[#allocation3] sm:$0x3]
          %v8042 = vld [vmem:[#allocation10] sm:$0x1]
          %v8044 = vlaneseq
          %v8045 = vshrl.u32 %v8044, 7
          %v8046 = vsub.s32 0, %v8045
          %v8047 = vrot.slane %v8042, %v8046
          %v8049 = vadd.f32 %v8041, %v8047
          %8050 = vst.msk [vmem:[#allocation13] sm:$0x3] %vm5536, %v8049
          %v8051 = vld [vmem:[#allocation4] sm:$0x3]
          %v8052 = vld [vmem:[#allocation11] sm:$0x1]
          %v8054 = vlaneseq
          %v8055 = vshrl.u32 %v8054, 7
          %v8056 = vsub.s32 0, %v8055
          %v8057 = vrot.slane %v8052, %v8056
          %v8059 = vadd.f32 %v8051, %v8057
          %8060 = vst.msk [vmem:[#allocation14] sm:$0x3] %vm5536, %v8059
        $region72: #{encoder_forward.1} parent=47 // pred_fallthru
          _
        // Predicated region
        $region73: #{encoder_forward.1} parent=47 // pred_check
          %p8061 = pneg %p199
        $region74: #{encoder_forward.1} parent=47 // pred_check_branch
          %8063 = sbr.rel (%p8061) target = $region76
        $region75: #{encoder_forward.1} parent=47 // pred_region
          %s8065 = ssub.s32 32, 32
          %8066 = vsyncadd [#allocation7], %s8065
          %s8068 = sshll.u32 [#allocation13], 4
          %s8069 = int_to_ptr.vmem [resolvable:$true] %s8068
          %8071 = dma.vmem_to_hbm [thread:$0]  %s8069, 32, %s7, [#allocation7]
        $region76: #{encoder_forward.1} parent=47 // pred_fallthru
          _
        // Predicated region
        $region77: #{encoder_forward.1} parent=47 // pred_check
          %p8072 = pneg %p220
        $region78: #{encoder_forward.1} parent=47 // pred_check_branch
          %8074 = sbr.rel (%p8072) target = $region80
        $region79: #{encoder_forward.1} parent=47 // pred_region
          %s8076 = ssub.s32 32, 32
          %8077 = vsyncadd [#allocation15], %s8076
          %s8079 = sshll.u32 [#allocation14], 4
          %s8080 = int_to_ptr.vmem [resolvable:$true] %s8079
          %8082 = dma.vmem_to_hbm [thread:$0]  %s8080, 32, %s8, [#allocation15]
        $region80: #{encoder_forward.1} parent=47 // pred_fallthru
          _
        // Predicated region
        $region81: #{encoder_forward.1} parent=47 // pred_check
          %p8083 = pneg %p199
        $region82: #{encoder_forward.1} parent=47 // pred_check_branch
          %8085 = sbr.rel (%p8083) target = $region84
        $region83: #{encoder_forward.1} parent=47 // pred_region
          %8086 = dma.done [#allocation7], 32
        $region84: #{encoder_forward.1} parent=47 // pred_fallthru
          _
        // Predicated region
        $region85: #{encoder_forward.1} parent=47 // pred_check
          %p8087 = pneg %p220
        $region86: #{encoder_forward.1} parent=47 // pred_check_branch
          %8089 = sbr.rel (%p8087) target = $region88
        $region87: #{encoder_forward.1} parent=47 // pred_region
          %8090 = dma.done [#allocation15], 32
        $region88: #{encoder_forward.1} parent=47 // pred_fallthru
          _
      $region48: #{encoder_forward.1} parent=5 // pred_fallthru
        _
      %p8091 = scmp.le.s32.totalorder 2, %s24
      // Predicated region
      $region89: #{encoder_forward.1} parent=5 // pred_check
        %p8092 = pneg %p8091
      $region90: #{encoder_forward.1} parent=5 // pred_check_branch
        %8094 = sbr.rel (%p8092) target = $region92
      $region91: #{encoder_forward.1} parent=5 // pred_region
        %s8095 = ssub.s32 %s24, 2
      $region92: #{encoder_forward.1} parent=5 // pred_fallthru
        _
    $region6: #{encoder_forward.1} parent=1 // loop_footer
      %s28 = sadd.s32 1, %s24
    $region7: #{encoder_forward.1} parent=1 // loop_footer_branch
      %23 = sbr.rel target = $region3
    $region8: #{encoder_forward.1} parent=1 // loop_exit
      _
    %8096 = vsyncpa [#allocation6], 1
    %s8097 = scalar_lea.sflag [#allocation6], 1
    %8098 = vsyncpa %s8097, 1
    %8099 = vsyncpa [#allocation9], 1
    %s8100 = scalar_lea.sflag [#allocation9], 1
    %8101 = vsyncpa %s8100, 1
    %8102 = vsyncpa [#allocation12], 1
    %8103 = vsyncpa [#allocation7], 1
    %s8104 = scalar_lea.sflag [#allocation7], 1
    %8105 = vsyncpa %s8104, 1
    %8106 = vsyncpa [#allocation15], 1

</llo_original>
